<compile_context>
chip_gen: v6e
topology: v6e:2x2x1
jax: 0.10.0
libtpu: 0.0.40
codegen_flags: <defaults>
</compile_context>

<pallas_src>
import functools
import math

import jax
import jax.numpy as jnp
from jax.experimental import pallas as pl
from jax.experimental.pallas import tpu as pltpu

# ------------------------------ configuration ------------------------------
B = 2                       # batch
IMG_C, IMG_H, IMG_W = 3, 16, 16
PATCH = 8                   # -> 2x2 = 4 patches, +CLS => seq 5
N_PATCH = (IMG_H // PATCH) * (IMG_W // PATCH)
VIT_T = N_PATCH + 1
CPP = IMG_C * PATCH * PATCH                      # 192
VIT_DIM, VIT_HEADS, VIT_LAYERS, VIT_MLP = 32, 4, 2, 64
VIT_DH = VIT_DIM // VIT_HEADS
GENE_IN, GENE_EMB = 20, 16
HIDDEN, HEADS, LAYERS = 32, 4, 2
FFN_DIM = 2048              # nn.TransformerEncoderLayer default dim_feedforward
NUM_CLASSES = 3
OUT_PAD = 128               # classifier output padded to a full lane tile
LANES = 128
VIT_EPS = 1e-12             # HF ViT LayerNorm eps
EPS = 1e-5                  # nn.LayerNorm / TransformerEncoderLayer eps


def _round_up(x, m):
    return (x + m - 1) // m * m


# --------------------------- host-side slab packing -------------------------

class _SlabBuilder:
    """Packs many small weights into one lane-dense (rows, 128) slab so the
    kernel issues a single DMA instead of one per leaf."""

    def __init__(self, row_align):
        self._row_align = row_align
        self._entries = []
        self._rows = 0

    def add(self, name, arr):
        arr = jnp.asarray(arr, jnp.float32)
        if arr.ndim == 1:
            arr = arr[None, :]
        h, w = arr.shape
        assert w <= LANES, (name, arr.shape)
        self._entries.append((name, arr, self._rows))
        self._rows += _round_up(h, self._row_align)

    def build(self, dtype):
        slab = jnp.zeros((self._rows, LANES), jnp.float32)
        offsets = {}
        for name, arr, r in self._entries:
            h, w = arr.shape
            slab = slab.at[r:r + h, :w].set(arr)
            offsets[name] = (r, h, w)
        return slab.astype(dtype), offsets


# --------------------------- in-kernel helpers ------------------------------

def _mm(a, b):
    """bf16 MXU matmul with f32 accumulation."""
    return jnp.dot(a.astype(jnp.bfloat16), b.astype(jnp.bfloat16),
                   preferred_element_type=jnp.float32)


def _mm_t(a, b):
    """a @ b.T (contract last dims) in bf16, f32 accumulation; no transpose."""
    return jax.lax.dot_general(a.astype(jnp.bfloat16), b.astype(jnp.bfloat16),
                               (((1,), (1,)), ((), ())),
                               preferred_element_type=jnp.float32)


def _ln(x, eps):
    """Affine-free LayerNorm (affines are folded into adjacent weights or
    applied explicitly where folding is not possible)."""
    m = jnp.mean(x, axis=-1, keepdims=True)
    xc = x - m
    v = jnp.mean(xc * xc, axis=-1, keepdims=True)
    return xc * jax.lax.rsqrt(v + eps)


def _gelu(x):
    # TODO(synk): tanh approximation; HF ViT uses exact erf GELU.
    return 0.5 * x * (1.0 + jnp.tanh(0.7978845608028654 *
                                     (x + 0.044715 * x * x * x)))


def _softmax(s):
    s = s - jnp.max(s, axis=-1, keepdims=True)
    p = jnp.exp(s)
    return p * pl.reciprocal(jnp.sum(p, axis=-1, keepdims=True), approx=True)


def _vit_attention(h, wqkv, bqkv, wo, bo):
    """Multi-head self-attention over B sequences packed as (B*VIT_T, D).

    1/sqrt(dh) and the pre-LN affine are folded into wqkv/bqkv host-side;
    per-head contexts are lane-concatenated so the output projection is a
    single K=D matmul."""
    qkv = _mm(h, wqkv) + bqkv                         # (B*T, 3D), one matmul
    per_sample = []
    for b in range(B):                                # static, B=2
        rows = qkv[b * VIT_T:(b + 1) * VIT_T, :]      # (T, 3D)
        heads = []
        for hh in range(VIT_HEADS):                   # static, 4 heads
            q = rows[:, hh * VIT_DH:(hh + 1) * VIT_DH]
            k = rows[:, VIT_DIM + hh * VIT_DH:VIT_DIM + (hh + 1) * VIT_DH]
            v = rows[:, 2 * VIT_DIM + hh * VIT_DH:2 * VIT_DIM + (hh + 1) * VIT_DH]
            p = _softmax(_mm_t(q, k))                 # scale pre-folded into Q
            heads.append(_mm(p, v))                   # (T, dh)
        per_sample.append(jnp.concatenate(heads, axis=-1))   # (T, D)
    ctx = jnp.concatenate(per_sample, axis=0)         # (B*T, D)
    return _mm(ctx, wo) + bo


# ------------------------------ fused kernel --------------------------------

def _fused_forward_kernel(woff, voff, patches_ref, gene_ref, wslab_ref,
                          vslab_ref, w1_ref, w2t_ref, b1_ref, out_ref):
    def W(name):                                      # bf16 matmul weight
        r, h, w = woff[name]
        return wslab_ref[r:r + h, 0:w]

    def V(name):                                      # f32 bias / LN vector
        r, h, w = voff[name]
        return vslab_ref[r:r + h, 0:w]

    # -------- ViT backbone (pre-LN); batch folded into the matmul M dim -----
    # Row b*VIT_T of `patches` is a zero "CLS patch"; CLS token, patch bias
    # and position table are folded into V("pos") host-side.
    seq = _mm(patches_ref[...], W("patch_w")) + V("pos")        # (B*T, D)
    for l in range(VIT_LAYERS):
        h = _ln(seq, VIT_EPS)                # LN1 affine folded into wqkv/bqkv
        seq = seq + _vit_attention(h, W(f"vit_wqkv{l}"), V(f"vit_bqkv{l}"),
                                   W(f"vit_wo{l}"), V(f"vit_bo{l}"))
        h = _ln(seq, VIT_EPS)                # LN2 affine folded into mlp_w1/b1
        m = _gelu(_mm(h, W(f"vit_mw1{l}")) + V(f"vit_mb1{l}"))
        seq = seq + _mm(m, W(f"vit_mw2{l}")) + V(f"vit_mb2{l}")
    seq = _ln(seq, VIT_EPS)                  # final LN affine folded into fuse_wi
    img = jnp.concatenate(
        [seq[b * VIT_T:b * VIT_T + 1, :] for b in range(B)], axis=0)  # (B, D)

    # -------- gene branch: Linear -> ReLU -> LayerNorm ----------------------
    g = jnp.maximum(_mm(gene_ref[...], W("gene_w")) + V("gene_b"), 0.0)
    gene = _ln(g, EPS)                       # LN affine folded into fuse_wg

    # -------- fusion: concat -> Linear -> ReLU -> LayerNorm -----------------
    # concat(img, gene) @ W == img @ W[:D_img] + gene @ W[D_img:]
    fused = _mm(img, W("fuse_wi")) + _mm(gene, W("fuse_wg")) + V("fuse_b")
    x = _ln(jnp.maximum(fused, 0.0), EPS) * V("fuse_ln_g") + V("fuse_ln_b")

    # -------- TransformerEncoder (post-LN, relu FFN) on seq-len 1 -----------
    # Self-attention over a length-1 sequence is exactly x @ (Wv@Wo) + const;
    # W_attn / b_attn are precomputed host-side.
    for l in range(LAYERS):
        a = _mm(x, W(f"enc_wattn{l}")) + V(f"enc_battn{l}")
        x = _ln(x + a, EPS) * V(f"enc_ln1g{l}") + V(f"enc_ln1b{l}")
        ff = jnp.maximum(_mm(x, w1_ref[l]) + b1_ref[l], 0.0)     # (B, FFN_DIM)
        ff = _mm_t(ff, w2t_ref[l]) + V(f"enc_b2{l}")             # lane-dense w2.T
        x = _ln(x + ff, EPS) * V(f"enc_ln2g{l}") + V(f"enc_ln2b{l}")

    # -------- classifier (lane-padded to 128 for an unmasked store) ---------
    out_ref[...] = (_mm(x, W("cls_w")) + V("cls_b")).astype(out_ref.dtype)


# ------------------------------ parameter init ------------------------------

def init_params(key):
    keys = iter(jax.random.split(key, 256))

    def nrm(shape, scale=0.02):
        return scale * jax.random.normal(next(keys), shape, dtype=jnp.float32)

    def attn_block(dim):
        return dict(wqkv=nrm((dim, 3 * dim)), bqkv=jnp.zeros((3 * dim,)),
                    wo=nrm((dim, dim)), bo=jnp.zeros((dim,)))

    vit_layers = []
    for _ in range(VIT_LAYERS):
        lyr = attn_block(VIT_DIM)
        lyr.update(
            ln1_g=jnp.ones((VIT_DIM,)), ln1_b=jnp.zeros((VIT_DIM,)),
            ln2_g=jnp.ones((VIT_DIM,)), ln2_b=jnp.zeros((VIT_DIM,)),
            mlp_w1=nrm((VIT_DIM, VIT_MLP)), mlp_b1=jnp.zeros((VIT_MLP,)),
            mlp_w2=nrm((VIT_MLP, VIT_DIM)), mlp_b2=jnp.zeros((VIT_DIM,)))
        vit_layers.append(lyr)
    vit = dict(
        patch_w=nrm((CPP, VIT_DIM)), patch_b=jnp.zeros((VIT_DIM,)),
        cls=nrm((1, VIT_DIM)), pos=nrm((VIT_T, VIT_DIM)),
        layers=vit_layers,
        lnf_g=jnp.ones((VIT_DIM,)), lnf_b=jnp.zeros((VIT_DIM,)))

    enc_layers = []
    for _ in range(LAYERS):
        lyr = attn_block(HIDDEN)
        lyr.update(
            ln1_g=jnp.ones((HIDDEN,)), ln1_b=jnp.zeros((HIDDEN,)),
            ln2_g=jnp.ones((HIDDEN,)), ln2_b=jnp.zeros((HIDDEN,)),
            w1=nrm((HIDDEN, FFN_DIM)), b1=jnp.zeros((FFN_DIM,)),
            w2=nrm((FFN_DIM, HIDDEN)), b2=jnp.zeros((HIDDEN,)))
        enc_layers.append(lyr)

    return dict(
        vit=vit,
        gene_w=nrm((GENE_IN, GENE_EMB)), gene_b=jnp.zeros((GENE_EMB,)),
        gene_ln_g=jnp.ones((GENE_EMB,)), gene_ln_b=jnp.zeros((GENE_EMB,)),
        fuse_w=nrm((VIT_DIM + GENE_EMB, HIDDEN)), fuse_b=jnp.zeros((HIDDEN,)),
        fuse_ln_g=jnp.ones((HIDDEN,)), fuse_ln_b=jnp.zeros((HIDDEN,)),
        enc_layers=enc_layers,
        cls_w=nrm((HIDDEN, NUM_CLASSES)), cls_b=jnp.zeros((NUM_CLASSES,)))


# ------------------- one-time host-side weight preparation ------------------

def prepare_kernel_params(params, batch):
    """Runs ONCE at init: algebraic folds + lane-dense slab packing.
    Returns (wslab, woff, vslab, voff, enc_w1, enc_w2t, enc_b1)."""
    v = params["vit"]
    wb = _SlabBuilder(row_align=16)     # bf16 matmul weights ((16,128) tiling)
    vb = _SlabBuilder(row_align=8)      # f32 bias / LN / position vectors

    # CLS token, patch-projection bias and position table folded into one
    # additive table, tiled over the batch (row b*T is the zero "CLS patch").
    pos_eff = jnp.concatenate(
        [v["cls"] + v["pos"][0:1], v["pos"][1:] + v["patch_b"][None, :]], axis=0)
    vb.add("pos", jnp.tile(pos_eff, (batch, 1)))
    wb.add("patch_w", v["patch_w"])

    q_scale = jnp.concatenate(
        [jnp.full((VIT_DIM,), 1.0 / math.sqrt(VIT_DH), jnp.float32),
         jnp.ones((2 * VIT_DIM,), jnp.float32)])
    for l, lyr in enumerate(v["layers"]):
        # pre-LN affine folded into QKV; 1/sqrt(dh) folded into the Q block.
        wb.add(f"vit_wqkv{l}", (lyr["ln1_g"][:, None] * lyr["wqkv"]) * q_scale[None, :])
        vb.add(f"vit_bqkv{l}", (lyr["ln1_b"] @ lyr["wqkv"] + lyr["bqkv"]) * q_scale)
        wb.add(f"vit_wo{l}", lyr["wo"])
        vb.add(f"vit_bo{l}", lyr["bo"])
        # pre-LN affine folded into the MLP up-projection.
        wb.add(f"vit_mw1{l}", lyr["ln2_g"][:, None] * lyr["mlp_w1"])
        vb.add(f"vit_mb1{l}", lyr["ln2_b"] @ lyr["mlp_w1"] + lyr["mlp_b1"])
        wb.add(f"vit_mw2{l}", lyr["mlp_w2"])
        vb.add(f"vit_mb2{l}", lyr["mlp_b2"])

    wb.add("gene_w", params["gene_w"])
    vb.add("gene_b", params["gene_b"])

    # Fusion weight split for the concat-free formulation; final ViT LN and
    # gene LN affines folded into the two halves + bias.
    fw_img, fw_gene = params["fuse_w"][:VIT_DIM], params["fuse_w"][VIT_DIM:]
    wb.add("fuse_wi", v["lnf_g"][:, None] * fw_img)
    wb.add("fuse_wg", params["gene_ln_g"][:, None] * fw_gene)
    vb.add("fuse_b", params["fuse_b"] + v["lnf_b"] @ fw_img
           + params["gene_ln_b"] @ fw_gene)
    vb.add("fuse_ln_g", params["fuse_ln_g"])
    vb.add("fuse_ln_b", params["fuse_ln_b"])

    w1s, w2ts, b1s = [], [], []
    for l, lyr in enumerate(params["enc_layers"]):
        # Seq-len-1 self-attention == x @ (Wv @ Wo) + (bv @ Wo + bo).
        wv, bv = lyr["wqkv"][:, 2 * HIDDEN:], lyr["bqkv"][2 * HIDDEN:]
        wb.add(f"enc_wattn{l}", wv @ lyr["wo"])
        vb.add(f"enc_battn{l}", bv @ lyr["wo"] + lyr["bo"])
        vb.add(f"enc_ln1g{l}", lyr["ln1_g"])
        vb.add(f"enc_ln1b{l}", lyr["ln1_b"])
        vb.add(f"enc_b2{l}", lyr["b2"])
        vb.add(f"enc_ln2g{l}", lyr["ln2_g"])
        vb.add(f"enc_ln2b{l}", lyr["ln2_b"])
        w1s.append(lyr["w1"])
        w2ts.append(lyr["w2"].T)            # (HIDDEN, FFN_DIM), lane-dense
        b1s.append(lyr["b1"][None, :])

    cls_w = jnp.zeros((HIDDEN, OUT_PAD), jnp.float32).at[:, :NUM_CLASSES].set(
        params["cls_w"])
    cls_b = jnp.zeros((OUT_PAD,), jnp.float32).at[:NUM_CLASSES].set(params["cls_b"])
    wb.add("cls_w", cls_w)
    vb.add("cls_b", cls_b)

    wslab, woff = wb.build(jnp.bfloat16)
    vslab, voff = vb.build(jnp.float32)
    enc_w1 = jnp.stack(w1s).astype(jnp.bfloat16)      # (L, HIDDEN, FFN_DIM)
    enc_w2t = jnp.stack(w2ts).astype(jnp.bfloat16)    # (L, HIDDEN, FFN_DIM)
    enc_b1 = jnp.stack(b1s)                           # (L, 1, FFN_DIM) f32
    return wslab, woff, vslab, voff, enc_w1, enc_w2t, enc_b1


def images_to_patch_tokens(images):
    """im2col: (B, C, H, W) -> (B*VIT_T, C*P*P) with a zeroed CLS row per sample."""
    b, c, h, w = images.shape
    nh, nw = h // PATCH, w // PATCH
    x = images.reshape(b, c, nh, PATCH, nw, PATCH)
    x = x.transpose(0, 2, 4, 1, 3, 5).reshape(b, nh * nw, CPP)
    x = jnp.concatenate([jnp.zeros((b, 1, CPP), x.dtype), x], axis=1)
    return x.reshape(b * VIT_T, CPP)


# ------------------------------ forward wrapper ------------------------------

def make_forward(prepped):
    """Builds a jitted forward; the packed weights are reused on every call."""
    wslab, woff, vslab, voff, enc_w1, enc_w2t, enc_b1 = prepped
    kernel = functools.partial(_fused_forward_kernel, woff, voff)

    def _full_spec(a):
        nd = a.ndim
        return pl.BlockSpec(a.shape, lambda i, nd=nd: (0,) * nd)

    @jax.jit
    def fwd(images, gene_expression, wslab, vslab, enc_w1, enc_w2t, enc_b1):
        assert images.shape[0] == B and gene_expression.shape == (B, GENE_IN)
        patches = images_to_patch_tokens(images)          # (B*VIT_T, CPP)
        operands = (patches, gene_expression, wslab, vslab,
                    enc_w1, enc_w2t, enc_b1)
        out = pl.pallas_call(
            kernel,
            out_shape=jax.ShapeDtypeStruct((B, OUT_PAD), jnp.float32),
            grid=(1,),
            in_specs=[_full_spec(a) for a in operands],
            out_specs=pl.BlockSpec((B, OUT_PAD), lambda i: (0, 0)),
            compiler_params=pltpu.CompilerParams(
                dimension_semantics=("arbitrary",)),
        )(*operands)
        return out[:, :NUM_CLASSES]

    return lambda images, genes: fwd(images, genes, wslab, vslab,
                                     enc_w1, enc_w2t, enc_b1)


# ------------------------------------ main ----------------------------------

if __name__ == "__main__":
    key = jax.random.PRNGKey(0)
    k_img, k_gene, k_param = jax.random.split(key, 3)
    images = jax.random.normal(k_img, (B, IMG_C, IMG_H, IMG_W), dtype=jnp.float32)
    gene_expression = jax.random.normal(k_gene, (B, GENE_IN), dtype=jnp.float32)

    params = init_params(k_param)
    # Hoisted out of the hot path: all weight folding/packing happens ONCE.
    prepped = prepare_kernel_params(params, batch=B)
    forward = make_forward(prepped)

    logits = forward(images, gene_expression)
    logits = jax.block_until_ready(logits)
    assert logits.shape == (B, NUM_CLASSES), logits.shape
    assert bool(jnp.all(jnp.isfinite(logits)))
    print("KERNEL_OK")
</pallas_src>

<mosaic_0001>
module attributes {stable_mosaic.version = 11 : i64} {
  func.func @_fused_forward_kernel(%arg0: i32, %arg1: memref<10x192xf32, #tpu.memory_space<vmem>>, %arg2: memref<2x20xf32, #tpu.memory_space<vmem>>, %arg3: memref<688x128xbf16, #tpu.memory_space<vmem>>, %arg4: memref<216x128xf32, #tpu.memory_space<vmem>>, %arg5: memref<2x32x2048xbf16, #tpu.memory_space<vmem>>, %arg6: memref<2x32x2048xbf16, #tpu.memory_space<vmem>>, %arg7: memref<2x1x2048xf32, #tpu.memory_space<vmem>>, %arg8: memref<2x128xf32, #tpu.memory_space<vmem>>) attributes {dimension_semantics = [#tpu.dimension_semantics<arbitrary>], iteration_bounds = array<i64: 1>, scalar_prefetch = 0 : i64, scratch_operands = 0 : i64, tpu.core_type = #tpu.core_type<tc>, window_params = [{pipeline_mode = #tpu.pipeline_mode<synchronous>, transform_indices = @transform_0, window_bounds = array<i64: 10, 192>}, {pipeline_mode = #tpu.pipeline_mode<synchronous>, transform_indices = @transform_1, window_bounds = array<i64: 2, 20>}, {pipeline_mode = #tpu.pipeline_mode<synchronous>, transform_indices = @transform_2, window_bounds = array<i64: 688, 128>}, {pipeline_mode = #tpu.pipeline_mode<synchronous>, transform_indices = @transform_3, window_bounds = array<i64: 216, 128>}, {pipeline_mode = #tpu.pipeline_mode<synchronous>, transform_indices = @transform_4, window_bounds = array<i64: 2, 32, 2048>}, {pipeline_mode = #tpu.pipeline_mode<synchronous>, transform_indices = @transform_5, window_bounds = array<i64: 2, 32, 2048>}, {pipeline_mode = #tpu.pipeline_mode<synchronous>, transform_indices = @transform_6, window_bounds = array<i64: 2, 1, 2048>}, {pipeline_mode = #tpu.pipeline_mode<synchronous>, transform_indices = @transform_7, window_bounds = array<i64: 2, 128>}]} {
    %c0 = arith.constant 0 : index
    %c0_0 = arith.constant 0 : index
    %0 = vector.load %arg1[%c0, %c0_0] : memref<10x192xf32, #tpu.memory_space<vmem>>, vector<10x192xf32>
    %c0_1 = arith.constant 0 : index
    %c0_2 = arith.constant 0 : index
    %1 = vector.load %arg3[%c0_1, %c0_2] : memref<688x128xbf16, #tpu.memory_space<vmem>>, vector<192x32xbf16>
    %2 = arith.truncf %0 : vector<10x192xf32> to vector<10x192xbf16>
    %cst = arith.constant dense<0.000000e+00> : vector<10x32xf32>
    %3 = tpu.matmul %2, %1, %cst {dimension_numbers = #tpu.dot_dimension_numbers<[1], [0], [0], [1], [0, 0, 1, 1], [], []>} : vector<10x192xbf16>, vector<192x32xbf16>, vector<10x32xf32> -> vector<10x32xf32>
    %c0_3 = arith.constant 0 : index
    %c0_4 = arith.constant 0 : index
    %4 = vector.load %arg4[%c0_3, %c0_4] : memref<216x128xf32, #tpu.memory_space<vmem>>, vector<10x32xf32>
    %5 = arith.addf %3, %4 : vector<10x32xf32>
    %cst_5 = arith.constant dense<0.000000e+00> : vector<10xf32>
    %6 = vector.multi_reduction <add>, %5, %cst_5 [1] : vector<10x32xf32> to vector<10xf32>
    %7 = vector.shape_cast %6 : vector<10xf32> to vector<10x1xf32>
    %cst_6 = arith.constant 3.200000e+01 : f32
    %8 = vector.broadcast %cst_6 : f32 to vector<10x1xf32>
    %9 = arith.divf %7, %8 : vector<10x1xf32>
    %10 = vector.broadcast %9 : vector<10x1xf32> to vector<10x32xf32>
    %11 = arith.subf %5, %10 : vector<10x32xf32>
    %12 = arith.mulf %11, %11 : vector<10x32xf32>
    %cst_7 = arith.constant dense<0.000000e+00> : vector<10xf32>
    %13 = vector.multi_reduction <add>, %12, %cst_7 [1] : vector<10x32xf32> to vector<10xf32>
    %14 = vector.shape_cast %13 : vector<10xf32> to vector<10x1xf32>
    %cst_8 = arith.constant 3.200000e+01 : f32
    %15 = vector.broadcast %cst_8 : f32 to vector<10x1xf32>
    %16 = arith.divf %14, %15 : vector<10x1xf32>
    %cst_9 = arith.constant 9.99999996E-13 : f32
    %17 = vector.broadcast %cst_9 : f32 to vector<10x1xf32>
    %18 = arith.addf %16, %17 : vector<10x1xf32>
    %19 = math.rsqrt %18 : vector<10x1xf32>
    %20 = vector.broadcast %19 : vector<10x1xf32> to vector<10x32xf32>
    %21 = arith.mulf %11, %20 : vector<10x32xf32>
    %c192 = arith.constant 192 : index
    %c0_10 = arith.constant 0 : index
    %22 = vector.load %arg3[%c192, %c0_10] : memref<688x128xbf16, #tpu.memory_space<vmem>>, vector<32x96xbf16>
    %c16 = arith.constant 16 : index
    %c0_11 = arith.constant 0 : index
    %23 = vector.load %arg4[%c16, %c0_11] : memref<216x128xf32, #tpu.memory_space<vmem>>, vector<1x96xf32>
    %c224 = arith.constant 224 : index
    %c0_12 = arith.constant 0 : index
    %24 = vector.load %arg3[%c224, %c0_12] : memref<688x128xbf16, #tpu.memory_space<vmem>>, vector<32x32xbf16>
    %c24 = arith.constant 24 : index
    %c0_13 = arith.constant 0 : index
    %25 = vector.load %arg4[%c24, %c0_13] : memref<216x128xf32, #tpu.memory_space<vmem>>, vector<1x32xf32>
    %26 = arith.truncf %21 : vector<10x32xf32> to vector<10x32xbf16>
    %cst_14 = arith.constant dense<0.000000e+00> : vector<10x96xf32>
    %27 = tpu.matmul %26, %22, %cst_14 {dimension_numbers = #tpu.dot_dimension_numbers<[1], [0], [0], [1], [0, 0, 1, 1], [], []>} : vector<10x32xbf16>, vector<32x96xbf16>, vector<10x96xf32> -> vector<10x96xf32>
    %28 = vector.broadcast %23 : vector<1x96xf32> to vector<10x96xf32>
    %29 = arith.addf %27, %28 : vector<10x96xf32>
    %30 = vector.extract_strided_slice %29 {offsets = [0, 0], sizes = [5, 96], strides = [1, 1]} : vector<10x96xf32> to vector<5x96xf32>
    %31 = vector.extract_strided_slice %30 {offsets = [0, 0], sizes = [5, 8], strides = [1, 1]} : vector<5x96xf32> to vector<5x8xf32>
    %32 = vector.extract_strided_slice %30 {offsets = [0, 32], sizes = [5, 8], strides = [1, 1]} : vector<5x96xf32> to vector<5x8xf32>
    %33 = vector.extract_strided_slice %30 {offsets = [0, 64], sizes = [5, 8], strides = [1, 1]} : vector<5x96xf32> to vector<5x8xf32>
    %34 = arith.truncf %31 : vector<5x8xf32> to vector<5x8xbf16>
    %35 = arith.truncf %32 : vector<5x8xf32> to vector<5x8xbf16>
    %cst_15 = arith.constant dense<0.000000e+00> : vector<5x5xf32>
    %36 = tpu.matmul %34, %35, %cst_15 {dimension_numbers = #tpu.dot_dimension_numbers<[1], [1], [0], [0], [0, 0, 1, 0], [], []>} : vector<5x8xbf16>, vector<5x8xbf16>, vector<5x5xf32> -> vector<5x5xf32>
    %cst_16 = arith.constant dense<0xFF800000> : vector<5xf32>
    %37 = vector.multi_reduction <maximumf>, %36, %cst_16 [1] : vector<5x5xf32> to vector<5xf32>
    %38 = vector.shape_cast %37 : vector<5xf32> to vector<5x1xf32>
    %39 = vector.broadcast %38 : vector<5x1xf32> to vector<5x5xf32>
    %40 = arith.subf %36, %39 : vector<5x5xf32>
    %41 = math.exp %40 : vector<5x5xf32>
    %cst_17 = arith.constant dense<0.000000e+00> : vector<5xf32>
    %42 = vector.multi_reduction <add>, %41, %cst_17 [1] : vector<5x5xf32> to vector<5xf32>
    %43 = vector.shape_cast %42 : vector<5xf32> to vector<5x1xf32>
    %44 = tpu.reciprocal %43 {approx = true} : vector<5x1xf32> -> vector<5x1xf32>
    %45 = vector.broadcast %44 : vector<5x1xf32> to vector<5x5xf32>
    %46 = arith.mulf %41, %45 : vector<5x5xf32>
    %47 = arith.truncf %46 : vector<5x5xf32> to vector<5x5xbf16>
    %48 = arith.truncf %33 : vector<5x8xf32> to vector<5x8xbf16>
    %cst_18 = arith.constant dense<0.000000e+00> : vector<5x8xf32>
    %49 = tpu.matmul %47, %48, %cst_18 {dimension_numbers = #tpu.dot_dimension_numbers<[1], [0], [0], [1], [0, 0, 1, 1], [], []>} : vector<5x5xbf16>, vector<5x8xbf16>, vector<5x8xf32> -> vector<5x8xf32>
    %50 = vector.extract_strided_slice %30 {offsets = [0, 8], sizes = [5, 8], strides = [1, 1]} : vector<5x96xf32> to vector<5x8xf32>
    %51 = vector.extract_strided_slice %30 {offsets = [0, 40], sizes = [5, 8], strides = [1, 1]} : vector<5x96xf32> to vector<5x8xf32>
    %52 = vector.extract_strided_slice %30 {offsets = [0, 72], sizes = [5, 8], strides = [1, 1]} : vector<5x96xf32> to vector<5x8xf32>
    %53 = arith.truncf %50 : vector<5x8xf32> to vector<5x8xbf16>
    %54 = arith.truncf %51 : vector<5x8xf32> to vector<5x8xbf16>
    %cst_19 = arith.constant dense<0.000000e+00> : vector<5x5xf32>
    %55 = tpu.matmul %53, %54, %cst_19 {dimension_numbers = #tpu.dot_dimension_numbers<[1], [1], [0], [0], [0, 0, 1, 0], [], []>} : vector<5x8xbf16>, vector<5x8xbf16>, vector<5x5xf32> -> vector<5x5xf32>
    %cst_20 = arith.constant dense<0xFF800000> : vector<5xf32>
    %56 = vector.multi_reduction <maximumf>, %55, %cst_20 [1] : vector<5x5xf32> to vector<5xf32>
    %57 = vector.shape_cast %56 : vector<5xf32> to vector<5x1xf32>
    %58 = vector.broadcast %57 : vector<5x1xf32> to vector<5x5xf32>
    %59 = arith.subf %55, %58 : vector<5x5xf32>
    %60 = math.exp %59 : vector<5x5xf32>
    %cst_21 = arith.constant dense<0.000000e+00> : vector<5xf32>
    %61 = vector.multi_reduction <add>, %60, %cst_21 [1] : vector<5x5xf32> to vector<5xf32>
    %62 = vector.shape_cast %61 : vector<5xf32> to vector<5x1xf32>
    %63 = tpu.reciprocal %62 {approx = true} : vector<5x1xf32> -> vector<5x1xf32>
    %64 = vector.broadcast %63 : vector<5x1xf32> to vector<5x5xf32>
    %65 = arith.mulf %60, %64 : vector<5x5xf32>
    %66 = arith.truncf %65 : vector<5x5xf32> to vector<5x5xbf16>
    %67 = arith.truncf %52 : vector<5x8xf32> to vector<5x8xbf16>
    %cst_22 = arith.constant dense<0.000000e+00> : vector<5x8xf32>
    %68 = tpu.matmul %66, %67, %cst_22 {dimension_numbers = #tpu.dot_dimension_numbers<[1], [0], [0], [1], [0, 0, 1, 1], [], []>} : vector<5x5xbf16>, vector<5x8xbf16>, vector<5x8xf32> -> vector<5x8xf32>
    %69 = vector.extract_strided_slice %30 {offsets = [0, 16], sizes = [5, 8], strides = [1, 1]} : vector<5x96xf32> to vector<5x8xf32>
    %70 = vector.extract_strided_slice %30 {offsets = [0, 48], sizes = [5, 8], strides = [1, 1]} : vector<5x96xf32> to vector<5x8xf32>
    %71 = vector.extract_strided_slice %30 {offsets = [0, 80], sizes = [5, 8], strides = [1, 1]} : vector<5x96xf32> to vector<5x8xf32>
    %72 = arith.truncf %69 : vector<5x8xf32> to vector<5x8xbf16>
    %73 = arith.truncf %70 : vector<5x8xf32> to vector<5x8xbf16>
    %cst_23 = arith.constant dense<0.000000e+00> : vector<5x5xf32>
    %74 = tpu.matmul %72, %73, %cst_23 {dimension_numbers = #tpu.dot_dimension_numbers<[1], [1], [0], [0], [0, 0, 1, 0], [], []>} : vector<5x8xbf16>, vector<5x8xbf16>, vector<5x5xf32> -> vector<5x5xf32>
    %cst_24 = arith.constant dense<0xFF800000> : vector<5xf32>
    %75 = vector.multi_reduction <maximumf>, %74, %cst_24 [1] : vector<5x5xf32> to vector<5xf32>
    %76 = vector.shape_cast %75 : vector<5xf32> to vector<5x1xf32>
    %77 = vector.broadcast %76 : vector<5x1xf32> to vector<5x5xf32>
    %78 = arith.subf %74, %77 : vector<5x5xf32>
    %79 = math.exp %78 : vector<5x5xf32>
    %cst_25 = arith.constant dense<0.000000e+00> : vector<5xf32>
    %80 = vector.multi_reduction <add>, %79, %cst_25 [1] : vector<5x5xf32> to vector<5xf32>
    %81 = vector.shape_cast %80 : vector<5xf32> to vector<5x1xf32>
    %82 = tpu.reciprocal %81 {approx = true} : vector<5x1xf32> -> vector<5x1xf32>
    %83 = vector.broadcast %82 : vector<5x1xf32> to vector<5x5xf32>
    %84 = arith.mulf %79, %83 : vector<5x5xf32>
    %85 = arith.truncf %84 : vector<5x5xf32> to vector<5x5xbf16>
    %86 = arith.truncf %71 : vector<5x8xf32> to vector<5x8xbf16>
    %cst_26 = arith.constant dense<0.000000e+00> : vector<5x8xf32>
    %87 = tpu.matmul %85, %86, %cst_26 {dimension_numbers = #tpu.dot_dimension_numbers<[1], [0], [0], [1], [0, 0, 1, 1], [], []>} : vector<5x5xbf16>, vector<5x8xbf16>, vector<5x8xf32> -> vector<5x8xf32>
    %88 = vector.extract_strided_slice %30 {offsets = [0, 24], sizes = [5, 8], strides = [1, 1]} : vector<5x96xf32> to vector<5x8xf32>
    %89 = vector.extract_strided_slice %30 {offsets = [0, 56], sizes = [5, 8], strides = [1, 1]} : vector<5x96xf32> to vector<5x8xf32>
    %90 = vector.extract_strided_slice %30 {offsets = [0, 88], sizes = [5, 8], strides = [1, 1]} : vector<5x96xf32> to vector<5x8xf32>
    %91 = arith.truncf %88 : vector<5x8xf32> to vector<5x8xbf16>
    %92 = arith.truncf %89 : vector<5x8xf32> to vector<5x8xbf16>
    %cst_27 = arith.constant dense<0.000000e+00> : vector<5x5xf32>
    %93 = tpu.matmul %91, %92, %cst_27 {dimension_numbers = #tpu.dot_dimension_numbers<[1], [1], [0], [0], [0, 0, 1, 0], [], []>} : vector<5x8xbf16>, vector<5x8xbf16>, vector<5x5xf32> -> vector<5x5xf32>
    %cst_28 = arith.constant dense<0xFF800000> : vector<5xf32>
    %94 = vector.multi_reduction <maximumf>, %93, %cst_28 [1] : vector<5x5xf32> to vector<5xf32>
    %95 = vector.shape_cast %94 : vector<5xf32> to vector<5x1xf32>
    %96 = vector.broadcast %95 : vector<5x1xf32> to vector<5x5xf32>
    %97 = arith.subf %93, %96 : vector<5x5xf32>
    %98 = math.exp %97 : vector<5x5xf32>
    %cst_29 = arith.constant dense<0.000000e+00> : vector<5xf32>
    %99 = vector.multi_reduction <add>, %98, %cst_29 [1] : vector<5x5xf32> to vector<5xf32>
    %100 = vector.shape_cast %99 : vector<5xf32> to vector<5x1xf32>
    %101 = tpu.reciprocal %100 {approx = true} : vector<5x1xf32> -> vector<5x1xf32>
    %102 = vector.broadcast %101 : vector<5x1xf32> to vector<5x5xf32>
    %103 = arith.mulf %98, %102 : vector<5x5xf32>
    %104 = arith.truncf %103 : vector<5x5xf32> to vector<5x5xbf16>
    %105 = arith.truncf %90 : vector<5x8xf32> to vector<5x8xbf16>
    %cst_30 = arith.constant dense<0.000000e+00> : vector<5x8xf32>
    %106 = tpu.matmul %104, %105, %cst_30 {dimension_numbers = #tpu.dot_dimension_numbers<[1], [0], [0], [1], [0, 0, 1, 1], [], []>} : vector<5x5xbf16>, vector<5x8xbf16>, vector<5x8xf32> -> vector<5x8xf32>
    %107 = tpu.concatenate %49, %68, %87, %106 in 1 : vector<5x8xf32>, vector<5x8xf32>, vector<5x8xf32>, vector<5x8xf32> -> vector<5x32xf32>
    %108 = vector.extract_strided_slice %29 {offsets = [5, 0], sizes = [5, 96], strides = [1, 1]} : vector<10x96xf32> to vector<5x96xf32>
    %109 = vector.extract_strided_slice %108 {offsets = [0, 0], sizes = [5, 8], strides = [1, 1]} : vector<5x96xf32> to vector<5x8xf32>
    %110 = vector.extract_strided_slice %108 {offsets = [0, 32], sizes = [5, 8], strides = [1, 1]} : vector<5x96xf32> to vector<5x8xf32>
    %111 = vector.extract_strided_slice %108 {offsets = [0, 64], sizes = [5, 8], strides = [1, 1]} : vector<5x96xf32> to vector<5x8xf32>
    %112 = arith.truncf %109 : vector<5x8xf32> to vector<5x8xbf16>
    %113 = arith.truncf %110 : vector<5x8xf32> to vector<5x8xbf16>
    %cst_31 = arith.constant dense<0.000000e+00> : vector<5x5xf32>
    %114 = tpu.matmul %112, %113, %cst_31 {dimension_numbers = #tpu.dot_dimension_numbers<[1], [1], [0], [0], [0, 0, 1, 0], [], []>} : vector<5x8xbf16>, vector<5x8xbf16>, vector<5x5xf32> -> vector<5x5xf32>
    %cst_32 = arith.constant dense<0xFF800000> : vector<5xf32>
    %115 = vector.multi_reduction <maximumf>, %114, %cst_32 [1] : vector<5x5xf32> to vector<5xf32>
    %116 = vector.shape_cast %115 : vector<5xf32> to vector<5x1xf32>
    %117 = vector.broadcast %116 : vector<5x1xf32> to vector<5x5xf32>
    %118 = arith.subf %114, %117 : vector<5x5xf32>
    %119 = math.exp %118 : vector<5x5xf32>
    %cst_33 = arith.constant dense<0.000000e+00> : vector<5xf32>
    %120 = vector.multi_reduction <add>, %119, %cst_33 [1] : vector<5x5xf32> to vector<5xf32>
    %121 = vector.shape_cast %120 : vector<5xf32> to vector<5x1xf32>
    %122 = tpu.reciprocal %121 {approx = true} : vector<5x1xf32> -> vector<5x1xf32>
    %123 = vector.broadcast %122 : vector<5x1xf32> to vector<5x5xf32>
    %124 = arith.mulf %119, %123 : vector<5x5xf32>
    %125 = arith.truncf %124 : vector<5x5xf32> to vector<5x5xbf16>
    %126 = arith.truncf %111 : vector<5x8xf32> to vector<5x8xbf16>
    %cst_34 = arith.constant dense<0.000000e+00> : vector<5x8xf32>
    %127 = tpu.matmul %125, %126, %cst_34 {dimension_numbers = #tpu.dot_dimension_numbers<[1], [0], [0], [1], [0, 0, 1, 1], [], []>} : vector<5x5xbf16>, vector<5x8xbf16>, vector<5x8xf32> -> vector<5x8xf32>
    %128 = vector.extract_strided_slice %108 {offsets = [0, 8], sizes = [5, 8], strides = [1, 1]} : vector<5x96xf32> to vector<5x8xf32>
    %129 = vector.extract_strided_slice %108 {offsets = [0, 40], sizes = [5, 8], strides = [1, 1]} : vector<5x96xf32> to vector<5x8xf32>
    %130 = vector.extract_strided_slice %108 {offsets = [0, 72], sizes = [5, 8], strides = [1, 1]} : vector<5x96xf32> to vector<5x8xf32>
    %131 = arith.truncf %128 : vector<5x8xf32> to vector<5x8xbf16>
    %132 = arith.truncf %129 : vector<5x8xf32> to vector<5x8xbf16>
    %cst_35 = arith.constant dense<0.000000e+00> : vector<5x5xf32>
    %133 = tpu.matmul %131, %132, %cst_35 {dimension_numbers = #tpu.dot_dimension_numbers<[1], [1], [0], [0], [0, 0, 1, 0], [], []>} : vector<5x8xbf16>, vector<5x8xbf16>, vector<5x5xf32> -> vector<5x5xf32>
    %cst_36 = arith.constant dense<0xFF800000> : vector<5xf32>
    %134 = vector.multi_reduction <maximumf>, %133, %cst_36 [1] : vector<5x5xf32> to vector<5xf32>
    %135 = vector.shape_cast %134 : vector<5xf32> to vector<5x1xf32>
    %136 = vector.broadcast %135 : vector<5x1xf32> to vector<5x5xf32>
    %137 = arith.subf %133, %136 : vector<5x5xf32>
    %138 = math.exp %137 : vector<5x5xf32>
    %cst_37 = arith.constant dense<0.000000e+00> : vector<5xf32>
    %139 = vector.multi_reduction <add>, %138, %cst_37 [1] : vector<5x5xf32> to vector<5xf32>
    %140 = vector.shape_cast %139 : vector<5xf32> to vector<5x1xf32>
    %141 = tpu.reciprocal %140 {approx = true} : vector<5x1xf32> -> vector<5x1xf32>
    %142 = vector.broadcast %141 : vector<5x1xf32> to vector<5x5xf32>
    %143 = arith.mulf %138, %142 : vector<5x5xf32>
    %144 = arith.truncf %143 : vector<5x5xf32> to vector<5x5xbf16>
    %145 = arith.truncf %130 : vector<5x8xf32> to vector<5x8xbf16>
    %cst_38 = arith.constant dense<0.000000e+00> : vector<5x8xf32>
    %146 = tpu.matmul %144, %145, %cst_38 {dimension_numbers = #tpu.dot_dimension_numbers<[1], [0], [0], [1], [0, 0, 1, 1], [], []>} : vector<5x5xbf16>, vector<5x8xbf16>, vector<5x8xf32> -> vector<5x8xf32>
    %147 = vector.extract_strided_slice %108 {offsets = [0, 16], sizes = [5, 8], strides = [1, 1]} : vector<5x96xf32> to vector<5x8xf32>
    %148 = vector.extract_strided_slice %108 {offsets = [0, 48], sizes = [5, 8], strides = [1, 1]} : vector<5x96xf32> to vector<5x8xf32>
    %149 = vector.extract_strided_slice %108 {offsets = [0, 80], sizes = [5, 8], strides = [1, 1]} : vector<5x96xf32> to vector<5x8xf32>
    %150 = arith.truncf %147 : vector<5x8xf32> to vector<5x8xbf16>
    %151 = arith.truncf %148 : vector<5x8xf32> to vector<5x8xbf16>
    %cst_39 = arith.constant dense<0.000000e+00> : vector<5x5xf32>
    %152 = tpu.matmul %150, %151, %cst_39 {dimension_numbers = #tpu.dot_dimension_numbers<[1], [1], [0], [0], [0, 0, 1, 0], [], []>} : vector<5x8xbf16>, vector<5x8xbf16>, vector<5x5xf32> -> vector<5x5xf32>
    %cst_40 = arith.constant dense<0xFF800000> : vector<5xf32>
    %153 = vector.multi_reduction <maximumf>, %152, %cst_40 [1] : vector<5x5xf32> to vector<5xf32>
    %154 = vector.shape_cast %153 : vector<5xf32> to vector<5x1xf32>
    %155 = vector.broadcast %154 : vector<5x1xf32> to vector<5x5xf32>
    %156 = arith.subf %152, %155 : vector<5x5xf32>
    %157 = math.exp %156 : vector<5x5xf32>
    %cst_41 = arith.constant dense<0.000000e+00> : vector<5xf32>
    %158 = vector.multi_reduction <add>, %157, %cst_41 [1] : vector<5x5xf32> to vector<5xf32>
    %159 = vector.shape_cast %158 : vector<5xf32> to vector<5x1xf32>
    %160 = tpu.reciprocal %159 {approx = true} : vector<5x1xf32> -> vector<5x1xf32>
    %161 = vector.broadcast %160 : vector<5x1xf32> to vector<5x5xf32>
    %162 = arith.mulf %157, %161 : vector<5x5xf32>
    %163 = arith.truncf %162 : vector<5x5xf32> to vector<5x5xbf16>
    %164 = arith.truncf %149 : vector<5x8xf32> to vector<5x8xbf16>
    %cst_42 = arith.constant dense<0.000000e+00> : vector<5x8xf32>
    %165 = tpu.matmul %163, %164, %cst_42 {dimension_numbers = #tpu.dot_dimension_numbers<[1], [0], [0], [1], [0, 0, 1, 1], [], []>} : vector<5x5xbf16>, vector<5x8xbf16>, vector<5x8xf32> -> vector<5x8xf32>
    %166 = vector.extract_strided_slice %108 {offsets = [0, 24], sizes = [5, 8], strides = [1, 1]} : vector<5x96xf32> to vector<5x8xf32>
    %167 = vector.extract_strided_slice %108 {offsets = [0, 56], sizes = [5, 8], strides = [1, 1]} : vector<5x96xf32> to vector<5x8xf32>
    %168 = vector.extract_strided_slice %108 {offsets = [0, 88], sizes = [5, 8], strides = [1, 1]} : vector<5x96xf32> to vector<5x8xf32>
    %169 = arith.truncf %166 : vector<5x8xf32> to vector<5x8xbf16>
    %170 = arith.truncf %167 : vector<5x8xf32> to vector<5x8xbf16>
    %cst_43 = arith.constant dense<0.000000e+00> : vector<5x5xf32>
    %171 = tpu.matmul %169, %170, %cst_43 {dimension_numbers = #tpu.dot_dimension_numbers<[1], [1], [0], [0], [0, 0, 1, 0], [], []>} : vector<5x8xbf16>, vector<5x8xbf16>, vector<5x5xf32> -> vector<5x5xf32>
    %cst_44 = arith.constant dense<0xFF800000> : vector<5xf32>
    %172 = vector.multi_reduction <maximumf>, %171, %cst_44 [1] : vector<5x5xf32> to vector<5xf32>
    %173 = vector.shape_cast %172 : vector<5xf32> to vector<5x1xf32>
    %174 = vector.broadcast %173 : vector<5x1xf32> to vector<5x5xf32>
    %175 = arith.subf %171, %174 : vector<5x5xf32>
    %176 = math.exp %175 : vector<5x5xf32>
    %cst_45 = arith.constant dense<0.000000e+00> : vector<5xf32>
    %177 = vector.multi_reduction <add>, %176, %cst_45 [1] : vector<5x5xf32> to vector<5xf32>
    %178 = vector.shape_cast %177 : vector<5xf32> to vector<5x1xf32>
    %179 = tpu.reciprocal %178 {approx = true} : vector<5x1xf32> -> vector<5x1xf32>
    %180 = vector.broadcast %179 : vector<5x1xf32> to vector<5x5xf32>
    %181 = arith.mulf %176, %180 : vector<5x5xf32>
    %182 = arith.truncf %181 : vector<5x5xf32> to vector<5x5xbf16>
    %183 = arith.truncf %168 : vector<5x8xf32> to vector<5x8xbf16>
    %cst_46 = arith.constant dense<0.000000e+00> : vector<5x8xf32>
    %184 = tpu.matmul %182, %183, %cst_46 {dimension_numbers = #tpu.dot_dimension_numbers<[1], [0], [0], [1], [0, 0, 1, 1], [], []>} : vector<5x5xbf16>, vector<5x8xbf16>, vector<5x8xf32> -> vector<5x8xf32>
    %185 = tpu.concatenate %127, %146, %165, %184 in 1 : vector<5x8xf32>, vector<5x8xf32>, vector<5x8xf32>, vector<5x8xf32> -> vector<5x32xf32>
    %186 = tpu.concatenate %107, %185 in 0 : vector<5x32xf32>, vector<5x32xf32> -> vector<10x32xf32>
    %187 = arith.truncf %186 : vector<10x32xf32> to vector<10x32xbf16>
    %cst_47 = arith.constant dense<0.000000e+00> : vector<10x32xf32>
    %188 = tpu.matmul %187, %24, %cst_47 {dimension_numbers = #tpu.dot_dimension_numbers<[1], [0], [0], [1], [0, 0, 1, 1], [], []>} : vector<10x32xbf16>, vector<32x32xbf16>, vector<10x32xf32> -> vector<10x32xf32>
    %189 = vector.broadcast %25 : vector<1x32xf32> to vector<10x32xf32>
    %190 = arith.addf %188, %189 : vector<10x32xf32>
    %191 = arith.addf %5, %190 : vector<10x32xf32>
    %cst_48 = arith.constant dense<0.000000e+00> : vector<10xf32>
    %192 = vector.multi_reduction <add>, %191, %cst_48 [1] : vector<10x32xf32> to vector<10xf32>
    %193 = vector.shape_cast %192 : vector<10xf32> to vector<10x1xf32>
    %cst_49 = arith.constant 3.200000e+01 : f32
    %194 = vector.broadcast %cst_49 : f32 to vector<10x1xf32>
    %195 = arith.divf %193, %194 : vector<10x1xf32>
    %196 = vector.broadcast %195 : vector<10x1xf32> to vector<10x32xf32>
    %197 = arith.subf %191, %196 : vector<10x32xf32>
    %198 = arith.mulf %197, %197 : vector<10x32xf32>
    %cst_50 = arith.constant dense<0.000000e+00> : vector<10xf32>
    %199 = vector.multi_reduction <add>, %198, %cst_50 [1] : vector<10x32xf32> to vector<10xf32>
    %200 = vector.shape_cast %199 : vector<10xf32> to vector<10x1xf32>
    %cst_51 = arith.constant 3.200000e+01 : f32
    %201 = vector.broadcast %cst_51 : f32 to vector<10x1xf32>
    %202 = arith.divf %200, %201 : vector<10x1xf32>
    %cst_52 = arith.constant 9.99999996E-13 : f32
    %203 = vector.broadcast %cst_52 : f32 to vector<10x1xf32>
    %204 = arith.addf %202, %203 : vector<10x1xf32>
    %205 = math.rsqrt %204 : vector<10x1xf32>
    %206 = vector.broadcast %205 : vector<10x1xf32> to vector<10x32xf32>
    %207 = arith.mulf %197, %206 : vector<10x32xf32>
    %c256 = arith.constant 256 : index
    %c0_53 = arith.constant 0 : index
    %208 = vector.load %arg3[%c256, %c0_53] : memref<688x128xbf16, #tpu.memory_space<vmem>>, vector<32x64xbf16>
    %209 = arith.truncf %207 : vector<10x32xf32> to vector<10x32xbf16>
    %cst_54 = arith.constant dense<0.000000e+00> : vector<10x64xf32>
    %210 = tpu.matmul %209, %208, %cst_54 {dimension_numbers = #tpu.dot_dimension_numbers<[1], [0], [0], [1], [0, 0, 1, 1], [], []>} : vector<10x32xbf16>, vector<32x64xbf16>, vector<10x64xf32> -> vector<10x64xf32>
    %c32 = arith.constant 32 : index
    %c0_55 = arith.constant 0 : index
    %211 = vector.load %arg4[%c32, %c0_55] : memref<216x128xf32, #tpu.memory_space<vmem>>, vector<1x64xf32>
    %212 = vector.broadcast %211 : vector<1x64xf32> to vector<10x64xf32>
    %213 = arith.addf %210, %212 : vector<10x64xf32>
    %cst_56 = arith.constant 5.000000e-01 : f32
    %214 = vector.broadcast %cst_56 : f32 to vector<10x64xf32>
    %215 = arith.mulf %214, %213 : vector<10x64xf32>
    %cst_57 = arith.constant 4.471500e-02 : f32
    %216 = vector.broadcast %cst_57 : f32 to vector<10x64xf32>
    %217 = arith.mulf %216, %213 : vector<10x64xf32>
    %218 = arith.mulf %217, %213 : vector<10x64xf32>
    %219 = arith.mulf %218, %213 : vector<10x64xf32>
    %220 = arith.addf %213, %219 : vector<10x64xf32>
    %cst_58 = arith.constant 0.797884583 : f32
    %221 = vector.broadcast %cst_58 : f32 to vector<10x64xf32>
    %222 = arith.mulf %221, %220 : vector<10x64xf32>
    %223 = math.tanh %222 : vector<10x64xf32>
    %cst_59 = arith.constant 1.000000e+00 : f32
    %224 = vector.broadcast %cst_59 : f32 to vector<10x64xf32>
    %225 = arith.addf %224, %223 : vector<10x64xf32>
    %226 = arith.mulf %215, %225 : vector<10x64xf32>
    %c288 = arith.constant 288 : index
    %c0_60 = arith.constant 0 : index
    %227 = vector.load %arg3[%c288, %c0_60] : memref<688x128xbf16, #tpu.memory_space<vmem>>, vector<64x32xbf16>
    %228 = arith.truncf %226 : vector<10x64xf32> to vector<10x64xbf16>
    %cst_61 = arith.constant dense<0.000000e+00> : vector<10x32xf32>
    %229 = tpu.matmul %228, %227, %cst_61 {dimension_numbers = #tpu.dot_dimension_numbers<[1], [0], [0], [1], [0, 0, 1, 1], [], []>} : vector<10x64xbf16>, vector<64x32xbf16>, vector<10x32xf32> -> vector<10x32xf32>
    %230 = arith.addf %191, %229 : vector<10x32xf32>
    %c40 = arith.constant 40 : index
    %c0_62 = arith.constant 0 : index
    %231 = vector.load %arg4[%c40, %c0_62] : memref<216x128xf32, #tpu.memory_space<vmem>>, vector<1x32xf32>
    %232 = vector.broadcast %231 : vector<1x32xf32> to vector<10x32xf32>
    %233 = arith.addf %230, %232 : vector<10x32xf32>
    %cst_63 = arith.constant dense<0.000000e+00> : vector<10xf32>
    %234 = vector.multi_reduction <add>, %233, %cst_63 [1] : vector<10x32xf32> to vector<10xf32>
    %235 = vector.shape_cast %234 : vector<10xf32> to vector<10x1xf32>
    %cst_64 = arith.constant 3.200000e+01 : f32
    %236 = vector.broadcast %cst_64 : f32 to vector<10x1xf32>
    %237 = arith.divf %235, %236 : vector<10x1xf32>
    %238 = vector.broadcast %237 : vector<10x1xf32> to vector<10x32xf32>
    %239 = arith.subf %233, %238 : vector<10x32xf32>
    %240 = arith.mulf %239, %239 : vector<10x32xf32>
    %cst_65 = arith.constant dense<0.000000e+00> : vector<10xf32>
    %241 = vector.multi_reduction <add>, %240, %cst_65 [1] : vector<10x32xf32> to vector<10xf32>
    %242 = vector.shape_cast %241 : vector<10xf32> to vector<10x1xf32>
    %cst_66 = arith.constant 3.200000e+01 : f32
    %243 = vector.broadcast %cst_66 : f32 to vector<10x1xf32>
    %244 = arith.divf %242, %243 : vector<10x1xf32>
    %cst_67 = arith.constant 9.99999996E-13 : f32
    %245 = vector.broadcast %cst_67 : f32 to vector<10x1xf32>
    %246 = arith.addf %244, %245 : vector<10x1xf32>
    %247 = math.rsqrt %246 : vector<10x1xf32>
    %248 = vector.broadcast %247 : vector<10x1xf32> to vector<10x32xf32>
    %249 = arith.mulf %239, %248 : vector<10x32xf32>
    %c352 = arith.constant 352 : index
    %c0_68 = arith.constant 0 : index
    %250 = vector.load %arg3[%c352, %c0_68] : memref<688x128xbf16, #tpu.memory_space<vmem>>, vector<32x96xbf16>
    %c48 = arith.constant 48 : index
    %c0_69 = arith.constant 0 : index
    %251 = vector.load %arg4[%c48, %c0_69] : memref<216x128xf32, #tpu.memory_space<vmem>>, vector<1x96xf32>
    %c384 = arith.constant 384 : index
    %c0_70 = arith.constant 0 : index
    %252 = vector.load %arg3[%c384, %c0_70] : memref<688x128xbf16, #tpu.memory_space<vmem>>, vector<32x32xbf16>
    %c56 = arith.constant 56 : index
    %c0_71 = arith.constant 0 : index
    %253 = vector.load %arg4[%c56, %c0_71] : memref<216x128xf32, #tpu.memory_space<vmem>>, vector<1x32xf32>
    %254 = arith.truncf %249 : vector<10x32xf32> to vector<10x32xbf16>
    %cst_72 = arith.constant dense<0.000000e+00> : vector<10x96xf32>
    %255 = tpu.matmul %254, %250, %cst_72 {dimension_numbers = #tpu.dot_dimension_numbers<[1], [0], [0], [1], [0, 0, 1, 1], [], []>} : vector<10x32xbf16>, vector<32x96xbf16>, vector<10x96xf32> -> vector<10x96xf32>
    %256 = vector.broadcast %251 : vector<1x96xf32> to vector<10x96xf32>
    %257 = arith.addf %255, %256 : vector<10x96xf32>
    %258 = vector.extract_strided_slice %257 {offsets = [0, 0], sizes = [5, 96], strides = [1, 1]} : vector<10x96xf32> to vector<5x96xf32>
    %259 = vector.extract_strided_slice %258 {offsets = [0, 0], sizes = [5, 8], strides = [1, 1]} : vector<5x96xf32> to vector<5x8xf32>
    %260 = vector.extract_strided_slice %258 {offsets = [0, 32], sizes = [5, 8], strides = [1, 1]} : vector<5x96xf32> to vector<5x8xf32>
    %261 = vector.extract_strided_slice %258 {offsets = [0, 64], sizes = [5, 8], strides = [1, 1]} : vector<5x96xf32> to vector<5x8xf32>
    %262 = arith.truncf %259 : vector<5x8xf32> to vector<5x8xbf16>
    %263 = arith.truncf %260 : vector<5x8xf32> to vector<5x8xbf16>
    %cst_73 = arith.constant dense<0.000000e+00> : vector<5x5xf32>
    %264 = tpu.matmul %262, %263, %cst_73 {dimension_numbers = #tpu.dot_dimension_numbers<[1], [1], [0], [0], [0, 0, 1, 0], [], []>} : vector<5x8xbf16>, vector<5x8xbf16>, vector<5x5xf32> -> vector<5x5xf32>
    %cst_74 = arith.constant dense<0xFF800000> : vector<5xf32>
    %265 = vector.multi_reduction <maximumf>, %264, %cst_74 [1] : vector<5x5xf32> to vector<5xf32>
    %266 = vector.shape_cast %265 : vector<5xf32> to vector<5x1xf32>
    %267 = vector.broadcast %266 : vector<5x1xf32> to vector<5x5xf32>
    %268 = arith.subf %264, %267 : vector<5x5xf32>
    %269 = math.exp %268 : vector<5x5xf32>
    %cst_75 = arith.constant dense<0.000000e+00> : vector<5xf32>
    %270 = vector.multi_reduction <add>, %269, %cst_75 [1] : vector<5x5xf32> to vector<5xf32>
    %271 = vector.shape_cast %270 : vector<5xf32> to vector<5x1xf32>
    %272 = tpu.reciprocal %271 {approx = true} : vector<5x1xf32> -> vector<5x1xf32>
    %273 = vector.broadcast %272 : vector<5x1xf32> to vector<5x5xf32>
    %274 = arith.mulf %269, %273 : vector<5x5xf32>
    %275 = arith.truncf %274 : vector<5x5xf32> to vector<5x5xbf16>
    %276 = arith.truncf %261 : vector<5x8xf32> to vector<5x8xbf16>
    %cst_76 = arith.constant dense<0.000000e+00> : vector<5x8xf32>
    %277 = tpu.matmul %275, %276, %cst_76 {dimension_numbers = #tpu.dot_dimension_numbers<[1], [0], [0], [1], [0, 0, 1, 1], [], []>} : vector<5x5xbf16>, vector<5x8xbf16>, vector<5x8xf32> -> vector<5x8xf32>
    %278 = vector.extract_strided_slice %258 {offsets = [0, 8], sizes = [5, 8], strides = [1, 1]} : vector<5x96xf32> to vector<5x8xf32>
    %279 = vector.extract_strided_slice %258 {offsets = [0, 40], sizes = [5, 8], strides = [1, 1]} : vector<5x96xf32> to vector<5x8xf32>
    %280 = vector.extract_strided_slice %258 {offsets = [0, 72], sizes = [5, 8], strides = [1, 1]} : vector<5x96xf32> to vector<5x8xf32>
    %281 = arith.truncf %278 : vector<5x8xf32> to vector<5x8xbf16>
    %282 = arith.truncf %279 : vector<5x8xf32> to vector<5x8xbf16>
    %cst_77 = arith.constant dense<0.000000e+00> : vector<5x5xf32>
    %283 = tpu.matmul %281, %282, %cst_77 {dimension_numbers = #tpu.dot_dimension_numbers<[1], [1], [0], [0], [0, 0, 1, 0], [], []>} : vector<5x8xbf16>, vector<5x8xbf16>, vector<5x5xf32> -> vector<5x5xf32>
    %cst_78 = arith.constant dense<0xFF800000> : vector<5xf32>
    %284 = vector.multi_reduction <maximumf>, %283, %cst_78 [1] : vector<5x5xf32> to vector<5xf32>
    %285 = vector.shape_cast %284 : vector<5xf32> to vector<5x1xf32>
    %286 = vector.broadcast %285 : vector<5x1xf32> to vector<5x5xf32>
    %287 = arith.subf %283, %286 : vector<5x5xf32>
    %288 = math.exp %287 : vector<5x5xf32>
    %cst_79 = arith.constant dense<0.000000e+00> : vector<5xf32>
    %289 = vector.multi_reduction <add>, %288, %cst_79 [1] : vector<5x5xf32> to vector<5xf32>
    %290 = vector.shape_cast %289 : vector<5xf32> to vector<5x1xf32>
    %291 = tpu.reciprocal %290 {approx = true} : vector<5x1xf32> -> vector<5x1xf32>
    %292 = vector.broadcast %291 : vector<5x1xf32> to vector<5x5xf32>
    %293 = arith.mulf %288, %292 : vector<5x5xf32>
    %294 = arith.truncf %293 : vector<5x5xf32> to vector<5x5xbf16>
    %295 = arith.truncf %280 : vector<5x8xf32> to vector<5x8xbf16>
    %cst_80 = arith.constant dense<0.000000e+00> : vector<5x8xf32>
    %296 = tpu.matmul %294, %295, %cst_80 {dimension_numbers = #tpu.dot_dimension_numbers<[1], [0], [0], [1], [0, 0, 1, 1], [], []>} : vector<5x5xbf16>, vector<5x8xbf16>, vector<5x8xf32> -> vector<5x8xf32>
    %297 = vector.extract_strided_slice %258 {offsets = [0, 16], sizes = [5, 8], strides = [1, 1]} : vector<5x96xf32> to vector<5x8xf32>
    %298 = vector.extract_strided_slice %258 {offsets = [0, 48], sizes = [5, 8], strides = [1, 1]} : vector<5x96xf32> to vector<5x8xf32>
    %299 = vector.extract_strided_slice %258 {offsets = [0, 80], sizes = [5, 8], strides = [1, 1]} : vector<5x96xf32> to vector<5x8xf32>
    %300 = arith.truncf %297 : vector<5x8xf32> to vector<5x8xbf16>
    %301 = arith.truncf %298 : vector<5x8xf32> to vector<5x8xbf16>
    %cst_81 = arith.constant dense<0.000000e+00> : vector<5x5xf32>
    %302 = tpu.matmul %300, %301, %cst_81 {dimension_numbers = #tpu.dot_dimension_numbers<[1], [1], [0], [0], [0, 0, 1, 0], [], []>} : vector<5x8xbf16>, vector<5x8xbf16>, vector<5x5xf32> -> vector<5x5xf32>
    %cst_82 = arith.constant dense<0xFF800000> : vector<5xf32>
    %303 = vector.multi_reduction <maximumf>, %302, %cst_82 [1] : vector<5x5xf32> to vector<5xf32>
    %304 = vector.shape_cast %303 : vector<5xf32> to vector<5x1xf32>
    %305 = vector.broadcast %304 : vector<5x1xf32> to vector<5x5xf32>
    %306 = arith.subf %302, %305 : vector<5x5xf32>
    %307 = math.exp %306 : vector<5x5xf32>
    %cst_83 = arith.constant dense<0.000000e+00> : vector<5xf32>
    %308 = vector.multi_reduction <add>, %307, %cst_83 [1] : vector<5x5xf32> to vector<5xf32>
    %309 = vector.shape_cast %308 : vector<5xf32> to vector<5x1xf32>
    %310 = tpu.reciprocal %309 {approx = true} : vector<5x1xf32> -> vector<5x1xf32>
    %311 = vector.broadcast %310 : vector<5x1xf32> to vector<5x5xf32>
    %312 = arith.mulf %307, %311 : vector<5x5xf32>
    %313 = arith.truncf %312 : vector<5x5xf32> to vector<5x5xbf16>
    %314 = arith.truncf %299 : vector<5x8xf32> to vector<5x8xbf16>
    %cst_84 = arith.constant dense<0.000000e+00> : vector<5x8xf32>
    %315 = tpu.matmul %313, %314, %cst_84 {dimension_numbers = #tpu.dot_dimension_numbers<[1], [0], [0], [1], [0, 0, 1, 1], [], []>} : vector<5x5xbf16>, vector<5x8xbf16>, vector<5x8xf32> -> vector<5x8xf32>
    %316 = vector.extract_strided_slice %258 {offsets = [0, 24], sizes = [5, 8], strides = [1, 1]} : vector<5x96xf32> to vector<5x8xf32>
    %317 = vector.extract_strided_slice %258 {offsets = [0, 56], sizes = [5, 8], strides = [1, 1]} : vector<5x96xf32> to vector<5x8xf32>
    %318 = vector.extract_strided_slice %258 {offsets = [0, 88], sizes = [5, 8], strides = [1, 1]} : vector<5x96xf32> to vector<5x8xf32>
    %319 = arith.truncf %316 : vector<5x8xf32> to vector<5x8xbf16>
    %320 = arith.truncf %317 : vector<5x8xf32> to vector<5x8xbf16>
    %cst_85 = arith.constant dense<0.000000e+00> : vector<5x5xf32>
    %321 = tpu.matmul %319, %320, %cst_85 {dimension_numbers = #tpu.dot_dimension_numbers<[1], [1], [0], [0], [0, 0, 1, 0], [], []>} : vector<5x8xbf16>, vector<5x8xbf16>, vector<5x5xf32> -> vector<5x5xf32>
    %cst_86 = arith.constant dense<0xFF800000> : vector<5xf32>
    %322 = vector.multi_reduction <maximumf>, %321, %cst_86 [1] : vector<5x5xf32> to vector<5xf32>
    %323 = vector.shape_cast %322 : vector<5xf32> to vector<5x1xf32>
    %324 = vector.broadcast %323 : vector<5x1xf32> to vector<5x5xf32>
    %325 = arith.subf %321, %324 : vector<5x5xf32>
    %326 = math.exp %325 : vector<5x5xf32>
    %cst_87 = arith.constant dense<0.000000e+00> : vector<5xf32>
    %327 = vector.multi_reduction <add>, %326, %cst_87 [1] : vector<5x5xf32> to vector<5xf32>
    %328 = vector.shape_cast %327 : vector<5xf32> to vector<5x1xf32>
    %329 = tpu.reciprocal %328 {approx = true} : vector<5x1xf32> -> vector<5x1xf32>
    %330 = vector.broadcast %329 : vector<5x1xf32> to vector<5x5xf32>
    %331 = arith.mulf %326, %330 : vector<5x5xf32>
    %332 = arith.truncf %331 : vector<5x5xf32> to vector<5x5xbf16>
    %333 = arith.truncf %318 : vector<5x8xf32> to vector<5x8xbf16>
    %cst_88 = arith.constant dense<0.000000e+00> : vector<5x8xf32>
    %334 = tpu.matmul %332, %333, %cst_88 {dimension_numbers = #tpu.dot_dimension_numbers<[1], [0], [0], [1], [0, 0, 1, 1], [], []>} : vector<5x5xbf16>, vector<5x8xbf16>, vector<5x8xf32> -> vector<5x8xf32>
    %335 = tpu.concatenate %277, %296, %315, %334 in 1 : vector<5x8xf32>, vector<5x8xf32>, vector<5x8xf32>, vector<5x8xf32> -> vector<5x32xf32>
    %336 = vector.extract_strided_slice %257 {offsets = [5, 0], sizes = [5, 96], strides = [1, 1]} : vector<10x96xf32> to vector<5x96xf32>
    %337 = vector.extract_strided_slice %336 {offsets = [0, 0], sizes = [5, 8], strides = [1, 1]} : vector<5x96xf32> to vector<5x8xf32>
    %338 = vector.extract_strided_slice %336 {offsets = [0, 32], sizes = [5, 8], strides = [1, 1]} : vector<5x96xf32> to vector<5x8xf32>
    %339 = vector.extract_strided_slice %336 {offsets = [0, 64], sizes = [5, 8], strides = [1, 1]} : vector<5x96xf32> to vector<5x8xf32>
    %340 = arith.truncf %337 : vector<5x8xf32> to vector<5x8xbf16>
    %341 = arith.truncf %338 : vector<5x8xf32> to vector<5x8xbf16>
    %cst_89 = arith.constant dense<0.000000e+00> : vector<5x5xf32>
    %342 = tpu.matmul %340, %341, %cst_89 {dimension_numbers = #tpu.dot_dimension_numbers<[1], [1], [0], [0], [0, 0, 1, 0], [], []>} : vector<5x8xbf16>, vector<5x8xbf16>, vector<5x5xf32> -> vector<5x5xf32>
    %cst_90 = arith.constant dense<0xFF800000> : vector<5xf32>
    %343 = vector.multi_reduction <maximumf>, %342, %cst_90 [1] : vector<5x5xf32> to vector<5xf32>
    %344 = vector.shape_cast %343 : vector<5xf32> to vector<5x1xf32>
    %345 = vector.broadcast %344 : vector<5x1xf32> to vector<5x5xf32>
    %346 = arith.subf %342, %345 : vector<5x5xf32>
    %347 = math.exp %346 : vector<5x5xf32>
    %cst_91 = arith.constant dense<0.000000e+00> : vector<5xf32>
    %348 = vector.multi_reduction <add>, %347, %cst_91 [1] : vector<5x5xf32> to vector<5xf32>
    %349 = vector.shape_cast %348 : vector<5xf32> to vector<5x1xf32>
    %350 = tpu.reciprocal %349 {approx = true} : vector<5x1xf32> -> vector<5x1xf32>
    %351 = vector.broadcast %350 : vector<5x1xf32> to vector<5x5xf32>
    %352 = arith.mulf %347, %351 : vector<5x5xf32>
    %353 = arith.truncf %352 : vector<5x5xf32> to vector<5x5xbf16>
    %354 = arith.truncf %339 : vector<5x8xf32> to vector<5x8xbf16>
    %cst_92 = arith.constant dense<0.000000e+00> : vector<5x8xf32>
    %355 = tpu.matmul %353, %354, %cst_92 {dimension_numbers = #tpu.dot_dimension_numbers<[1], [0], [0], [1], [0, 0, 1, 1], [], []>} : vector<5x5xbf16>, vector<5x8xbf16>, vector<5x8xf32> -> vector<5x8xf32>
    %356 = vector.extract_strided_slice %336 {offsets = [0, 8], sizes = [5, 8], strides = [1, 1]} : vector<5x96xf32> to vector<5x8xf32>
    %357 = vector.extract_strided_slice %336 {offsets = [0, 40], sizes = [5, 8], strides = [1, 1]} : vector<5x96xf32> to vector<5x8xf32>
    %358 = vector.extract_strided_slice %336 {offsets = [0, 72], sizes = [5, 8], strides = [1, 1]} : vector<5x96xf32> to vector<5x8xf32>
    %359 = arith.truncf %356 : vector<5x8xf32> to vector<5x8xbf16>
    %360 = arith.truncf %357 : vector<5x8xf32> to vector<5x8xbf16>
    %cst_93 = arith.constant dense<0.000000e+00> : vector<5x5xf32>
    %361 = tpu.matmul %359, %360, %cst_93 {dimension_numbers = #tpu.dot_dimension_numbers<[1], [1], [0], [0], [0, 0, 1, 0], [], []>} : vector<5x8xbf16>, vector<5x8xbf16>, vector<5x5xf32> -> vector<5x5xf32>
    %cst_94 = arith.constant dense<0xFF800000> : vector<5xf32>
    %362 = vector.multi_reduction <maximumf>, %361, %cst_94 [1] : vector<5x5xf32> to vector<5xf32>
    %363 = vector.shape_cast %362 : vector<5xf32> to vector<5x1xf32>
    %364 = vector.broadcast %363 : vector<5x1xf32> to vector<5x5xf32>
    %365 = arith.subf %361, %364 : vector<5x5xf32>
    %366 = math.exp %365 : vector<5x5xf32>
    %cst_95 = arith.constant dense<0.000000e+00> : vector<5xf32>
    %367 = vector.multi_reduction <add>, %366, %cst_95 [1] : vector<5x5xf32> to vector<5xf32>
    %368 = vector.shape_cast %367 : vector<5xf32> to vector<5x1xf32>
    %369 = tpu.reciprocal %368 {approx = true} : vector<5x1xf32> -> vector<5x1xf32>
    %370 = vector.broadcast %369 : vector<5x1xf32> to vector<5x5xf32>
    %371 = arith.mulf %366, %370 : vector<5x5xf32>
    %372 = arith.truncf %371 : vector<5x5xf32> to vector<5x5xbf16>
    %373 = arith.truncf %358 : vector<5x8xf32> to vector<5x8xbf16>
    %cst_96 = arith.constant dense<0.000000e+00> : vector<5x8xf32>
    %374 = tpu.matmul %372, %373, %cst_96 {dimension_numbers = #tpu.dot_dimension_numbers<[1], [0], [0], [1], [0, 0, 1, 1], [], []>} : vector<5x5xbf16>, vector<5x8xbf16>, vector<5x8xf32> -> vector<5x8xf32>
    %375 = vector.extract_strided_slice %336 {offsets = [0, 16], sizes = [5, 8], strides = [1, 1]} : vector<5x96xf32> to vector<5x8xf32>
    %376 = vector.extract_strided_slice %336 {offsets = [0, 48], sizes = [5, 8], strides = [1, 1]} : vector<5x96xf32> to vector<5x8xf32>
    %377 = vector.extract_strided_slice %336 {offsets = [0, 80], sizes = [5, 8], strides = [1, 1]} : vector<5x96xf32> to vector<5x8xf32>
    %378 = arith.truncf %375 : vector<5x8xf32> to vector<5x8xbf16>
    %379 = arith.truncf %376 : vector<5x8xf32> to vector<5x8xbf16>
    %cst_97 = arith.constant dense<0.000000e+00> : vector<5x5xf32>
    %380 = tpu.matmul %378, %379, %cst_97 {dimension_numbers = #tpu.dot_dimension_numbers<[1], [1], [0], [0], [0, 0, 1, 0], [], []>} : vector<5x8xbf16>, vector<5x8xbf16>, vector<5x5xf32> -> vector<5x5xf32>
    %cst_98 = arith.constant dense<0xFF800000> : vector<5xf32>
    %381 = vector.multi_reduction <maximumf>, %380, %cst_98 [1] : vector<5x5xf32> to vector<5xf32>
    %382 = vector.shape_cast %381 : vector<5xf32> to vector<5x1xf32>
    %383 = vector.broadcast %382 : vector<5x1xf32> to vector<5x5xf32>
    %384 = arith.subf %380, %383 : vector<5x5xf32>
    %385 = math.exp %384 : vector<5x5xf32>
    %cst_99 = arith.constant dense<0.000000e+00> : vector<5xf32>
    %386 = vector.multi_reduction <add>, %385, %cst_99 [1] : vector<5x5xf32> to vector<5xf32>
    %387 = vector.shape_cast %386 : vector<5xf32> to vector<5x1xf32>
    %388 = tpu.reciprocal %387 {approx = true} : vector<5x1xf32> -> vector<5x1xf32>
    %389 = vector.broadcast %388 : vector<5x1xf32> to vector<5x5xf32>
    %390 = arith.mulf %385, %389 : vector<5x5xf32>
    %391 = arith.truncf %390 : vector<5x5xf32> to vector<5x5xbf16>
    %392 = arith.truncf %377 : vector<5x8xf32> to vector<5x8xbf16>
    %cst_100 = arith.constant dense<0.000000e+00> : vector<5x8xf32>
    %393 = tpu.matmul %391, %392, %cst_100 {dimension_numbers = #tpu.dot_dimension_numbers<[1], [0], [0], [1], [0, 0, 1, 1], [], []>} : vector<5x5xbf16>, vector<5x8xbf16>, vector<5x8xf32> -> vector<5x8xf32>
    %394 = vector.extract_strided_slice %336 {offsets = [0, 24], sizes = [5, 8], strides = [1, 1]} : vector<5x96xf32> to vector<5x8xf32>
    %395 = vector.extract_strided_slice %336 {offsets = [0, 56], sizes = [5, 8], strides = [1, 1]} : vector<5x96xf32> to vector<5x8xf32>
    %396 = vector.extract_strided_slice %336 {offsets = [0, 88], sizes = [5, 8], strides = [1, 1]} : vector<5x96xf32> to vector<5x8xf32>
    %397 = arith.truncf %394 : vector<5x8xf32> to vector<5x8xbf16>
    %398 = arith.truncf %395 : vector<5x8xf32> to vector<5x8xbf16>
    %cst_101 = arith.constant dense<0.000000e+00> : vector<5x5xf32>
    %399 = tpu.matmul %397, %398, %cst_101 {dimension_numbers = #tpu.dot_dimension_numbers<[1], [1], [0], [0], [0, 0, 1, 0], [], []>} : vector<5x8xbf16>, vector<5x8xbf16>, vector<5x5xf32> -> vector<5x5xf32>
    %cst_102 = arith.constant dense<0xFF800000> : vector<5xf32>
    %400 = vector.multi_reduction <maximumf>, %399, %cst_102 [1] : vector<5x5xf32> to vector<5xf32>
    %401 = vector.shape_cast %400 : vector<5xf32> to vector<5x1xf32>
    %402 = vector.broadcast %401 : vector<5x1xf32> to vector<5x5xf32>
    %403 = arith.subf %399, %402 : vector<5x5xf32>
    %404 = math.exp %403 : vector<5x5xf32>
    %cst_103 = arith.constant dense<0.000000e+00> : vector<5xf32>
    %405 = vector.multi_reduction <add>, %404, %cst_103 [1] : vector<5x5xf32> to vector<5xf32>
    %406 = vector.shape_cast %405 : vector<5xf32> to vector<5x1xf32>
    %407 = tpu.reciprocal %406 {approx = true} : vector<5x1xf32> -> vector<5x1xf32>
    %408 = vector.broadcast %407 : vector<5x1xf32> to vector<5x5xf32>
    %409 = arith.mulf %404, %408 : vector<5x5xf32>
    %410 = arith.truncf %409 : vector<5x5xf32> to vector<5x5xbf16>
    %411 = arith.truncf %396 : vector<5x8xf32> to vector<5x8xbf16>
    %cst_104 = arith.constant dense<0.000000e+00> : vector<5x8xf32>
    %412 = tpu.matmul %410, %411, %cst_104 {dimension_numbers = #tpu.dot_dimension_numbers<[1], [0], [0], [1], [0, 0, 1, 1], [], []>} : vector<5x5xbf16>, vector<5x8xbf16>, vector<5x8xf32> -> vector<5x8xf32>
    %413 = tpu.concatenate %355, %374, %393, %412 in 1 : vector<5x8xf32>, vector<5x8xf32>, vector<5x8xf32>, vector<5x8xf32> -> vector<5x32xf32>
    %414 = tpu.concatenate %335, %413 in 0 : vector<5x32xf32>, vector<5x32xf32> -> vector<10x32xf32>
    %415 = arith.truncf %414 : vector<10x32xf32> to vector<10x32xbf16>
    %cst_105 = arith.constant dense<0.000000e+00> : vector<10x32xf32>
    %416 = tpu.matmul %415, %252, %cst_105 {dimension_numbers = #tpu.dot_dimension_numbers<[1], [0], [0], [1], [0, 0, 1, 1], [], []>} : vector<10x32xbf16>, vector<32x32xbf16>, vector<10x32xf32> -> vector<10x32xf32>
    %417 = vector.broadcast %253 : vector<1x32xf32> to vector<10x32xf32>
    %418 = arith.addf %416, %417 : vector<10x32xf32>
    %419 = arith.addf %233, %418 : vector<10x32xf32>
    %cst_106 = arith.constant dense<0.000000e+00> : vector<10xf32>
    %420 = vector.multi_reduction <add>, %419, %cst_106 [1] : vector<10x32xf32> to vector<10xf32>
    %421 = vector.shape_cast %420 : vector<10xf32> to vector<10x1xf32>
    %cst_107 = arith.constant 3.200000e+01 : f32
    %422 = vector.broadcast %cst_107 : f32 to vector<10x1xf32>
    %423 = arith.divf %421, %422 : vector<10x1xf32>
    %424 = vector.broadcast %423 : vector<10x1xf32> to vector<10x32xf32>
    %425 = arith.subf %419, %424 : vector<10x32xf32>
    %426 = arith.mulf %425, %425 : vector<10x32xf32>
    %cst_108 = arith.constant dense<0.000000e+00> : vector<10xf32>
    %427 = vector.multi_reduction <add>, %426, %cst_108 [1] : vector<10x32xf32> to vector<10xf32>
    %428 = vector.shape_cast %427 : vector<10xf32> to vector<10x1xf32>
    %cst_109 = arith.constant 3.200000e+01 : f32
    %429 = vector.broadcast %cst_109 : f32 to vector<10x1xf32>
    %430 = arith.divf %428, %429 : vector<10x1xf32>
    %cst_110 = arith.constant 9.99999996E-13 : f32
    %431 = vector.broadcast %cst_110 : f32 to vector<10x1xf32>
    %432 = arith.addf %430, %431 : vector<10x1xf32>
    %433 = math.rsqrt %432 : vector<10x1xf32>
    %434 = vector.broadcast %433 : vector<10x1xf32> to vector<10x32xf32>
    %435 = arith.mulf %425, %434 : vector<10x32xf32>
    %c416 = arith.constant 416 : index
    %c0_111 = arith.constant 0 : index
    %436 = vector.load %arg3[%c416, %c0_111] : memref<688x128xbf16, #tpu.memory_space<vmem>>, vector<32x64xbf16>
    %437 = arith.truncf %435 : vector<10x32xf32> to vector<10x32xbf16>
    %cst_112 = arith.constant dense<0.000000e+00> : vector<10x64xf32>
    %438 = tpu.matmul %437, %436, %cst_112 {dimension_numbers = #tpu.dot_dimension_numbers<[1], [0], [0], [1], [0, 0, 1, 1], [], []>} : vector<10x32xbf16>, vector<32x64xbf16>, vector<10x64xf32> -> vector<10x64xf32>
    %c64 = arith.constant 64 : index
    %c0_113 = arith.constant 0 : index
    %439 = vector.load %arg4[%c64, %c0_113] : memref<216x128xf32, #tpu.memory_space<vmem>>, vector<1x64xf32>
    %440 = vector.broadcast %439 : vector<1x64xf32> to vector<10x64xf32>
    %441 = arith.addf %438, %440 : vector<10x64xf32>
    %cst_114 = arith.constant 5.000000e-01 : f32
    %442 = vector.broadcast %cst_114 : f32 to vector<10x64xf32>
    %443 = arith.mulf %442, %441 : vector<10x64xf32>
    %cst_115 = arith.constant 4.471500e-02 : f32
    %444 = vector.broadcast %cst_115 : f32 to vector<10x64xf32>
    %445 = arith.mulf %444, %441 : vector<10x64xf32>
    %446 = arith.mulf %445, %441 : vector<10x64xf32>
    %447 = arith.mulf %446, %441 : vector<10x64xf32>
    %448 = arith.addf %441, %447 : vector<10x64xf32>
    %cst_116 = arith.constant 0.797884583 : f32
    %449 = vector.broadcast %cst_116 : f32 to vector<10x64xf32>
    %450 = arith.mulf %449, %448 : vector<10x64xf32>
    %451 = math.tanh %450 : vector<10x64xf32>
    %cst_117 = arith.constant 1.000000e+00 : f32
    %452 = vector.broadcast %cst_117 : f32 to vector<10x64xf32>
    %453 = arith.addf %452, %451 : vector<10x64xf32>
    %454 = arith.mulf %443, %453 : vector<10x64xf32>
    %c448 = arith.constant 448 : index
    %c0_118 = arith.constant 0 : index
    %455 = vector.load %arg3[%c448, %c0_118] : memref<688x128xbf16, #tpu.memory_space<vmem>>, vector<64x32xbf16>
    %456 = arith.truncf %454 : vector<10x64xf32> to vector<10x64xbf16>
    %cst_119 = arith.constant dense<0.000000e+00> : vector<10x32xf32>
    %457 = tpu.matmul %456, %455, %cst_119 {dimension_numbers = #tpu.dot_dimension_numbers<[1], [0], [0], [1], [0, 0, 1, 1], [], []>} : vector<10x64xbf16>, vector<64x32xbf16>, vector<10x32xf32> -> vector<10x32xf32>
    %458 = arith.addf %419, %457 : vector<10x32xf32>
    %c72 = arith.constant 72 : index
    %c0_120 = arith.constant 0 : index
    %459 = vector.load %arg4[%c72, %c0_120] : memref<216x128xf32, #tpu.memory_space<vmem>>, vector<1x32xf32>
    %460 = vector.broadcast %459 : vector<1x32xf32> to vector<10x32xf32>
    %461 = arith.addf %458, %460 : vector<10x32xf32>
    %cst_121 = arith.constant dense<0.000000e+00> : vector<10xf32>
    %462 = vector.multi_reduction <add>, %461, %cst_121 [1] : vector<10x32xf32> to vector<10xf32>
    %463 = vector.shape_cast %462 : vector<10xf32> to vector<10x1xf32>
    %cst_122 = arith.constant 3.200000e+01 : f32
    %464 = vector.broadcast %cst_122 : f32 to vector<10x1xf32>
    %465 = arith.divf %463, %464 : vector<10x1xf32>
    %466 = vector.broadcast %465 : vector<10x1xf32> to vector<10x32xf32>
    %467 = arith.subf %461, %466 : vector<10x32xf32>
    %468 = arith.mulf %467, %467 : vector<10x32xf32>
    %cst_123 = arith.constant dense<0.000000e+00> : vector<10xf32>
    %469 = vector.multi_reduction <add>, %468, %cst_123 [1] : vector<10x32xf32> to vector<10xf32>
    %470 = vector.shape_cast %469 : vector<10xf32> to vector<10x1xf32>
    %cst_124 = arith.constant 3.200000e+01 : f32
    %471 = vector.broadcast %cst_124 : f32 to vector<10x1xf32>
    %472 = arith.divf %470, %471 : vector<10x1xf32>
    %cst_125 = arith.constant 9.99999996E-13 : f32
    %473 = vector.broadcast %cst_125 : f32 to vector<10x1xf32>
    %474 = arith.addf %472, %473 : vector<10x1xf32>
    %475 = math.rsqrt %474 : vector<10x1xf32>
    %476 = vector.broadcast %475 : vector<10x1xf32> to vector<10x32xf32>
    %477 = arith.mulf %467, %476 : vector<10x32xf32>
    %478 = vector.extract_strided_slice %477 {offsets = [0, 0], sizes = [1, 32], strides = [1, 1]} : vector<10x32xf32> to vector<1x32xf32>
    %479 = vector.extract_strided_slice %477 {offsets = [5, 0], sizes = [1, 32], strides = [1, 1]} : vector<10x32xf32> to vector<1x32xf32>
    %480 = tpu.concatenate %478, %479 in 0 : vector<1x32xf32>, vector<1x32xf32> -> vector<2x32xf32>
    %c0_126 = arith.constant 0 : index
    %c0_127 = arith.constant 0 : index
    %481 = vector.load %arg2[%c0_126, %c0_127] : memref<2x20xf32, #tpu.memory_space<vmem>>, vector<2x20xf32>
    %c512 = arith.constant 512 : index
    %c0_128 = arith.constant 0 : index
    %482 = vector.load %arg3[%c512, %c0_128] : memref<688x128xbf16, #tpu.memory_space<vmem>>, vector<20x16xbf16>
    %483 = arith.truncf %481 : vector<2x20xf32> to vector<2x20xbf16>
    %cst_129 = arith.constant dense<0.000000e+00> : vector<2x16xf32>
    %484 = tpu.matmul %483, %482, %cst_129 {dimension_numbers = #tpu.dot_dimension_numbers<[1], [0], [0], [1], [0, 0, 1, 1], [], []>} : vector<2x20xbf16>, vector<20x16xbf16>, vector<2x16xf32> -> vector<2x16xf32>
    %c80 = arith.constant 80 : index
    %c0_130 = arith.constant 0 : index
    %485 = vector.load %arg4[%c80, %c0_130] : memref<216x128xf32, #tpu.memory_space<vmem>>, vector<1x16xf32>
    %486 = vector.broadcast %485 : vector<1x16xf32> to vector<2x16xf32>
    %487 = arith.addf %484, %486 : vector<2x16xf32>
    %cst_131 = arith.constant 0.000000e+00 : f32
    %488 = vector.broadcast %cst_131 : f32 to vector<2x16xf32>
    %489 = arith.maximumf %487, %488 : vector<2x16xf32>
    %cst_132 = arith.constant dense<0.000000e+00> : vector<2xf32>
    %490 = vector.multi_reduction <add>, %489, %cst_132 [1] : vector<2x16xf32> to vector<2xf32>
    %491 = vector.shape_cast %490 : vector<2xf32> to vector<2x1xf32>
    %cst_133 = arith.constant 1.600000e+01 : f32
    %492 = vector.broadcast %cst_133 : f32 to vector<2x1xf32>
    %493 = arith.divf %491, %492 : vector<2x1xf32>
    %494 = vector.broadcast %493 : vector<2x1xf32> to vector<2x16xf32>
    %495 = arith.subf %489, %494 : vector<2x16xf32>
    %496 = arith.mulf %495, %495 : vector<2x16xf32>
    %cst_134 = arith.constant dense<0.000000e+00> : vector<2xf32>
    %497 = vector.multi_reduction <add>, %496, %cst_134 [1] : vector<2x16xf32> to vector<2xf32>
    %498 = vector.shape_cast %497 : vector<2xf32> to vector<2x1xf32>
    %cst_135 = arith.constant 1.600000e+01 : f32
    %499 = vector.broadcast %cst_135 : f32 to vector<2x1xf32>
    %500 = arith.divf %498, %499 : vector<2x1xf32>
    %cst_136 = arith.constant 9.99999974E-6 : f32
    %501 = vector.broadcast %cst_136 : f32 to vector<2x1xf32>
    %502 = arith.addf %500, %501 : vector<2x1xf32>
    %503 = math.rsqrt %502 : vector<2x1xf32>
    %504 = vector.broadcast %503 : vector<2x1xf32> to vector<2x16xf32>
    %505 = arith.mulf %495, %504 : vector<2x16xf32>
    %c544 = arith.constant 544 : index
    %c0_137 = arith.constant 0 : index
    %506 = vector.load %arg3[%c544, %c0_137] : memref<688x128xbf16, #tpu.memory_space<vmem>>, vector<32x32xbf16>
    %507 = arith.truncf %480 : vector<2x32xf32> to vector<2x32xbf16>
    %cst_138 = arith.constant dense<0.000000e+00> : vector<2x32xf32>
    %508 = tpu.matmul %507, %506, %cst_138 {dimension_numbers = #tpu.dot_dimension_numbers<[1], [0], [0], [1], [0, 0, 1, 1], [], []>} : vector<2x32xbf16>, vector<32x32xbf16>, vector<2x32xf32> -> vector<2x32xf32>
    %c576 = arith.constant 576 : index
    %c0_139 = arith.constant 0 : index
    %509 = vector.load %arg3[%c576, %c0_139] : memref<688x128xbf16, #tpu.memory_space<vmem>>, vector<16x32xbf16>
    %510 = arith.truncf %505 : vector<2x16xf32> to vector<2x16xbf16>
    %cst_140 = arith.constant dense<0.000000e+00> : vector<2x32xf32>
    %511 = tpu.matmul %510, %509, %cst_140 {dimension_numbers = #tpu.dot_dimension_numbers<[1], [0], [0], [1], [0, 0, 1, 1], [], []>} : vector<2x16xbf16>, vector<16x32xbf16>, vector<2x32xf32> -> vector<2x32xf32>
    %512 = arith.addf %508, %511 : vector<2x32xf32>
    %c88 = arith.constant 88 : index
    %c0_141 = arith.constant 0 : index
    %513 = vector.load %arg4[%c88, %c0_141] : memref<216x128xf32, #tpu.memory_space<vmem>>, vector<1x32xf32>
    %514 = vector.broadcast %513 : vector<1x32xf32> to vector<2x32xf32>
    %515 = arith.addf %512, %514 : vector<2x32xf32>
    %cst_142 = arith.constant 0.000000e+00 : f32
    %516 = vector.broadcast %cst_142 : f32 to vector<2x32xf32>
    %517 = arith.maximumf %515, %516 : vector<2x32xf32>
    %cst_143 = arith.constant dense<0.000000e+00> : vector<2xf32>
    %518 = vector.multi_reduction <add>, %517, %cst_143 [1] : vector<2x32xf32> to vector<2xf32>
    %519 = vector.shape_cast %518 : vector<2xf32> to vector<2x1xf32>
    %cst_144 = arith.constant 3.200000e+01 : f32
    %520 = vector.broadcast %cst_144 : f32 to vector<2x1xf32>
    %521 = arith.divf %519, %520 : vector<2x1xf32>
    %522 = vector.broadcast %521 : vector<2x1xf32> to vector<2x32xf32>
    %523 = arith.subf %517, %522 : vector<2x32xf32>
    %524 = arith.mulf %523, %523 : vector<2x32xf32>
    %cst_145 = arith.constant dense<0.000000e+00> : vector<2xf32>
    %525 = vector.multi_reduction <add>, %524, %cst_145 [1] : vector<2x32xf32> to vector<2xf32>
    %526 = vector.shape_cast %525 : vector<2xf32> to vector<2x1xf32>
    %cst_146 = arith.constant 3.200000e+01 : f32
    %527 = vector.broadcast %cst_146 : f32 to vector<2x1xf32>
    %528 = arith.divf %526, %527 : vector<2x1xf32>
    %cst_147 = arith.constant 9.99999974E-6 : f32
    %529 = vector.broadcast %cst_147 : f32 to vector<2x1xf32>
    %530 = arith.addf %528, %529 : vector<2x1xf32>
    %531 = math.rsqrt %530 : vector<2x1xf32>
    %532 = vector.broadcast %531 : vector<2x1xf32> to vector<2x32xf32>
    %533 = arith.mulf %523, %532 : vector<2x32xf32>
    %c96 = arith.constant 96 : index
    %c0_148 = arith.constant 0 : index
    %534 = vector.load %arg4[%c96, %c0_148] : memref<216x128xf32, #tpu.memory_space<vmem>>, vector<1x32xf32>
    %535 = vector.broadcast %534 : vector<1x32xf32> to vector<2x32xf32>
    %536 = arith.mulf %533, %535 : vector<2x32xf32>
    %c104 = arith.constant 104 : index
    %c0_149 = arith.constant 0 : index
    %537 = vector.load %arg4[%c104, %c0_149] : memref<216x128xf32, #tpu.memory_space<vmem>>, vector<1x32xf32>
    %538 = vector.broadcast %537 : vector<1x32xf32> to vector<2x32xf32>
    %539 = arith.addf %536, %538 : vector<2x32xf32>
    %c592 = arith.constant 592 : index
    %c0_150 = arith.constant 0 : index
    %540 = vector.load %arg3[%c592, %c0_150] : memref<688x128xbf16, #tpu.memory_space<vmem>>, vector<32x32xbf16>
    %541 = arith.truncf %539 : vector<2x32xf32> to vector<2x32xbf16>
    %cst_151 = arith.constant dense<0.000000e+00> : vector<2x32xf32>
    %542 = tpu.matmul %541, %540, %cst_151 {dimension_numbers = #tpu.dot_dimension_numbers<[1], [0], [0], [1], [0, 0, 1, 1], [], []>} : vector<2x32xbf16>, vector<32x32xbf16>, vector<2x32xf32> -> vector<2x32xf32>
    %c112 = arith.constant 112 : index
    %c0_152 = arith.constant 0 : index
    %543 = vector.load %arg4[%c112, %c0_152] : memref<216x128xf32, #tpu.memory_space<vmem>>, vector<1x32xf32>
    %544 = vector.broadcast %543 : vector<1x32xf32> to vector<2x32xf32>
    %545 = arith.addf %542, %544 : vector<2x32xf32>
    %546 = arith.addf %539, %545 : vector<2x32xf32>
    %cst_153 = arith.constant dense<0.000000e+00> : vector<2xf32>
    %547 = vector.multi_reduction <add>, %546, %cst_153 [1] : vector<2x32xf32> to vector<2xf32>
    %548 = vector.shape_cast %547 : vector<2xf32> to vector<2x1xf32>
    %cst_154 = arith.constant 3.200000e+01 : f32
    %549 = vector.broadcast %cst_154 : f32 to vector<2x1xf32>
    %550 = arith.divf %548, %549 : vector<2x1xf32>
    %551 = vector.broadcast %550 : vector<2x1xf32> to vector<2x32xf32>
    %552 = arith.subf %546, %551 : vector<2x32xf32>
    %553 = arith.mulf %552, %552 : vector<2x32xf32>
    %cst_155 = arith.constant dense<0.000000e+00> : vector<2xf32>
    %554 = vector.multi_reduction <add>, %553, %cst_155 [1] : vector<2x32xf32> to vector<2xf32>
    %555 = vector.shape_cast %554 : vector<2xf32> to vector<2x1xf32>
    %cst_156 = arith.constant 3.200000e+01 : f32
    %556 = vector.broadcast %cst_156 : f32 to vector<2x1xf32>
    %557 = arith.divf %555, %556 : vector<2x1xf32>
    %cst_157 = arith.constant 9.99999974E-6 : f32
    %558 = vector.broadcast %cst_157 : f32 to vector<2x1xf32>
    %559 = arith.addf %557, %558 : vector<2x1xf32>
    %560 = math.rsqrt %559 : vector<2x1xf32>
    %561 = vector.broadcast %560 : vector<2x1xf32> to vector<2x32xf32>
    %562 = arith.mulf %552, %561 : vector<2x32xf32>
    %c120 = arith.constant 120 : index
    %c0_158 = arith.constant 0 : index
    %563 = vector.load %arg4[%c120, %c0_158] : memref<216x128xf32, #tpu.memory_space<vmem>>, vector<1x32xf32>
    %564 = vector.broadcast %563 : vector<1x32xf32> to vector<2x32xf32>
    %565 = arith.mulf %562, %564 : vector<2x32xf32>
    %c128 = arith.constant 128 : index
    %c0_159 = arith.constant 0 : index
    %566 = vector.load %arg4[%c128, %c0_159] : memref<216x128xf32, #tpu.memory_space<vmem>>, vector<1x32xf32>
    %567 = vector.broadcast %566 : vector<1x32xf32> to vector<2x32xf32>
    %568 = arith.addf %565, %567 : vector<2x32xf32>
    %c0_160 = arith.constant 0 : index
    %c0_161 = arith.constant 0 : index
    %c0_162 = arith.constant 0 : index
    %569 = vector.load %arg5[%c0_160, %c0_161, %c0_162] : memref<2x32x2048xbf16, #tpu.memory_space<vmem>>, vector<1x32x2048xbf16>
    %570 = vector.shape_cast %569 : vector<1x32x2048xbf16> to vector<32x2048xbf16>
    %571 = arith.truncf %568 : vector<2x32xf32> to vector<2x32xbf16>
    %cst_163 = arith.constant dense<0.000000e+00> : vector<2x2048xf32>
    %572 = tpu.matmul %571, %570, %cst_163 {dimension_numbers = #tpu.dot_dimension_numbers<[1], [0], [0], [1], [0, 0, 1, 1], [], []>} : vector<2x32xbf16>, vector<32x2048xbf16>, vector<2x2048xf32> -> vector<2x2048xf32>
    %c0_164 = arith.constant 0 : index
    %c0_165 = arith.constant 0 : index
    %c0_166 = arith.constant 0 : index
    %573 = vector.load %arg7[%c0_164, %c0_165, %c0_166] : memref<2x1x2048xf32, #tpu.memory_space<vmem>>, vector<1x1x2048xf32>
    %574 = vector.shape_cast %573 : vector<1x1x2048xf32> to vector<1x2048xf32>
    %575 = vector.broadcast %574 : vector<1x2048xf32> to vector<2x2048xf32>
    %576 = arith.addf %572, %575 : vector<2x2048xf32>
    %cst_167 = arith.constant 0.000000e+00 : f32
    %577 = vector.broadcast %cst_167 : f32 to vector<2x2048xf32>
    %578 = arith.maximumf %576, %577 : vector<2x2048xf32>
    %c0_168 = arith.constant 0 : index
    %c0_169 = arith.constant 0 : index
    %c0_170 = arith.constant 0 : index
    %579 = vector.load %arg6[%c0_168, %c0_169, %c0_170] : memref<2x32x2048xbf16, #tpu.memory_space<vmem>>, vector<1x32x2048xbf16>
    %580 = vector.shape_cast %579 : vector<1x32x2048xbf16> to vector<32x2048xbf16>
    %581 = arith.truncf %578 : vector<2x2048xf32> to vector<2x2048xbf16>
    %cst_171 = arith.constant dense<0.000000e+00> : vector<2x32xf32>
    %582 = tpu.matmul %581, %580, %cst_171 {dimension_numbers = #tpu.dot_dimension_numbers<[1], [1], [0], [0], [0, 0, 1, 0], [], []>} : vector<2x2048xbf16>, vector<32x2048xbf16>, vector<2x32xf32> -> vector<2x32xf32>
    %c136 = arith.constant 136 : index
    %c0_172 = arith.constant 0 : index
    %583 = vector.load %arg4[%c136, %c0_172] : memref<216x128xf32, #tpu.memory_space<vmem>>, vector<1x32xf32>
    %584 = vector.broadcast %583 : vector<1x32xf32> to vector<2x32xf32>
    %585 = arith.addf %582, %584 : vector<2x32xf32>
    %586 = arith.addf %568, %585 : vector<2x32xf32>
    %cst_173 = arith.constant dense<0.000000e+00> : vector<2xf32>
    %587 = vector.multi_reduction <add>, %586, %cst_173 [1] : vector<2x32xf32> to vector<2xf32>
    %588 = vector.shape_cast %587 : vector<2xf32> to vector<2x1xf32>
    %cst_174 = arith.constant 3.200000e+01 : f32
    %589 = vector.broadcast %cst_174 : f32 to vector<2x1xf32>
    %590 = arith.divf %588, %589 : vector<2x1xf32>
    %591 = vector.broadcast %590 : vector<2x1xf32> to vector<2x32xf32>
    %592 = arith.subf %586, %591 : vector<2x32xf32>
    %593 = arith.mulf %592, %592 : vector<2x32xf32>
    %cst_175 = arith.constant dense<0.000000e+00> : vector<2xf32>
    %594 = vector.multi_reduction <add>, %593, %cst_175 [1] : vector<2x32xf32> to vector<2xf32>
    %595 = vector.shape_cast %594 : vector<2xf32> to vector<2x1xf32>
    %cst_176 = arith.constant 3.200000e+01 : f32
    %596 = vector.broadcast %cst_176 : f32 to vector<2x1xf32>
    %597 = arith.divf %595, %596 : vector<2x1xf32>
    %cst_177 = arith.constant 9.99999974E-6 : f32
    %598 = vector.broadcast %cst_177 : f32 to vector<2x1xf32>
    %599 = arith.addf %597, %598 : vector<2x1xf32>
    %600 = math.rsqrt %599 : vector<2x1xf32>
    %601 = vector.broadcast %600 : vector<2x1xf32> to vector<2x32xf32>
    %602 = arith.mulf %592, %601 : vector<2x32xf32>
    %c144 = arith.constant 144 : index
    %c0_178 = arith.constant 0 : index
    %603 = vector.load %arg4[%c144, %c0_178] : memref<216x128xf32, #tpu.memory_space<vmem>>, vector<1x32xf32>
    %604 = vector.broadcast %603 : vector<1x32xf32> to vector<2x32xf32>
    %605 = arith.mulf %602, %604 : vector<2x32xf32>
    %c152 = arith.constant 152 : index
    %c0_179 = arith.constant 0 : index
    %606 = vector.load %arg4[%c152, %c0_179] : memref<216x128xf32, #tpu.memory_space<vmem>>, vector<1x32xf32>
    %607 = vector.broadcast %606 : vector<1x32xf32> to vector<2x32xf32>
    %608 = arith.addf %605, %607 : vector<2x32xf32>
    %c624 = arith.constant 624 : index
    %c0_180 = arith.constant 0 : index
    %609 = vector.load %arg3[%c624, %c0_180] : memref<688x128xbf16, #tpu.memory_space<vmem>>, vector<32x32xbf16>
    %610 = arith.truncf %608 : vector<2x32xf32> to vector<2x32xbf16>
    %cst_181 = arith.constant dense<0.000000e+00> : vector<2x32xf32>
    %611 = tpu.matmul %610, %609, %cst_181 {dimension_numbers = #tpu.dot_dimension_numbers<[1], [0], [0], [1], [0, 0, 1, 1], [], []>} : vector<2x32xbf16>, vector<32x32xbf16>, vector<2x32xf32> -> vector<2x32xf32>
    %c160 = arith.constant 160 : index
    %c0_182 = arith.constant 0 : index
    %612 = vector.load %arg4[%c160, %c0_182] : memref<216x128xf32, #tpu.memory_space<vmem>>, vector<1x32xf32>
    %613 = vector.broadcast %612 : vector<1x32xf32> to vector<2x32xf32>
    %614 = arith.addf %611, %613 : vector<2x32xf32>
    %615 = arith.addf %608, %614 : vector<2x32xf32>
    %cst_183 = arith.constant dense<0.000000e+00> : vector<2xf32>
    %616 = vector.multi_reduction <add>, %615, %cst_183 [1] : vector<2x32xf32> to vector<2xf32>
    %617 = vector.shape_cast %616 : vector<2xf32> to vector<2x1xf32>
    %cst_184 = arith.constant 3.200000e+01 : f32
    %618 = vector.broadcast %cst_184 : f32 to vector<2x1xf32>
    %619 = arith.divf %617, %618 : vector<2x1xf32>
    %620 = vector.broadcast %619 : vector<2x1xf32> to vector<2x32xf32>
    %621 = arith.subf %615, %620 : vector<2x32xf32>
    %622 = arith.mulf %621, %621 : vector<2x32xf32>
    %cst_185 = arith.constant dense<0.000000e+00> : vector<2xf32>
    %623 = vector.multi_reduction <add>, %622, %cst_185 [1] : vector<2x32xf32> to vector<2xf32>
    %624 = vector.shape_cast %623 : vector<2xf32> to vector<2x1xf32>
    %cst_186 = arith.constant 3.200000e+01 : f32
    %625 = vector.broadcast %cst_186 : f32 to vector<2x1xf32>
    %626 = arith.divf %624, %625 : vector<2x1xf32>
    %cst_187 = arith.constant 9.99999974E-6 : f32
    %627 = vector.broadcast %cst_187 : f32 to vector<2x1xf32>
    %628 = arith.addf %626, %627 : vector<2x1xf32>
    %629 = math.rsqrt %628 : vector<2x1xf32>
    %630 = vector.broadcast %629 : vector<2x1xf32> to vector<2x32xf32>
    %631 = arith.mulf %621, %630 : vector<2x32xf32>
    %c168 = arith.constant 168 : index
    %c0_188 = arith.constant 0 : index
    %632 = vector.load %arg4[%c168, %c0_188] : memref<216x128xf32, #tpu.memory_space<vmem>>, vector<1x32xf32>
    %633 = vector.broadcast %632 : vector<1x32xf32> to vector<2x32xf32>
    %634 = arith.mulf %631, %633 : vector<2x32xf32>
    %c176 = arith.constant 176 : index
    %c0_189 = arith.constant 0 : index
    %635 = vector.load %arg4[%c176, %c0_189] : memref<216x128xf32, #tpu.memory_space<vmem>>, vector<1x32xf32>
    %636 = vector.broadcast %635 : vector<1x32xf32> to vector<2x32xf32>
    %637 = arith.addf %634, %636 : vector<2x32xf32>
    %c1 = arith.constant 1 : index
    %c0_190 = arith.constant 0 : index
    %c0_191 = arith.constant 0 : index
    %638 = vector.load %arg5[%c1, %c0_190, %c0_191] : memref<2x32x2048xbf16, #tpu.memory_space<vmem>>, vector<1x32x2048xbf16>
    %639 = vector.shape_cast %638 : vector<1x32x2048xbf16> to vector<32x2048xbf16>
    %640 = arith.truncf %637 : vector<2x32xf32> to vector<2x32xbf16>
    %cst_192 = arith.constant dense<0.000000e+00> : vector<2x2048xf32>
    %641 = tpu.matmul %640, %639, %cst_192 {dimension_numbers = #tpu.dot_dimension_numbers<[1], [0], [0], [1], [0, 0, 1, 1], [], []>} : vector<2x32xbf16>, vector<32x2048xbf16>, vector<2x2048xf32> -> vector<2x2048xf32>
    %c1_193 = arith.constant 1 : index
    %c0_194 = arith.constant 0 : index
    %c0_195 = arith.constant 0 : index
    %642 = vector.load %arg7[%c1_193, %c0_194, %c0_195] : memref<2x1x2048xf32, #tpu.memory_space<vmem>>, vector<1x1x2048xf32>
    %643 = vector.shape_cast %642 : vector<1x1x2048xf32> to vector<1x2048xf32>
    %644 = vector.broadcast %643 : vector<1x2048xf32> to vector<2x2048xf32>
    %645 = arith.addf %641, %644 : vector<2x2048xf32>
    %cst_196 = arith.constant 0.000000e+00 : f32
    %646 = vector.broadcast %cst_196 : f32 to vector<2x2048xf32>
    %647 = arith.maximumf %645, %646 : vector<2x2048xf32>
    %c1_197 = arith.constant 1 : index
    %c0_198 = arith.constant 0 : index
    %c0_199 = arith.constant 0 : index
    %648 = vector.load %arg6[%c1_197, %c0_198, %c0_199] : memref<2x32x2048xbf16, #tpu.memory_space<vmem>>, vector<1x32x2048xbf16>
    %649 = vector.shape_cast %648 : vector<1x32x2048xbf16> to vector<32x2048xbf16>
    %650 = arith.truncf %647 : vector<2x2048xf32> to vector<2x2048xbf16>
    %cst_200 = arith.constant dense<0.000000e+00> : vector<2x32xf32>
    %651 = tpu.matmul %650, %649, %cst_200 {dimension_numbers = #tpu.dot_dimension_numbers<[1], [1], [0], [0], [0, 0, 1, 0], [], []>} : vector<2x2048xbf16>, vector<32x2048xbf16>, vector<2x32xf32> -> vector<2x32xf32>
    %c184 = arith.constant 184 : index
    %c0_201 = arith.constant 0 : index
    %652 = vector.load %arg4[%c184, %c0_201] : memref<216x128xf32, #tpu.memory_space<vmem>>, vector<1x32xf32>
    %653 = vector.broadcast %652 : vector<1x32xf32> to vector<2x32xf32>
    %654 = arith.addf %651, %653 : vector<2x32xf32>
    %655 = arith.addf %637, %654 : vector<2x32xf32>
    %cst_202 = arith.constant dense<0.000000e+00> : vector<2xf32>
    %656 = vector.multi_reduction <add>, %655, %cst_202 [1] : vector<2x32xf32> to vector<2xf32>
    %657 = vector.shape_cast %656 : vector<2xf32> to vector<2x1xf32>
    %cst_203 = arith.constant 3.200000e+01 : f32
    %658 = vector.broadcast %cst_203 : f32 to vector<2x1xf32>
    %659 = arith.divf %657, %658 : vector<2x1xf32>
    %660 = vector.broadcast %659 : vector<2x1xf32> to vector<2x32xf32>
    %661 = arith.subf %655, %660 : vector<2x32xf32>
    %662 = arith.mulf %661, %661 : vector<2x32xf32>
    %cst_204 = arith.constant dense<0.000000e+00> : vector<2xf32>
    %663 = vector.multi_reduction <add>, %662, %cst_204 [1] : vector<2x32xf32> to vector<2xf32>
    %664 = vector.shape_cast %663 : vector<2xf32> to vector<2x1xf32>
    %cst_205 = arith.constant 3.200000e+01 : f32
    %665 = vector.broadcast %cst_205 : f32 to vector<2x1xf32>
    %666 = arith.divf %664, %665 : vector<2x1xf32>
    %cst_206 = arith.constant 9.99999974E-6 : f32
    %667 = vector.broadcast %cst_206 : f32 to vector<2x1xf32>
    %668 = arith.addf %666, %667 : vector<2x1xf32>
    %669 = math.rsqrt %668 : vector<2x1xf32>
    %670 = vector.broadcast %669 : vector<2x1xf32> to vector<2x32xf32>
    %671 = arith.mulf %661, %670 : vector<2x32xf32>
    %c192_207 = arith.constant 192 : index
    %c0_208 = arith.constant 0 : index
    %672 = vector.load %arg4[%c192_207, %c0_208] : memref<216x128xf32, #tpu.memory_space<vmem>>, vector<1x32xf32>
    %673 = vector.broadcast %672 : vector<1x32xf32> to vector<2x32xf32>
    %674 = arith.mulf %671, %673 : vector<2x32xf32>
    %c200 = arith.constant 200 : index
    %c0_209 = arith.constant 0 : index
    %675 = vector.load %arg4[%c200, %c0_209] : memref<216x128xf32, #tpu.memory_space<vmem>>, vector<1x32xf32>
    %676 = vector.broadcast %675 : vector<1x32xf32> to vector<2x32xf32>
    %677 = arith.addf %674, %676 : vector<2x32xf32>
    %c656 = arith.constant 656 : index
    %c0_210 = arith.constant 0 : index
    %678 = vector.load %arg3[%c656, %c0_210] : memref<688x128xbf16, #tpu.memory_space<vmem>>, vector<32x128xbf16>
    %679 = arith.truncf %677 : vector<2x32xf32> to vector<2x32xbf16>
    %cst_211 = arith.constant dense<0.000000e+00> : vector<2x128xf32>
    %680 = tpu.matmul %679, %678, %cst_211 {dimension_numbers = #tpu.dot_dimension_numbers<[1], [0], [0], [1], [0, 0, 1, 1], [], []>} : vector<2x32xbf16>, vector<32x128xbf16>, vector<2x128xf32> -> vector<2x128xf32>
    %c208 = arith.constant 208 : index
    %c0_212 = arith.constant 0 : index
    %681 = vector.load %arg4[%c208, %c0_212] : memref<216x128xf32, #tpu.memory_space<vmem>>, vector<1x128xf32>
    %682 = vector.broadcast %681 : vector<1x128xf32> to vector<2x128xf32>
    %683 = arith.addf %680, %682 : vector<2x128xf32>
    %c0_213 = arith.constant 0 : index
    %c0_214 = arith.constant 0 : index
    %684 = vector.load %arg8[%c0_213, %c0_214] : memref<2x128xf32, #tpu.memory_space<vmem>>, vector<2x128xf32>
    tpu.vector_store %arg8[%c0_213, %c0_214], %683 {strides = array<i32>} : memref<2x128xf32, #tpu.memory_space<vmem>>, vector<2x128xf32>,
    return
  }
  func.func @transform_0(%arg0: i32) -> (i32, i32) {
    %c0_i32 = arith.constant 0 : i32
    %c0_i32_0 = arith.constant 0 : i32
    %c0_i32_1 = arith.constant 0 : i32
    return %c0_i32, %c0_i32_0 : i32, i32
  }
  func.func @transform_1(%arg0: i32) -> (i32, i32) {
    %c0_i32 = arith.constant 0 : i32
    %c0_i32_0 = arith.constant 0 : i32
    %c0_i32_1 = arith.constant 0 : i32
    return %c0_i32, %c0_i32_0 : i32, i32
  }
  func.func @transform_2(%arg0: i32) -> (i32, i32) {
    %c0_i32 = arith.constant 0 : i32
    %c0_i32_0 = arith.constant 0 : i32
    %c0_i32_1 = arith.constant 0 : i32
    return %c0_i32, %c0_i32_0 : i32, i32
  }
  func.func @transform_3(%arg0: i32) -> (i32, i32) {
    %c0_i32 = arith.constant 0 : i32
    %c0_i32_0 = arith.constant 0 : i32
    %c0_i32_1 = arith.constant 0 : i32
    return %c0_i32, %c0_i32_0 : i32, i32
  }
  func.func @transform_4(%arg0: i32) -> (i32, i32, i32) {
    %c0_i32 = arith.constant 0 : i32
    %c0_i32_0 = arith.constant 0 : i32
    %c0_i32_1 = arith.constant 0 : i32
    %c0_i32_2 = arith.constant 0 : i32
    return %c0_i32, %c0_i32_0, %c0_i32_1 : i32, i32, i32
  }
  func.func @transform_5(%arg0: i32) -> (i32, i32, i32) {
    %c0_i32 = arith.constant 0 : i32
    %c0_i32_0 = arith.constant 0 : i32
    %c0_i32_1 = arith.constant 0 : i32
    %c0_i32_2 = arith.constant 0 : i32
    return %c0_i32, %c0_i32_0, %c0_i32_1 : i32, i32, i32
  }
  func.func @transform_6(%arg0: i32) -> (i32, i32, i32) {
    %c0_i32 = arith.constant 0 : i32
    %c0_i32_0 = arith.constant 0 : i32
    %c0_i32_1 = arith.constant 0 : i32
    %c0_i32_2 = arith.constant 0 : i32
    return %c0_i32, %c0_i32_0, %c0_i32_1 : i32, i32, i32
  }
  func.func @transform_7(%arg0: i32) -> (i32, i32) {
    %c0_i32 = arith.constant 0 : i32
    %c0_i32_0 = arith.constant 0 : i32
    %c0_i32_1 = arith.constant 0 : i32
    return %c0_i32, %c0_i32_0 : i32, i32
  }
}

</mosaic_0001>

<llo_original>
// kernel: fwd.1
$region0: #{fwd.1}
  #allocation0 [shape = 'u32[]', space=smem, size = 0x4, offset = 0x4, fixed_abs, tag = 'smem constant byte address 0x4 - core index']
  #allocation1 [shape = 'u32[144,128]{1,0:T(1,128)}', space=vmem, size = 0x12000, scoped, tag = 'internal scratch']
  %s0 = inlined_call_operand.vmem [shape: f32[10,192], index: 0, kind: input, shape index: {}]
  %s1 = inlined_call_operand.vmem [shape: f32[2,20], index: 1, kind: input, shape index: {}]
  %s2 = inlined_call_operand.vmem [shape: bf16[688,128], index: 2, kind: input, shape index: {}]
  %s3 = inlined_call_operand.hbm [shape: f32[216,128], index: 3, kind: input, shape index: {}]
  %s4 = inlined_call_operand.vmem [shape: bf16[2,32,2048], index: 4, kind: input, shape index: {}]
  %s5 = inlined_call_operand.hbm [shape: bf16[2,32,2048], index: 5, kind: input, shape index: {}]
  %s6 = inlined_call_operand.vmem [shape: f32[2,1,2048], index: 6, kind: input, shape index: {}]
  %s7 = inlined_call_operand.hbm [shape: f32[2,128], index: 7, kind: output, shape index: {}]
  %s8 = sld [smem:[#allocation0]]
  $region46: #{fwd.1} parent=0
    _
  %s10 = ssub.s32 1, %s8
  %s11 = scalar_select 0, %s10, %s8
  $region1: #{fwd.1} parent=0
    #allocation2 [shape = 'u8[110592]{0}', space=vmem, size = 0x1b000, scoped, tag = 'input window, operand 3, single buffered']
    #allocation3 [shape = 's32[1]{0}', space=sflag, size = 0x4, scoped, tag = 'scoped memory for fwd.1']
    #allocation4 [shape = 's32[1]{0}', space=sflag, size = 0x4, scoped, tag = 'scoped memory for fwd.1']
    #allocation5 [shape = 'u8[262144]{0}', space=vmem, size = 0x40000, scoped, tag = 'input window, operand 5, single buffered']
    #allocation6 [shape = 's32[1]{0}', space=sflag, size = 0x4, scoped, tag = 'scoped memory for fwd.1']
    #allocation7 [shape = 'u8[1024]{0}', space=vmem, size = 0x400, scoped, tag = 'output window, operand 0, single buffered']
    %12 = vsyncpa [#allocation3], 0
    %13 = vsyncpa [#allocation6], 0
    %14 = vsyncpa [#allocation4], 0
    // Predicated region
    $region2: #{fwd.1} parent=1 // pred_check
      _
    $region3: #{fwd.1} parent=1 // pred_check_branch
      %16 = sbr.rel (0) target = $region5
    $region4: #{fwd.1} parent=1 // pred_region
      _
    $region5: #{fwd.1} parent=1 // pred_fallthru
      _
    // Predicated region
    $region6: #{fwd.1} parent=1 // pred_check
      _
    $region7: #{fwd.1} parent=1 // pred_check_branch
      %18 = sbr.rel (0) target = $region9
    $region8: #{fwd.1} parent=1 // pred_region
      _
    $region9: #{fwd.1} parent=1 // pred_fallthru
      _
    // Predicated region
    $region10: #{fwd.1} parent=1 // pred_check
      _
    $region11: #{fwd.1} parent=1 // pred_check_branch
      %20 = sbr.rel (0) target = $region13
    $region12: #{fwd.1} parent=1 // pred_region
      _
    $region13: #{fwd.1} parent=1 // pred_fallthru
      _
    // Predicated region
    $region14: #{fwd.1} parent=1 // pred_check
      _
    $region15: #{fwd.1} parent=1 // pred_check_branch
      %22 = sbr.rel (0) target = $region17
    $region16: #{fwd.1} parent=1 // pred_region
      %s24 = ssub.s32 3456, 3456
      %25 = vsyncadd [#allocation3], %s24
      %s26 = sshll.u32 [#allocation2], 4
      %s27 = int_to_ptr.vmem [resolvable:$true] %s26
      %32 = dma.hbm_to_vmem [thread:$0]  %s3, 3456, %s27, [#allocation3], 128, 128, 8
    $region17: #{fwd.1} parent=1 // pred_fallthru
      _
    // Predicated region
    $region18: #{fwd.1} parent=1 // pred_check
      _
    $region19: #{fwd.1} parent=1 // pred_check_branch
      %34 = sbr.rel (0) target = $region21
    $region20: #{fwd.1} parent=1 // pred_region
      _
    $region21: #{fwd.1} parent=1 // pred_fallthru
      _
    // Predicated region
    $region22: #{fwd.1} parent=1 // pred_check
      _
    $region23: #{fwd.1} parent=1 // pred_check_branch
      %36 = sbr.rel (0) target = $region25
    $region24: #{fwd.1} parent=1 // pred_region
      %s38 = ssub.s32 8192, 8192
      %39 = vsyncadd [#allocation6], %s38
      %s40 = sshll.u32 [#allocation5], 4
      %s41 = int_to_ptr.vmem [resolvable:$true] %s40
      %46 = dma.hbm_to_vmem [thread:$0]  %s5, 8192, %s41, [#allocation6], 1024, 1024, 64
    $region25: #{fwd.1} parent=1 // pred_fallthru
      _
    // Predicated region
    $region26: #{fwd.1} parent=1 // pred_check
      _
    $region27: #{fwd.1} parent=1 // pred_check_branch
      %48 = sbr.rel (0) target = $region29
    $region28: #{fwd.1} parent=1 // pred_region
      _
    $region29: #{fwd.1} parent=1 // pred_fallthru
      _
    // Predicated region
    $region30: #{fwd.1} parent=1 // pred_check
      _
    $region31: #{fwd.1} parent=1 // pred_check_branch
      %50 = sbr.rel (0) target = $region33
    $region32: #{fwd.1} parent=1 // pred_region
      %51 = dma.done [#allocation3], 3456
    $region33: #{fwd.1} parent=1 // pred_fallthru
      _
    // Predicated region
    $region34: #{fwd.1} parent=1 // pred_check
      _
    $region35: #{fwd.1} parent=1 // pred_check_branch
      %53 = sbr.rel (0) target = $region37
    $region36: #{fwd.1} parent=1 // pred_region
      %54 = dma.done [#allocation6], 8192
    $region37: #{fwd.1} parent=1 // pred_fallthru
      _
    %v56 = vld [vmem:[%s0] sm:$0xff]
    %v57 = vld [vmem:[%s0 + $0x8] sm:$0xff]
    %v58 = vld [vmem:[%s0 + $0x10] sm:$0x3]
    %v59 = vld [vmem:[%s0 + $0x18] sm:$0x3]
    %v60 = vld [vmem:[%s2] sm:$0xf]
    %v61 = vld [vmem:[%s2 + $0x4] sm:$0xf]
    %v62 = vld [vmem:[%s2 + $0x8] sm:$0xf]
    %v63 = vld [vmem:[%s2 + $0xc] sm:$0xf]
    %v64 = vld [vmem:[%s2 + $0x10] sm:$0xf]
    %v65 = vld [vmem:[%s2 + $0x14] sm:$0xf]
    %v66 = vld [vmem:[%s2 + $0x18] sm:$0xf]
    %v67 = vld [vmem:[%s2 + $0x1c] sm:$0xf]
    %v68 = vld [vmem:[%s2 + $0x20] sm:$0xf]
    %v69 = vld [vmem:[%s2 + $0x24] sm:$0xf]
    %v70 = vld [vmem:[%s2 + $0x28] sm:$0xf]
    %v71 = vld [vmem:[%s2 + $0x2c] sm:$0xf]
    %v72 = vld [vmem:[%s2 + $0x30] sm:$0xf]
    %v73 = vld [vmem:[%s2 + $0x34] sm:$0xf]
    %v74 = vld [vmem:[%s2 + $0x38] sm:$0xf]
    %v75 = vld [vmem:[%s2 + $0x3c] sm:$0xf]
    %v76 = vld [vmem:[%s2 + $0x40] sm:$0xf]
    %v77 = vld [vmem:[%s2 + $0x44] sm:$0xf]
    %v78 = vld [vmem:[%s2 + $0x48] sm:$0xf]
    %v79 = vld [vmem:[%s2 + $0x4c] sm:$0xf]
    %v80 = vld [vmem:[%s2 + $0x50] sm:$0xf]
    %v81 = vld [vmem:[%s2 + $0x54] sm:$0xf]
    %v82 = vld [vmem:[%s2 + $0x58] sm:$0xf]
    %v83 = vld [vmem:[%s2 + $0x5c] sm:$0xf]
    %v84 = vpack.c.bf16 %v58, %v56
    %v85 = vpack.c.bf16 %v59, %v57
    %v86 = vld [vmem:[#allocation2] sm:$0xff]
    %v87 = vld [vmem:[#allocation2 + $0x8] sm:$0x3]
    %v112 = vunpack.c.l.b16 %v60
    %v113 = vunpack.c.l.b16 %v61
    %v114 = vunpack.c.l.b16 %v62
    %v115 = vunpack.c.l.b16 %v63
    %v116 = vunpack.c.l.b16 %v64
    %v117 = vunpack.c.l.b16 %v65
    %v118 = vunpack.c.l.b16 %v66
    %v119 = vunpack.c.l.b16 %v67
    %v120 = vunpack.c.l.b16 %v68
    %v121 = vunpack.c.l.b16 %v69
    %v122 = vunpack.c.l.b16 %v70
    %v123 = vunpack.c.l.b16 %v71
    %v124 = vunpack.c.l.b16 %v72
    %v125 = vunpack.c.l.b16 %v73
    %v126 = vunpack.c.l.b16 %v74
    %v127 = vunpack.c.l.b16 %v75
    %v128 = vunpack.c.l.b16 %v76
    %v129 = vunpack.c.l.b16 %v77
    %v130 = vunpack.c.l.b16 %v78
    %v131 = vunpack.c.l.b16 %v79
    %v132 = vunpack.c.l.b16 %v80
    %v133 = vunpack.c.l.b16 %v81
    %v134 = vunpack.c.l.b16 %v82
    %v135 = vunpack.c.l.b16 %v83
    %v136 = vpack.c.b16 %v113, %v112
    %v137 = vpack.c.b16 %v115, %v114
    %v138 = vpack.c.b16 %v117, %v116
    %v139 = vpack.c.b16 %v119, %v118
    %v140 = vpack.c.b16 %v121, %v120
    %v141 = vpack.c.b16 %v123, %v122
    %v142 = vpack.c.b16 %v125, %v124
    %v143 = vpack.c.b16 %v127, %v126
    %v144 = vpack.c.b16 %v129, %v128
    %v145 = vpack.c.b16 %v131, %v130
    %v146 = vpack.c.b16 %v133, %v132
    %v147 = vpack.c.b16 %v135, %v134
    %vm160 = vcmask 523264
    %v162 = vsel %vm160, %v85, 0
    %164 = vmatprep.subr.bf16.mxu0 0
    %165 = vmatpush1.bf16.msra.mxu0 %v143
    %166 = vmatprep.subr.bf16.mxu0 0
    %167 = vmatpush1.bf16.msra.mxu0 %v142
    %168 = vmatprep.subr.bf16.mxu0 0
    %169 = vmatpush1.bf16.msra.mxu0 %v141
    %170 = vmatprep.subr.bf16.mxu0 0
    %171 = vmatpush1.bf16.msra.mxu0 %v140
    %172 = vmatprep.subr.bf16.mxu0 0
    %173 = vmatpush1.bf16.msra.mxu0 %v139
    %174 = vmatprep.subr.bf16.mxu0 0
    %175 = vmatpush1.bf16.msra.mxu0 %v138
    %176 = vmatprep.subr.bf16.mxu0 0
    %177 = vmatpush1.bf16.msra.mxu0 %v137
    %178 = vmatprep.subr.bf16.mxu0 0
    %179 = vmatpush1.bf16.msra.mxu0 %v136
    %180 = vmatprep.subr.bf16.mxu0 0
    %181 = vmatpush2.bf16.msra.mxu0 0
    %182 = vmatprep.subr.bf16.mxu0 0
    %183 = vmatpush2.bf16.msra.mxu0 0
    %184 = vmatprep.subr.bf16.mxu0 0
    %185 = vmatpush2.bf16.msra.mxu0 0
    %186 = vmatprep.subr.bf16.mxu0 0
    %187 = vmatpush2.bf16.msra.mxu0 0
    %188 = vmatprep.subr.bf16.mxu0 0
    %189 = vmatpush2.bf16.msra.mxu0 %v147
    %190 = vmatprep.subr.bf16.mxu0 0
    %191 = vmatpush2.bf16.msra.mxu0 %v146
    %192 = vmatprep.subr.bf16.mxu0 0
    %193 = vmatpush2.bf16.msra.mxu0 %v145
    %194 = vmatprep.subr.bf16.mxu0 0
    %195 = vmatpush2.bf16.msra.mxu0 %v144
    %196 = vmatprep.mubr.bf16.mxu0 %v162
    %197 = vmatmul.mubr.bf16.gmra.mxu0 %v84
    %v198 = vpop.f32.mrf.mxu0
    %v199 = vadd.f32 %v86, %v198
    %v200 = vpop.f32.mrf.mxu0
    %v201 = vpop.f32.mrf.mxu0
    %v202 = vadd.f32 %v87, %v201
    %v203 = vpop.f32.mrf.mxu0
    %204 = vdwg.mxu0
    %vm205 = vcmask 261120
    %v206 = vsel %vm205, %v199, 0.0
    %207 = vadd.xlane.f32.xlu0 %v206
    %v208 = vpop.xlane.xlu0 %207
    %vm209 = vcmask 254976
    %v210 = vsel %vm209, %v202, 0.0
    %211 = vadd.xlane.f32.xlu0 %v210
    %v212 = vpop.xlane.xlu0 %211
    %v213 = vrcp.pop 32.0
    %v214 = vmul.f32 %v208, %v213
    %v215 = vmul.f32 %v212, %v213
    %v216 = vsub.f32 %v199, %v214
    %v217 = vsub.f32 %v202, %v215
    %v218 = vmul.f32 %v216, %v216
    %v219 = vmul.f32 %v217, %v217
    %v220 = vsel %vm205, %v218, 0.0
    %221 = vadd.xlane.f32.xlu0 %v220
    %v222 = vpop.xlane.xlu0 %221
    %v223 = vsel %vm209, %v219, 0.0
    %224 = vadd.xlane.f32.xlu0 %v223
    %v225 = vpop.xlane.xlu0 %224
    %v226 = vmul.f32 %v222, %v213
    %v227 = vmul.f32 %v225, %v213
    %v228 = vadd.f32 %v226, 1e-12
    %v229 = vadd.f32 %v227, 1e-12
    %v230 = vrsqrt.pop %v228
    %v231 = vrsqrt.pop %v229
    %v232 = vmul.f32 %v216, %v230
    %v233 = vmul.f32 %v217, %v231
    %v234 = vld [vmem:[%s2 + $0x60] sm:$0xf]
    %v235 = vld [vmem:[%s2 + $0x64] sm:$0xf]
    %v236 = vld [vmem:[%s2 + $0x68] sm:$0xf]
    %v237 = vld [vmem:[%s2 + $0x6c] sm:$0xf]
    %v238 = vld [vmem:[#allocation2 + $0x10] sm:$0x1]
    %v239 = vld [vmem:[%s2 + $0x70] sm:$0xf]
    %v240 = vld [vmem:[%s2 + $0x74] sm:$0xf]
    %v241 = vld [vmem:[%s2 + $0x78] sm:$0xf]
    %v242 = vld [vmem:[%s2 + $0x7c] sm:$0xf]
    %v243 = vld [vmem:[#allocation2 + $0x18] sm:$0x1]
    %v244 = vpack.c.bf16 %v233, %v232
    %v245 = vlaneseq
    %v246 = vshrl.u32 %v245, 7
    %v247 = vsub.s32 0, %v246
    %v248 = vrot.slane %v238, %v247
    %v253 = vunpack.c.l.b16 %v234
    %v254 = vunpack.c.l.b16 %v235
    %v255 = vunpack.c.l.b16 %v236
    %v256 = vunpack.c.l.b16 %v237
    %v257 = vpack.c.b16 %v254, %v253
    %v258 = vpack.c.b16 %v256, %v255
    %v262 = vsel %vm205, %v244, 0
    %264 = vmatprep.subr.bf16.mxu0 0
    %265 = vmatpush1.bf16.msra.mxu0 0
    %266 = vmatprep.subr.bf16.mxu0 0
    %267 = vmatpush1.bf16.msra.mxu0 0
    %268 = vmatprep.subr.bf16.mxu0 0
    %269 = vmatpush1.bf16.msra.mxu0 0
    %270 = vmatprep.subr.bf16.mxu0 0
    %271 = vmatpush1.bf16.msra.mxu0 0
    %272 = vmatprep.subr.bf16.mxu0 0
    %273 = vmatpush1.bf16.msra.mxu0 0
    %274 = vmatprep.subr.bf16.mxu0 0
    %275 = vmatpush1.bf16.msra.mxu0 0
    %276 = vmatprep.subr.bf16.mxu0 0
    %277 = vmatpush1.bf16.msra.mxu0 %v258
    %278 = vmatprep.subr.bf16.mxu0 0
    %279 = vmatpush1.bf16.msra.mxu0 %v257
    %280 = vmatprep.subr.bf16.mxu0 0
    %281 = vmatpush2.bf16.msra.mxu0 0
    %282 = vmatprep.subr.bf16.mxu0 0
    %283 = vmatpush2.bf16.msra.mxu0 0
    %284 = vmatprep.subr.bf16.mxu0 0
    %285 = vmatpush2.bf16.msra.mxu0 0
    %286 = vmatprep.subr.bf16.mxu0 0
    %287 = vmatpush2.bf16.msra.mxu0 0
    %288 = vmatprep.subr.bf16.mxu0 0
    %289 = vmatpush2.bf16.msra.mxu0 0
    %290 = vmatprep.subr.bf16.mxu0 0
    %291 = vmatpush2.bf16.msra.mxu0 0
    %292 = vmatprep.subr.bf16.mxu0 0
    %293 = vmatpush2.bf16.msra.mxu0 0
    %294 = vmatprep.subr.bf16.mxu0 0
    %295 = vmatpush2.bf16.msra.mxu0 0
    %296 = vmatprep.mubr.bf16.mxu0 0
    %297 = vmatmul.mubr.bf16.gmra.mxu0 %v262
    %v298 = vpop.f32.mrf.mxu0
    %v299 = vadd.f32 %v248, %v298
    %v300 = vpop.f32.mrf.mxu0
    %v301 = vpop.f32.mrf.mxu0
    %v302 = vadd.f32 %v248, %v301
    %v303 = vpop.f32.mrf.mxu0
    %304 = vdwg.mxu0
    %v305 = vpack.c.bf16 %v299, %v299
    %307 = vrot.lane.b32.xlu0 %v305, 96
    %v308 = vpop.permute.xlu0 %307
    %vm309 = vcmask 64512
    %v311 = vsel %vm309, %v305, 0
    %v314 = vsel %vm309, %v308, 0
    %316 = vmatprep.subr.bf16.mxu0 0
    %317 = vmatpush1.bf16.xpose.msra.mxu0 0
    %318 = vmatprep.subr.bf16.mxu0 0
    %319 = vmatpush1.bf16.xpose.msra.mxu0 0
    %320 = vmatprep.subr.bf16.mxu0 0
    %321 = vmatpush1.bf16.xpose.msra.mxu0 0
    %322 = vmatprep.subr.bf16.mxu0 0
    %323 = vmatpush1.bf16.xpose.msra.mxu0 0
    %324 = vmatprep.subr.bf16.mxu0 0
    %325 = vmatpush1.bf16.xpose.msra.mxu0 0
    %326 = vmatprep.subr.bf16.mxu0 0
    %327 = vmatpush1.bf16.xpose.msra.mxu0 0
    %328 = vmatprep.subr.bf16.mxu0 0
    %329 = vmatpush1.bf16.xpose.msra.mxu0 0
    %330 = vmatprep.subr.bf16.mxu0 0
    %331 = vmatpush1.bf16.xpose.msra.mxu0 %v314
    %332 = vmatprep.subr.bf16.mxu0 0
    %333 = vmatpush2.bf16.xpose.msra.mxu0 0
    %334 = vmatprep.subr.bf16.mxu0 0
    %335 = vmatpush2.bf16.xpose.msra.mxu0 0
    %336 = vmatprep.subr.bf16.mxu0 0
    %337 = vmatpush2.bf16.xpose.msra.mxu0 0
    %338 = vmatprep.subr.bf16.mxu0 0
    %339 = vmatpush2.bf16.xpose.msra.mxu0 0
    %340 = vmatprep.subr.bf16.mxu0 0
    %341 = vmatpush2.bf16.xpose.msra.mxu0 0
    %342 = vmatprep.subr.bf16.mxu0 0
    %343 = vmatpush2.bf16.xpose.msra.mxu0 0
    %344 = vmatprep.subr.bf16.mxu0 0
    %345 = vmatpush2.bf16.xpose.msra.mxu0 0
    %346 = vmatprep.subr.bf16.mxu0 0
    %347 = vmatpush2.bf16.xpose.msra.mxu0 0
    %348 = vmatprep.mubr.bf16.mxu0 0
    %349 = vmatmul.mubr.bf16.gmra.mxu0 %v311
    %v350 = vpop.f32.mrf.mxu0
    %v351 = vadd.f32 0.0, %v350
    %v352 = vpop.f32.mrf.mxu0
    %v353 = vpop.f32.mrf.mxu0
    %v354 = vpop.f32.mrf.mxu0
    %355 = vdwg.mxu0
    %vm356 = vcmask 36864
    %v357 = vsel %vm356, %v351, -inf
    %358 = vmax.xlane.f32.xlu0 %v357
    %v359 = vpop.xlane.xlu0 %358
    %v360 = vsub.f32 %v351, %v359
    %v361 = vmul.f32 %v360, 1.442695
    %v362 = vpow.pop %v361
    %v363 = vsel %vm356, %v362, 0.0
    %364 = vadd.xlane.f32.xlu0 %v363
    %v365 = vpop.xlane.xlu0 %364
    %v366 = vrcp.pop %v365
    %v367 = vmul.f32 %v362, %v366
    %v368 = vpack.c.bf16 %v367, %v367
    %369 = vrot.lane.b32.xlu0 %v305, 64
    %v370 = vpop.permute.xlu0 %369
    %vm371 = vcmask 39936
    %v373 = vsel %vm371, %v368, 0
    %vm375 = vcmask 1041408
    %vm376 = vcmask 1042432
    %v377 = vsel %vm375, 4294967295, 65535
    %v378 = vsel %vm376, %v377, 0
    %v380 = vand.u32 %v370, %v378
    %382 = vmatprep.subr.bf16.mxu0 0
    %383 = vmatpush1.bf16.msra.mxu0 0
    %384 = vmatprep.subr.bf16.mxu0 0
    %385 = vmatpush1.bf16.msra.mxu0 0
    %386 = vmatprep.subr.bf16.mxu0 0
    %387 = vmatpush1.bf16.msra.mxu0 0
    %388 = vmatprep.subr.bf16.mxu0 0
    %389 = vmatpush1.bf16.msra.mxu0 0
    %390 = vmatprep.subr.bf16.mxu0 0
    %391 = vmatpush1.bf16.msra.mxu0 0
    %392 = vmatprep.subr.bf16.mxu0 0
    %393 = vmatpush1.bf16.msra.mxu0 0
    %394 = vmatprep.subr.bf16.mxu0 0
    %395 = vmatpush1.bf16.msra.mxu0 0
    %396 = vmatprep.subr.bf16.mxu0 0
    %397 = vmatpush1.bf16.msra.mxu0 %v380
    %398 = vmatprep.subr.bf16.mxu0 0
    %399 = vmatpush2.bf16.msra.mxu0 0
    %400 = vmatprep.subr.bf16.mxu0 0
    %401 = vmatpush2.bf16.msra.mxu0 0
    %402 = vmatprep.subr.bf16.mxu0 0
    %403 = vmatpush2.bf16.msra.mxu0 0
    %404 = vmatprep.subr.bf16.mxu0 0
    %405 = vmatpush2.bf16.msra.mxu0 0
    %406 = vmatprep.subr.bf16.mxu0 0
    %407 = vmatpush2.bf16.msra.mxu0 0
    %408 = vmatprep.subr.bf16.mxu0 0
    %409 = vmatpush2.bf16.msra.mxu0 0
    %410 = vmatprep.subr.bf16.mxu0 0
    %411 = vmatpush2.bf16.msra.mxu0 0
    %412 = vmatprep.subr.bf16.mxu0 0
    %413 = vmatpush2.bf16.msra.mxu0 0
    %414 = vmatprep.mubr.bf16.mxu0 0
    %415 = vmatmul.mubr.bf16.gmra.mxu0 %v373
    %v416 = vpop.f32.mrf.mxu0
    %v417 = vadd.f32 0.0, %v416
    %v418 = vpop.f32.mrf.mxu0
    %v419 = vpop.f32.mrf.mxu0
    %v420 = vpop.f32.mrf.mxu0
    %421 = vdwg.mxu0
    %422 = vrot.lane.b32.xlu0 %v305, 120
    %v423 = vpop.permute.xlu0 %422
    %424 = vrot.lane.b32.xlu0 %v305, 88
    %v425 = vpop.permute.xlu0 %424
    %v427 = vsel %vm309, %v423, 0
    %v430 = vsel %vm309, %v425, 0
    %432 = vmatprep.subr.bf16.mxu0 0
    %433 = vmatpush1.bf16.xpose.msra.mxu0 0
    %434 = vmatprep.subr.bf16.mxu0 0
    %435 = vmatpush1.bf16.xpose.msra.mxu0 0
    %436 = vmatprep.subr.bf16.mxu0 0
    %437 = vmatpush1.bf16.xpose.msra.mxu0 0
    %438 = vmatprep.subr.bf16.mxu0 0
    %439 = vmatpush1.bf16.xpose.msra.mxu0 0
    %440 = vmatprep.subr.bf16.mxu0 0
    %441 = vmatpush1.bf16.xpose.msra.mxu0 0
    %442 = vmatprep.subr.bf16.mxu0 0
    %443 = vmatpush1.bf16.xpose.msra.mxu0 0
    %444 = vmatprep.subr.bf16.mxu0 0
    %445 = vmatpush1.bf16.xpose.msra.mxu0 0
    %446 = vmatprep.subr.bf16.mxu0 0
    %447 = vmatpush1.bf16.xpose.msra.mxu0 %v430
    %448 = vmatprep.subr.bf16.mxu0 0
    %449 = vmatpush2.bf16.xpose.msra.mxu0 0
    %450 = vmatprep.subr.bf16.mxu0 0
    %451 = vmatpush2.bf16.xpose.msra.mxu0 0
    %452 = vmatprep.subr.bf16.mxu0 0
    %453 = vmatpush2.bf16.xpose.msra.mxu0 0
    %454 = vmatprep.subr.bf16.mxu0 0
    %455 = vmatpush2.bf16.xpose.msra.mxu0 0
    %456 = vmatprep.subr.bf16.mxu0 0
    %457 = vmatpush2.bf16.xpose.msra.mxu0 0
    %458 = vmatprep.subr.bf16.mxu0 0
    %459 = vmatpush2.bf16.xpose.msra.mxu0 0
    %460 = vmatprep.subr.bf16.mxu0 0
    %461 = vmatpush2.bf16.xpose.msra.mxu0 0
    %462 = vmatprep.subr.bf16.mxu0 0
    %463 = vmatpush2.bf16.xpose.msra.mxu0 0
    %464 = vmatprep.mubr.bf16.mxu0 0
    %465 = vmatmul.mubr.bf16.gmra.mxu0 %v427
    %v466 = vpop.f32.mrf.mxu0
    %v467 = vadd.f32 0.0, %v466
    %v468 = vpop.f32.mrf.mxu0
    %v469 = vpop.f32.mrf.mxu0
    %v470 = vpop.f32.mrf.mxu0
    %471 = vdwg.mxu0
    %v472 = vsel %vm356, %v467, -inf
    %473 = vmax.xlane.f32.xlu0 %v472
    %v474 = vpop.xlane.xlu0 %473
    %v475 = vsub.f32 %v467, %v474
    %v476 = vmul.f32 %v475, 1.442695
    %v477 = vpow.pop %v476
    %v478 = vsel %vm356, %v477, 0.0
    %479 = vadd.xlane.f32.xlu0 %v478
    %v480 = vpop.xlane.xlu0 %479
    %v481 = vrcp.pop %v480
    %v482 = vmul.f32 %v477, %v481
    %v483 = vpack.c.bf16 %v482, %v482
    %484 = vrot.lane.b32.xlu0 %v305, 56
    %v485 = vpop.permute.xlu0 %484
    %v487 = vsel %vm371, %v483, 0
    %v490 = vand.u32 %v485, %v378
    %492 = vmatprep.subr.bf16.mxu0 0
    %493 = vmatpush1.bf16.msra.mxu0 0
    %494 = vmatprep.subr.bf16.mxu0 0
    %495 = vmatpush1.bf16.msra.mxu0 0
    %496 = vmatprep.subr.bf16.mxu0 0
    %497 = vmatpush1.bf16.msra.mxu0 0
    %498 = vmatprep.subr.bf16.mxu0 0
    %499 = vmatpush1.bf16.msra.mxu0 0
    %500 = vmatprep.subr.bf16.mxu0 0
    %501 = vmatpush1.bf16.msra.mxu0 0
    %502 = vmatprep.subr.bf16.mxu0 0
    %503 = vmatpush1.bf16.msra.mxu0 0
    %504 = vmatprep.subr.bf16.mxu0 0
    %505 = vmatpush1.bf16.msra.mxu0 0
    %506 = vmatprep.subr.bf16.mxu0 0
    %507 = vmatpush1.bf16.msra.mxu0 %v490
    %508 = vmatprep.subr.bf16.mxu0 0
    %509 = vmatpush2.bf16.msra.mxu0 0
    %510 = vmatprep.subr.bf16.mxu0 0
    %511 = vmatpush2.bf16.msra.mxu0 0
    %512 = vmatprep.subr.bf16.mxu0 0
    %513 = vmatpush2.bf16.msra.mxu0 0
    %514 = vmatprep.subr.bf16.mxu0 0
    %515 = vmatpush2.bf16.msra.mxu0 0
    %516 = vmatprep.subr.bf16.mxu0 0
    %517 = vmatpush2.bf16.msra.mxu0 0
    %518 = vmatprep.subr.bf16.mxu0 0
    %519 = vmatpush2.bf16.msra.mxu0 0
    %520 = vmatprep.subr.bf16.mxu0 0
    %521 = vmatpush2.bf16.msra.mxu0 0
    %522 = vmatprep.subr.bf16.mxu0 0
    %523 = vmatpush2.bf16.msra.mxu0 0
    %524 = vmatprep.mubr.bf16.mxu0 0
    %525 = vmatmul.mubr.bf16.gmra.mxu0 %v487
    %v526 = vpop.f32.mrf.mxu0
    %v527 = vadd.f32 0.0, %v526
    %v528 = vpop.f32.mrf.mxu0
    %v529 = vpop.f32.mrf.mxu0
    %v530 = vpop.f32.mrf.mxu0
    %531 = vdwg.mxu0
    %532 = vrot.lane.b32.xlu0 %v305, 112
    %v533 = vpop.permute.xlu0 %532
    %534 = vrot.lane.b32.xlu0 %v305, 80
    %v535 = vpop.permute.xlu0 %534
    %v537 = vsel %vm309, %v533, 0
    %v540 = vsel %vm309, %v535, 0
    %542 = vmatprep.subr.bf16.mxu0 0
    %543 = vmatpush1.bf16.xpose.msra.mxu0 0
    %544 = vmatprep.subr.bf16.mxu0 0
    %545 = vmatpush1.bf16.xpose.msra.mxu0 0
    %546 = vmatprep.subr.bf16.mxu0 0
    %547 = vmatpush1.bf16.xpose.msra.mxu0 0
    %548 = vmatprep.subr.bf16.mxu0 0
    %549 = vmatpush1.bf16.xpose.msra.mxu0 0
    %550 = vmatprep.subr.bf16.mxu0 0
    %551 = vmatpush1.bf16.xpose.msra.mxu0 0
    %552 = vmatprep.subr.bf16.mxu0 0
    %553 = vmatpush1.bf16.xpose.msra.mxu0 0
    %554 = vmatprep.subr.bf16.mxu0 0
    %555 = vmatpush1.bf16.xpose.msra.mxu0 0
    %556 = vmatprep.subr.bf16.mxu0 0
    %557 = vmatpush1.bf16.xpose.msra.mxu0 %v540
    %558 = vmatprep.subr.bf16.mxu0 0
    %559 = vmatpush2.bf16.xpose.msra.mxu0 0
    %560 = vmatprep.subr.bf16.mxu0 0
    %561 = vmatpush2.bf16.xpose.msra.mxu0 0
    %562 = vmatprep.subr.bf16.mxu0 0
    %563 = vmatpush2.bf16.xpose.msra.mxu0 0
    %564 = vmatprep.subr.bf16.mxu0 0
    %565 = vmatpush2.bf16.xpose.msra.mxu0 0
    %566 = vmatprep.subr.bf16.mxu0 0
    %567 = vmatpush2.bf16.xpose.msra.mxu0 0
    %568 = vmatprep.subr.bf16.mxu0 0
    %569 = vmatpush2.bf16.xpose.msra.mxu0 0
    %570 = vmatprep.subr.bf16.mxu0 0
    %571 = vmatpush2.bf16.xpose.msra.mxu0 0
    %572 = vmatprep.subr.bf16.mxu0 0
    %573 = vmatpush2.bf16.xpose.msra.mxu0 0
    %574 = vmatprep.mubr.bf16.mxu0 0
    %575 = vmatmul.mubr.bf16.gmra.mxu0 %v537
    %v576 = vpop.f32.mrf.mxu0
    %v577 = vadd.f32 0.0, %v576
    %v578 = vpop.f32.mrf.mxu0
    %v579 = vpop.f32.mrf.mxu0
    %v580 = vpop.f32.mrf.mxu0
    %581 = vdwg.mxu0
    %v582 = vsel %vm356, %v577, -inf
    %583 = vmax.xlane.f32.xlu0 %v582
    %v584 = vpop.xlane.xlu0 %583
    %v585 = vsub.f32 %v577, %v584
    %v586 = vmul.f32 %v585, 1.442695
    %v587 = vpow.pop %v586
    %v588 = vsel %vm356, %v587, 0.0
    %589 = vadd.xlane.f32.xlu0 %v588
    %v590 = vpop.xlane.xlu0 %589
    %v591 = vrcp.pop %v590
    %v592 = vmul.f32 %v587, %v591
    %v593 = vpack.c.bf16 %v592, %v592
    %594 = vrot.lane.b32.xlu0 %v305, 48
    %v595 = vpop.permute.xlu0 %594
    %v597 = vsel %vm371, %v593, 0
    %v600 = vand.u32 %v595, %v378
    %602 = vmatprep.subr.bf16.mxu0 0
    %603 = vmatpush1.bf16.msra.mxu0 0
    %604 = vmatprep.subr.bf16.mxu0 0
    %605 = vmatpush1.bf16.msra.mxu0 0
    %606 = vmatprep.subr.bf16.mxu0 0
    %607 = vmatpush1.bf16.msra.mxu0 0
    %608 = vmatprep.subr.bf16.mxu0 0
    %609 = vmatpush1.bf16.msra.mxu0 0
    %610 = vmatprep.subr.bf16.mxu0 0
    %611 = vmatpush1.bf16.msra.mxu0 0
    %612 = vmatprep.subr.bf16.mxu0 0
    %613 = vmatpush1.bf16.msra.mxu0 0
    %614 = vmatprep.subr.bf16.mxu0 0
    %615 = vmatpush1.bf16.msra.mxu0 0
    %616 = vmatprep.subr.bf16.mxu0 0
    %617 = vmatpush1.bf16.msra.mxu0 %v600
    %618 = vmatprep.subr.bf16.mxu0 0
    %619 = vmatpush2.bf16.msra.mxu0 0
    %620 = vmatprep.subr.bf16.mxu0 0
    %621 = vmatpush2.bf16.msra.mxu0 0
    %622 = vmatprep.subr.bf16.mxu0 0
    %623 = vmatpush2.bf16.msra.mxu0 0
    %624 = vmatprep.subr.bf16.mxu0 0
    %625 = vmatpush2.bf16.msra.mxu0 0
    %626 = vmatprep.subr.bf16.mxu0 0
    %627 = vmatpush2.bf16.msra.mxu0 0
    %628 = vmatprep.subr.bf16.mxu0 0
    %629 = vmatpush2.bf16.msra.mxu0 0
    %630 = vmatprep.subr.bf16.mxu0 0
    %631 = vmatpush2.bf16.msra.mxu0 0
    %632 = vmatprep.subr.bf16.mxu0 0
    %633 = vmatpush2.bf16.msra.mxu0 0
    %634 = vmatprep.mubr.bf16.mxu0 0
    %635 = vmatmul.mubr.bf16.gmra.mxu0 %v597
    %v636 = vpop.f32.mrf.mxu0
    %v637 = vadd.f32 0.0, %v636
    %v638 = vpop.f32.mrf.mxu0
    %v639 = vpop.f32.mrf.mxu0
    %v640 = vpop.f32.mrf.mxu0
    %641 = vdwg.mxu0
    %642 = vrot.lane.b32.xlu0 %v305, 104
    %v643 = vpop.permute.xlu0 %642
    %644 = vrot.lane.b32.xlu0 %v305, 72
    %v645 = vpop.permute.xlu0 %644
    %v647 = vsel %vm309, %v643, 0
    %v650 = vsel %vm309, %v645, 0
    %652 = vmatprep.subr.bf16.mxu0 0
    %653 = vmatpush1.bf16.xpose.msra.mxu0 0
    %654 = vmatprep.subr.bf16.mxu0 0
    %655 = vmatpush1.bf16.xpose.msra.mxu0 0
    %656 = vmatprep.subr.bf16.mxu0 0
    %657 = vmatpush1.bf16.xpose.msra.mxu0 0
    %658 = vmatprep.subr.bf16.mxu0 0
    %659 = vmatpush1.bf16.xpose.msra.mxu0 0
    %660 = vmatprep.subr.bf16.mxu0 0
    %661 = vmatpush1.bf16.xpose.msra.mxu0 0
    %662 = vmatprep.subr.bf16.mxu0 0
    %663 = vmatpush1.bf16.xpose.msra.mxu0 0
    %664 = vmatprep.subr.bf16.mxu0 0
    %665 = vmatpush1.bf16.xpose.msra.mxu0 0
    %666 = vmatprep.subr.bf16.mxu0 0
    %667 = vmatpush1.bf16.xpose.msra.mxu0 %v650
    %668 = vmatprep.subr.bf16.mxu0 0
    %669 = vmatpush2.bf16.xpose.msra.mxu0 0
    %670 = vmatprep.subr.bf16.mxu0 0
    %671 = vmatpush2.bf16.xpose.msra.mxu0 0
    %672 = vmatprep.subr.bf16.mxu0 0
    %673 = vmatpush2.bf16.xpose.msra.mxu0 0
    %674 = vmatprep.subr.bf16.mxu0 0
    %675 = vmatpush2.bf16.xpose.msra.mxu0 0
    %676 = vmatprep.subr.bf16.mxu0 0
    %677 = vmatpush2.bf16.xpose.msra.mxu0 0
    %678 = vmatprep.subr.bf16.mxu0 0
    %679 = vmatpush2.bf16.xpose.msra.mxu0 0
    %680 = vmatprep.subr.bf16.mxu0 0
    %681 = vmatpush2.bf16.xpose.msra.mxu0 0
    %682 = vmatprep.subr.bf16.mxu0 0
    %683 = vmatpush2.bf16.xpose.msra.mxu0 0
    %684 = vmatprep.mubr.bf16.mxu0 0
    %685 = vmatmul.mubr.bf16.gmra.mxu0 %v647
    %v686 = vpop.f32.mrf.mxu0
    %v687 = vadd.f32 0.0, %v686
    %v688 = vpop.f32.mrf.mxu0
    %v689 = vpop.f32.mrf.mxu0
    %v690 = vpop.f32.mrf.mxu0
    %691 = vdwg.mxu0
    %v692 = vsel %vm356, %v687, -inf
    %693 = vmax.xlane.f32.xlu0 %v692
    %v694 = vpop.xlane.xlu0 %693
    %v695 = vsub.f32 %v687, %v694
    %v696 = vmul.f32 %v695, 1.442695
    %v697 = vpow.pop %v696
    %v698 = vsel %vm356, %v697, 0.0
    %699 = vadd.xlane.f32.xlu0 %v698
    %v700 = vpop.xlane.xlu0 %699
    %v701 = vrcp.pop %v700
    %v702 = vmul.f32 %v697, %v701
    %v703 = vpack.c.bf16 %v702, %v702
    %704 = vrot.lane.b32.xlu0 %v305, 40
    %v705 = vpop.permute.xlu0 %704
    %v707 = vsel %vm371, %v703, 0
    %v710 = vand.u32 %v705, %v378
    %712 = vmatprep.subr.bf16.mxu0 0
    %713 = vmatpush1.bf16.msra.mxu0 0
    %714 = vmatprep.subr.bf16.mxu0 0
    %715 = vmatpush1.bf16.msra.mxu0 0
    %716 = vmatprep.subr.bf16.mxu0 0
    %717 = vmatpush1.bf16.msra.mxu0 0
    %718 = vmatprep.subr.bf16.mxu0 0
    %719 = vmatpush1.bf16.msra.mxu0 0
    %720 = vmatprep.subr.bf16.mxu0 0
    %721 = vmatpush1.bf16.msra.mxu0 0
    %722 = vmatprep.subr.bf16.mxu0 0
    %723 = vmatpush1.bf16.msra.mxu0 0
    %724 = vmatprep.subr.bf16.mxu0 0
    %725 = vmatpush1.bf16.msra.mxu0 0
    %726 = vmatprep.subr.bf16.mxu0 0
    %727 = vmatpush1.bf16.msra.mxu0 %v710
    %728 = vmatprep.subr.bf16.mxu0 0
    %729 = vmatpush2.bf16.msra.mxu0 0
    %730 = vmatprep.subr.bf16.mxu0 0
    %731 = vmatpush2.bf16.msra.mxu0 0
    %732 = vmatprep.subr.bf16.mxu0 0
    %733 = vmatpush2.bf16.msra.mxu0 0
    %734 = vmatprep.subr.bf16.mxu0 0
    %735 = vmatpush2.bf16.msra.mxu0 0
    %736 = vmatprep.subr.bf16.mxu0 0
    %737 = vmatpush2.bf16.msra.mxu0 0
    %738 = vmatprep.subr.bf16.mxu0 0
    %739 = vmatpush2.bf16.msra.mxu0 0
    %740 = vmatprep.subr.bf16.mxu0 0
    %741 = vmatpush2.bf16.msra.mxu0 0
    %742 = vmatprep.subr.bf16.mxu0 0
    %743 = vmatpush2.bf16.msra.mxu0 0
    %744 = vmatprep.mubr.bf16.mxu0 0
    %745 = vmatmul.mubr.bf16.gmra.mxu0 %v707
    %v746 = vpop.f32.mrf.mxu0
    %v747 = vadd.f32 0.0, %v746
    %v748 = vpop.f32.mrf.mxu0
    %v749 = vpop.f32.mrf.mxu0
    %v750 = vpop.f32.mrf.mxu0
    %751 = vdwg.mxu0
    %753 = vrot.lane.b32.xlu0 %v527, 8
    %v754 = vpop.permute.xlu0 %753
    %757 = vrot.lane.b32.xlu0 %v637, 16
    %v758 = vpop.permute.xlu0 %757
    %761 = vrot.lane.b32.xlu0 %v747, 24
    %v762 = vpop.permute.xlu0 %761
    %v764 = vsel %vm309, %v417, %v754
    %vm765 = vcmask 130048
    %v766 = vsel %vm765, %v764, %v758
    %vm767 = vcmask 195584
    %v768 = vsel %vm767, %v766, %v762
    %v769 = vpack.c.bf16 %v302, %v299
    %v771 = vshrl.u32 %v769, 16
    %v773 = vrot.slane %v771, 2
    %v774 = vshll.u32 %v769, 16
    %v776 = vrot.slane %v774, 3
    %v777 = vor.u32 %v773, %v776
    %778 = vrot.lane.b32.xlu0 %v777, 96
    %v779 = vpop.permute.xlu0 %778
    %v781 = vsel %vm309, %v777, 0
    %v784 = vsel %vm309, %v779, 0
    %786 = vmatprep.subr.bf16.mxu0 0
    %787 = vmatpush1.bf16.xpose.msra.mxu0 0
    %788 = vmatprep.subr.bf16.mxu0 0
    %789 = vmatpush1.bf16.xpose.msra.mxu0 0
    %790 = vmatprep.subr.bf16.mxu0 0
    %791 = vmatpush1.bf16.xpose.msra.mxu0 0
    %792 = vmatprep.subr.bf16.mxu0 0
    %793 = vmatpush1.bf16.xpose.msra.mxu0 0
    %794 = vmatprep.subr.bf16.mxu0 0
    %795 = vmatpush1.bf16.xpose.msra.mxu0 0
    %796 = vmatprep.subr.bf16.mxu0 0
    %797 = vmatpush1.bf16.xpose.msra.mxu0 0
    %798 = vmatprep.subr.bf16.mxu0 0
    %799 = vmatpush1.bf16.xpose.msra.mxu0 0
    %800 = vmatprep.subr.bf16.mxu0 0
    %801 = vmatpush1.bf16.xpose.msra.mxu0 %v784
    %802 = vmatprep.subr.bf16.mxu0 0
    %803 = vmatpush2.bf16.xpose.msra.mxu0 0
    %804 = vmatprep.subr.bf16.mxu0 0
    %805 = vmatpush2.bf16.xpose.msra.mxu0 0
    %806 = vmatprep.subr.bf16.mxu0 0
    %807 = vmatpush2.bf16.xpose.msra.mxu0 0
    %808 = vmatprep.subr.bf16.mxu0 0
    %809 = vmatpush2.bf16.xpose.msra.mxu0 0
    %810 = vmatprep.subr.bf16.mxu0 0
    %811 = vmatpush2.bf16.xpose.msra.mxu0 0
    %812 = vmatprep.subr.bf16.mxu0 0
    %813 = vmatpush2.bf16.xpose.msra.mxu0 0
    %814 = vmatprep.subr.bf16.mxu0 0
    %815 = vmatpush2.bf16.xpose.msra.mxu0 0
    %816 = vmatprep.subr.bf16.mxu0 0
    %817 = vmatpush2.bf16.xpose.msra.mxu0 0
    %818 = vmatprep.mubr.bf16.mxu0 0
    %819 = vmatmul.mubr.bf16.gmra.mxu0 %v781
    %v820 = vpop.f32.mrf.mxu0
    %v821 = vadd.f32 0.0, %v820
    %v822 = vpop.f32.mrf.mxu0
    %v823 = vpop.f32.mrf.mxu0
    %v824 = vpop.f32.mrf.mxu0
    %825 = vdwg.mxu0
    %v826 = vsel %vm356, %v821, -inf
    %827 = vmax.xlane.f32.xlu0 %v826
    %v828 = vpop.xlane.xlu0 %827
    %v829 = vsub.f32 %v821, %v828
    %v830 = vmul.f32 %v829, 1.442695
    %v831 = vpow.pop %v830
    %v832 = vsel %vm356, %v831, 0.0
    %833 = vadd.xlane.f32.xlu0 %v832
    %v834 = vpop.xlane.xlu0 %833
    %v835 = vrcp.pop %v834
    %v836 = vmul.f32 %v831, %v835
    %v837 = vpack.c.bf16 %v836, %v836
    %838 = vrot.lane.b32.xlu0 %v777, 64
    %v839 = vpop.permute.xlu0 %838
    %v841 = vsel %vm371, %v837, 0
    %v844 = vand.u32 %v839, %v378
    %846 = vmatprep.subr.bf16.mxu0 0
    %847 = vmatpush1.bf16.msra.mxu0 0
    %848 = vmatprep.subr.bf16.mxu0 0
    %849 = vmatpush1.bf16.msra.mxu0 0
    %850 = vmatprep.subr.bf16.mxu0 0
    %851 = vmatpush1.bf16.msra.mxu0 0
    %852 = vmatprep.subr.bf16.mxu0 0
    %853 = vmatpush1.bf16.msra.mxu0 0
    %854 = vmatprep.subr.bf16.mxu0 0
    %855 = vmatpush1.bf16.msra.mxu0 0
    %856 = vmatprep.subr.bf16.mxu0 0
    %857 = vmatpush1.bf16.msra.mxu0 0
    %858 = vmatprep.subr.bf16.mxu0 0
    %859 = vmatpush1.bf16.msra.mxu0 0
    %860 = vmatprep.subr.bf16.mxu0 0
    %861 = vmatpush1.bf16.msra.mxu0 %v844
    %862 = vmatprep.subr.bf16.mxu0 0
    %863 = vmatpush2.bf16.msra.mxu0 0
    %864 = vmatprep.subr.bf16.mxu0 0
    %865 = vmatpush2.bf16.msra.mxu0 0
    %866 = vmatprep.subr.bf16.mxu0 0
    %867 = vmatpush2.bf16.msra.mxu0 0
    %868 = vmatprep.subr.bf16.mxu0 0
    %869 = vmatpush2.bf16.msra.mxu0 0
    %870 = vmatprep.subr.bf16.mxu0 0
    %871 = vmatpush2.bf16.msra.mxu0 0
    %872 = vmatprep.subr.bf16.mxu0 0
    %873 = vmatpush2.bf16.msra.mxu0 0
    %874 = vmatprep.subr.bf16.mxu0 0
    %875 = vmatpush2.bf16.msra.mxu0 0
    %876 = vmatprep.subr.bf16.mxu0 0
    %877 = vmatpush2.bf16.msra.mxu0 0
    %878 = vmatprep.mubr.bf16.mxu0 0
    %879 = vmatmul.mubr.bf16.gmra.mxu0 %v841
    %v880 = vpop.f32.mrf.mxu0
    %v881 = vadd.f32 0.0, %v880
    %v882 = vpop.f32.mrf.mxu0
    %v883 = vpop.f32.mrf.mxu0
    %v884 = vpop.f32.mrf.mxu0
    %885 = vdwg.mxu0
    %886 = vrot.lane.b32.xlu0 %v777, 120
    %v887 = vpop.permute.xlu0 %886
    %888 = vrot.lane.b32.xlu0 %v777, 88
    %v889 = vpop.permute.xlu0 %888
    %v891 = vsel %vm309, %v887, 0
    %v894 = vsel %vm309, %v889, 0
    %896 = vmatprep.subr.bf16.mxu0 0
    %897 = vmatpush1.bf16.xpose.msra.mxu0 0
    %898 = vmatprep.subr.bf16.mxu0 0
    %899 = vmatpush1.bf16.xpose.msra.mxu0 0
    %900 = vmatprep.subr.bf16.mxu0 0
    %901 = vmatpush1.bf16.xpose.msra.mxu0 0
    %902 = vmatprep.subr.bf16.mxu0 0
    %903 = vmatpush1.bf16.xpose.msra.mxu0 0
    %904 = vmatprep.subr.bf16.mxu0 0
    %905 = vmatpush1.bf16.xpose.msra.mxu0 0
    %906 = vmatprep.subr.bf16.mxu0 0
    %907 = vmatpush1.bf16.xpose.msra.mxu0 0
    %908 = vmatprep.subr.bf16.mxu0 0
    %909 = vmatpush1.bf16.xpose.msra.mxu0 0
    %910 = vmatprep.subr.bf16.mxu0 0
    %911 = vmatpush1.bf16.xpose.msra.mxu0 %v894
    %912 = vmatprep.subr.bf16.mxu0 0
    %913 = vmatpush2.bf16.xpose.msra.mxu0 0
    %914 = vmatprep.subr.bf16.mxu0 0
    %915 = vmatpush2.bf16.xpose.msra.mxu0 0
    %916 = vmatprep.subr.bf16.mxu0 0
    %917 = vmatpush2.bf16.xpose.msra.mxu0 0
    %918 = vmatprep.subr.bf16.mxu0 0
    %919 = vmatpush2.bf16.xpose.msra.mxu0 0
    %920 = vmatprep.subr.bf16.mxu0 0
    %921 = vmatpush2.bf16.xpose.msra.mxu0 0
    %922 = vmatprep.subr.bf16.mxu0 0
    %923 = vmatpush2.bf16.xpose.msra.mxu0 0
    %924 = vmatprep.subr.bf16.mxu0 0
    %925 = vmatpush2.bf16.xpose.msra.mxu0 0
    %926 = vmatprep.subr.bf16.mxu0 0
    %927 = vmatpush2.bf16.xpose.msra.mxu0 0
    %928 = vmatprep.mubr.bf16.mxu0 0
    %929 = vmatmul.mubr.bf16.gmra.mxu0 %v891
    %v930 = vpop.f32.mrf.mxu0
    %v931 = vadd.f32 0.0, %v930
    %v932 = vpop.f32.mrf.mxu0
    %v933 = vpop.f32.mrf.mxu0
    %v934 = vpop.f32.mrf.mxu0
    %935 = vdwg.mxu0
    %v936 = vsel %vm356, %v931, -inf
    %937 = vmax.xlane.f32.xlu0 %v936
    %v938 = vpop.xlane.xlu0 %937
    %v939 = vsub.f32 %v931, %v938
    %v940 = vmul.f32 %v939, 1.442695
    %v941 = vpow.pop %v940
    %v942 = vsel %vm356, %v941, 0.0
    %943 = vadd.xlane.f32.xlu0 %v942
    %v944 = vpop.xlane.xlu0 %943
    %v945 = vrcp.pop %v944
    %v946 = vmul.f32 %v941, %v945
    %v947 = vpack.c.bf16 %v946, %v946
    %948 = vrot.lane.b32.xlu0 %v777, 56
    %v949 = vpop.permute.xlu0 %948
    %v951 = vsel %vm371, %v947, 0
    %v954 = vand.u32 %v949, %v378
    %956 = vmatprep.subr.bf16.mxu0 0
    %957 = vmatpush1.bf16.msra.mxu0 0
    %958 = vmatprep.subr.bf16.mxu0 0
    %959 = vmatpush1.bf16.msra.mxu0 0
    %960 = vmatprep.subr.bf16.mxu0 0
    %961 = vmatpush1.bf16.msra.mxu0 0
    %962 = vmatprep.subr.bf16.mxu0 0
    %963 = vmatpush1.bf16.msra.mxu0 0
    %964 = vmatprep.subr.bf16.mxu0 0
    %965 = vmatpush1.bf16.msra.mxu0 0
    %966 = vmatprep.subr.bf16.mxu0 0
    %967 = vmatpush1.bf16.msra.mxu0 0
    %968 = vmatprep.subr.bf16.mxu0 0
    %969 = vmatpush1.bf16.msra.mxu0 0
    %970 = vmatprep.subr.bf16.mxu0 0
    %971 = vmatpush1.bf16.msra.mxu0 %v954
    %972 = vmatprep.subr.bf16.mxu0 0
    %973 = vmatpush2.bf16.msra.mxu0 0
    %974 = vmatprep.subr.bf16.mxu0 0
    %975 = vmatpush2.bf16.msra.mxu0 0
    %976 = vmatprep.subr.bf16.mxu0 0
    %977 = vmatpush2.bf16.msra.mxu0 0
    %978 = vmatprep.subr.bf16.mxu0 0
    %979 = vmatpush2.bf16.msra.mxu0 0
    %980 = vmatprep.subr.bf16.mxu0 0
    %981 = vmatpush2.bf16.msra.mxu0 0
    %982 = vmatprep.subr.bf16.mxu0 0
    %983 = vmatpush2.bf16.msra.mxu0 0
    %984 = vmatprep.subr.bf16.mxu0 0
    %985 = vmatpush2.bf16.msra.mxu0 0
    %986 = vmatprep.subr.bf16.mxu0 0
    %987 = vmatpush2.bf16.msra.mxu0 0
    %988 = vmatprep.mubr.bf16.mxu0 0
    %989 = vmatmul.mubr.bf16.gmra.mxu0 %v951
    %v990 = vpop.f32.mrf.mxu0
    %v991 = vadd.f32 0.0, %v990
    %v992 = vpop.f32.mrf.mxu0
    %v993 = vpop.f32.mrf.mxu0
    %v994 = vpop.f32.mrf.mxu0
    %995 = vdwg.mxu0
    %996 = vrot.lane.b32.xlu0 %v777, 112
    %v997 = vpop.permute.xlu0 %996
    %998 = vrot.lane.b32.xlu0 %v777, 80
    %v999 = vpop.permute.xlu0 %998
    %v1001 = vsel %vm309, %v997, 0
    %v1004 = vsel %vm309, %v999, 0
    %1006 = vmatprep.subr.bf16.mxu0 0
    %1007 = vmatpush1.bf16.xpose.msra.mxu0 0
    %1008 = vmatprep.subr.bf16.mxu0 0
    %1009 = vmatpush1.bf16.xpose.msra.mxu0 0
    %1010 = vmatprep.subr.bf16.mxu0 0
    %1011 = vmatpush1.bf16.xpose.msra.mxu0 0
    %1012 = vmatprep.subr.bf16.mxu0 0
    %1013 = vmatpush1.bf16.xpose.msra.mxu0 0
    %1014 = vmatprep.subr.bf16.mxu0 0
    %1015 = vmatpush1.bf16.xpose.msra.mxu0 0
    %1016 = vmatprep.subr.bf16.mxu0 0
    %1017 = vmatpush1.bf16.xpose.msra.mxu0 0
    %1018 = vmatprep.subr.bf16.mxu0 0
    %1019 = vmatpush1.bf16.xpose.msra.mxu0 0
    %1020 = vmatprep.subr.bf16.mxu0 0
    %1021 = vmatpush1.bf16.xpose.msra.mxu0 %v1004
    %1022 = vmatprep.subr.bf16.mxu0 0
    %1023 = vmatpush2.bf16.xpose.msra.mxu0 0
    %1024 = vmatprep.subr.bf16.mxu0 0
    %1025 = vmatpush2.bf16.xpose.msra.mxu0 0
    %1026 = vmatprep.subr.bf16.mxu0 0
    %1027 = vmatpush2.bf16.xpose.msra.mxu0 0
    %1028 = vmatprep.subr.bf16.mxu0 0
    %1029 = vmatpush2.bf16.xpose.msra.mxu0 0
    %1030 = vmatprep.subr.bf16.mxu0 0
    %1031 = vmatpush2.bf16.xpose.msra.mxu0 0
    %1032 = vmatprep.subr.bf16.mxu0 0
    %1033 = vmatpush2.bf16.xpose.msra.mxu0 0
    %1034 = vmatprep.subr.bf16.mxu0 0
    %1035 = vmatpush2.bf16.xpose.msra.mxu0 0
    %1036 = vmatprep.subr.bf16.mxu0 0
    %1037 = vmatpush2.bf16.xpose.msra.mxu0 0
    %1038 = vmatprep.mubr.bf16.mxu0 0
    %1039 = vmatmul.mubr.bf16.gmra.mxu0 %v1001
    %v1040 = vpop.f32.mrf.mxu0
    %v1041 = vadd.f32 0.0, %v1040
    %v1042 = vpop.f32.mrf.mxu0
    %v1043 = vpop.f32.mrf.mxu0
    %v1044 = vpop.f32.mrf.mxu0
    %1045 = vdwg.mxu0
    %v1046 = vsel %vm356, %v1041, -inf
    %1047 = vmax.xlane.f32.xlu0 %v1046
    %v1048 = vpop.xlane.xlu0 %1047
    %v1049 = vsub.f32 %v1041, %v1048
    %v1050 = vmul.f32 %v1049, 1.442695
    %v1051 = vpow.pop %v1050
    %v1052 = vsel %vm356, %v1051, 0.0
    %1053 = vadd.xlane.f32.xlu0 %v1052
    %v1054 = vpop.xlane.xlu0 %1053
    %v1055 = vrcp.pop %v1054
    %v1056 = vmul.f32 %v1051, %v1055
    %v1057 = vpack.c.bf16 %v1056, %v1056
    %1058 = vrot.lane.b32.xlu0 %v777, 48
    %v1059 = vpop.permute.xlu0 %1058
    %v1061 = vsel %vm371, %v1057, 0
    %v1064 = vand.u32 %v1059, %v378
    %1066 = vmatprep.subr.bf16.mxu0 0
    %1067 = vmatpush1.bf16.msra.mxu0 0
    %1068 = vmatprep.subr.bf16.mxu0 0
    %1069 = vmatpush1.bf16.msra.mxu0 0
    %1070 = vmatprep.subr.bf16.mxu0 0
    %1071 = vmatpush1.bf16.msra.mxu0 0
    %1072 = vmatprep.subr.bf16.mxu0 0
    %1073 = vmatpush1.bf16.msra.mxu0 0
    %1074 = vmatprep.subr.bf16.mxu0 0
    %1075 = vmatpush1.bf16.msra.mxu0 0
    %1076 = vmatprep.subr.bf16.mxu0 0
    %1077 = vmatpush1.bf16.msra.mxu0 0
    %1078 = vmatprep.subr.bf16.mxu0 0
    %1079 = vmatpush1.bf16.msra.mxu0 0
    %1080 = vmatprep.subr.bf16.mxu0 0
    %1081 = vmatpush1.bf16.msra.mxu0 %v1064
    %1082 = vmatprep.subr.bf16.mxu0 0
    %1083 = vmatpush2.bf16.msra.mxu0 0
    %1084 = vmatprep.subr.bf16.mxu0 0
    %1085 = vmatpush2.bf16.msra.mxu0 0
    %1086 = vmatprep.subr.bf16.mxu0 0
    %1087 = vmatpush2.bf16.msra.mxu0 0
    %1088 = vmatprep.subr.bf16.mxu0 0
    %1089 = vmatpush2.bf16.msra.mxu0 0
    %1090 = vmatprep.subr.bf16.mxu0 0
    %1091 = vmatpush2.bf16.msra.mxu0 0
    %1092 = vmatprep.subr.bf16.mxu0 0
    %1093 = vmatpush2.bf16.msra.mxu0 0
    %1094 = vmatprep.subr.bf16.mxu0 0
    %1095 = vmatpush2.bf16.msra.mxu0 0
    %1096 = vmatprep.subr.bf16.mxu0 0
    %1097 = vmatpush2.bf16.msra.mxu0 0
    %1098 = vmatprep.mubr.bf16.mxu0 0
    %1099 = vmatmul.mubr.bf16.gmra.mxu0 %v1061
    %v1100 = vpop.f32.mrf.mxu0
    %v1101 = vadd.f32 0.0, %v1100
    %v1102 = vpop.f32.mrf.mxu0
    %v1103 = vpop.f32.mrf.mxu0
    %v1104 = vpop.f32.mrf.mxu0
    %1105 = vdwg.mxu0
    %1106 = vrot.lane.b32.xlu0 %v777, 104
    %v1107 = vpop.permute.xlu0 %1106
    %1108 = vrot.lane.b32.xlu0 %v777, 72
    %v1109 = vpop.permute.xlu0 %1108
    %v1111 = vsel %vm309, %v1107, 0
    %v1114 = vsel %vm309, %v1109, 0
    %1116 = vmatprep.subr.bf16.mxu0 0
    %1117 = vmatpush1.bf16.xpose.msra.mxu0 0
    %1118 = vmatprep.subr.bf16.mxu0 0
    %1119 = vmatpush1.bf16.xpose.msra.mxu0 0
    %1120 = vmatprep.subr.bf16.mxu0 0
    %1121 = vmatpush1.bf16.xpose.msra.mxu0 0
    %1122 = vmatprep.subr.bf16.mxu0 0
    %1123 = vmatpush1.bf16.xpose.msra.mxu0 0
    %1124 = vmatprep.subr.bf16.mxu0 0
    %1125 = vmatpush1.bf16.xpose.msra.mxu0 0
    %1126 = vmatprep.subr.bf16.mxu0 0
    %1127 = vmatpush1.bf16.xpose.msra.mxu0 0
    %1128 = vmatprep.subr.bf16.mxu0 0
    %1129 = vmatpush1.bf16.xpose.msra.mxu0 0
    %1130 = vmatprep.subr.bf16.mxu0 0
    %1131 = vmatpush1.bf16.xpose.msra.mxu0 %v1114
    %1132 = vmatprep.subr.bf16.mxu0 0
    %1133 = vmatpush2.bf16.xpose.msra.mxu0 0
    %1134 = vmatprep.subr.bf16.mxu0 0
    %1135 = vmatpush2.bf16.xpose.msra.mxu0 0
    %1136 = vmatprep.subr.bf16.mxu0 0
    %1137 = vmatpush2.bf16.xpose.msra.mxu0 0
    %1138 = vmatprep.subr.bf16.mxu0 0
    %1139 = vmatpush2.bf16.xpose.msra.mxu0 0
    %1140 = vmatprep.subr.bf16.mxu0 0
    %1141 = vmatpush2.bf16.xpose.msra.mxu0 0
    %1142 = vmatprep.subr.bf16.mxu0 0
    %1143 = vmatpush2.bf16.xpose.msra.mxu0 0
    %1144 = vmatprep.subr.bf16.mxu0 0
    %1145 = vmatpush2.bf16.xpose.msra.mxu0 0
    %1146 = vmatprep.subr.bf16.mxu0 0
    %1147 = vmatpush2.bf16.xpose.msra.mxu0 0
    %1148 = vmatprep.mubr.bf16.mxu0 0
    %1149 = vmatmul.mubr.bf16.gmra.mxu0 %v1111
    %v1150 = vpop.f32.mrf.mxu0
    %v1151 = vadd.f32 0.0, %v1150
    %v1152 = vpop.f32.mrf.mxu0
    %v1153 = vpop.f32.mrf.mxu0
    %v1154 = vpop.f32.mrf.mxu0
    %1155 = vdwg.mxu0
    %v1156 = vsel %vm356, %v1151, -inf
    %1157 = vmax.xlane.f32.xlu0 %v1156
    %v1158 = vpop.xlane.xlu0 %1157
    %v1159 = vsub.f32 %v1151, %v1158
    %v1160 = vmul.f32 %v1159, 1.442695
    %v1161 = vpow.pop %v1160
    %v1162 = vsel %vm356, %v1161, 0.0
    %1163 = vadd.xlane.f32.xlu0 %v1162
    %v1164 = vpop.xlane.xlu0 %1163
    %v1165 = vrcp.pop %v1164
    %v1166 = vmul.f32 %v1161, %v1165
    %v1167 = vpack.c.bf16 %v1166, %v1166
    %1168 = vrot.lane.b32.xlu0 %v777, 40
    %v1169 = vpop.permute.xlu0 %1168
    %v1171 = vsel %vm371, %v1167, 0
    %v1174 = vand.u32 %v1169, %v378
    %1176 = vmatprep.subr.bf16.mxu0 0
    %1177 = vmatpush1.bf16.msra.mxu0 0
    %1178 = vmatprep.subr.bf16.mxu0 0
    %1179 = vmatpush1.bf16.msra.mxu0 0
    %1180 = vmatprep.subr.bf16.mxu0 0
    %1181 = vmatpush1.bf16.msra.mxu0 0
    %1182 = vmatprep.subr.bf16.mxu0 0
    %1183 = vmatpush1.bf16.msra.mxu0 0
    %1184 = vmatprep.subr.bf16.mxu0 0
    %1185 = vmatpush1.bf16.msra.mxu0 0
    %1186 = vmatprep.subr.bf16.mxu0 0
    %1187 = vmatpush1.bf16.msra.mxu0 0
    %1188 = vmatprep.subr.bf16.mxu0 0
    %1189 = vmatpush1.bf16.msra.mxu0 0
    %1190 = vmatprep.subr.bf16.mxu0 0
    %1191 = vmatpush1.bf16.msra.mxu0 %v1174
    %1192 = vmatprep.subr.bf16.mxu0 0
    %1193 = vmatpush2.bf16.msra.mxu0 0
    %1194 = vmatprep.subr.bf16.mxu0 0
    %1195 = vmatpush2.bf16.msra.mxu0 0
    %1196 = vmatprep.subr.bf16.mxu0 0
    %1197 = vmatpush2.bf16.msra.mxu0 0
    %1198 = vmatprep.subr.bf16.mxu0 0
    %1199 = vmatpush2.bf16.msra.mxu0 0
    %1200 = vmatprep.subr.bf16.mxu0 0
    %1201 = vmatpush2.bf16.msra.mxu0 0
    %1202 = vmatprep.subr.bf16.mxu0 0
    %1203 = vmatpush2.bf16.msra.mxu0 0
    %1204 = vmatprep.subr.bf16.mxu0 0
    %1205 = vmatpush2.bf16.msra.mxu0 0
    %1206 = vmatprep.subr.bf16.mxu0 0
    %1207 = vmatpush2.bf16.msra.mxu0 0
    %1208 = vmatprep.mubr.bf16.mxu0 0
    %1209 = vmatmul.mubr.bf16.gmra.mxu0 %v1171
    %v1210 = vpop.f32.mrf.mxu0
    %v1211 = vadd.f32 0.0, %v1210
    %v1212 = vpop.f32.mrf.mxu0
    %v1213 = vpop.f32.mrf.mxu0
    %v1214 = vpop.f32.mrf.mxu0
    %1215 = vdwg.mxu0
    %1217 = vrot.lane.b32.xlu0 %v991, 8
    %v1218 = vpop.permute.xlu0 %1217
    %1221 = vrot.lane.b32.xlu0 %v1101, 16
    %v1222 = vpop.permute.xlu0 %1221
    %1225 = vrot.lane.b32.xlu0 %v1211, 24
    %v1226 = vpop.permute.xlu0 %1225
    %v1228 = vsel %vm309, %v881, %v1218
    %v1229 = vsel %vm765, %v1228, %v1222
    %v1230 = vsel %vm767, %v1229, %v1226
    %v1232 = vrot.slane %v1230, 3
    %vm1234 = vcmask 1044480
    %v1235 = vsel %vm1234, %v768, %v1232
    %v1236 = vpack.c.bf16 %v1232, %v1235
    %v1237 = vlaneseq
    %v1238 = vshrl.u32 %v1237, 7
    %v1239 = vsub.s32 0, %v1238
    %v1240 = vrot.slane %v243, %v1239
    %v1245 = vunpack.c.l.b16 %v239
    %v1246 = vunpack.c.l.b16 %v240
    %v1247 = vunpack.c.l.b16 %v241
    %v1248 = vunpack.c.l.b16 %v242
    %v1249 = vpack.c.b16 %v1246, %v1245
    %v1250 = vpack.c.b16 %v1248, %v1247
    %v1254 = vsel %vm205, %v1236, 0
    %1256 = vmatprep.subr.bf16.mxu0 0
    %1257 = vmatpush1.bf16.msra.mxu0 0
    %1258 = vmatprep.subr.bf16.mxu0 0
    %1259 = vmatpush1.bf16.msra.mxu0 0
    %1260 = vmatprep.subr.bf16.mxu0 0
    %1261 = vmatpush1.bf16.msra.mxu0 0
    %1262 = vmatprep.subr.bf16.mxu0 0
    %1263 = vmatpush1.bf16.msra.mxu0 0
    %1264 = vmatprep.subr.bf16.mxu0 0
    %1265 = vmatpush1.bf16.msra.mxu0 0
    %1266 = vmatprep.subr.bf16.mxu0 0
    %1267 = vmatpush1.bf16.msra.mxu0 0
    %1268 = vmatprep.subr.bf16.mxu0 0
    %1269 = vmatpush1.bf16.msra.mxu0 %v1250
    %1270 = vmatprep.subr.bf16.mxu0 0
    %1271 = vmatpush1.bf16.msra.mxu0 %v1249
    %1272 = vmatprep.subr.bf16.mxu0 0
    %1273 = vmatpush2.bf16.msra.mxu0 0
    %1274 = vmatprep.subr.bf16.mxu0 0
    %1275 = vmatpush2.bf16.msra.mxu0 0
    %1276 = vmatprep.subr.bf16.mxu0 0
    %1277 = vmatpush2.bf16.msra.mxu0 0
    %1278 = vmatprep.subr.bf16.mxu0 0
    %1279 = vmatpush2.bf16.msra.mxu0 0
    %1280 = vmatprep.subr.bf16.mxu0 0
    %1281 = vmatpush2.bf16.msra.mxu0 0
    %1282 = vmatprep.subr.bf16.mxu0 0
    %1283 = vmatpush2.bf16.msra.mxu0 0
    %1284 = vmatprep.subr.bf16.mxu0 0
    %1285 = vmatpush2.bf16.msra.mxu0 0
    %1286 = vmatprep.subr.bf16.mxu0 0
    %1287 = vmatpush2.bf16.msra.mxu0 0
    %1288 = vmatprep.mubr.bf16.mxu0 0
    %1289 = vmatmul.mubr.bf16.gmra.mxu0 %v1254
    %v1290 = vpop.f32.mrf.mxu0
    %v1291 = vadd.f32 %v1240, %v1290
    %v1292 = vpop.f32.mrf.mxu0
    %v1293 = vpop.f32.mrf.mxu0
    %v1294 = vadd.f32 %v1240, %v1293
    %v1295 = vpop.f32.mrf.mxu0
    %1296 = vdwg.mxu0
    %v1297 = vadd.f32 %v199, %v1291
    %v1298 = vadd.f32 %v202, %v1294
    %v1299 = vsel %vm205, %v1297, 0.0
    %1300 = vadd.xlane.f32.xlu0 %v1299
    %v1301 = vpop.xlane.xlu0 %1300
    %v1302 = vsel %vm209, %v1298, 0.0
    %1303 = vadd.xlane.f32.xlu0 %v1302
    %v1304 = vpop.xlane.xlu0 %1303
    %v1305 = vmul.f32 %v1301, %v213
    %v1306 = vmul.f32 %v1304, %v213
    %v1307 = vsub.f32 %v1297, %v1305
    %v1308 = vsub.f32 %v1298, %v1306
    %v1309 = vmul.f32 %v1307, %v1307
    %v1310 = vmul.f32 %v1308, %v1308
    %v1311 = vsel %vm205, %v1309, 0.0
    %1312 = vadd.xlane.f32.xlu0 %v1311
    %v1313 = vpop.xlane.xlu0 %1312
    %v1314 = vsel %vm209, %v1310, 0.0
    %1315 = vadd.xlane.f32.xlu0 %v1314
    %v1316 = vpop.xlane.xlu0 %1315
    %v1317 = vmul.f32 %v1313, %v213
    %v1318 = vmul.f32 %v1316, %v213
    %v1319 = vadd.f32 %v1317, 1e-12
    %v1320 = vadd.f32 %v1318, 1e-12
    %v1321 = vrsqrt.pop %v1319
    %v1322 = vrsqrt.pop %v1320
    %v1323 = vmul.f32 %v1307, %v1321
    %v1324 = vmul.f32 %v1308, %v1322
    %v1325 = vld [vmem:[%s2 + $0x80] sm:$0xf]
    %v1326 = vld [vmem:[%s2 + $0x84] sm:$0xf]
    %v1327 = vld [vmem:[%s2 + $0x88] sm:$0xf]
    %v1328 = vld [vmem:[%s2 + $0x8c] sm:$0xf]
    %v1329 = vpack.c.bf16 %v1324, %v1323
    %v1330 = vld [vmem:[#allocation2 + $0x20] sm:$0x1]
    %v1331 = vlaneseq
    %v1332 = vshrl.u32 %v1331, 7
    %v1333 = vsub.s32 0, %v1332
    %v1334 = vrot.slane %v1330, %v1333
    %v1339 = vunpack.c.l.b16 %v1325
    %v1340 = vunpack.c.l.b16 %v1326
    %v1341 = vunpack.c.l.b16 %v1327
    %v1342 = vunpack.c.l.b16 %v1328
    %v1343 = vpack.c.b16 %v1340, %v1339
    %v1344 = vpack.c.b16 %v1342, %v1341
    %v1348 = vsel %vm205, %v1329, 0
    %1350 = vmatprep.subr.bf16.mxu0 0
    %1351 = vmatpush1.bf16.msra.mxu0 0
    %1352 = vmatprep.subr.bf16.mxu0 0
    %1353 = vmatpush1.bf16.msra.mxu0 0
    %1354 = vmatprep.subr.bf16.mxu0 0
    %1355 = vmatpush1.bf16.msra.mxu0 0
    %1356 = vmatprep.subr.bf16.mxu0 0
    %1357 = vmatpush1.bf16.msra.mxu0 0
    %1358 = vmatprep.subr.bf16.mxu0 0
    %1359 = vmatpush1.bf16.msra.mxu0 0
    %1360 = vmatprep.subr.bf16.mxu0 0
    %1361 = vmatpush1.bf16.msra.mxu0 0
    %1362 = vmatprep.subr.bf16.mxu0 0
    %1363 = vmatpush1.bf16.msra.mxu0 %v1344
    %1364 = vmatprep.subr.bf16.mxu0 0
    %1365 = vmatpush1.bf16.msra.mxu0 %v1343
    %1366 = vmatprep.subr.bf16.mxu0 0
    %1367 = vmatpush2.bf16.msra.mxu0 0
    %1368 = vmatprep.subr.bf16.mxu0 0
    %1369 = vmatpush2.bf16.msra.mxu0 0
    %1370 = vmatprep.subr.bf16.mxu0 0
    %1371 = vmatpush2.bf16.msra.mxu0 0
    %1372 = vmatprep.subr.bf16.mxu0 0
    %1373 = vmatpush2.bf16.msra.mxu0 0
    %1374 = vmatprep.subr.bf16.mxu0 0
    %1375 = vmatpush2.bf16.msra.mxu0 0
    %1376 = vmatprep.subr.bf16.mxu0 0
    %1377 = vmatpush2.bf16.msra.mxu0 0
    %1378 = vmatprep.subr.bf16.mxu0 0
    %1379 = vmatpush2.bf16.msra.mxu0 0
    %1380 = vmatprep.subr.bf16.mxu0 0
    %1381 = vmatpush2.bf16.msra.mxu0 0
    %1382 = vmatprep.mubr.bf16.mxu0 0
    %1383 = vmatmul.mubr.bf16.gmra.mxu0 %v1348
    %v1384 = vpop.f32.mrf.mxu0
    %v1385 = vadd.f32 %v1334, %v1384
    %v1386 = vpop.f32.mrf.mxu0
    %v1387 = vpop.f32.mrf.mxu0
    %v1388 = vadd.f32 %v1334, %v1387
    %v1389 = vpop.f32.mrf.mxu0
    %1390 = vdwg.mxu0
    %v1391 = vmul.f32 %v1385, 0.5
    %v1392 = vmul.f32 %v1388, 0.5
    %v1393 = vmul.f32 %v1385, 0.044715
    %v1394 = vmul.f32 %v1388, 0.044715
    %v1395 = vmul.f32 %v1393, %v1385
    %v1396 = vmul.f32 %v1394, %v1388
    %v1397 = vmul.f32 %v1395, %v1385
    %v1398 = vmul.f32 %v1396, %v1388
    %v1399 = vadd.f32 %v1385, %v1397
    %v1400 = vadd.f32 %v1388, %v1398
    %v1401 = vmul.f32 %v1399, 0.7978846
    %v1402 = vmul.f32 %v1400, 0.7978846
    %v1403 = vtanh.pop %v1401
    %v1404 = vtanh.pop %v1402
    %v1405 = vadd.f32 %v1403, 1.0
    %v1406 = vadd.f32 %v1404, 1.0
    %v1407 = vmul.f32 %v1391, %v1405
    %v1408 = vmul.f32 %v1392, %v1406
    %v1409 = vld [vmem:[%s2 + $0x90] sm:$0xf]
    %v1410 = vld [vmem:[%s2 + $0x94] sm:$0xf]
    %v1411 = vld [vmem:[%s2 + $0x98] sm:$0xf]
    %v1412 = vld [vmem:[%s2 + $0x9c] sm:$0xf]
    %v1413 = vld [vmem:[%s2 + $0xa0] sm:$0xf]
    %v1414 = vld [vmem:[%s2 + $0xa4] sm:$0xf]
    %v1415 = vld [vmem:[%s2 + $0xa8] sm:$0xf]
    %v1416 = vld [vmem:[%s2 + $0xac] sm:$0xf]
    %v1417 = vpack.c.bf16 %v1408, %v1407
    %v1426 = vunpack.c.l.b16 %v1409
    %v1427 = vunpack.c.l.b16 %v1410
    %v1428 = vunpack.c.l.b16 %v1411
    %v1429 = vunpack.c.l.b16 %v1412
    %v1430 = vunpack.c.l.b16 %v1413
    %v1431 = vunpack.c.l.b16 %v1414
    %v1432 = vunpack.c.l.b16 %v1415
    %v1433 = vunpack.c.l.b16 %v1416
    %v1434 = vpack.c.b16 %v1427, %v1426
    %v1435 = vpack.c.b16 %v1429, %v1428
    %v1436 = vpack.c.b16 %v1431, %v1430
    %v1437 = vpack.c.b16 %v1433, %v1432
    %v1443 = vsel %vm160, %v1417, 0
    %1445 = vmatprep.subr.bf16.mxu0 0
    %1446 = vmatpush1.bf16.msra.mxu0 0
    %1447 = vmatprep.subr.bf16.mxu0 0
    %1448 = vmatpush1.bf16.msra.mxu0 0
    %1449 = vmatprep.subr.bf16.mxu0 0
    %1450 = vmatpush1.bf16.msra.mxu0 0
    %1451 = vmatprep.subr.bf16.mxu0 0
    %1452 = vmatpush1.bf16.msra.mxu0 0
    %1453 = vmatprep.subr.bf16.mxu0 0
    %1454 = vmatpush1.bf16.msra.mxu0 %v1437
    %1455 = vmatprep.subr.bf16.mxu0 0
    %1456 = vmatpush1.bf16.msra.mxu0 %v1436
    %1457 = vmatprep.subr.bf16.mxu0 0
    %1458 = vmatpush1.bf16.msra.mxu0 %v1435
    %1459 = vmatprep.subr.bf16.mxu0 0
    %1460 = vmatpush1.bf16.msra.mxu0 %v1434
    %1461 = vmatprep.subr.bf16.mxu0 0
    %1462 = vmatpush2.bf16.msra.mxu0 0
    %1463 = vmatprep.subr.bf16.mxu0 0
    %1464 = vmatpush2.bf16.msra.mxu0 0
    %1465 = vmatprep.subr.bf16.mxu0 0
    %1466 = vmatpush2.bf16.msra.mxu0 0
    %1467 = vmatprep.subr.bf16.mxu0 0
    %1468 = vmatpush2.bf16.msra.mxu0 0
    %1469 = vmatprep.subr.bf16.mxu0 0
    %1470 = vmatpush2.bf16.msra.mxu0 0
    %1471 = vmatprep.subr.bf16.mxu0 0
    %1472 = vmatpush2.bf16.msra.mxu0 0
    %1473 = vmatprep.subr.bf16.mxu0 0
    %1474 = vmatpush2.bf16.msra.mxu0 0
    %1475 = vmatprep.subr.bf16.mxu0 0
    %1476 = vmatpush2.bf16.msra.mxu0 0
    %1477 = vmatprep.mubr.bf16.mxu0 0
    %1478 = vmatmul.mubr.bf16.gmra.mxu0 %v1443
    %v1479 = vpop.f32.mrf.mxu0
    %v1480 = vadd.f32 0.0, %v1479
    %v1481 = vpop.f32.mrf.mxu0
    %v1482 = vpop.f32.mrf.mxu0
    %v1483 = vadd.f32 0.0, %v1482
    %v1484 = vpop.f32.mrf.mxu0
    %1485 = vdwg.mxu0
    %v1486 = vadd.f32 %v1297, %v1480
    %v1487 = vadd.f32 %v1298, %v1483
    %v1488 = vld [vmem:[#allocation2 + $0x28] sm:$0x1]
    %v1489 = vlaneseq
    %v1490 = vshrl.u32 %v1489, 7
    %v1491 = vsub.s32 0, %v1490
    %v1492 = vrot.slane %v1488, %v1491
    %v1493 = vadd.f32 %v1486, %v1492
    %v1494 = vadd.f32 %v1487, %v1492
    %v1495 = vsel %vm205, %v1493, 0.0
    %1496 = vadd.xlane.f32.xlu0 %v1495
    %v1497 = vpop.xlane.xlu0 %1496
    %v1498 = vsel %vm209, %v1494, 0.0
    %1499 = vadd.xlane.f32.xlu0 %v1498
    %v1500 = vpop.xlane.xlu0 %1499
    %v1501 = vmul.f32 %v1497, %v213
    %v1502 = vmul.f32 %v1500, %v213
    %v1503 = vsub.f32 %v1493, %v1501
    %v1504 = vsub.f32 %v1494, %v1502
    %v1505 = vmul.f32 %v1503, %v1503
    %v1506 = vmul.f32 %v1504, %v1504
    %v1507 = vsel %vm205, %v1505, 0.0
    %1508 = vadd.xlane.f32.xlu0 %v1507
    %v1509 = vpop.xlane.xlu0 %1508
    %v1510 = vsel %vm209, %v1506, 0.0
    %1511 = vadd.xlane.f32.xlu0 %v1510
    %v1512 = vpop.xlane.xlu0 %1511
    %v1513 = vmul.f32 %v1509, %v213
    %v1514 = vmul.f32 %v1512, %v213
    %v1515 = vadd.f32 %v1513, 1e-12
    %v1516 = vadd.f32 %v1514, 1e-12
    %v1517 = vrsqrt.pop %v1515
    %v1518 = vrsqrt.pop %v1516
    %v1519 = vmul.f32 %v1503, %v1517
    %v1520 = vmul.f32 %v1504, %v1518
    %v1521 = vld [vmem:[%s2 + $0xb0] sm:$0xf]
    %v1522 = vld [vmem:[%s2 + $0xb4] sm:$0xf]
    %v1523 = vld [vmem:[%s2 + $0xb8] sm:$0xf]
    %v1524 = vld [vmem:[%s2 + $0xbc] sm:$0xf]
    %v1525 = vld [vmem:[#allocation2 + $0x30] sm:$0x1]
    %v1526 = vld [vmem:[%s2 + $0xc0] sm:$0xf]
    %v1527 = vld [vmem:[%s2 + $0xc4] sm:$0xf]
    %v1528 = vld [vmem:[%s2 + $0xc8] sm:$0xf]
    %v1529 = vld [vmem:[%s2 + $0xcc] sm:$0xf]
    %v1530 = vld [vmem:[#allocation2 + $0x38] sm:$0x1]
    %v1531 = vpack.c.bf16 %v1520, %v1519
    %v1532 = vlaneseq
    %v1533 = vshrl.u32 %v1532, 7
    %v1534 = vsub.s32 0, %v1533
    %v1535 = vrot.slane %v1525, %v1534
    %v1540 = vunpack.c.l.b16 %v1521
    %v1541 = vunpack.c.l.b16 %v1522
    %v1542 = vunpack.c.l.b16 %v1523
    %v1543 = vunpack.c.l.b16 %v1524
    %v1544 = vpack.c.b16 %v1541, %v1540
    %v1545 = vpack.c.b16 %v1543, %v1542
    %v1549 = vsel %vm205, %v1531, 0
    %1551 = vmatprep.subr.bf16.mxu0 0
    %1552 = vmatpush1.bf16.msra.mxu0 0
    %1553 = vmatprep.subr.bf16.mxu0 0
    %1554 = vmatpush1.bf16.msra.mxu0 0
    %1555 = vmatprep.subr.bf16.mxu0 0
    %1556 = vmatpush1.bf16.msra.mxu0 0
    %1557 = vmatprep.subr.bf16.mxu0 0
    %1558 = vmatpush1.bf16.msra.mxu0 0
    %1559 = vmatprep.subr.bf16.mxu0 0
    %1560 = vmatpush1.bf16.msra.mxu0 0
    %1561 = vmatprep.subr.bf16.mxu0 0
    %1562 = vmatpush1.bf16.msra.mxu0 0
    %1563 = vmatprep.subr.bf16.mxu0 0
    %1564 = vmatpush1.bf16.msra.mxu0 %v1545
    %1565 = vmatprep.subr.bf16.mxu0 0
    %1566 = vmatpush1.bf16.msra.mxu0 %v1544
    %1567 = vmatprep.subr.bf16.mxu0 0
    %1568 = vmatpush2.bf16.msra.mxu0 0
    %1569 = vmatprep.subr.bf16.mxu0 0
    %1570 = vmatpush2.bf16.msra.mxu0 0
    %1571 = vmatprep.subr.bf16.mxu0 0
    %1572 = vmatpush2.bf16.msra.mxu0 0
    %1573 = vmatprep.subr.bf16.mxu0 0
    %1574 = vmatpush2.bf16.msra.mxu0 0
    %1575 = vmatprep.subr.bf16.mxu0 0
    %1576 = vmatpush2.bf16.msra.mxu0 0
    %1577 = vmatprep.subr.bf16.mxu0 0
    %1578 = vmatpush2.bf16.msra.mxu0 0
    %1579 = vmatprep.subr.bf16.mxu0 0
    %1580 = vmatpush2.bf16.msra.mxu0 0
    %1581 = vmatprep.subr.bf16.mxu0 0
    %1582 = vmatpush2.bf16.msra.mxu0 0
    %1583 = vmatprep.mubr.bf16.mxu0 0
    %1584 = vmatmul.mubr.bf16.gmra.mxu0 %v1549
    %v1585 = vpop.f32.mrf.mxu0
    %v1586 = vadd.f32 %v1535, %v1585
    %v1587 = vpop.f32.mrf.mxu0
    %v1588 = vpop.f32.mrf.mxu0
    %v1589 = vadd.f32 %v1535, %v1588
    %v1590 = vpop.f32.mrf.mxu0
    %1591 = vdwg.mxu0
    %v1592 = vpack.c.bf16 %v1586, %v1586
    %1594 = vrot.lane.b32.xlu0 %v1592, 96
    %v1595 = vpop.permute.xlu0 %1594
    %v1597 = vsel %vm309, %v1592, 0
    %v1600 = vsel %vm309, %v1595, 0
    %1602 = vmatprep.subr.bf16.mxu0 0
    %1603 = vmatpush1.bf16.xpose.msra.mxu0 0
    %1604 = vmatprep.subr.bf16.mxu0 0
    %1605 = vmatpush1.bf16.xpose.msra.mxu0 0
    %1606 = vmatprep.subr.bf16.mxu0 0
    %1607 = vmatpush1.bf16.xpose.msra.mxu0 0
    %1608 = vmatprep.subr.bf16.mxu0 0
    %1609 = vmatpush1.bf16.xpose.msra.mxu0 0
    %1610 = vmatprep.subr.bf16.mxu0 0
    %1611 = vmatpush1.bf16.xpose.msra.mxu0 0
    %1612 = vmatprep.subr.bf16.mxu0 0
    %1613 = vmatpush1.bf16.xpose.msra.mxu0 0
    %1614 = vmatprep.subr.bf16.mxu0 0
    %1615 = vmatpush1.bf16.xpose.msra.mxu0 0
    %1616 = vmatprep.subr.bf16.mxu0 0
    %1617 = vmatpush1.bf16.xpose.msra.mxu0 %v1600
    %1618 = vmatprep.subr.bf16.mxu0 0
    %1619 = vmatpush2.bf16.xpose.msra.mxu0 0
    %1620 = vmatprep.subr.bf16.mxu0 0
    %1621 = vmatpush2.bf16.xpose.msra.mxu0 0
    %1622 = vmatprep.subr.bf16.mxu0 0
    %1623 = vmatpush2.bf16.xpose.msra.mxu0 0
    %1624 = vmatprep.subr.bf16.mxu0 0
    %1625 = vmatpush2.bf16.xpose.msra.mxu0 0
    %1626 = vmatprep.subr.bf16.mxu0 0
    %1627 = vmatpush2.bf16.xpose.msra.mxu0 0
    %1628 = vmatprep.subr.bf16.mxu0 0
    %1629 = vmatpush2.bf16.xpose.msra.mxu0 0
    %1630 = vmatprep.subr.bf16.mxu0 0
    %1631 = vmatpush2.bf16.xpose.msra.mxu0 0
    %1632 = vmatprep.subr.bf16.mxu0 0
    %1633 = vmatpush2.bf16.xpose.msra.mxu0 0
    %1634 = vmatprep.mubr.bf16.mxu0 0
    %1635 = vmatmul.mubr.bf16.gmra.mxu0 %v1597
    %v1636 = vpop.f32.mrf.mxu0
    %v1637 = vadd.f32 0.0, %v1636
    %v1638 = vpop.f32.mrf.mxu0
    %v1639 = vpop.f32.mrf.mxu0
    %v1640 = vpop.f32.mrf.mxu0
    %1641 = vdwg.mxu0
    %v1642 = vsel %vm356, %v1637, -inf
    %1643 = vmax.xlane.f32.xlu0 %v1642
    %v1644 = vpop.xlane.xlu0 %1643
    %v1645 = vsub.f32 %v1637, %v1644
    %v1646 = vmul.f32 %v1645, 1.442695
    %v1647 = vpow.pop %v1646
    %v1648 = vsel %vm356, %v1647, 0.0
    %1649 = vadd.xlane.f32.xlu0 %v1648
    %v1650 = vpop.xlane.xlu0 %1649
    %v1651 = vrcp.pop %v1650
    %v1652 = vmul.f32 %v1647, %v1651
    %v1653 = vpack.c.bf16 %v1652, %v1652
    %1654 = vrot.lane.b32.xlu0 %v1592, 64
    %v1655 = vpop.permute.xlu0 %1654
    %v1657 = vsel %vm371, %v1653, 0
    %v1660 = vand.u32 %v1655, %v378
    %1662 = vmatprep.subr.bf16.mxu0 0
    %1663 = vmatpush1.bf16.msra.mxu0 0
    %1664 = vmatprep.subr.bf16.mxu0 0
    %1665 = vmatpush1.bf16.msra.mxu0 0
    %1666 = vmatprep.subr.bf16.mxu0 0
    %1667 = vmatpush1.bf16.msra.mxu0 0
    %1668 = vmatprep.subr.bf16.mxu0 0
    %1669 = vmatpush1.bf16.msra.mxu0 0
    %1670 = vmatprep.subr.bf16.mxu0 0
    %1671 = vmatpush1.bf16.msra.mxu0 0
    %1672 = vmatprep.subr.bf16.mxu0 0
    %1673 = vmatpush1.bf16.msra.mxu0 0
    %1674 = vmatprep.subr.bf16.mxu0 0
    %1675 = vmatpush1.bf16.msra.mxu0 0
    %1676 = vmatprep.subr.bf16.mxu0 0
    %1677 = vmatpush1.bf16.msra.mxu0 %v1660
    %1678 = vmatprep.subr.bf16.mxu0 0
    %1679 = vmatpush2.bf16.msra.mxu0 0
    %1680 = vmatprep.subr.bf16.mxu0 0
    %1681 = vmatpush2.bf16.msra.mxu0 0
    %1682 = vmatprep.subr.bf16.mxu0 0
    %1683 = vmatpush2.bf16.msra.mxu0 0
    %1684 = vmatprep.subr.bf16.mxu0 0
    %1685 = vmatpush2.bf16.msra.mxu0 0
    %1686 = vmatprep.subr.bf16.mxu0 0
    %1687 = vmatpush2.bf16.msra.mxu0 0
    %1688 = vmatprep.subr.bf16.mxu0 0
    %1689 = vmatpush2.bf16.msra.mxu0 0
    %1690 = vmatprep.subr.bf16.mxu0 0
    %1691 = vmatpush2.bf16.msra.mxu0 0
    %1692 = vmatprep.subr.bf16.mxu0 0
    %1693 = vmatpush2.bf16.msra.mxu0 0
    %1694 = vmatprep.mubr.bf16.mxu0 0
    %1695 = vmatmul.mubr.bf16.gmra.mxu0 %v1657
    %v1696 = vpop.f32.mrf.mxu0
    %v1697 = vadd.f32 0.0, %v1696
    %v1698 = vpop.f32.mrf.mxu0
    %v1699 = vpop.f32.mrf.mxu0
    %v1700 = vpop.f32.mrf.mxu0
    %1701 = vdwg.mxu0
    %1702 = vrot.lane.b32.xlu0 %v1592, 120
    %v1703 = vpop.permute.xlu0 %1702
    %1704 = vrot.lane.b32.xlu0 %v1592, 88
    %v1705 = vpop.permute.xlu0 %1704
    %v1707 = vsel %vm309, %v1703, 0
    %v1710 = vsel %vm309, %v1705, 0
    %1712 = vmatprep.subr.bf16.mxu0 0
    %1713 = vmatpush1.bf16.xpose.msra.mxu0 0
    %1714 = vmatprep.subr.bf16.mxu0 0
    %1715 = vmatpush1.bf16.xpose.msra.mxu0 0
    %1716 = vmatprep.subr.bf16.mxu0 0
    %1717 = vmatpush1.bf16.xpose.msra.mxu0 0
    %1718 = vmatprep.subr.bf16.mxu0 0
    %1719 = vmatpush1.bf16.xpose.msra.mxu0 0
    %1720 = vmatprep.subr.bf16.mxu0 0
    %1721 = vmatpush1.bf16.xpose.msra.mxu0 0
    %1722 = vmatprep.subr.bf16.mxu0 0
    %1723 = vmatpush1.bf16.xpose.msra.mxu0 0
    %1724 = vmatprep.subr.bf16.mxu0 0
    %1725 = vmatpush1.bf16.xpose.msra.mxu0 0
    %1726 = vmatprep.subr.bf16.mxu0 0
    %1727 = vmatpush1.bf16.xpose.msra.mxu0 %v1710
    %1728 = vmatprep.subr.bf16.mxu0 0
    %1729 = vmatpush2.bf16.xpose.msra.mxu0 0
    %1730 = vmatprep.subr.bf16.mxu0 0
    %1731 = vmatpush2.bf16.xpose.msra.mxu0 0
    %1732 = vmatprep.subr.bf16.mxu0 0
    %1733 = vmatpush2.bf16.xpose.msra.mxu0 0
    %1734 = vmatprep.subr.bf16.mxu0 0
    %1735 = vmatpush2.bf16.xpose.msra.mxu0 0
    %1736 = vmatprep.subr.bf16.mxu0 0
    %1737 = vmatpush2.bf16.xpose.msra.mxu0 0
    %1738 = vmatprep.subr.bf16.mxu0 0
    %1739 = vmatpush2.bf16.xpose.msra.mxu0 0
    %1740 = vmatprep.subr.bf16.mxu0 0
    %1741 = vmatpush2.bf16.xpose.msra.mxu0 0
    %1742 = vmatprep.subr.bf16.mxu0 0
    %1743 = vmatpush2.bf16.xpose.msra.mxu0 0
    %1744 = vmatprep.mubr.bf16.mxu0 0
    %1745 = vmatmul.mubr.bf16.gmra.mxu0 %v1707
    %v1746 = vpop.f32.mrf.mxu0
    %v1747 = vadd.f32 0.0, %v1746
    %v1748 = vpop.f32.mrf.mxu0
    %v1749 = vpop.f32.mrf.mxu0
    %v1750 = vpop.f32.mrf.mxu0
    %1751 = vdwg.mxu0
    %v1752 = vsel %vm356, %v1747, -inf
    %1753 = vmax.xlane.f32.xlu0 %v1752
    %v1754 = vpop.xlane.xlu0 %1753
    %v1755 = vsub.f32 %v1747, %v1754
    %v1756 = vmul.f32 %v1755, 1.442695
    %v1757 = vpow.pop %v1756
    %v1758 = vsel %vm356, %v1757, 0.0
    %1759 = vadd.xlane.f32.xlu0 %v1758
    %v1760 = vpop.xlane.xlu0 %1759
    %v1761 = vrcp.pop %v1760
    %v1762 = vmul.f32 %v1757, %v1761
    %v1763 = vpack.c.bf16 %v1762, %v1762
    %1764 = vrot.lane.b32.xlu0 %v1592, 56
    %v1765 = vpop.permute.xlu0 %1764
    %v1767 = vsel %vm371, %v1763, 0
    %v1770 = vand.u32 %v1765, %v378
    %1772 = vmatprep.subr.bf16.mxu0 0
    %1773 = vmatpush1.bf16.msra.mxu0 0
    %1774 = vmatprep.subr.bf16.mxu0 0
    %1775 = vmatpush1.bf16.msra.mxu0 0
    %1776 = vmatprep.subr.bf16.mxu0 0
    %1777 = vmatpush1.bf16.msra.mxu0 0
    %1778 = vmatprep.subr.bf16.mxu0 0
    %1779 = vmatpush1.bf16.msra.mxu0 0
    %1780 = vmatprep.subr.bf16.mxu0 0
    %1781 = vmatpush1.bf16.msra.mxu0 0
    %1782 = vmatprep.subr.bf16.mxu0 0
    %1783 = vmatpush1.bf16.msra.mxu0 0
    %1784 = vmatprep.subr.bf16.mxu0 0
    %1785 = vmatpush1.bf16.msra.mxu0 0
    %1786 = vmatprep.subr.bf16.mxu0 0
    %1787 = vmatpush1.bf16.msra.mxu0 %v1770
    %1788 = vmatprep.subr.bf16.mxu0 0
    %1789 = vmatpush2.bf16.msra.mxu0 0
    %1790 = vmatprep.subr.bf16.mxu0 0
    %1791 = vmatpush2.bf16.msra.mxu0 0
    %1792 = vmatprep.subr.bf16.mxu0 0
    %1793 = vmatpush2.bf16.msra.mxu0 0
    %1794 = vmatprep.subr.bf16.mxu0 0
    %1795 = vmatpush2.bf16.msra.mxu0 0
    %1796 = vmatprep.subr.bf16.mxu0 0
    %1797 = vmatpush2.bf16.msra.mxu0 0
    %1798 = vmatprep.subr.bf16.mxu0 0
    %1799 = vmatpush2.bf16.msra.mxu0 0
    %1800 = vmatprep.subr.bf16.mxu0 0
    %1801 = vmatpush2.bf16.msra.mxu0 0
    %1802 = vmatprep.subr.bf16.mxu0 0
    %1803 = vmatpush2.bf16.msra.mxu0 0
    %1804 = vmatprep.mubr.bf16.mxu0 0
    %1805 = vmatmul.mubr.bf16.gmra.mxu0 %v1767
    %v1806 = vpop.f32.mrf.mxu0
    %v1807 = vadd.f32 0.0, %v1806
    %v1808 = vpop.f32.mrf.mxu0
    %v1809 = vpop.f32.mrf.mxu0
    %v1810 = vpop.f32.mrf.mxu0
    %1811 = vdwg.mxu0
    %1812 = vrot.lane.b32.xlu0 %v1592, 112
    %v1813 = vpop.permute.xlu0 %1812
    %1814 = vrot.lane.b32.xlu0 %v1592, 80
    %v1815 = vpop.permute.xlu0 %1814
    %v1817 = vsel %vm309, %v1813, 0
    %v1820 = vsel %vm309, %v1815, 0
    %1822 = vmatprep.subr.bf16.mxu0 0
    %1823 = vmatpush1.bf16.xpose.msra.mxu0 0
    %1824 = vmatprep.subr.bf16.mxu0 0
    %1825 = vmatpush1.bf16.xpose.msra.mxu0 0
    %1826 = vmatprep.subr.bf16.mxu0 0
    %1827 = vmatpush1.bf16.xpose.msra.mxu0 0
    %1828 = vmatprep.subr.bf16.mxu0 0
    %1829 = vmatpush1.bf16.xpose.msra.mxu0 0
    %1830 = vmatprep.subr.bf16.mxu0 0
    %1831 = vmatpush1.bf16.xpose.msra.mxu0 0
    %1832 = vmatprep.subr.bf16.mxu0 0
    %1833 = vmatpush1.bf16.xpose.msra.mxu0 0
    %1834 = vmatprep.subr.bf16.mxu0 0
    %1835 = vmatpush1.bf16.xpose.msra.mxu0 0
    %1836 = vmatprep.subr.bf16.mxu0 0
    %1837 = vmatpush1.bf16.xpose.msra.mxu0 %v1820
    %1838 = vmatprep.subr.bf16.mxu0 0
    %1839 = vmatpush2.bf16.xpose.msra.mxu0 0
    %1840 = vmatprep.subr.bf16.mxu0 0
    %1841 = vmatpush2.bf16.xpose.msra.mxu0 0
    %1842 = vmatprep.subr.bf16.mxu0 0
    %1843 = vmatpush2.bf16.xpose.msra.mxu0 0
    %1844 = vmatprep.subr.bf16.mxu0 0
    %1845 = vmatpush2.bf16.xpose.msra.mxu0 0
    %1846 = vmatprep.subr.bf16.mxu0 0
    %1847 = vmatpush2.bf16.xpose.msra.mxu0 0
    %1848 = vmatprep.subr.bf16.mxu0 0
    %1849 = vmatpush2.bf16.xpose.msra.mxu0 0
    %1850 = vmatprep.subr.bf16.mxu0 0
    %1851 = vmatpush2.bf16.xpose.msra.mxu0 0
    %1852 = vmatprep.subr.bf16.mxu0 0
    %1853 = vmatpush2.bf16.xpose.msra.mxu0 0
    %1854 = vmatprep.mubr.bf16.mxu0 0
    %1855 = vmatmul.mubr.bf16.gmra.mxu0 %v1817
    %v1856 = vpop.f32.mrf.mxu0
    %v1857 = vadd.f32 0.0, %v1856
    %v1858 = vpop.f32.mrf.mxu0
    %v1859 = vpop.f32.mrf.mxu0
    %v1860 = vpop.f32.mrf.mxu0
    %1861 = vdwg.mxu0
    %v1862 = vsel %vm356, %v1857, -inf
    %1863 = vmax.xlane.f32.xlu0 %v1862
    %v1864 = vpop.xlane.xlu0 %1863
    %v1865 = vsub.f32 %v1857, %v1864
    %v1866 = vmul.f32 %v1865, 1.442695
    %v1867 = vpow.pop %v1866
    %v1868 = vsel %vm356, %v1867, 0.0
    %1869 = vadd.xlane.f32.xlu0 %v1868
    %v1870 = vpop.xlane.xlu0 %1869
    %v1871 = vrcp.pop %v1870
    %v1872 = vmul.f32 %v1867, %v1871
    %v1873 = vpack.c.bf16 %v1872, %v1872
    %1874 = vrot.lane.b32.xlu0 %v1592, 48
    %v1875 = vpop.permute.xlu0 %1874
    %v1877 = vsel %vm371, %v1873, 0
    %v1880 = vand.u32 %v1875, %v378
    %1882 = vmatprep.subr.bf16.mxu0 0
    %1883 = vmatpush1.bf16.msra.mxu0 0
    %1884 = vmatprep.subr.bf16.mxu0 0
    %1885 = vmatpush1.bf16.msra.mxu0 0
    %1886 = vmatprep.subr.bf16.mxu0 0
    %1887 = vmatpush1.bf16.msra.mxu0 0
    %1888 = vmatprep.subr.bf16.mxu0 0
    %1889 = vmatpush1.bf16.msra.mxu0 0
    %1890 = vmatprep.subr.bf16.mxu0 0
    %1891 = vmatpush1.bf16.msra.mxu0 0
    %1892 = vmatprep.subr.bf16.mxu0 0
    %1893 = vmatpush1.bf16.msra.mxu0 0
    %1894 = vmatprep.subr.bf16.mxu0 0
    %1895 = vmatpush1.bf16.msra.mxu0 0
    %1896 = vmatprep.subr.bf16.mxu0 0
    %1897 = vmatpush1.bf16.msra.mxu0 %v1880
    %1898 = vmatprep.subr.bf16.mxu0 0
    %1899 = vmatpush2.bf16.msra.mxu0 0
    %1900 = vmatprep.subr.bf16.mxu0 0
    %1901 = vmatpush2.bf16.msra.mxu0 0
    %1902 = vmatprep.subr.bf16.mxu0 0
    %1903 = vmatpush2.bf16.msra.mxu0 0
    %1904 = vmatprep.subr.bf16.mxu0 0
    %1905 = vmatpush2.bf16.msra.mxu0 0
    %1906 = vmatprep.subr.bf16.mxu0 0
    %1907 = vmatpush2.bf16.msra.mxu0 0
    %1908 = vmatprep.subr.bf16.mxu0 0
    %1909 = vmatpush2.bf16.msra.mxu0 0
    %1910 = vmatprep.subr.bf16.mxu0 0
    %1911 = vmatpush2.bf16.msra.mxu0 0
    %1912 = vmatprep.subr.bf16.mxu0 0
    %1913 = vmatpush2.bf16.msra.mxu0 0
    %1914 = vmatprep.mubr.bf16.mxu0 0
    %1915 = vmatmul.mubr.bf16.gmra.mxu0 %v1877
    %v1916 = vpop.f32.mrf.mxu0
    %v1917 = vadd.f32 0.0, %v1916
    %v1918 = vpop.f32.mrf.mxu0
    %v1919 = vpop.f32.mrf.mxu0
    %v1920 = vpop.f32.mrf.mxu0
    %1921 = vdwg.mxu0
    %1922 = vrot.lane.b32.xlu0 %v1592, 104
    %v1923 = vpop.permute.xlu0 %1922
    %1924 = vrot.lane.b32.xlu0 %v1592, 72
    %v1925 = vpop.permute.xlu0 %1924
    %v1927 = vsel %vm309, %v1923, 0
    %v1930 = vsel %vm309, %v1925, 0
    %1932 = vmatprep.subr.bf16.mxu0 0
    %1933 = vmatpush1.bf16.xpose.msra.mxu0 0
    %1934 = vmatprep.subr.bf16.mxu0 0
    %1935 = vmatpush1.bf16.xpose.msra.mxu0 0
    %1936 = vmatprep.subr.bf16.mxu0 0
    %1937 = vmatpush1.bf16.xpose.msra.mxu0 0
    %1938 = vmatprep.subr.bf16.mxu0 0
    %1939 = vmatpush1.bf16.xpose.msra.mxu0 0
    %1940 = vmatprep.subr.bf16.mxu0 0
    %1941 = vmatpush1.bf16.xpose.msra.mxu0 0
    %1942 = vmatprep.subr.bf16.mxu0 0
    %1943 = vmatpush1.bf16.xpose.msra.mxu0 0
    %1944 = vmatprep.subr.bf16.mxu0 0
    %1945 = vmatpush1.bf16.xpose.msra.mxu0 0
    %1946 = vmatprep.subr.bf16.mxu0 0
    %1947 = vmatpush1.bf16.xpose.msra.mxu0 %v1930
    %1948 = vmatprep.subr.bf16.mxu0 0
    %1949 = vmatpush2.bf16.xpose.msra.mxu0 0
    %1950 = vmatprep.subr.bf16.mxu0 0
    %1951 = vmatpush2.bf16.xpose.msra.mxu0 0
    %1952 = vmatprep.subr.bf16.mxu0 0
    %1953 = vmatpush2.bf16.xpose.msra.mxu0 0
    %1954 = vmatprep.subr.bf16.mxu0 0
    %1955 = vmatpush2.bf16.xpose.msra.mxu0 0
    %1956 = vmatprep.subr.bf16.mxu0 0
    %1957 = vmatpush2.bf16.xpose.msra.mxu0 0
    %1958 = vmatprep.subr.bf16.mxu0 0
    %1959 = vmatpush2.bf16.xpose.msra.mxu0 0
    %1960 = vmatprep.subr.bf16.mxu0 0
    %1961 = vmatpush2.bf16.xpose.msra.mxu0 0
    %1962 = vmatprep.subr.bf16.mxu0 0
    %1963 = vmatpush2.bf16.xpose.msra.mxu0 0
    %1964 = vmatprep.mubr.bf16.mxu0 0
    %1965 = vmatmul.mubr.bf16.gmra.mxu0 %v1927
    %v1966 = vpop.f32.mrf.mxu0
    %v1967 = vadd.f32 0.0, %v1966
    %v1968 = vpop.f32.mrf.mxu0
    %v1969 = vpop.f32.mrf.mxu0
    %v1970 = vpop.f32.mrf.mxu0
    %1971 = vdwg.mxu0
    %v1972 = vsel %vm356, %v1967, -inf
    %1973 = vmax.xlane.f32.xlu0 %v1972
    %v1974 = vpop.xlane.xlu0 %1973
    %v1975 = vsub.f32 %v1967, %v1974
    %v1976 = vmul.f32 %v1975, 1.442695
    %v1977 = vpow.pop %v1976
    %v1978 = vsel %vm356, %v1977, 0.0
    %1979 = vadd.xlane.f32.xlu0 %v1978
    %v1980 = vpop.xlane.xlu0 %1979
    %v1981 = vrcp.pop %v1980
    %v1982 = vmul.f32 %v1977, %v1981
    %v1983 = vpack.c.bf16 %v1982, %v1982
    %1984 = vrot.lane.b32.xlu0 %v1592, 40
    %v1985 = vpop.permute.xlu0 %1984
    %v1987 = vsel %vm371, %v1983, 0
    %v1990 = vand.u32 %v1985, %v378
    %1992 = vmatprep.subr.bf16.mxu0 0
    %1993 = vmatpush1.bf16.msra.mxu0 0
    %1994 = vmatprep.subr.bf16.mxu0 0
    %1995 = vmatpush1.bf16.msra.mxu0 0
    %1996 = vmatprep.subr.bf16.mxu0 0
    %1997 = vmatpush1.bf16.msra.mxu0 0
    %1998 = vmatprep.subr.bf16.mxu0 0
    %1999 = vmatpush1.bf16.msra.mxu0 0
    %2000 = vmatprep.subr.bf16.mxu0 0
    %2001 = vmatpush1.bf16.msra.mxu0 0
    %2002 = vmatprep.subr.bf16.mxu0 0
    %2003 = vmatpush1.bf16.msra.mxu0 0
    %2004 = vmatprep.subr.bf16.mxu0 0
    %2005 = vmatpush1.bf16.msra.mxu0 0
    %2006 = vmatprep.subr.bf16.mxu0 0
    %2007 = vmatpush1.bf16.msra.mxu0 %v1990
    %2008 = vmatprep.subr.bf16.mxu0 0
    %2009 = vmatpush2.bf16.msra.mxu0 0
    %2010 = vmatprep.subr.bf16.mxu0 0
    %2011 = vmatpush2.bf16.msra.mxu0 0
    %2012 = vmatprep.subr.bf16.mxu0 0
    %2013 = vmatpush2.bf16.msra.mxu0 0
    %2014 = vmatprep.subr.bf16.mxu0 0
    %2015 = vmatpush2.bf16.msra.mxu0 0
    %2016 = vmatprep.subr.bf16.mxu0 0
    %2017 = vmatpush2.bf16.msra.mxu0 0
    %2018 = vmatprep.subr.bf16.mxu0 0
    %2019 = vmatpush2.bf16.msra.mxu0 0
    %2020 = vmatprep.subr.bf16.mxu0 0
    %2021 = vmatpush2.bf16.msra.mxu0 0
    %2022 = vmatprep.subr.bf16.mxu0 0
    %2023 = vmatpush2.bf16.msra.mxu0 0
    %2024 = vmatprep.mubr.bf16.mxu0 0
    %2025 = vmatmul.mubr.bf16.gmra.mxu0 %v1987
    %v2026 = vpop.f32.mrf.mxu0
    %v2027 = vadd.f32 0.0, %v2026
    %v2028 = vpop.f32.mrf.mxu0
    %v2029 = vpop.f32.mrf.mxu0
    %v2030 = vpop.f32.mrf.mxu0
    %2031 = vdwg.mxu0
    %2033 = vrot.lane.b32.xlu0 %v1807, 8
    %v2034 = vpop.permute.xlu0 %2033
    %2037 = vrot.lane.b32.xlu0 %v1917, 16
    %v2038 = vpop.permute.xlu0 %2037
    %2041 = vrot.lane.b32.xlu0 %v2027, 24
    %v2042 = vpop.permute.xlu0 %2041
    %v2044 = vsel %vm309, %v1697, %v2034
    %v2045 = vsel %vm765, %v2044, %v2038
    %v2046 = vsel %vm767, %v2045, %v2042
    %v2047 = vpack.c.bf16 %v1589, %v1586
    %v2049 = vshrl.u32 %v2047, 16
    %v2051 = vrot.slane %v2049, 2
    %v2052 = vshll.u32 %v2047, 16
    %v2054 = vrot.slane %v2052, 3
    %v2055 = vor.u32 %v2051, %v2054
    %2056 = vrot.lane.b32.xlu0 %v2055, 96
    %v2057 = vpop.permute.xlu0 %2056
    %v2059 = vsel %vm309, %v2055, 0
    %v2062 = vsel %vm309, %v2057, 0
    %2064 = vmatprep.subr.bf16.mxu0 0
    %2065 = vmatpush1.bf16.xpose.msra.mxu0 0
    %2066 = vmatprep.subr.bf16.mxu0 0
    %2067 = vmatpush1.bf16.xpose.msra.mxu0 0
    %2068 = vmatprep.subr.bf16.mxu0 0
    %2069 = vmatpush1.bf16.xpose.msra.mxu0 0
    %2070 = vmatprep.subr.bf16.mxu0 0
    %2071 = vmatpush1.bf16.xpose.msra.mxu0 0
    %2072 = vmatprep.subr.bf16.mxu0 0
    %2073 = vmatpush1.bf16.xpose.msra.mxu0 0
    %2074 = vmatprep.subr.bf16.mxu0 0
    %2075 = vmatpush1.bf16.xpose.msra.mxu0 0
    %2076 = vmatprep.subr.bf16.mxu0 0
    %2077 = vmatpush1.bf16.xpose.msra.mxu0 0
    %2078 = vmatprep.subr.bf16.mxu0 0
    %2079 = vmatpush1.bf16.xpose.msra.mxu0 %v2062
    %2080 = vmatprep.subr.bf16.mxu0 0
    %2081 = vmatpush2.bf16.xpose.msra.mxu0 0
    %2082 = vmatprep.subr.bf16.mxu0 0
    %2083 = vmatpush2.bf16.xpose.msra.mxu0 0
    %2084 = vmatprep.subr.bf16.mxu0 0
    %2085 = vmatpush2.bf16.xpose.msra.mxu0 0
    %2086 = vmatprep.subr.bf16.mxu0 0
    %2087 = vmatpush2.bf16.xpose.msra.mxu0 0
    %2088 = vmatprep.subr.bf16.mxu0 0
    %2089 = vmatpush2.bf16.xpose.msra.mxu0 0
    %2090 = vmatprep.subr.bf16.mxu0 0
    %2091 = vmatpush2.bf16.xpose.msra.mxu0 0
    %2092 = vmatprep.subr.bf16.mxu0 0
    %2093 = vmatpush2.bf16.xpose.msra.mxu0 0
    %2094 = vmatprep.subr.bf16.mxu0 0
    %2095 = vmatpush2.bf16.xpose.msra.mxu0 0
    %2096 = vmatprep.mubr.bf16.mxu0 0
    %2097 = vmatmul.mubr.bf16.gmra.mxu0 %v2059
    %v2098 = vpop.f32.mrf.mxu0
    %v2099 = vadd.f32 0.0, %v2098
    %v2100 = vpop.f32.mrf.mxu0
    %v2101 = vpop.f32.mrf.mxu0
    %v2102 = vpop.f32.mrf.mxu0
    %2103 = vdwg.mxu0
    %v2104 = vsel %vm356, %v2099, -inf
    %2105 = vmax.xlane.f32.xlu0 %v2104
    %v2106 = vpop.xlane.xlu0 %2105
    %v2107 = vsub.f32 %v2099, %v2106
    %v2108 = vmul.f32 %v2107, 1.442695
    %v2109 = vpow.pop %v2108
    %v2110 = vsel %vm356, %v2109, 0.0
    %2111 = vadd.xlane.f32.xlu0 %v2110
    %v2112 = vpop.xlane.xlu0 %2111
    %v2113 = vrcp.pop %v2112
    %v2114 = vmul.f32 %v2109, %v2113
    %v2115 = vpack.c.bf16 %v2114, %v2114
    %2116 = vrot.lane.b32.xlu0 %v2055, 64
    %v2117 = vpop.permute.xlu0 %2116
    %v2119 = vsel %vm371, %v2115, 0
    %v2122 = vand.u32 %v2117, %v378
    %2124 = vmatprep.subr.bf16.mxu0 0
    %2125 = vmatpush1.bf16.msra.mxu0 0
    %2126 = vmatprep.subr.bf16.mxu0 0
    %2127 = vmatpush1.bf16.msra.mxu0 0
    %2128 = vmatprep.subr.bf16.mxu0 0
    %2129 = vmatpush1.bf16.msra.mxu0 0
    %2130 = vmatprep.subr.bf16.mxu0 0
    %2131 = vmatpush1.bf16.msra.mxu0 0
    %2132 = vmatprep.subr.bf16.mxu0 0
    %2133 = vmatpush1.bf16.msra.mxu0 0
    %2134 = vmatprep.subr.bf16.mxu0 0
    %2135 = vmatpush1.bf16.msra.mxu0 0
    %2136 = vmatprep.subr.bf16.mxu0 0
    %2137 = vmatpush1.bf16.msra.mxu0 0
    %2138 = vmatprep.subr.bf16.mxu0 0
    %2139 = vmatpush1.bf16.msra.mxu0 %v2122
    %2140 = vmatprep.subr.bf16.mxu0 0
    %2141 = vmatpush2.bf16.msra.mxu0 0
    %2142 = vmatprep.subr.bf16.mxu0 0
    %2143 = vmatpush2.bf16.msra.mxu0 0
    %2144 = vmatprep.subr.bf16.mxu0 0
    %2145 = vmatpush2.bf16.msra.mxu0 0
    %2146 = vmatprep.subr.bf16.mxu0 0
    %2147 = vmatpush2.bf16.msra.mxu0 0
    %2148 = vmatprep.subr.bf16.mxu0 0
    %2149 = vmatpush2.bf16.msra.mxu0 0
    %2150 = vmatprep.subr.bf16.mxu0 0
    %2151 = vmatpush2.bf16.msra.mxu0 0
    %2152 = vmatprep.subr.bf16.mxu0 0
    %2153 = vmatpush2.bf16.msra.mxu0 0
    %2154 = vmatprep.subr.bf16.mxu0 0
    %2155 = vmatpush2.bf16.msra.mxu0 0
    %2156 = vmatprep.mubr.bf16.mxu0 0
    %2157 = vmatmul.mubr.bf16.gmra.mxu0 %v2119
    %v2158 = vpop.f32.mrf.mxu0
    %v2159 = vadd.f32 0.0, %v2158
    %v2160 = vpop.f32.mrf.mxu0
    %v2161 = vpop.f32.mrf.mxu0
    %v2162 = vpop.f32.mrf.mxu0
    %2163 = vdwg.mxu0
    %2164 = vrot.lane.b32.xlu0 %v2055, 120
    %v2165 = vpop.permute.xlu0 %2164
    %2166 = vrot.lane.b32.xlu0 %v2055, 88
    %v2167 = vpop.permute.xlu0 %2166
    %v2169 = vsel %vm309, %v2165, 0
    %v2172 = vsel %vm309, %v2167, 0
    %2174 = vmatprep.subr.bf16.mxu0 0
    %2175 = vmatpush1.bf16.xpose.msra.mxu0 0
    %2176 = vmatprep.subr.bf16.mxu0 0
    %2177 = vmatpush1.bf16.xpose.msra.mxu0 0
    %2178 = vmatprep.subr.bf16.mxu0 0
    %2179 = vmatpush1.bf16.xpose.msra.mxu0 0
    %2180 = vmatprep.subr.bf16.mxu0 0
    %2181 = vmatpush1.bf16.xpose.msra.mxu0 0
    %2182 = vmatprep.subr.bf16.mxu0 0
    %2183 = vmatpush1.bf16.xpose.msra.mxu0 0
    %2184 = vmatprep.subr.bf16.mxu0 0
    %2185 = vmatpush1.bf16.xpose.msra.mxu0 0
    %2186 = vmatprep.subr.bf16.mxu0 0
    %2187 = vmatpush1.bf16.xpose.msra.mxu0 0
    %2188 = vmatprep.subr.bf16.mxu0 0
    %2189 = vmatpush1.bf16.xpose.msra.mxu0 %v2172
    %2190 = vmatprep.subr.bf16.mxu0 0
    %2191 = vmatpush2.bf16.xpose.msra.mxu0 0
    %2192 = vmatprep.subr.bf16.mxu0 0
    %2193 = vmatpush2.bf16.xpose.msra.mxu0 0
    %2194 = vmatprep.subr.bf16.mxu0 0
    %2195 = vmatpush2.bf16.xpose.msra.mxu0 0
    %2196 = vmatprep.subr.bf16.mxu0 0
    %2197 = vmatpush2.bf16.xpose.msra.mxu0 0
    %2198 = vmatprep.subr.bf16.mxu0 0
    %2199 = vmatpush2.bf16.xpose.msra.mxu0 0
    %2200 = vmatprep.subr.bf16.mxu0 0
    %2201 = vmatpush2.bf16.xpose.msra.mxu0 0
    %2202 = vmatprep.subr.bf16.mxu0 0
    %2203 = vmatpush2.bf16.xpose.msra.mxu0 0
    %2204 = vmatprep.subr.bf16.mxu0 0
    %2205 = vmatpush2.bf16.xpose.msra.mxu0 0
    %2206 = vmatprep.mubr.bf16.mxu0 0
    %2207 = vmatmul.mubr.bf16.gmra.mxu0 %v2169
    %v2208 = vpop.f32.mrf.mxu0
    %v2209 = vadd.f32 0.0, %v2208
    %v2210 = vpop.f32.mrf.mxu0
    %v2211 = vpop.f32.mrf.mxu0
    %v2212 = vpop.f32.mrf.mxu0
    %2213 = vdwg.mxu0
    %v2214 = vsel %vm356, %v2209, -inf
    %2215 = vmax.xlane.f32.xlu0 %v2214
    %v2216 = vpop.xlane.xlu0 %2215
    %v2217 = vsub.f32 %v2209, %v2216
    %v2218 = vmul.f32 %v2217, 1.442695
    %v2219 = vpow.pop %v2218
    %v2220 = vsel %vm356, %v2219, 0.0
    %2221 = vadd.xlane.f32.xlu0 %v2220
    %v2222 = vpop.xlane.xlu0 %2221
    %v2223 = vrcp.pop %v2222
    %v2224 = vmul.f32 %v2219, %v2223
    %v2225 = vpack.c.bf16 %v2224, %v2224
    %2226 = vrot.lane.b32.xlu0 %v2055, 56
    %v2227 = vpop.permute.xlu0 %2226
    %v2229 = vsel %vm371, %v2225, 0
    %v2232 = vand.u32 %v2227, %v378
    %2234 = vmatprep.subr.bf16.mxu0 0
    %2235 = vmatpush1.bf16.msra.mxu0 0
    %2236 = vmatprep.subr.bf16.mxu0 0
    %2237 = vmatpush1.bf16.msra.mxu0 0
    %2238 = vmatprep.subr.bf16.mxu0 0
    %2239 = vmatpush1.bf16.msra.mxu0 0
    %2240 = vmatprep.subr.bf16.mxu0 0
    %2241 = vmatpush1.bf16.msra.mxu0 0
    %2242 = vmatprep.subr.bf16.mxu0 0
    %2243 = vmatpush1.bf16.msra.mxu0 0
    %2244 = vmatprep.subr.bf16.mxu0 0
    %2245 = vmatpush1.bf16.msra.mxu0 0
    %2246 = vmatprep.subr.bf16.mxu0 0
    %2247 = vmatpush1.bf16.msra.mxu0 0
    %2248 = vmatprep.subr.bf16.mxu0 0
    %2249 = vmatpush1.bf16.msra.mxu0 %v2232
    %2250 = vmatprep.subr.bf16.mxu0 0
    %2251 = vmatpush2.bf16.msra.mxu0 0
    %2252 = vmatprep.subr.bf16.mxu0 0
    %2253 = vmatpush2.bf16.msra.mxu0 0
    %2254 = vmatprep.subr.bf16.mxu0 0
    %2255 = vmatpush2.bf16.msra.mxu0 0
    %2256 = vmatprep.subr.bf16.mxu0 0
    %2257 = vmatpush2.bf16.msra.mxu0 0
    %2258 = vmatprep.subr.bf16.mxu0 0
    %2259 = vmatpush2.bf16.msra.mxu0 0
    %2260 = vmatprep.subr.bf16.mxu0 0
    %2261 = vmatpush2.bf16.msra.mxu0 0
    %2262 = vmatprep.subr.bf16.mxu0 0
    %2263 = vmatpush2.bf16.msra.mxu0 0
    %2264 = vmatprep.subr.bf16.mxu0 0
    %2265 = vmatpush2.bf16.msra.mxu0 0
    %2266 = vmatprep.mubr.bf16.mxu0 0
    %2267 = vmatmul.mubr.bf16.gmra.mxu0 %v2229
    %v2268 = vpop.f32.mrf.mxu0
    %v2269 = vadd.f32 0.0, %v2268
    %v2270 = vpop.f32.mrf.mxu0
    %v2271 = vpop.f32.mrf.mxu0
    %v2272 = vpop.f32.mrf.mxu0
    %2273 = vdwg.mxu0
    %2274 = vrot.lane.b32.xlu0 %v2055, 112
    %v2275 = vpop.permute.xlu0 %2274
    %2276 = vrot.lane.b32.xlu0 %v2055, 80
    %v2277 = vpop.permute.xlu0 %2276
    %v2279 = vsel %vm309, %v2275, 0
    %v2282 = vsel %vm309, %v2277, 0
    %2284 = vmatprep.subr.bf16.mxu0 0
    %2285 = vmatpush1.bf16.xpose.msra.mxu0 0
    %2286 = vmatprep.subr.bf16.mxu0 0
    %2287 = vmatpush1.bf16.xpose.msra.mxu0 0
    %2288 = vmatprep.subr.bf16.mxu0 0
    %2289 = vmatpush1.bf16.xpose.msra.mxu0 0
    %2290 = vmatprep.subr.bf16.mxu0 0
    %2291 = vmatpush1.bf16.xpose.msra.mxu0 0
    %2292 = vmatprep.subr.bf16.mxu0 0
    %2293 = vmatpush1.bf16.xpose.msra.mxu0 0
    %2294 = vmatprep.subr.bf16.mxu0 0
    %2295 = vmatpush1.bf16.xpose.msra.mxu0 0
    %2296 = vmatprep.subr.bf16.mxu0 0
    %2297 = vmatpush1.bf16.xpose.msra.mxu0 0
    %2298 = vmatprep.subr.bf16.mxu0 0
    %2299 = vmatpush1.bf16.xpose.msra.mxu0 %v2282
    %2300 = vmatprep.subr.bf16.mxu0 0
    %2301 = vmatpush2.bf16.xpose.msra.mxu0 0
    %2302 = vmatprep.subr.bf16.mxu0 0
    %2303 = vmatpush2.bf16.xpose.msra.mxu0 0
    %2304 = vmatprep.subr.bf16.mxu0 0
    %2305 = vmatpush2.bf16.xpose.msra.mxu0 0
    %2306 = vmatprep.subr.bf16.mxu0 0
    %2307 = vmatpush2.bf16.xpose.msra.mxu0 0
    %2308 = vmatprep.subr.bf16.mxu0 0
    %2309 = vmatpush2.bf16.xpose.msra.mxu0 0
    %2310 = vmatprep.subr.bf16.mxu0 0
    %2311 = vmatpush2.bf16.xpose.msra.mxu0 0
    %2312 = vmatprep.subr.bf16.mxu0 0
    %2313 = vmatpush2.bf16.xpose.msra.mxu0 0
    %2314 = vmatprep.subr.bf16.mxu0 0
    %2315 = vmatpush2.bf16.xpose.msra.mxu0 0
    %2316 = vmatprep.mubr.bf16.mxu0 0
    %2317 = vmatmul.mubr.bf16.gmra.mxu0 %v2279
    %v2318 = vpop.f32.mrf.mxu0
    %v2319 = vadd.f32 0.0, %v2318
    %v2320 = vpop.f32.mrf.mxu0
    %v2321 = vpop.f32.mrf.mxu0
    %v2322 = vpop.f32.mrf.mxu0
    %2323 = vdwg.mxu0
    %v2324 = vsel %vm356, %v2319, -inf
    %2325 = vmax.xlane.f32.xlu0 %v2324
    %v2326 = vpop.xlane.xlu0 %2325
    %v2327 = vsub.f32 %v2319, %v2326
    %v2328 = vmul.f32 %v2327, 1.442695
    %v2329 = vpow.pop %v2328
    %v2330 = vsel %vm356, %v2329, 0.0
    %2331 = vadd.xlane.f32.xlu0 %v2330
    %v2332 = vpop.xlane.xlu0 %2331
    %v2333 = vrcp.pop %v2332
    %v2334 = vmul.f32 %v2329, %v2333
    %v2335 = vpack.c.bf16 %v2334, %v2334
    %2336 = vrot.lane.b32.xlu0 %v2055, 48
    %v2337 = vpop.permute.xlu0 %2336
    %v2339 = vsel %vm371, %v2335, 0
    %v2342 = vand.u32 %v2337, %v378
    %2344 = vmatprep.subr.bf16.mxu0 0
    %2345 = vmatpush1.bf16.msra.mxu0 0
    %2346 = vmatprep.subr.bf16.mxu0 0
    %2347 = vmatpush1.bf16.msra.mxu0 0
    %2348 = vmatprep.subr.bf16.mxu0 0
    %2349 = vmatpush1.bf16.msra.mxu0 0
    %2350 = vmatprep.subr.bf16.mxu0 0
    %2351 = vmatpush1.bf16.msra.mxu0 0
    %2352 = vmatprep.subr.bf16.mxu0 0
    %2353 = vmatpush1.bf16.msra.mxu0 0
    %2354 = vmatprep.subr.bf16.mxu0 0
    %2355 = vmatpush1.bf16.msra.mxu0 0
    %2356 = vmatprep.subr.bf16.mxu0 0
    %2357 = vmatpush1.bf16.msra.mxu0 0
    %2358 = vmatprep.subr.bf16.mxu0 0
    %2359 = vmatpush1.bf16.msra.mxu0 %v2342
    %2360 = vmatprep.subr.bf16.mxu0 0
    %2361 = vmatpush2.bf16.msra.mxu0 0
    %2362 = vmatprep.subr.bf16.mxu0 0
    %2363 = vmatpush2.bf16.msra.mxu0 0
    %2364 = vmatprep.subr.bf16.mxu0 0
    %2365 = vmatpush2.bf16.msra.mxu0 0
    %2366 = vmatprep.subr.bf16.mxu0 0
    %2367 = vmatpush2.bf16.msra.mxu0 0
    %2368 = vmatprep.subr.bf16.mxu0 0
    %2369 = vmatpush2.bf16.msra.mxu0 0
    %2370 = vmatprep.subr.bf16.mxu0 0
    %2371 = vmatpush2.bf16.msra.mxu0 0
    %2372 = vmatprep.subr.bf16.mxu0 0
    %2373 = vmatpush2.bf16.msra.mxu0 0
    %2374 = vmatprep.subr.bf16.mxu0 0
    %2375 = vmatpush2.bf16.msra.mxu0 0
    %2376 = vmatprep.mubr.bf16.mxu0 0
    %2377 = vmatmul.mubr.bf16.gmra.mxu0 %v2339
    %v2378 = vpop.f32.mrf.mxu0
    %v2379 = vadd.f32 0.0, %v2378
    %v2380 = vpop.f32.mrf.mxu0
    %v2381 = vpop.f32.mrf.mxu0
    %v2382 = vpop.f32.mrf.mxu0
    %2383 = vdwg.mxu0
    %2384 = vrot.lane.b32.xlu0 %v2055, 104
    %v2385 = vpop.permute.xlu0 %2384
    %2386 = vrot.lane.b32.xlu0 %v2055, 72
    %v2387 = vpop.permute.xlu0 %2386
    %v2389 = vsel %vm309, %v2385, 0
    %v2392 = vsel %vm309, %v2387, 0
    %2394 = vmatprep.subr.bf16.mxu0 0
    %2395 = vmatpush1.bf16.xpose.msra.mxu0 0
    %2396 = vmatprep.subr.bf16.mxu0 0
    %2397 = vmatpush1.bf16.xpose.msra.mxu0 0
    %2398 = vmatprep.subr.bf16.mxu0 0
    %2399 = vmatpush1.bf16.xpose.msra.mxu0 0
    %2400 = vmatprep.subr.bf16.mxu0 0
    %2401 = vmatpush1.bf16.xpose.msra.mxu0 0
    %2402 = vmatprep.subr.bf16.mxu0 0
    %2403 = vmatpush1.bf16.xpose.msra.mxu0 0
    %2404 = vmatprep.subr.bf16.mxu0 0
    %2405 = vmatpush1.bf16.xpose.msra.mxu0 0
    %2406 = vmatprep.subr.bf16.mxu0 0
    %2407 = vmatpush1.bf16.xpose.msra.mxu0 0
    %2408 = vmatprep.subr.bf16.mxu0 0
    %2409 = vmatpush1.bf16.xpose.msra.mxu0 %v2392
    %2410 = vmatprep.subr.bf16.mxu0 0
    %2411 = vmatpush2.bf16.xpose.msra.mxu0 0
    %2412 = vmatprep.subr.bf16.mxu0 0
    %2413 = vmatpush2.bf16.xpose.msra.mxu0 0
    %2414 = vmatprep.subr.bf16.mxu0 0
    %2415 = vmatpush2.bf16.xpose.msra.mxu0 0
    %2416 = vmatprep.subr.bf16.mxu0 0
    %2417 = vmatpush2.bf16.xpose.msra.mxu0 0
    %2418 = vmatprep.subr.bf16.mxu0 0
    %2419 = vmatpush2.bf16.xpose.msra.mxu0 0
    %2420 = vmatprep.subr.bf16.mxu0 0
    %2421 = vmatpush2.bf16.xpose.msra.mxu0 0
    %2422 = vmatprep.subr.bf16.mxu0 0
    %2423 = vmatpush2.bf16.xpose.msra.mxu0 0
    %2424 = vmatprep.subr.bf16.mxu0 0
    %2425 = vmatpush2.bf16.xpose.msra.mxu0 0
    %2426 = vmatprep.mubr.bf16.mxu0 0
    %2427 = vmatmul.mubr.bf16.gmra.mxu0 %v2389
    %v2428 = vpop.f32.mrf.mxu0
    %v2429 = vadd.f32 0.0, %v2428
    %v2430 = vpop.f32.mrf.mxu0
    %v2431 = vpop.f32.mrf.mxu0
    %v2432 = vpop.f32.mrf.mxu0
    %2433 = vdwg.mxu0
    %v2434 = vsel %vm356, %v2429, -inf
    %2435 = vmax.xlane.f32.xlu0 %v2434
    %v2436 = vpop.xlane.xlu0 %2435
    %v2437 = vsub.f32 %v2429, %v2436
    %v2438 = vmul.f32 %v2437, 1.442695
    %v2439 = vpow.pop %v2438
    %v2440 = vsel %vm356, %v2439, 0.0
    %2441 = vadd.xlane.f32.xlu0 %v2440
    %v2442 = vpop.xlane.xlu0 %2441
    %v2443 = vrcp.pop %v2442
    %v2444 = vmul.f32 %v2439, %v2443
    %v2445 = vpack.c.bf16 %v2444, %v2444
    %2446 = vrot.lane.b32.xlu0 %v2055, 40
    %v2447 = vpop.permute.xlu0 %2446
    %v2449 = vsel %vm371, %v2445, 0
    %v2452 = vand.u32 %v2447, %v378
    %2454 = vmatprep.subr.bf16.mxu0 0
    %2455 = vmatpush1.bf16.msra.mxu0 0
    %2456 = vmatprep.subr.bf16.mxu0 0
    %2457 = vmatpush1.bf16.msra.mxu0 0
    %2458 = vmatprep.subr.bf16.mxu0 0
    %2459 = vmatpush1.bf16.msra.mxu0 0
    %2460 = vmatprep.subr.bf16.mxu0 0
    %2461 = vmatpush1.bf16.msra.mxu0 0
    %2462 = vmatprep.subr.bf16.mxu0 0
    %2463 = vmatpush1.bf16.msra.mxu0 0
    %2464 = vmatprep.subr.bf16.mxu0 0
    %2465 = vmatpush1.bf16.msra.mxu0 0
    %2466 = vmatprep.subr.bf16.mxu0 0
    %2467 = vmatpush1.bf16.msra.mxu0 0
    %2468 = vmatprep.subr.bf16.mxu0 0
    %2469 = vmatpush1.bf16.msra.mxu0 %v2452
    %2470 = vmatprep.subr.bf16.mxu0 0
    %2471 = vmatpush2.bf16.msra.mxu0 0
    %2472 = vmatprep.subr.bf16.mxu0 0
    %2473 = vmatpush2.bf16.msra.mxu0 0
    %2474 = vmatprep.subr.bf16.mxu0 0
    %2475 = vmatpush2.bf16.msra.mxu0 0
    %2476 = vmatprep.subr.bf16.mxu0 0
    %2477 = vmatpush2.bf16.msra.mxu0 0
    %2478 = vmatprep.subr.bf16.mxu0 0
    %2479 = vmatpush2.bf16.msra.mxu0 0
    %2480 = vmatprep.subr.bf16.mxu0 0
    %2481 = vmatpush2.bf16.msra.mxu0 0
    %2482 = vmatprep.subr.bf16.mxu0 0
    %2483 = vmatpush2.bf16.msra.mxu0 0
    %2484 = vmatprep.subr.bf16.mxu0 0
    %2485 = vmatpush2.bf16.msra.mxu0 0
    %2486 = vmatprep.mubr.bf16.mxu0 0
    %2487 = vmatmul.mubr.bf16.gmra.mxu0 %v2449
    %v2488 = vpop.f32.mrf.mxu0
    %v2489 = vadd.f32 0.0, %v2488
    %v2490 = vpop.f32.mrf.mxu0
    %v2491 = vpop.f32.mrf.mxu0
    %v2492 = vpop.f32.mrf.mxu0
    %2493 = vdwg.mxu0
    %2495 = vrot.lane.b32.xlu0 %v2269, 8
    %v2496 = vpop.permute.xlu0 %2495
    %2499 = vrot.lane.b32.xlu0 %v2379, 16
    %v2500 = vpop.permute.xlu0 %2499
    %2503 = vrot.lane.b32.xlu0 %v2489, 24
    %v2504 = vpop.permute.xlu0 %2503
    %v2506 = vsel %vm309, %v2159, %v2496
    %v2507 = vsel %vm765, %v2506, %v2500
    %v2508 = vsel %vm767, %v2507, %v2504
    %v2510 = vrot.slane %v2508, 3
    %v2512 = vsel %vm1234, %v2046, %v2510
    %v2513 = vpack.c.bf16 %v2510, %v2512
    %v2514 = vlaneseq
    %v2515 = vshrl.u32 %v2514, 7
    %v2516 = vsub.s32 0, %v2515
    %v2517 = vrot.slane %v1530, %v2516
    %v2522 = vunpack.c.l.b16 %v1526
    %v2523 = vunpack.c.l.b16 %v1527
    %v2524 = vunpack.c.l.b16 %v1528
    %v2525 = vunpack.c.l.b16 %v1529
    %v2526 = vpack.c.b16 %v2523, %v2522
    %v2527 = vpack.c.b16 %v2525, %v2524
    %v2531 = vsel %vm205, %v2513, 0
    %2533 = vmatprep.subr.bf16.mxu0 0
    %2534 = vmatpush1.bf16.msra.mxu0 0
    %2535 = vmatprep.subr.bf16.mxu0 0
    %2536 = vmatpush1.bf16.msra.mxu0 0
    %2537 = vmatprep.subr.bf16.mxu0 0
    %2538 = vmatpush1.bf16.msra.mxu0 0
    %2539 = vmatprep.subr.bf16.mxu0 0
    %2540 = vmatpush1.bf16.msra.mxu0 0
    %2541 = vmatprep.subr.bf16.mxu0 0
    %2542 = vmatpush1.bf16.msra.mxu0 0
    %2543 = vmatprep.subr.bf16.mxu0 0
    %2544 = vmatpush1.bf16.msra.mxu0 0
    %2545 = vmatprep.subr.bf16.mxu0 0
    %2546 = vmatpush1.bf16.msra.mxu0 %v2527
    %2547 = vmatprep.subr.bf16.mxu0 0
    %2548 = vmatpush1.bf16.msra.mxu0 %v2526
    %2549 = vmatprep.subr.bf16.mxu0 0
    %2550 = vmatpush2.bf16.msra.mxu0 0
    %2551 = vmatprep.subr.bf16.mxu0 0
    %2552 = vmatpush2.bf16.msra.mxu0 0
    %2553 = vmatprep.subr.bf16.mxu0 0
    %2554 = vmatpush2.bf16.msra.mxu0 0
    %2555 = vmatprep.subr.bf16.mxu0 0
    %2556 = vmatpush2.bf16.msra.mxu0 0
    %2557 = vmatprep.subr.bf16.mxu0 0
    %2558 = vmatpush2.bf16.msra.mxu0 0
    %2559 = vmatprep.subr.bf16.mxu0 0
    %2560 = vmatpush2.bf16.msra.mxu0 0
    %2561 = vmatprep.subr.bf16.mxu0 0
    %2562 = vmatpush2.bf16.msra.mxu0 0
    %2563 = vmatprep.subr.bf16.mxu0 0
    %2564 = vmatpush2.bf16.msra.mxu0 0
    %2565 = vmatprep.mubr.bf16.mxu0 0
    %2566 = vmatmul.mubr.bf16.gmra.mxu0 %v2531
    %v2567 = vpop.f32.mrf.mxu0
    %v2568 = vadd.f32 %v2517, %v2567
    %v2569 = vpop.f32.mrf.mxu0
    %v2570 = vpop.f32.mrf.mxu0
    %v2571 = vadd.f32 %v2517, %v2570
    %v2572 = vpop.f32.mrf.mxu0
    %2573 = vdwg.mxu0
    %v2574 = vadd.f32 %v1493, %v2568
    %v2575 = vadd.f32 %v1494, %v2571
    %v2576 = vsel %vm205, %v2574, 0.0
    %2577 = vadd.xlane.f32.xlu0 %v2576
    %v2578 = vpop.xlane.xlu0 %2577
    %v2579 = vsel %vm209, %v2575, 0.0
    %2580 = vadd.xlane.f32.xlu0 %v2579
    %v2581 = vpop.xlane.xlu0 %2580
    %v2582 = vmul.f32 %v2578, %v213
    %v2583 = vmul.f32 %v2581, %v213
    %v2584 = vsub.f32 %v2574, %v2582
    %v2585 = vsub.f32 %v2575, %v2583
    %v2586 = vmul.f32 %v2584, %v2584
    %v2587 = vmul.f32 %v2585, %v2585
    %v2588 = vsel %vm205, %v2586, 0.0
    %2589 = vadd.xlane.f32.xlu0 %v2588
    %v2590 = vpop.xlane.xlu0 %2589
    %v2591 = vsel %vm209, %v2587, 0.0
    %2592 = vadd.xlane.f32.xlu0 %v2591
    %v2593 = vpop.xlane.xlu0 %2592
    %v2594 = vmul.f32 %v2590, %v213
    %v2595 = vmul.f32 %v2593, %v213
    %v2596 = vadd.f32 %v2594, 1e-12
    %v2597 = vadd.f32 %v2595, 1e-12
    %v2598 = vrsqrt.pop %v2596
    %v2599 = vrsqrt.pop %v2597
    %v2600 = vmul.f32 %v2584, %v2598
    %v2601 = vmul.f32 %v2585, %v2599
    %v2602 = vld [vmem:[%s2 + $0xd0] sm:$0xf]
    %v2603 = vld [vmem:[%s2 + $0xd4] sm:$0xf]
    %v2604 = vld [vmem:[%s2 + $0xd8] sm:$0xf]
    %v2605 = vld [vmem:[%s2 + $0xdc] sm:$0xf]
    %v2606 = vpack.c.bf16 %v2601, %v2600
    %v2607 = vld [vmem:[#allocation2 + $0x40] sm:$0x1]
    %v2608 = vlaneseq
    %v2609 = vshrl.u32 %v2608, 7
    %v2610 = vsub.s32 0, %v2609
    %v2611 = vrot.slane %v2607, %v2610
    %v2616 = vunpack.c.l.b16 %v2602
    %v2617 = vunpack.c.l.b16 %v2603
    %v2618 = vunpack.c.l.b16 %v2604
    %v2619 = vunpack.c.l.b16 %v2605
    %v2620 = vpack.c.b16 %v2617, %v2616
    %v2621 = vpack.c.b16 %v2619, %v2618
    %v2625 = vsel %vm205, %v2606, 0
    %2627 = vmatprep.subr.bf16.mxu0 0
    %2628 = vmatpush1.bf16.msra.mxu0 0
    %2629 = vmatprep.subr.bf16.mxu0 0
    %2630 = vmatpush1.bf16.msra.mxu0 0
    %2631 = vmatprep.subr.bf16.mxu0 0
    %2632 = vmatpush1.bf16.msra.mxu0 0
    %2633 = vmatprep.subr.bf16.mxu0 0
    %2634 = vmatpush1.bf16.msra.mxu0 0
    %2635 = vmatprep.subr.bf16.mxu0 0
    %2636 = vmatpush1.bf16.msra.mxu0 0
    %2637 = vmatprep.subr.bf16.mxu0 0
    %2638 = vmatpush1.bf16.msra.mxu0 0
    %2639 = vmatprep.subr.bf16.mxu0 0
    %2640 = vmatpush1.bf16.msra.mxu0 %v2621
    %2641 = vmatprep.subr.bf16.mxu0 0
    %2642 = vmatpush1.bf16.msra.mxu0 %v2620
    %2643 = vmatprep.subr.bf16.mxu0 0
    %2644 = vmatpush2.bf16.msra.mxu0 0
    %2645 = vmatprep.subr.bf16.mxu0 0
    %2646 = vmatpush2.bf16.msra.mxu0 0
    %2647 = vmatprep.subr.bf16.mxu0 0
    %2648 = vmatpush2.bf16.msra.mxu0 0
    %2649 = vmatprep.subr.bf16.mxu0 0
    %2650 = vmatpush2.bf16.msra.mxu0 0
    %2651 = vmatprep.subr.bf16.mxu0 0
    %2652 = vmatpush2.bf16.msra.mxu0 0
    %2653 = vmatprep.subr.bf16.mxu0 0
    %2654 = vmatpush2.bf16.msra.mxu0 0
    %2655 = vmatprep.subr.bf16.mxu0 0
    %2656 = vmatpush2.bf16.msra.mxu0 0
    %2657 = vmatprep.subr.bf16.mxu0 0
    %2658 = vmatpush2.bf16.msra.mxu0 0
    %2659 = vmatprep.mubr.bf16.mxu0 0
    %2660 = vmatmul.mubr.bf16.gmra.mxu0 %v2625
    %v2661 = vpop.f32.mrf.mxu0
    %v2662 = vadd.f32 %v2611, %v2661
    %v2663 = vpop.f32.mrf.mxu0
    %v2664 = vpop.f32.mrf.mxu0
    %v2665 = vadd.f32 %v2611, %v2664
    %v2666 = vpop.f32.mrf.mxu0
    %2667 = vdwg.mxu0
    %v2668 = vmul.f32 %v2662, 0.5
    %v2669 = vmul.f32 %v2665, 0.5
    %v2670 = vmul.f32 %v2662, 0.044715
    %v2671 = vmul.f32 %v2665, 0.044715
    %v2672 = vmul.f32 %v2670, %v2662
    %v2673 = vmul.f32 %v2671, %v2665
    %v2674 = vmul.f32 %v2672, %v2662
    %v2675 = vmul.f32 %v2673, %v2665
    %v2676 = vadd.f32 %v2662, %v2674
    %v2677 = vadd.f32 %v2665, %v2675
    %v2678 = vmul.f32 %v2676, 0.7978846
    %v2679 = vmul.f32 %v2677, 0.7978846
    %v2680 = vtanh.pop %v2678
    %v2681 = vtanh.pop %v2679
    %v2682 = vadd.f32 %v2680, 1.0
    %v2683 = vadd.f32 %v2681, 1.0
    %v2684 = vmul.f32 %v2668, %v2682
    %v2685 = vmul.f32 %v2669, %v2683
    %v2686 = vld [vmem:[%s2 + $0xe0] sm:$0xf]
    %v2687 = vld [vmem:[%s2 + $0xe4] sm:$0xf]
    %v2688 = vld [vmem:[%s2 + $0xe8] sm:$0xf]
    %v2689 = vld [vmem:[%s2 + $0xec] sm:$0xf]
    %v2690 = vld [vmem:[%s2 + $0xf0] sm:$0xf]
    %v2691 = vld [vmem:[%s2 + $0xf4] sm:$0xf]
    %v2692 = vld [vmem:[%s2 + $0xf8] sm:$0xf]
    %v2693 = vld [vmem:[%s2 + $0xfc] sm:$0xf]
    %v2694 = vpack.c.bf16 %v2685, %v2684
    %v2703 = vunpack.c.l.b16 %v2686
    %v2704 = vunpack.c.l.b16 %v2687
    %v2705 = vunpack.c.l.b16 %v2688
    %v2706 = vunpack.c.l.b16 %v2689
    %v2707 = vunpack.c.l.b16 %v2690
    %v2708 = vunpack.c.l.b16 %v2691
    %v2709 = vunpack.c.l.b16 %v2692
    %v2710 = vunpack.c.l.b16 %v2693
    %v2711 = vpack.c.b16 %v2704, %v2703
    %v2712 = vpack.c.b16 %v2706, %v2705
    %v2713 = vpack.c.b16 %v2708, %v2707
    %v2714 = vpack.c.b16 %v2710, %v2709
    %v2720 = vsel %vm160, %v2694, 0
    %2722 = vmatprep.subr.bf16.mxu0 0
    %2723 = vmatpush1.bf16.msra.mxu0 0
    %2724 = vmatprep.subr.bf16.mxu0 0
    %2725 = vmatpush1.bf16.msra.mxu0 0
    %2726 = vmatprep.subr.bf16.mxu0 0
    %2727 = vmatpush1.bf16.msra.mxu0 0
    %2728 = vmatprep.subr.bf16.mxu0 0
    %2729 = vmatpush1.bf16.msra.mxu0 0
    %2730 = vmatprep.subr.bf16.mxu0 0
    %2731 = vmatpush1.bf16.msra.mxu0 %v2714
    %2732 = vmatprep.subr.bf16.mxu0 0
    %2733 = vmatpush1.bf16.msra.mxu0 %v2713
    %2734 = vmatprep.subr.bf16.mxu0 0
    %2735 = vmatpush1.bf16.msra.mxu0 %v2712
    %2736 = vmatprep.subr.bf16.mxu0 0
    %2737 = vmatpush1.bf16.msra.mxu0 %v2711
    %2738 = vmatprep.subr.bf16.mxu0 0
    %2739 = vmatpush2.bf16.msra.mxu0 0
    %2740 = vmatprep.subr.bf16.mxu0 0
    %2741 = vmatpush2.bf16.msra.mxu0 0
    %2742 = vmatprep.subr.bf16.mxu0 0
    %2743 = vmatpush2.bf16.msra.mxu0 0
    %2744 = vmatprep.subr.bf16.mxu0 0
    %2745 = vmatpush2.bf16.msra.mxu0 0
    %2746 = vmatprep.subr.bf16.mxu0 0
    %2747 = vmatpush2.bf16.msra.mxu0 0
    %2748 = vmatprep.subr.bf16.mxu0 0
    %2749 = vmatpush2.bf16.msra.mxu0 0
    %2750 = vmatprep.subr.bf16.mxu0 0
    %2751 = vmatpush2.bf16.msra.mxu0 0
    %2752 = vmatprep.subr.bf16.mxu0 0
    %2753 = vmatpush2.bf16.msra.mxu0 0
    %2754 = vmatprep.mubr.bf16.mxu0 0
    %2755 = vmatmul.mubr.bf16.gmra.mxu0 %v2720
    %v2756 = vpop.f32.mrf.mxu0
    %v2757 = vadd.f32 0.0, %v2756
    %v2758 = vpop.f32.mrf.mxu0
    %v2759 = vpop.f32.mrf.mxu0
    %v2760 = vpop.f32.mrf.mxu0
    %2761 = vdwg.mxu0
    %v2762 = vadd.f32 %v2574, %v2757
    %v2763 = vld [vmem:[#allocation2 + $0x48] sm:$0x1]
    %v2764 = vlaneseq
    %v2765 = vshrl.u32 %v2764, 7
    %v2766 = vsub.s32 0, %v2765
    %v2767 = vrot.slane %v2763, %v2766
    %v2768 = vadd.f32 %v2762, %v2767
    %v2769 = vsel %vm205, %v2768, 0.0
    %2770 = vadd.xlane.f32.xlu0 %v2769
    %v2771 = vpop.xlane.xlu0 %2770
    %v2772 = vmul.f32 %v2771, %v213
    %v2773 = vsub.f32 %v2768, %v2772
    %v2774 = vmul.f32 %v2773, %v2773
    %v2775 = vsel %vm205, %v2774, 0.0
    %2776 = vadd.xlane.f32.xlu0 %v2775
    %v2777 = vpop.xlane.xlu0 %2776
    %v2778 = vmul.f32 %v2777, %v213
    %v2779 = vadd.f32 %v2778, 1e-12
    %v2780 = vrsqrt.pop %v2779
    %v2781 = vmul.f32 %v2773, %v2780
    %v2783 = vrot.slane %v2781, 4
    %vm2785 = vcmask 1040384
    %v2786 = vsel %vm2785, %v2781, %v2783
    %v2787 = vld [vmem:[%s1] sm:$0x3]
    %v2788 = vld [vmem:[%s2 + $0x100] sm:$0xf]
    %v2789 = vld [vmem:[%s2 + $0x104] sm:$0xf]
    %v2790 = vld [vmem:[%s2 + $0x108] sm:$0x3]
    %v2791 = vpack.c.bf16 %v2787, %v2787
    %v2792 = vld [vmem:[#allocation2 + $0x50] sm:$0x1]
    %v2793 = vlaneseq
    %v2794 = vshrl.u32 %v2793, 7
    %v2795 = vsub.s32 0, %v2794
    %v2796 = vrot.slane %v2792, %v2795
    %v2800 = vunpack.c.l.b16 %v2788
    %v2801 = vunpack.c.l.b16 %v2789
    %v2802 = vunpack.c.l.b16 %v2790
    %v2803 = vpack.c.b16 %v2801, %v2800
    %v2804 = vpack.c.b16 %v2802, %v2802
    %vm2806 = vcmask 162816
    %v2808 = vsel %vm2806, %v2791, 0
    %v2811 = vsel %vm375, %v2804, 0
    %2813 = vmatprep.subr.bf16.mxu0 0
    %2814 = vmatpush1.bf16.msra.mxu0 0
    %2815 = vmatprep.subr.bf16.mxu0 0
    %2816 = vmatpush1.bf16.msra.mxu0 0
    %2817 = vmatprep.subr.bf16.mxu0 0
    %2818 = vmatpush1.bf16.msra.mxu0 0
    %2819 = vmatprep.subr.bf16.mxu0 0
    %2820 = vmatpush1.bf16.msra.mxu0 0
    %2821 = vmatprep.subr.bf16.mxu0 0
    %2822 = vmatpush1.bf16.msra.mxu0 0
    %2823 = vmatprep.subr.bf16.mxu0 0
    %2824 = vmatpush1.bf16.msra.mxu0 0
    %2825 = vmatprep.subr.bf16.mxu0 0
    %2826 = vmatpush1.bf16.msra.mxu0 %v2811
    %2827 = vmatprep.subr.bf16.mxu0 0
    %2828 = vmatpush1.bf16.msra.mxu0 %v2803
    %2829 = vmatprep.subr.bf16.mxu0 0
    %2830 = vmatpush2.bf16.msra.mxu0 0
    %2831 = vmatprep.subr.bf16.mxu0 0
    %2832 = vmatpush2.bf16.msra.mxu0 0
    %2833 = vmatprep.subr.bf16.mxu0 0
    %2834 = vmatpush2.bf16.msra.mxu0 0
    %2835 = vmatprep.subr.bf16.mxu0 0
    %2836 = vmatpush2.bf16.msra.mxu0 0
    %2837 = vmatprep.subr.bf16.mxu0 0
    %2838 = vmatpush2.bf16.msra.mxu0 0
    %2839 = vmatprep.subr.bf16.mxu0 0
    %2840 = vmatpush2.bf16.msra.mxu0 0
    %2841 = vmatprep.subr.bf16.mxu0 0
    %2842 = vmatpush2.bf16.msra.mxu0 0
    %2843 = vmatprep.subr.bf16.mxu0 0
    %2844 = vmatpush2.bf16.msra.mxu0 0
    %2845 = vmatprep.mubr.bf16.mxu0 0
    %2846 = vmatmul.mubr.bf16.gmra.mxu0 %v2808
    %v2847 = vpop.f32.mrf.mxu0
    %v2848 = vadd.f32 %v2796, %v2847
    %v2849 = vpop.f32.mrf.mxu0
    %v2850 = vpop.f32.mrf.mxu0
    %v2851 = vpop.f32.mrf.mxu0
    %2852 = vdwg.mxu0
    %v2853 = vmax.f32 %v2848, 0.0
    %vm2854 = vcmask 123904
    %v2855 = vsel %vm2854, %v2853, 0.0
    %2856 = vadd.xlane.f32.xlu0 %v2855
    %v2857 = vpop.xlane.xlu0 %2856
    %v2858 = vrcp.pop 16.0
    %v2859 = vmul.f32 %v2857, %v2858
    %v2860 = vsub.f32 %v2853, %v2859
    %v2861 = vmul.f32 %v2860, %v2860
    %v2862 = vsel %vm2854, %v2861, 0.0
    %2863 = vadd.xlane.f32.xlu0 %v2862
    %v2864 = vpop.xlane.xlu0 %2863
    %v2865 = vmul.f32 %v2864, %v2858
    %v2866 = vadd.f32 %v2865, 1e-05
    %v2867 = vrsqrt.pop %v2866
    %v2868 = vmul.f32 %v2860, %v2867
    %v2869 = vld [vmem:[%s2 + $0x110] sm:$0xf]
    %v2870 = vld [vmem:[%s2 + $0x114] sm:$0xf]
    %v2871 = vld [vmem:[%s2 + $0x118] sm:$0xf]
    %v2872 = vld [vmem:[%s2 + $0x11c] sm:$0xf]
    %v2873 = vpack.c.bf16 %v2786, %v2786
    %v2874 = vld [vmem:[%s2 + $0x120] sm:$0xf]
    %v2875 = vld [vmem:[%s2 + $0x124] sm:$0xf]
    %v2876 = vpack.c.bf16 %v2868, %v2868
    %v2879 = vunpack.c.l.b16 %v2874
    %v2880 = vunpack.c.l.b16 %v2875
    %v2881 = vpack.c.b16 %v2880, %v2879
    %v2884 = vsel %vm765, %v2876, 0
    %2886 = vmatprep.subr.bf16.mxu0 0
    %2887 = vmatpush1.bf16.msra.mxu0 0
    %2888 = vmatprep.subr.bf16.mxu0 0
    %2889 = vmatpush1.bf16.msra.mxu0 0
    %2890 = vmatprep.subr.bf16.mxu0 0
    %2891 = vmatpush1.bf16.msra.mxu0 0
    %2892 = vmatprep.subr.bf16.mxu0 0
    %2893 = vmatpush1.bf16.msra.mxu0 0
    %2894 = vmatprep.subr.bf16.mxu0 0
    %2895 = vmatpush1.bf16.msra.mxu0 0
    %2896 = vmatprep.subr.bf16.mxu0 0
    %2897 = vmatpush1.bf16.msra.mxu0 0
    %2898 = vmatprep.subr.bf16.mxu0 0
    %2899 = vmatpush1.bf16.msra.mxu0 0
    %2900 = vmatprep.subr.bf16.mxu0 0
    %2901 = vmatpush1.bf16.msra.mxu0 %v2881
    %2902 = vmatprep.subr.bf16.mxu0 0
    %2903 = vmatpush2.bf16.msra.mxu0 0
    %2904 = vmatprep.subr.bf16.mxu0 0
    %2905 = vmatpush2.bf16.msra.mxu0 0
    %2906 = vmatprep.subr.bf16.mxu0 0
    %2907 = vmatpush2.bf16.msra.mxu0 0
    %2908 = vmatprep.subr.bf16.mxu0 0
    %2909 = vmatpush2.bf16.msra.mxu0 0
    %2910 = vmatprep.subr.bf16.mxu0 0
    %2911 = vmatpush2.bf16.msra.mxu0 0
    %2912 = vmatprep.subr.bf16.mxu0 0
    %2913 = vmatpush2.bf16.msra.mxu0 0
    %2914 = vmatprep.subr.bf16.mxu0 0
    %2915 = vmatpush2.bf16.msra.mxu0 0
    %2916 = vmatprep.subr.bf16.mxu0 0
    %2917 = vmatpush2.bf16.msra.mxu0 0
    %2918 = vmatprep.mubr.bf16.mxu0 0
    %2919 = vmatmul.mubr.bf16.gmra.mxu0 %v2884
    %v2920 = vpop.f32.mrf.mxu0
    %v2921 = vadd.f32 0.0, %v2920
    %v2922 = vpop.f32.mrf.mxu0
    %v2923 = vpop.f32.mrf.mxu0
    %v2924 = vpop.f32.mrf.mxu0
    %2925 = vdwg.mxu0
    %v2930 = vunpack.c.l.b16 %v2869
    %v2931 = vunpack.c.l.b16 %v2870
    %v2932 = vunpack.c.l.b16 %v2871
    %v2933 = vunpack.c.l.b16 %v2872
    %v2934 = vpack.c.b16 %v2931, %v2930
    %v2935 = vpack.c.b16 %v2933, %v2932
    %v2939 = vsel %vm205, %v2873, 0
    %2941 = vmatprep.subr.bf16.mxu0 0
    %2942 = vmatpush1.bf16.msra.mxu0 0
    %2943 = vmatprep.subr.bf16.mxu0 0
    %2944 = vmatpush1.bf16.msra.mxu0 0
    %2945 = vmatprep.subr.bf16.mxu0 0
    %2946 = vmatpush1.bf16.msra.mxu0 0
    %2947 = vmatprep.subr.bf16.mxu0 0
    %2948 = vmatpush1.bf16.msra.mxu0 0
    %2949 = vmatprep.subr.bf16.mxu0 0
    %2950 = vmatpush1.bf16.msra.mxu0 0
    %2951 = vmatprep.subr.bf16.mxu0 0
    %2952 = vmatpush1.bf16.msra.mxu0 0
    %2953 = vmatprep.subr.bf16.mxu0 0
    %2954 = vmatpush1.bf16.msra.mxu0 %v2935
    %2955 = vmatprep.subr.bf16.mxu0 0
    %2956 = vmatpush1.bf16.msra.mxu0 %v2934
    %2957 = vmatprep.subr.bf16.mxu0 0
    %2958 = vmatpush2.bf16.msra.mxu0 0
    %2959 = vmatprep.subr.bf16.mxu0 0
    %2960 = vmatpush2.bf16.msra.mxu0 0
    %2961 = vmatprep.subr.bf16.mxu0 0
    %2962 = vmatpush2.bf16.msra.mxu0 0
    %2963 = vmatprep.subr.bf16.mxu0 0
    %2964 = vmatpush2.bf16.msra.mxu0 0
    %2965 = vmatprep.subr.bf16.mxu0 0
    %2966 = vmatpush2.bf16.msra.mxu0 0
    %2967 = vmatprep.subr.bf16.mxu0 0
    %2968 = vmatpush2.bf16.msra.mxu0 0
    %2969 = vmatprep.subr.bf16.mxu0 0
    %2970 = vmatpush2.bf16.msra.mxu0 0
    %2971 = vmatprep.subr.bf16.mxu0 0
    %2972 = vmatpush2.bf16.msra.mxu0 0
    %2973 = vmatprep.mubr.bf16.mxu0 0
    %2974 = vmatmul.mubr.bf16.gmra.mxu0 %v2939
    %v2975 = vpop.f32.mrf.mxu0
    %v2976 = vadd.f32 %v2921, %v2975
    %v2977 = vpop.f32.mrf.mxu0
    %v2978 = vpop.f32.mrf.mxu0
    %v2979 = vpop.f32.mrf.mxu0
    %2980 = vdwg.mxu0
    %v2981 = vld [vmem:[#allocation2 + $0x58] sm:$0x1]
    %v2982 = vlaneseq
    %v2983 = vshrl.u32 %v2982, 7
    %v2984 = vsub.s32 0, %v2983
    %v2985 = vrot.slane %v2981, %v2984
    %v2986 = vadd.f32 %v2976, %v2985
    %v2987 = vmax.f32 %v2986, 0.0
    %v2988 = vsel %vm209, %v2987, 0.0
    %2989 = vadd.xlane.f32.xlu0 %v2988
    %v2990 = vpop.xlane.xlu0 %2989
    %v2991 = vmul.f32 %v2990, %v213
    %v2992 = vsub.f32 %v2987, %v2991
    %v2993 = vmul.f32 %v2992, %v2992
    %v2994 = vsel %vm209, %v2993, 0.0
    %2995 = vadd.xlane.f32.xlu0 %v2994
    %v2996 = vpop.xlane.xlu0 %2995
    %v2997 = vmul.f32 %v2996, %v213
    %v2998 = vadd.f32 %v2997, 1e-05
    %v2999 = vrsqrt.pop %v2998
    %v3000 = vmul.f32 %v2992, %v2999
    %v3001 = vld [vmem:[#allocation2 + $0x60] sm:$0x1]
    %v3002 = vlaneseq
    %v3003 = vshrl.u32 %v3002, 7
    %v3004 = vsub.s32 0, %v3003
    %v3005 = vrot.slane %v3001, %v3004
    %v3006 = vmul.f32 %v3000, %v3005
    %v3007 = vld [vmem:[#allocation2 + $0x68] sm:$0x1]
    %v3008 = vlaneseq
    %v3009 = vshrl.u32 %v3008, 7
    %v3010 = vsub.s32 0, %v3009
    %v3011 = vrot.slane %v3007, %v3010
    %v3012 = vadd.f32 %v3006, %v3011
    %v3013 = vld [vmem:[%s2 + $0x128] sm:$0xf]
    %v3014 = vld [vmem:[%s2 + $0x12c] sm:$0xf]
    %v3015 = vld [vmem:[%s2 + $0x130] sm:$0xf]
    %v3016 = vld [vmem:[%s2 + $0x134] sm:$0xf]
    %v3017 = vpack.c.bf16 %v3012, %v3012
    %v3018 = vld [vmem:[#allocation2 + $0x70] sm:$0x1]
    %v3019 = vlaneseq
    %v3020 = vshrl.u32 %v3019, 7
    %v3021 = vsub.s32 0, %v3020
    %v3022 = vrot.slane %v3018, %v3021
    %v3027 = vunpack.c.l.b16 %v3013
    %v3028 = vunpack.c.l.b16 %v3014
    %v3029 = vunpack.c.l.b16 %v3015
    %v3030 = vunpack.c.l.b16 %v3016
    %v3031 = vpack.c.b16 %v3028, %v3027
    %v3032 = vpack.c.b16 %v3030, %v3029
    %v3036 = vsel %vm205, %v3017, 0
    %3038 = vmatprep.subr.bf16.mxu0 0
    %3039 = vmatpush1.bf16.msra.mxu0 0
    %3040 = vmatprep.subr.bf16.mxu0 0
    %3041 = vmatpush1.bf16.msra.mxu0 0
    %3042 = vmatprep.subr.bf16.mxu0 0
    %3043 = vmatpush1.bf16.msra.mxu0 0
    %3044 = vmatprep.subr.bf16.mxu0 0
    %3045 = vmatpush1.bf16.msra.mxu0 0
    %3046 = vmatprep.subr.bf16.mxu0 0
    %3047 = vmatpush1.bf16.msra.mxu0 0
    %3048 = vmatprep.subr.bf16.mxu0 0
    %3049 = vmatpush1.bf16.msra.mxu0 0
    %3050 = vmatprep.subr.bf16.mxu0 0
    %3051 = vmatpush1.bf16.msra.mxu0 %v3032
    %3052 = vmatprep.subr.bf16.mxu0 0
    %3053 = vmatpush1.bf16.msra.mxu0 %v3031
    %3054 = vmatprep.subr.bf16.mxu0 0
    %3055 = vmatpush2.bf16.msra.mxu0 0
    %3056 = vmatprep.subr.bf16.mxu0 0
    %3057 = vmatpush2.bf16.msra.mxu0 0
    %3058 = vmatprep.subr.bf16.mxu0 0
    %3059 = vmatpush2.bf16.msra.mxu0 0
    %3060 = vmatprep.subr.bf16.mxu0 0
    %3061 = vmatpush2.bf16.msra.mxu0 0
    %3062 = vmatprep.subr.bf16.mxu0 0
    %3063 = vmatpush2.bf16.msra.mxu0 0
    %3064 = vmatprep.subr.bf16.mxu0 0
    %3065 = vmatpush2.bf16.msra.mxu0 0
    %3066 = vmatprep.subr.bf16.mxu0 0
    %3067 = vmatpush2.bf16.msra.mxu0 0
    %3068 = vmatprep.subr.bf16.mxu0 0
    %3069 = vmatpush2.bf16.msra.mxu0 0
    %3070 = vmatprep.mubr.bf16.mxu0 0
    %3071 = vmatmul.mubr.bf16.gmra.mxu0 %v3036
    %v3072 = vpop.f32.mrf.mxu0
    %v3073 = vadd.f32 %v3022, %v3072
    %v3074 = vpop.f32.mrf.mxu0
    %v3075 = vpop.f32.mrf.mxu0
    %v3076 = vpop.f32.mrf.mxu0
    %3077 = vdwg.mxu0
    %v3078 = vadd.f32 %v3012, %v3073
    %v3079 = vsel %vm209, %v3078, 0.0
    %3080 = vadd.xlane.f32.xlu0 %v3079
    %v3081 = vpop.xlane.xlu0 %3080
    %v3082 = vmul.f32 %v3081, %v213
    %v3083 = vsub.f32 %v3078, %v3082
    %v3084 = vmul.f32 %v3083, %v3083
    %v3085 = vsel %vm209, %v3084, 0.0
    %3086 = vadd.xlane.f32.xlu0 %v3085
    %v3087 = vpop.xlane.xlu0 %3086
    %v3088 = vmul.f32 %v3087, %v213
    %v3089 = vadd.f32 %v3088, 1e-05
    %v3090 = vrsqrt.pop %v3089
    %v3091 = vmul.f32 %v3083, %v3090
    %v3092 = vld [vmem:[#allocation2 + $0x78] sm:$0x1]
    %v3093 = vlaneseq
    %v3094 = vshrl.u32 %v3093, 7
    %v3095 = vsub.s32 0, %v3094
    %v3096 = vrot.slane %v3092, %v3095
    %v3097 = vmul.f32 %v3091, %v3096
    %v3098 = vld [vmem:[#allocation2 + $0x80] sm:$0x1]
    %v3099 = vlaneseq
    %v3100 = vshrl.u32 %v3099, 7
    %v3101 = vsub.s32 0, %v3100
    %v3102 = vrot.slane %v3098, %v3101
    %v3103 = vadd.f32 %v3097, %v3102
    %v3104 = vld [vmem:[%s4] sm:$0xff]
    %v3105 = vld [vmem:[%s4 + $0x8] sm:$0xff]
    %v3106 = vld [vmem:[%s4 + $0x10] sm:$0xff]
    %v3107 = vld [vmem:[%s4 + $0x18] sm:$0xff]
    %v3108 = vld [vmem:[%s4 + $0x20] sm:$0xff]
    %v3109 = vld [vmem:[%s4 + $0x28] sm:$0xff]
    %v3110 = vld [vmem:[%s4 + $0x30] sm:$0xff]
    %v3111 = vld [vmem:[%s4 + $0x38] sm:$0xff]
    %v3112 = vld [vmem:[%s4 + $0x40] sm:$0xff]
    %v3113 = vld [vmem:[%s4 + $0x48] sm:$0xff]
    %v3114 = vld [vmem:[%s4 + $0x50] sm:$0xff]
    %v3115 = vld [vmem:[%s4 + $0x58] sm:$0xff]
    %v3116 = vld [vmem:[%s4 + $0x60] sm:$0xff]
    %v3117 = vld [vmem:[%s4 + $0x68] sm:$0xff]
    %v3118 = vld [vmem:[%s4 + $0x70] sm:$0xff]
    %v3119 = vld [vmem:[%s4 + $0x78] sm:$0xff]
    %v3120 = vld [vmem:[%s4 + $0x80] sm:$0xff]
    %v3121 = vld [vmem:[%s4 + $0x88] sm:$0xff]
    %v3122 = vld [vmem:[%s4 + $0x90] sm:$0xff]
    %v3123 = vld [vmem:[%s4 + $0x98] sm:$0xff]
    %v3124 = vld [vmem:[%s4 + $0xa0] sm:$0xff]
    %v3125 = vld [vmem:[%s4 + $0xa8] sm:$0xff]
    %v3126 = vld [vmem:[%s4 + $0xb0] sm:$0xff]
    %v3127 = vld [vmem:[%s4 + $0xb8] sm:$0xff]
    %v3128 = vld [vmem:[%s4 + $0xc0] sm:$0xff]
    %v3129 = vld [vmem:[%s4 + $0xc8] sm:$0xff]
    %v3130 = vld [vmem:[%s4 + $0xd0] sm:$0xff]
    %v3131 = vld [vmem:[%s4 + $0xd8] sm:$0xff]
    %v3132 = vld [vmem:[%s4 + $0xe0] sm:$0xff]
    %v3133 = vld [vmem:[%s4 + $0xe8] sm:$0xff]
    %v3134 = vld [vmem:[%s4 + $0xf0] sm:$0xff]
    %v3135 = vld [vmem:[%s4 + $0xf8] sm:$0xff]
    %v3136 = vpack.c.bf16 %v3103, %v3103
    %v3137 = vld [vmem:[%s6] sm:$0xff]
    %v3138 = vld [vmem:[%s6 + $0x8] sm:$0xff]
    %v3141 = vlaneseq
    %v3142 = vshrl.u32 %v3141, 7
    %v3143 = vsub.s32 0, %v3142
    %v3144 = vrot.slane %v3137, %v3143
    %v3145 = vlaneseq
    %v3146 = vshrl.u32 %v3145, 7
    %v3147 = vsub.s32 1, %v3146
    %v3148 = vrot.slane %v3137, %v3147
    %v3149 = vlaneseq
    %v3150 = vshrl.u32 %v3149, 7
    %v3151 = vsub.s32 2, %v3150
    %v3152 = vrot.slane %v3137, %v3151
    %v3153 = vlaneseq
    %v3154 = vshrl.u32 %v3153, 7
    %v3155 = vsub.s32 3, %v3154
    %v3156 = vrot.slane %v3137, %v3155
    %v3157 = vlaneseq
    %v3158 = vshrl.u32 %v3157, 7
    %v3159 = vsub.s32 4, %v3158
    %v3160 = vrot.slane %v3137, %v3159
    %v3161 = vlaneseq
    %v3162 = vshrl.u32 %v3161, 7
    %v3163 = vsub.s32 5, %v3162
    %v3164 = vrot.slane %v3137, %v3163
    %v3165 = vlaneseq
    %v3166 = vshrl.u32 %v3165, 7
    %v3167 = vsub.s32 6, %v3166
    %v3168 = vrot.slane %v3137, %v3167
    %v3169 = vlaneseq
    %v3170 = vshrl.u32 %v3169, 7
    %v3171 = vsub.s32 7, %v3170
    %v3172 = vrot.slane %v3137, %v3171
    %v3173 = vlaneseq
    %v3174 = vshrl.u32 %v3173, 7
    %v3175 = vsub.s32 0, %v3174
    %v3176 = vrot.slane %v3138, %v3175
    %v3177 = vlaneseq
    %v3178 = vshrl.u32 %v3177, 7
    %v3179 = vsub.s32 1, %v3178
    %v3180 = vrot.slane %v3138, %v3179
    %v3181 = vlaneseq
    %v3182 = vshrl.u32 %v3181, 7
    %v3183 = vsub.s32 2, %v3182
    %v3184 = vrot.slane %v3138, %v3183
    %v3185 = vlaneseq
    %v3186 = vshrl.u32 %v3185, 7
    %v3187 = vsub.s32 3, %v3186
    %v3188 = vrot.slane %v3138, %v3187
    %v3189 = vlaneseq
    %v3190 = vshrl.u32 %v3189, 7
    %v3191 = vsub.s32 4, %v3190
    %v3192 = vrot.slane %v3138, %v3191
    %v3193 = vlaneseq
    %v3194 = vshrl.u32 %v3193, 7
    %v3195 = vsub.s32 5, %v3194
    %v3196 = vrot.slane %v3138, %v3195
    %v3197 = vlaneseq
    %v3198 = vshrl.u32 %v3197, 7
    %v3199 = vsub.s32 6, %v3198
    %v3200 = vrot.slane %v3138, %v3199
    %v3201 = vlaneseq
    %v3202 = vshrl.u32 %v3201, 7
    %v3203 = vsub.s32 7, %v3202
    %v3204 = vrot.slane %v3138, %v3203
    %v3253 = vunpack.c.l.b16 %v3104
    %v3254 = vunpack.c.h.b16 %v3104
    %v3255 = vunpack.c.l.b16 %v3105
    %v3256 = vunpack.c.h.b16 %v3105
    %v3257 = vunpack.c.l.b16 %v3106
    %v3258 = vunpack.c.h.b16 %v3106
    %v3259 = vunpack.c.l.b16 %v3107
    %v3260 = vunpack.c.h.b16 %v3107
    %v3261 = vunpack.c.l.b16 %v3108
    %v3262 = vunpack.c.h.b16 %v3108
    %v3263 = vunpack.c.l.b16 %v3109
    %v3264 = vunpack.c.h.b16 %v3109
    %v3265 = vunpack.c.l.b16 %v3110
    %v3266 = vunpack.c.h.b16 %v3110
    %v3267 = vunpack.c.l.b16 %v3111
    %v3268 = vunpack.c.h.b16 %v3111
    %v3269 = vunpack.c.l.b16 %v3112
    %v3270 = vunpack.c.h.b16 %v3112
    %v3271 = vunpack.c.l.b16 %v3113
    %v3272 = vunpack.c.h.b16 %v3113
    %v3273 = vunpack.c.l.b16 %v3114
    %v3274 = vunpack.c.h.b16 %v3114
    %v3275 = vunpack.c.l.b16 %v3115
    %v3276 = vunpack.c.h.b16 %v3115
    %v3277 = vunpack.c.l.b16 %v3116
    %v3278 = vunpack.c.h.b16 %v3116
    %v3279 = vunpack.c.l.b16 %v3117
    %v3280 = vunpack.c.h.b16 %v3117
    %v3281 = vunpack.c.l.b16 %v3118
    %v3282 = vunpack.c.h.b16 %v3118
    %v3283 = vunpack.c.l.b16 %v3119
    %v3284 = vunpack.c.h.b16 %v3119
    %v3285 = vunpack.c.l.b16 %v3120
    %v3286 = vunpack.c.h.b16 %v3120
    %v3287 = vunpack.c.l.b16 %v3121
    %v3288 = vunpack.c.h.b16 %v3121
    %v3289 = vunpack.c.l.b16 %v3122
    %v3290 = vunpack.c.h.b16 %v3122
    %v3291 = vunpack.c.l.b16 %v3123
    %v3292 = vunpack.c.h.b16 %v3123
    %v3293 = vunpack.c.l.b16 %v3124
    %v3294 = vunpack.c.h.b16 %v3124
    %v3295 = vunpack.c.l.b16 %v3125
    %v3296 = vunpack.c.h.b16 %v3125
    %v3297 = vunpack.c.l.b16 %v3126
    %v3298 = vunpack.c.h.b16 %v3126
    %v3299 = vunpack.c.l.b16 %v3127
    %v3300 = vunpack.c.h.b16 %v3127
    %v3301 = vunpack.c.l.b16 %v3128
    %v3302 = vunpack.c.h.b16 %v3128
    %v3303 = vunpack.c.l.b16 %v3129
    %v3304 = vunpack.c.h.b16 %v3129
    %v3305 = vunpack.c.l.b16 %v3130
    %v3306 = vunpack.c.h.b16 %v3130
    %v3307 = vunpack.c.l.b16 %v3131
    %v3308 = vunpack.c.h.b16 %v3131
    %v3309 = vunpack.c.l.b16 %v3132
    %v3310 = vunpack.c.h.b16 %v3132
    %v3311 = vunpack.c.l.b16 %v3133
    %v3312 = vunpack.c.h.b16 %v3133
    %v3313 = vunpack.c.l.b16 %v3134
    %v3314 = vunpack.c.h.b16 %v3134
    %v3315 = vunpack.c.l.b16 %v3135
    %v3316 = vunpack.c.h.b16 %v3135
    %v3317 = vpack.c.b16 %v3269, %v3253
    %v3318 = vpack.c.b16 %v3270, %v3254
    %v3319 = vpack.c.b16 %v3271, %v3255
    %v3320 = vpack.c.b16 %v3272, %v3256
    %v3321 = vpack.c.b16 %v3273, %v3257
    %v3322 = vpack.c.b16 %v3274, %v3258
    %v3323 = vpack.c.b16 %v3275, %v3259
    %v3324 = vpack.c.b16 %v3276, %v3260
    %v3325 = vpack.c.b16 %v3277, %v3261
    %v3326 = vpack.c.b16 %v3278, %v3262
    %v3327 = vpack.c.b16 %v3279, %v3263
    %v3328 = vpack.c.b16 %v3280, %v3264
    %v3329 = vpack.c.b16 %v3281, %v3265
    %v3330 = vpack.c.b16 %v3282, %v3266
    %v3331 = vpack.c.b16 %v3283, %v3267
    %v3332 = vpack.c.b16 %v3284, %v3268
    %v3333 = vpack.c.b16 %v3301, %v3285
    %v3334 = vpack.c.b16 %v3302, %v3286
    %v3335 = vpack.c.b16 %v3303, %v3287
    %v3336 = vpack.c.b16 %v3304, %v3288
    %v3337 = vpack.c.b16 %v3305, %v3289
    %v3338 = vpack.c.b16 %v3306, %v3290
    %v3339 = vpack.c.b16 %v3307, %v3291
    %v3340 = vpack.c.b16 %v3308, %v3292
    %v3341 = vpack.c.b16 %v3309, %v3293
    %v3342 = vpack.c.b16 %v3310, %v3294
    %v3343 = vpack.c.b16 %v3311, %v3295
    %v3344 = vpack.c.b16 %v3312, %v3296
    %v3345 = vpack.c.b16 %v3313, %v3297
    %v3346 = vpack.c.b16 %v3314, %v3298
    %v3347 = vpack.c.b16 %v3315, %v3299
    %v3348 = vpack.c.b16 %v3316, %v3300
    %v3382 = vsel %vm205, %v3136, 0
    %3384 = vmatprep.subr.bf16.mxu0 0
    %3385 = vmatpush1.bf16.msra.mxu0 0
    %3386 = vmatprep.subr.bf16.mxu0 0
    %3387 = vmatpush1.bf16.msra.mxu0 0
    %3388 = vmatprep.subr.bf16.mxu0 0
    %3389 = vmatpush1.bf16.msra.mxu0 0
    %3390 = vmatprep.subr.bf16.mxu0 0
    %3391 = vmatpush1.bf16.msra.mxu0 0
    %3392 = vmatprep.subr.bf16.mxu0 0
    %3393 = vmatpush1.bf16.msra.mxu0 0
    %3394 = vmatprep.subr.bf16.mxu0 0
    %3395 = vmatpush1.bf16.msra.mxu0 0
    %3396 = vmatprep.subr.bf16.mxu0 %v3334
    %3397 = vmatpush1.bf16.msra.mxu0 %v3333
    %3398 = vmatprep.subr.bf16.mxu0 %v3318
    %3399 = vmatpush1.bf16.msra.mxu0 %v3317
    %3400 = vmatprep.subr.bf16.mxu0 0
    %3401 = vmatpush2.bf16.msra.mxu0 0
    %3402 = vmatprep.subr.bf16.mxu0 0
    %3403 = vmatpush2.bf16.msra.mxu0 0
    %3404 = vmatprep.subr.bf16.mxu0 0
    %3405 = vmatpush2.bf16.msra.mxu0 0
    %3406 = vmatprep.subr.bf16.mxu0 0
    %3407 = vmatpush2.bf16.msra.mxu0 0
    %3408 = vmatprep.subr.bf16.mxu0 0
    %3409 = vmatpush2.bf16.msra.mxu0 0
    %3410 = vmatprep.subr.bf16.mxu0 0
    %3411 = vmatpush2.bf16.msra.mxu0 0
    %3412 = vmatprep.subr.bf16.mxu0 0
    %3413 = vmatpush2.bf16.msra.mxu0 0
    %3414 = vmatprep.subr.bf16.mxu0 0
    %3415 = vmatpush2.bf16.msra.mxu0 0
    %3416 = vmatprep.mubr.bf16.mxu0 0
    %3417 = vmatmul.mubr.bf16.gmra.mxu0 %v3382
    %v3418 = vpop.f32.mrf.mxu0
    %v3419 = vadd.f32 %v3144, %v3418
    %v3420 = vpop.f32.mrf.mxu0
    %v3421 = vadd.f32 %v3148, %v3420
    %v3422 = vpop.f32.mrf.mxu0
    %v3423 = vpop.f32.mrf.mxu0
    %3424 = vdwg.mxu0
    %3425 = vmatprep.subr.bf16.mxu0 0
    %3426 = vmatpush1.bf16.msra.mxu0 0
    %3427 = vmatprep.subr.bf16.mxu0 0
    %3428 = vmatpush1.bf16.msra.mxu0 0
    %3429 = vmatprep.subr.bf16.mxu0 0
    %3430 = vmatpush1.bf16.msra.mxu0 0
    %3431 = vmatprep.subr.bf16.mxu0 0
    %3432 = vmatpush1.bf16.msra.mxu0 0
    %3433 = vmatprep.subr.bf16.mxu0 0
    %3434 = vmatpush1.bf16.msra.mxu0 0
    %3435 = vmatprep.subr.bf16.mxu0 0
    %3436 = vmatpush1.bf16.msra.mxu0 0
    %3437 = vmatprep.subr.bf16.mxu0 %v3336
    %3438 = vmatpush1.bf16.msra.mxu0 %v3335
    %3439 = vmatprep.subr.bf16.mxu0 %v3320
    %3440 = vmatpush1.bf16.msra.mxu0 %v3319
    %3441 = vmatprep.subr.bf16.mxu0 0
    %3442 = vmatpush2.bf16.msra.mxu0 0
    %3443 = vmatprep.subr.bf16.mxu0 0
    %3444 = vmatpush2.bf16.msra.mxu0 0
    %3445 = vmatprep.subr.bf16.mxu0 0
    %3446 = vmatpush2.bf16.msra.mxu0 0
    %3447 = vmatprep.subr.bf16.mxu0 0
    %3448 = vmatpush2.bf16.msra.mxu0 0
    %3449 = vmatprep.subr.bf16.mxu0 0
    %3450 = vmatpush2.bf16.msra.mxu0 0
    %3451 = vmatprep.subr.bf16.mxu0 0
    %3452 = vmatpush2.bf16.msra.mxu0 0
    %3453 = vmatprep.subr.bf16.mxu0 0
    %3454 = vmatpush2.bf16.msra.mxu0 0
    %3455 = vmatprep.subr.bf16.mxu0 0
    %3456 = vmatpush2.bf16.msra.mxu0 0
    %3457 = vmatprep.mubr.bf16.mxu0 0
    %3458 = vmatmul.mubr.bf16.gmra.mxu0 %v3382
    %v3459 = vpop.f32.mrf.mxu0
    %v3460 = vadd.f32 %v3152, %v3459
    %v3461 = vpop.f32.mrf.mxu0
    %v3462 = vadd.f32 %v3156, %v3461
    %v3463 = vpop.f32.mrf.mxu0
    %v3464 = vpop.f32.mrf.mxu0
    %3465 = vdwg.mxu0
    %3466 = vmatprep.subr.bf16.mxu0 0
    %3467 = vmatpush1.bf16.msra.mxu0 0
    %3468 = vmatprep.subr.bf16.mxu0 0
    %3469 = vmatpush1.bf16.msra.mxu0 0
    %3470 = vmatprep.subr.bf16.mxu0 0
    %3471 = vmatpush1.bf16.msra.mxu0 0
    %3472 = vmatprep.subr.bf16.mxu0 0
    %3473 = vmatpush1.bf16.msra.mxu0 0
    %3474 = vmatprep.subr.bf16.mxu0 0
    %3475 = vmatpush1.bf16.msra.mxu0 0
    %3476 = vmatprep.subr.bf16.mxu0 0
    %3477 = vmatpush1.bf16.msra.mxu0 0
    %3478 = vmatprep.subr.bf16.mxu0 %v3338
    %3479 = vmatpush1.bf16.msra.mxu0 %v3337
    %3480 = vmatprep.subr.bf16.mxu0 %v3322
    %3481 = vmatpush1.bf16.msra.mxu0 %v3321
    %3482 = vmatprep.subr.bf16.mxu0 0
    %3483 = vmatpush2.bf16.msra.mxu0 0
    %3484 = vmatprep.subr.bf16.mxu0 0
    %3485 = vmatpush2.bf16.msra.mxu0 0
    %3486 = vmatprep.subr.bf16.mxu0 0
    %3487 = vmatpush2.bf16.msra.mxu0 0
    %3488 = vmatprep.subr.bf16.mxu0 0
    %3489 = vmatpush2.bf16.msra.mxu0 0
    %3490 = vmatprep.subr.bf16.mxu0 0
    %3491 = vmatpush2.bf16.msra.mxu0 0
    %3492 = vmatprep.subr.bf16.mxu0 0
    %3493 = vmatpush2.bf16.msra.mxu0 0
    %3494 = vmatprep.subr.bf16.mxu0 0
    %3495 = vmatpush2.bf16.msra.mxu0 0
    %3496 = vmatprep.subr.bf16.mxu0 0
    %3497 = vmatpush2.bf16.msra.mxu0 0
    %3498 = vmatprep.mubr.bf16.mxu0 0
    %3499 = vmatmul.mubr.bf16.gmra.mxu0 %v3382
    %v3500 = vpop.f32.mrf.mxu0
    %v3501 = vadd.f32 %v3160, %v3500
    %v3502 = vpop.f32.mrf.mxu0
    %v3503 = vadd.f32 %v3164, %v3502
    %v3504 = vpop.f32.mrf.mxu0
    %v3505 = vpop.f32.mrf.mxu0
    %3506 = vdwg.mxu0
    %3507 = vmatprep.subr.bf16.mxu0 0
    %3508 = vmatpush1.bf16.msra.mxu0 0
    %3509 = vmatprep.subr.bf16.mxu0 0
    %3510 = vmatpush1.bf16.msra.mxu0 0
    %3511 = vmatprep.subr.bf16.mxu0 0
    %3512 = vmatpush1.bf16.msra.mxu0 0
    %3513 = vmatprep.subr.bf16.mxu0 0
    %3514 = vmatpush1.bf16.msra.mxu0 0
    %3515 = vmatprep.subr.bf16.mxu0 0
    %3516 = vmatpush1.bf16.msra.mxu0 0
    %3517 = vmatprep.subr.bf16.mxu0 0
    %3518 = vmatpush1.bf16.msra.mxu0 0
    %3519 = vmatprep.subr.bf16.mxu0 %v3340
    %3520 = vmatpush1.bf16.msra.mxu0 %v3339
    %3521 = vmatprep.subr.bf16.mxu0 %v3324
    %3522 = vmatpush1.bf16.msra.mxu0 %v3323
    %3523 = vmatprep.subr.bf16.mxu0 0
    %3524 = vmatpush2.bf16.msra.mxu0 0
    %3525 = vmatprep.subr.bf16.mxu0 0
    %3526 = vmatpush2.bf16.msra.mxu0 0
    %3527 = vmatprep.subr.bf16.mxu0 0
    %3528 = vmatpush2.bf16.msra.mxu0 0
    %3529 = vmatprep.subr.bf16.mxu0 0
    %3530 = vmatpush2.bf16.msra.mxu0 0
    %3531 = vmatprep.subr.bf16.mxu0 0
    %3532 = vmatpush2.bf16.msra.mxu0 0
    %3533 = vmatprep.subr.bf16.mxu0 0
    %3534 = vmatpush2.bf16.msra.mxu0 0
    %3535 = vmatprep.subr.bf16.mxu0 0
    %3536 = vmatpush2.bf16.msra.mxu0 0
    %3537 = vmatprep.subr.bf16.mxu0 0
    %3538 = vmatpush2.bf16.msra.mxu0 0
    %3539 = vmatprep.mubr.bf16.mxu0 0
    %3540 = vmatmul.mubr.bf16.gmra.mxu0 %v3382
    %v3541 = vpop.f32.mrf.mxu0
    %v3542 = vadd.f32 %v3168, %v3541
    %v3543 = vpop.f32.mrf.mxu0
    %v3544 = vadd.f32 %v3172, %v3543
    %v3545 = vpop.f32.mrf.mxu0
    %v3546 = vpop.f32.mrf.mxu0
    %3547 = vdwg.mxu0
    %3548 = vmatprep.subr.bf16.mxu0 0
    %3549 = vmatpush1.bf16.msra.mxu0 0
    %3550 = vmatprep.subr.bf16.mxu0 0
    %3551 = vmatpush1.bf16.msra.mxu0 0
    %3552 = vmatprep.subr.bf16.mxu0 0
    %3553 = vmatpush1.bf16.msra.mxu0 0
    %3554 = vmatprep.subr.bf16.mxu0 0
    %3555 = vmatpush1.bf16.msra.mxu0 0
    %3556 = vmatprep.subr.bf16.mxu0 0
    %3557 = vmatpush1.bf16.msra.mxu0 0
    %3558 = vmatprep.subr.bf16.mxu0 0
    %3559 = vmatpush1.bf16.msra.mxu0 0
    %3560 = vmatprep.subr.bf16.mxu0 %v3342
    %3561 = vmatpush1.bf16.msra.mxu0 %v3341
    %3562 = vmatprep.subr.bf16.mxu0 %v3326
    %3563 = vmatpush1.bf16.msra.mxu0 %v3325
    %3564 = vmatprep.subr.bf16.mxu0 0
    %3565 = vmatpush2.bf16.msra.mxu0 0
    %3566 = vmatprep.subr.bf16.mxu0 0
    %3567 = vmatpush2.bf16.msra.mxu0 0
    %3568 = vmatprep.subr.bf16.mxu0 0
    %3569 = vmatpush2.bf16.msra.mxu0 0
    %3570 = vmatprep.subr.bf16.mxu0 0
    %3571 = vmatpush2.bf16.msra.mxu0 0
    %3572 = vmatprep.subr.bf16.mxu0 0
    %3573 = vmatpush2.bf16.msra.mxu0 0
    %3574 = vmatprep.subr.bf16.mxu0 0
    %3575 = vmatpush2.bf16.msra.mxu0 0
    %3576 = vmatprep.subr.bf16.mxu0 0
    %3577 = vmatpush2.bf16.msra.mxu0 0
    %3578 = vmatprep.subr.bf16.mxu0 0
    %3579 = vmatpush2.bf16.msra.mxu0 0
    %3580 = vmatprep.mubr.bf16.mxu0 0
    %3581 = vmatmul.mubr.bf16.gmra.mxu0 %v3382
    %v3582 = vpop.f32.mrf.mxu0
    %v3583 = vadd.f32 %v3176, %v3582
    %v3584 = vpop.f32.mrf.mxu0
    %v3585 = vadd.f32 %v3180, %v3584
    %v3586 = vpop.f32.mrf.mxu0
    %v3587 = vpop.f32.mrf.mxu0
    %3588 = vdwg.mxu0
    %3589 = vmatprep.subr.bf16.mxu0 0
    %3590 = vmatpush1.bf16.msra.mxu0 0
    %3591 = vmatprep.subr.bf16.mxu0 0
    %3592 = vmatpush1.bf16.msra.mxu0 0
    %3593 = vmatprep.subr.bf16.mxu0 0
    %3594 = vmatpush1.bf16.msra.mxu0 0
    %3595 = vmatprep.subr.bf16.mxu0 0
    %3596 = vmatpush1.bf16.msra.mxu0 0
    %3597 = vmatprep.subr.bf16.mxu0 0
    %3598 = vmatpush1.bf16.msra.mxu0 0
    %3599 = vmatprep.subr.bf16.mxu0 0
    %3600 = vmatpush1.bf16.msra.mxu0 0
    %3601 = vmatprep.subr.bf16.mxu0 %v3344
    %3602 = vmatpush1.bf16.msra.mxu0 %v3343
    %3603 = vmatprep.subr.bf16.mxu0 %v3328
    %3604 = vmatpush1.bf16.msra.mxu0 %v3327
    %3605 = vmatprep.subr.bf16.mxu0 0
    %3606 = vmatpush2.bf16.msra.mxu0 0
    %3607 = vmatprep.subr.bf16.mxu0 0
    %3608 = vmatpush2.bf16.msra.mxu0 0
    %3609 = vmatprep.subr.bf16.mxu0 0
    %3610 = vmatpush2.bf16.msra.mxu0 0
    %3611 = vmatprep.subr.bf16.mxu0 0
    %3612 = vmatpush2.bf16.msra.mxu0 0
    %3613 = vmatprep.subr.bf16.mxu0 0
    %3614 = vmatpush2.bf16.msra.mxu0 0
    %3615 = vmatprep.subr.bf16.mxu0 0
    %3616 = vmatpush2.bf16.msra.mxu0 0
    %3617 = vmatprep.subr.bf16.mxu0 0
    %3618 = vmatpush2.bf16.msra.mxu0 0
    %3619 = vmatprep.subr.bf16.mxu0 0
    %3620 = vmatpush2.bf16.msra.mxu0 0
    %3621 = vmatprep.mubr.bf16.mxu0 0
    %3622 = vmatmul.mubr.bf16.gmra.mxu0 %v3382
    %v3623 = vpop.f32.mrf.mxu0
    %v3624 = vadd.f32 %v3184, %v3623
    %v3625 = vpop.f32.mrf.mxu0
    %v3626 = vadd.f32 %v3188, %v3625
    %v3627 = vpop.f32.mrf.mxu0
    %v3628 = vpop.f32.mrf.mxu0
    %3629 = vdwg.mxu0
    %3630 = vmatprep.subr.bf16.mxu0 0
    %3631 = vmatpush1.bf16.msra.mxu0 0
    %3632 = vmatprep.subr.bf16.mxu0 0
    %3633 = vmatpush1.bf16.msra.mxu0 0
    %3634 = vmatprep.subr.bf16.mxu0 0
    %3635 = vmatpush1.bf16.msra.mxu0 0
    %3636 = vmatprep.subr.bf16.mxu0 0
    %3637 = vmatpush1.bf16.msra.mxu0 0
    %3638 = vmatprep.subr.bf16.mxu0 0
    %3639 = vmatpush1.bf16.msra.mxu0 0
    %3640 = vmatprep.subr.bf16.mxu0 0
    %3641 = vmatpush1.bf16.msra.mxu0 0
    %3642 = vmatprep.subr.bf16.mxu0 %v3346
    %3643 = vmatpush1.bf16.msra.mxu0 %v3345
    %3644 = vmatprep.subr.bf16.mxu0 %v3330
    %3645 = vmatpush1.bf16.msra.mxu0 %v3329
    %3646 = vmatprep.subr.bf16.mxu0 0
    %3647 = vmatpush2.bf16.msra.mxu0 0
    %3648 = vmatprep.subr.bf16.mxu0 0
    %3649 = vmatpush2.bf16.msra.mxu0 0
    %3650 = vmatprep.subr.bf16.mxu0 0
    %3651 = vmatpush2.bf16.msra.mxu0 0
    %3652 = vmatprep.subr.bf16.mxu0 0
    %3653 = vmatpush2.bf16.msra.mxu0 0
    %3654 = vmatprep.subr.bf16.mxu0 0
    %3655 = vmatpush2.bf16.msra.mxu0 0
    %3656 = vmatprep.subr.bf16.mxu0 0
    %3657 = vmatpush2.bf16.msra.mxu0 0
    %3658 = vmatprep.subr.bf16.mxu0 0
    %3659 = vmatpush2.bf16.msra.mxu0 0
    %3660 = vmatprep.subr.bf16.mxu0 0
    %3661 = vmatpush2.bf16.msra.mxu0 0
    %3662 = vmatprep.mubr.bf16.mxu0 0
    %3663 = vmatmul.mubr.bf16.gmra.mxu0 %v3382
    %v3664 = vpop.f32.mrf.mxu0
    %v3665 = vadd.f32 %v3192, %v3664
    %v3666 = vpop.f32.mrf.mxu0
    %v3667 = vadd.f32 %v3196, %v3666
    %v3668 = vpop.f32.mrf.mxu0
    %v3669 = vpop.f32.mrf.mxu0
    %3670 = vdwg.mxu0
    %3671 = vmatprep.subr.bf16.mxu0 0
    %3672 = vmatpush1.bf16.msra.mxu0 0
    %3673 = vmatprep.subr.bf16.mxu0 0
    %3674 = vmatpush1.bf16.msra.mxu0 0
    %3675 = vmatprep.subr.bf16.mxu0 0
    %3676 = vmatpush1.bf16.msra.mxu0 0
    %3677 = vmatprep.subr.bf16.mxu0 0
    %3678 = vmatpush1.bf16.msra.mxu0 0
    %3679 = vmatprep.subr.bf16.mxu0 0
    %3680 = vmatpush1.bf16.msra.mxu0 0
    %3681 = vmatprep.subr.bf16.mxu0 0
    %3682 = vmatpush1.bf16.msra.mxu0 0
    %3683 = vmatprep.subr.bf16.mxu0 %v3348
    %3684 = vmatpush1.bf16.msra.mxu0 %v3347
    %3685 = vmatprep.subr.bf16.mxu0 %v3332
    %3686 = vmatpush1.bf16.msra.mxu0 %v3331
    %3687 = vmatprep.subr.bf16.mxu0 0
    %3688 = vmatpush2.bf16.msra.mxu0 0
    %3689 = vmatprep.subr.bf16.mxu0 0
    %3690 = vmatpush2.bf16.msra.mxu0 0
    %3691 = vmatprep.subr.bf16.mxu0 0
    %3692 = vmatpush2.bf16.msra.mxu0 0
    %3693 = vmatprep.subr.bf16.mxu0 0
    %3694 = vmatpush2.bf16.msra.mxu0 0
    %3695 = vmatprep.subr.bf16.mxu0 0
    %3696 = vmatpush2.bf16.msra.mxu0 0
    %3697 = vmatprep.subr.bf16.mxu0 0
    %3698 = vmatpush2.bf16.msra.mxu0 0
    %3699 = vmatprep.subr.bf16.mxu0 0
    %3700 = vmatpush2.bf16.msra.mxu0 0
    %3701 = vmatprep.subr.bf16.mxu0 0
    %3702 = vmatpush2.bf16.msra.mxu0 0
    %3703 = vmatprep.mubr.bf16.mxu0 0
    %3704 = vmatmul.mubr.bf16.gmra.mxu0 %v3382
    %v3705 = vpop.f32.mrf.mxu0
    %v3706 = vadd.f32 %v3200, %v3705
    %v3707 = vpop.f32.mrf.mxu0
    %v3708 = vadd.f32 %v3204, %v3707
    %v3709 = vpop.f32.mrf.mxu0
    %v3710 = vpop.f32.mrf.mxu0
    %3711 = vdwg.mxu0
    %v3712 = vmax.f32 %v3419, 0.0
    %v3713 = vmax.f32 %v3421, 0.0
    %v3714 = vmax.f32 %v3460, 0.0
    %v3715 = vmax.f32 %v3462, 0.0
    %v3716 = vmax.f32 %v3501, 0.0
    %v3717 = vmax.f32 %v3503, 0.0
    %v3718 = vmax.f32 %v3542, 0.0
    %v3719 = vmax.f32 %v3544, 0.0
    %v3720 = vmax.f32 %v3583, 0.0
    %v3721 = vmax.f32 %v3585, 0.0
    %v3722 = vmax.f32 %v3624, 0.0
    %v3723 = vmax.f32 %v3626, 0.0
    %v3724 = vmax.f32 %v3665, 0.0
    %v3725 = vmax.f32 %v3667, 0.0
    %v3726 = vmax.f32 %v3706, 0.0
    %v3727 = vmax.f32 %v3708, 0.0
    %v3728 = vld [vmem:[#allocation5] sm:$0xff]
    %v3729 = vld [vmem:[#allocation5 + $0x8] sm:$0xff]
    %v3730 = vld [vmem:[#allocation5 + $0x10] sm:$0xff]
    %v3731 = vld [vmem:[#allocation5 + $0x18] sm:$0xff]
    %v3732 = vld [vmem:[#allocation5 + $0x20] sm:$0xff]
    %v3733 = vld [vmem:[#allocation5 + $0x28] sm:$0xff]
    %v3734 = vld [vmem:[#allocation5 + $0x30] sm:$0xff]
    %v3735 = vld [vmem:[#allocation5 + $0x38] sm:$0xff]
    %v3736 = vld [vmem:[#allocation5 + $0x40] sm:$0xff]
    %v3737 = vld [vmem:[#allocation5 + $0x48] sm:$0xff]
    %v3738 = vld [vmem:[#allocation5 + $0x50] sm:$0xff]
    %v3739 = vld [vmem:[#allocation5 + $0x58] sm:$0xff]
    %v3740 = vld [vmem:[#allocation5 + $0x60] sm:$0xff]
    %v3741 = vld [vmem:[#allocation5 + $0x68] sm:$0xff]
    %v3742 = vld [vmem:[#allocation5 + $0x70] sm:$0xff]
    %v3743 = vld [vmem:[#allocation5 + $0x78] sm:$0xff]
    %v3744 = vld [vmem:[#allocation5 + $0x80] sm:$0xff]
    %v3745 = vld [vmem:[#allocation5 + $0x88] sm:$0xff]
    %v3746 = vld [vmem:[#allocation5 + $0x90] sm:$0xff]
    %v3747 = vld [vmem:[#allocation5 + $0x98] sm:$0xff]
    %v3748 = vld [vmem:[#allocation5 + $0xa0] sm:$0xff]
    %v3749 = vld [vmem:[#allocation5 + $0xa8] sm:$0xff]
    %v3750 = vld [vmem:[#allocation5 + $0xb0] sm:$0xff]
    %v3751 = vld [vmem:[#allocation5 + $0xb8] sm:$0xff]
    %v3752 = vld [vmem:[#allocation5 + $0xc0] sm:$0xff]
    %v3753 = vld [vmem:[#allocation5 + $0xc8] sm:$0xff]
    %v3754 = vld [vmem:[#allocation5 + $0xd0] sm:$0xff]
    %v3755 = vld [vmem:[#allocation5 + $0xd8] sm:$0xff]
    %v3756 = vld [vmem:[#allocation5 + $0xe0] sm:$0xff]
    %v3757 = vld [vmem:[#allocation5 + $0xe8] sm:$0xff]
    %v3758 = vld [vmem:[#allocation5 + $0xf0] sm:$0xff]
    %v3759 = vld [vmem:[#allocation5 + $0xf8] sm:$0xff]
    %v3760 = vpack.c.bf16 %v3712, %v3712
    %v3761 = vpack.c.bf16 %v3713, %v3713
    %v3762 = vpack.c.bf16 %v3714, %v3714
    %v3763 = vpack.c.bf16 %v3715, %v3715
    %v3764 = vpack.c.bf16 %v3716, %v3716
    %v3765 = vpack.c.bf16 %v3717, %v3717
    %v3766 = vpack.c.bf16 %v3718, %v3718
    %v3767 = vpack.c.bf16 %v3719, %v3719
    %v3768 = vpack.c.bf16 %v3720, %v3720
    %v3769 = vpack.c.bf16 %v3721, %v3721
    %v3770 = vpack.c.bf16 %v3722, %v3722
    %v3771 = vpack.c.bf16 %v3723, %v3723
    %v3772 = vpack.c.bf16 %v3724, %v3724
    %v3773 = vpack.c.bf16 %v3725, %v3725
    %v3774 = vpack.c.bf16 %v3726, %v3726
    %v3775 = vpack.c.bf16 %v3727, %v3727
    %v3776 = vld [vmem:[#allocation2 + $0x88] sm:$0x1]
    %v3777 = vlaneseq
    %v3778 = vshrl.u32 %v3777, 7
    %v3779 = vsub.s32 0, %v3778
    %v3780 = vrot.slane %v3776, %v3779
    %v3813 = vunpack.c.l.b16 %v3728
    %v3814 = vunpack.c.h.b16 %v3728
    %v3815 = vunpack.c.l.b16 %v3729
    %v3816 = vunpack.c.h.b16 %v3729
    %v3817 = vunpack.c.l.b16 %v3730
    %v3818 = vunpack.c.h.b16 %v3730
    %v3819 = vunpack.c.l.b16 %v3731
    %v3820 = vunpack.c.h.b16 %v3731
    %v3821 = vunpack.c.l.b16 %v3732
    %v3822 = vunpack.c.h.b16 %v3732
    %v3823 = vunpack.c.l.b16 %v3733
    %v3824 = vunpack.c.h.b16 %v3733
    %v3825 = vunpack.c.l.b16 %v3734
    %v3826 = vunpack.c.h.b16 %v3734
    %v3827 = vunpack.c.l.b16 %v3735
    %v3828 = vunpack.c.h.b16 %v3735
    %v3829 = vunpack.c.l.b16 %v3736
    %v3830 = vunpack.c.h.b16 %v3736
    %v3831 = vunpack.c.l.b16 %v3737
    %v3832 = vunpack.c.h.b16 %v3737
    %v3833 = vunpack.c.l.b16 %v3738
    %v3834 = vunpack.c.h.b16 %v3738
    %v3835 = vunpack.c.l.b16 %v3739
    %v3836 = vunpack.c.h.b16 %v3739
    %v3837 = vunpack.c.l.b16 %v3740
    %v3838 = vunpack.c.h.b16 %v3740
    %v3839 = vunpack.c.l.b16 %v3741
    %v3840 = vunpack.c.h.b16 %v3741
    %v3841 = vunpack.c.l.b16 %v3742
    %v3842 = vunpack.c.h.b16 %v3742
    %v3843 = vunpack.c.l.b16 %v3743
    %v3844 = vunpack.c.h.b16 %v3743
    %v3845 = vunpack.c.l.b16 %v3744
    %v3846 = vunpack.c.h.b16 %v3744
    %v3847 = vunpack.c.l.b16 %v3745
    %v3848 = vunpack.c.h.b16 %v3745
    %v3849 = vunpack.c.l.b16 %v3746
    %v3850 = vunpack.c.h.b16 %v3746
    %v3851 = vunpack.c.l.b16 %v3747
    %v3852 = vunpack.c.h.b16 %v3747
    %v3853 = vunpack.c.l.b16 %v3748
    %v3854 = vunpack.c.h.b16 %v3748
    %v3855 = vunpack.c.l.b16 %v3749
    %v3856 = vunpack.c.h.b16 %v3749
    %v3857 = vunpack.c.l.b16 %v3750
    %v3858 = vunpack.c.h.b16 %v3750
    %v3859 = vunpack.c.l.b16 %v3751
    %v3860 = vunpack.c.h.b16 %v3751
    %v3861 = vunpack.c.l.b16 %v3752
    %v3862 = vunpack.c.h.b16 %v3752
    %v3863 = vunpack.c.l.b16 %v3753
    %v3864 = vunpack.c.h.b16 %v3753
    %v3865 = vunpack.c.l.b16 %v3754
    %v3866 = vunpack.c.h.b16 %v3754
    %v3867 = vunpack.c.l.b16 %v3755
    %v3868 = vunpack.c.h.b16 %v3755
    %v3869 = vunpack.c.l.b16 %v3756
    %v3870 = vunpack.c.h.b16 %v3756
    %v3871 = vunpack.c.l.b16 %v3757
    %v3872 = vunpack.c.h.b16 %v3757
    %v3873 = vunpack.c.l.b16 %v3758
    %v3874 = vunpack.c.h.b16 %v3758
    %v3875 = vunpack.c.l.b16 %v3759
    %v3876 = vunpack.c.h.b16 %v3759
    %v3877 = vpack.c.b16 %v3829, %v3813
    %v3878 = vpack.c.b16 %v3830, %v3814
    %v3879 = vpack.c.b16 %v3831, %v3815
    %v3880 = vpack.c.b16 %v3832, %v3816
    %v3881 = vpack.c.b16 %v3833, %v3817
    %v3882 = vpack.c.b16 %v3834, %v3818
    %v3883 = vpack.c.b16 %v3835, %v3819
    %v3884 = vpack.c.b16 %v3836, %v3820
    %v3885 = vpack.c.b16 %v3837, %v3821
    %v3886 = vpack.c.b16 %v3838, %v3822
    %v3887 = vpack.c.b16 %v3839, %v3823
    %v3888 = vpack.c.b16 %v3840, %v3824
    %v3889 = vpack.c.b16 %v3841, %v3825
    %v3890 = vpack.c.b16 %v3842, %v3826
    %v3891 = vpack.c.b16 %v3843, %v3827
    %v3892 = vpack.c.b16 %v3844, %v3828
    %v3893 = vpack.c.b16 %v3861, %v3845
    %v3894 = vpack.c.b16 %v3862, %v3846
    %v3895 = vpack.c.b16 %v3863, %v3847
    %v3896 = vpack.c.b16 %v3864, %v3848
    %v3897 = vpack.c.b16 %v3865, %v3849
    %v3898 = vpack.c.b16 %v3866, %v3850
    %v3899 = vpack.c.b16 %v3867, %v3851
    %v3900 = vpack.c.b16 %v3868, %v3852
    %v3901 = vpack.c.b16 %v3869, %v3853
    %v3902 = vpack.c.b16 %v3870, %v3854
    %v3903 = vpack.c.b16 %v3871, %v3855
    %v3904 = vpack.c.b16 %v3872, %v3856
    %v3905 = vpack.c.b16 %v3873, %v3857
    %v3906 = vpack.c.b16 %v3874, %v3858
    %v3907 = vpack.c.b16 %v3875, %v3859
    %v3908 = vpack.c.b16 %v3876, %v3860
    %3941 = vmatprep.subr.bf16.mxu0 0
    %3942 = vmatpush1.bf16.xpose.msra.mxu0 0
    %3943 = vmatprep.subr.bf16.mxu0 0
    %3944 = vmatpush1.bf16.xpose.msra.mxu0 0
    %3945 = vmatprep.subr.bf16.mxu0 0
    %3946 = vmatpush1.bf16.xpose.msra.mxu0 0
    %3947 = vmatprep.subr.bf16.mxu0 0
    %3948 = vmatpush1.bf16.xpose.msra.mxu0 0
    %3949 = vmatprep.subr.bf16.mxu0 0
    %3950 = vmatpush1.bf16.xpose.msra.mxu0 0
    %3951 = vmatprep.subr.bf16.mxu0 0
    %3952 = vmatpush1.bf16.xpose.msra.mxu0 0
    %3953 = vmatprep.subr.bf16.mxu0 %v3894
    %3954 = vmatpush1.bf16.xpose.msra.mxu0 %v3893
    %3955 = vmatprep.subr.bf16.mxu0 %v3878
    %3956 = vmatpush1.bf16.xpose.msra.mxu0 %v3877
    %3957 = vmatprep.subr.bf16.mxu0 0
    %3958 = vmatpush2.bf16.xpose.msra.mxu0 0
    %3959 = vmatprep.subr.bf16.mxu0 0
    %3960 = vmatpush2.bf16.xpose.msra.mxu0 0
    %3961 = vmatprep.subr.bf16.mxu0 0
    %3962 = vmatpush2.bf16.xpose.msra.mxu0 0
    %3963 = vmatprep.subr.bf16.mxu0 0
    %3964 = vmatpush2.bf16.xpose.msra.mxu0 0
    %3965 = vmatprep.subr.bf16.mxu0 0
    %3966 = vmatpush2.bf16.xpose.msra.mxu0 0
    %3967 = vmatprep.subr.bf16.mxu0 0
    %3968 = vmatpush2.bf16.xpose.msra.mxu0 0
    %3969 = vmatprep.subr.bf16.mxu0 0
    %3970 = vmatpush2.bf16.xpose.msra.mxu0 0
    %3971 = vmatprep.subr.bf16.mxu0 0
    %3972 = vmatpush2.bf16.xpose.msra.mxu0 0
    %3973 = vmatprep.mubr.bf16.mxu0 %v3761
    %3974 = vmatmul.mubr.bf16.gmra.mxu0 %v3760
    %v3975 = vpop.f32.mrf.mxu0
    %v3976 = vadd.f32 %v3780, %v3975
    %v3977 = vpop.f32.mrf.mxu0
    %v3978 = vpop.f32.mrf.mxu0
    %v3979 = vpop.f32.mrf.mxu0
    %3980 = vdwg.mxu0
    %3981 = vmatprep.subr.bf16.mxu0 0
    %3982 = vmatpush1.bf16.xpose.msra.mxu0 0
    %3983 = vmatprep.subr.bf16.mxu0 0
    %3984 = vmatpush1.bf16.xpose.msra.mxu0 0
    %3985 = vmatprep.subr.bf16.mxu0 0
    %3986 = vmatpush1.bf16.xpose.msra.mxu0 0
    %3987 = vmatprep.subr.bf16.mxu0 0
    %3988 = vmatpush1.bf16.xpose.msra.mxu0 0
    %3989 = vmatprep.subr.bf16.mxu0 0
    %3990 = vmatpush1.bf16.xpose.msra.mxu0 0
    %3991 = vmatprep.subr.bf16.mxu0 0
    %3992 = vmatpush1.bf16.xpose.msra.mxu0 0
    %3993 = vmatprep.subr.bf16.mxu0 %v3896
    %3994 = vmatpush1.bf16.xpose.msra.mxu0 %v3895
    %3995 = vmatprep.subr.bf16.mxu0 %v3880
    %3996 = vmatpush1.bf16.xpose.msra.mxu0 %v3879
    %3997 = vmatprep.subr.bf16.mxu0 0
    %3998 = vmatpush2.bf16.xpose.msra.mxu0 0
    %3999 = vmatprep.subr.bf16.mxu0 0
    %4000 = vmatpush2.bf16.xpose.msra.mxu0 0
    %4001 = vmatprep.subr.bf16.mxu0 0
    %4002 = vmatpush2.bf16.xpose.msra.mxu0 0
    %4003 = vmatprep.subr.bf16.mxu0 0
    %4004 = vmatpush2.bf16.xpose.msra.mxu0 0
    %4005 = vmatprep.subr.bf16.mxu0 0
    %4006 = vmatpush2.bf16.xpose.msra.mxu0 0
    %4007 = vmatprep.subr.bf16.mxu0 0
    %4008 = vmatpush2.bf16.xpose.msra.mxu0 0
    %4009 = vmatprep.subr.bf16.mxu0 0
    %4010 = vmatpush2.bf16.xpose.msra.mxu0 0
    %4011 = vmatprep.subr.bf16.mxu0 0
    %4012 = vmatpush2.bf16.xpose.msra.mxu0 0
    %4013 = vmatprep.mubr.bf16.mxu0 %v3763
    %4014 = vmatmul.mubr.bf16.gmra.mxu0 %v3762
    %v4015 = vpop.f32.mrf.mxu0
    %v4016 = vadd.f32 %v3976, %v4015
    %v4017 = vpop.f32.mrf.mxu0
    %v4018 = vpop.f32.mrf.mxu0
    %v4019 = vpop.f32.mrf.mxu0
    %4020 = vdwg.mxu0
    %4021 = vmatprep.subr.bf16.mxu0 0
    %4022 = vmatpush1.bf16.xpose.msra.mxu0 0
    %4023 = vmatprep.subr.bf16.mxu0 0
    %4024 = vmatpush1.bf16.xpose.msra.mxu0 0
    %4025 = vmatprep.subr.bf16.mxu0 0
    %4026 = vmatpush1.bf16.xpose.msra.mxu0 0
    %4027 = vmatprep.subr.bf16.mxu0 0
    %4028 = vmatpush1.bf16.xpose.msra.mxu0 0
    %4029 = vmatprep.subr.bf16.mxu0 0
    %4030 = vmatpush1.bf16.xpose.msra.mxu0 0
    %4031 = vmatprep.subr.bf16.mxu0 0
    %4032 = vmatpush1.bf16.xpose.msra.mxu0 0
    %4033 = vmatprep.subr.bf16.mxu0 %v3898
    %4034 = vmatpush1.bf16.xpose.msra.mxu0 %v3897
    %4035 = vmatprep.subr.bf16.mxu0 %v3882
    %4036 = vmatpush1.bf16.xpose.msra.mxu0 %v3881
    %4037 = vmatprep.subr.bf16.mxu0 0
    %4038 = vmatpush2.bf16.xpose.msra.mxu0 0
    %4039 = vmatprep.subr.bf16.mxu0 0
    %4040 = vmatpush2.bf16.xpose.msra.mxu0 0
    %4041 = vmatprep.subr.bf16.mxu0 0
    %4042 = vmatpush2.bf16.xpose.msra.mxu0 0
    %4043 = vmatprep.subr.bf16.mxu0 0
    %4044 = vmatpush2.bf16.xpose.msra.mxu0 0
    %4045 = vmatprep.subr.bf16.mxu0 0
    %4046 = vmatpush2.bf16.xpose.msra.mxu0 0
    %4047 = vmatprep.subr.bf16.mxu0 0
    %4048 = vmatpush2.bf16.xpose.msra.mxu0 0
    %4049 = vmatprep.subr.bf16.mxu0 0
    %4050 = vmatpush2.bf16.xpose.msra.mxu0 0
    %4051 = vmatprep.subr.bf16.mxu0 0
    %4052 = vmatpush2.bf16.xpose.msra.mxu0 0
    %4053 = vmatprep.mubr.bf16.mxu0 %v3765
    %4054 = vmatmul.mubr.bf16.gmra.mxu0 %v3764
    %v4055 = vpop.f32.mrf.mxu0
    %v4056 = vadd.f32 %v4016, %v4055
    %v4057 = vpop.f32.mrf.mxu0
    %v4058 = vpop.f32.mrf.mxu0
    %v4059 = vpop.f32.mrf.mxu0
    %4060 = vdwg.mxu0
    %4061 = vmatprep.subr.bf16.mxu0 0
    %4062 = vmatpush1.bf16.xpose.msra.mxu0 0
    %4063 = vmatprep.subr.bf16.mxu0 0
    %4064 = vmatpush1.bf16.xpose.msra.mxu0 0
    %4065 = vmatprep.subr.bf16.mxu0 0
    %4066 = vmatpush1.bf16.xpose.msra.mxu0 0
    %4067 = vmatprep.subr.bf16.mxu0 0
    %4068 = vmatpush1.bf16.xpose.msra.mxu0 0
    %4069 = vmatprep.subr.bf16.mxu0 0
    %4070 = vmatpush1.bf16.xpose.msra.mxu0 0
    %4071 = vmatprep.subr.bf16.mxu0 0
    %4072 = vmatpush1.bf16.xpose.msra.mxu0 0
    %4073 = vmatprep.subr.bf16.mxu0 %v3900
    %4074 = vmatpush1.bf16.xpose.msra.mxu0 %v3899
    %4075 = vmatprep.subr.bf16.mxu0 %v3884
    %4076 = vmatpush1.bf16.xpose.msra.mxu0 %v3883
    %4077 = vmatprep.subr.bf16.mxu0 0
    %4078 = vmatpush2.bf16.xpose.msra.mxu0 0
    %4079 = vmatprep.subr.bf16.mxu0 0
    %4080 = vmatpush2.bf16.xpose.msra.mxu0 0
    %4081 = vmatprep.subr.bf16.mxu0 0
    %4082 = vmatpush2.bf16.xpose.msra.mxu0 0
    %4083 = vmatprep.subr.bf16.mxu0 0
    %4084 = vmatpush2.bf16.xpose.msra.mxu0 0
    %4085 = vmatprep.subr.bf16.mxu0 0
    %4086 = vmatpush2.bf16.xpose.msra.mxu0 0
    %4087 = vmatprep.subr.bf16.mxu0 0
    %4088 = vmatpush2.bf16.xpose.msra.mxu0 0
    %4089 = vmatprep.subr.bf16.mxu0 0
    %4090 = vmatpush2.bf16.xpose.msra.mxu0 0
    %4091 = vmatprep.subr.bf16.mxu0 0
    %4092 = vmatpush2.bf16.xpose.msra.mxu0 0
    %4093 = vmatprep.mubr.bf16.mxu0 %v3767
    %4094 = vmatmul.mubr.bf16.gmra.mxu0 %v3766
    %v4095 = vpop.f32.mrf.mxu0
    %v4096 = vadd.f32 %v4056, %v4095
    %v4097 = vpop.f32.mrf.mxu0
    %v4098 = vpop.f32.mrf.mxu0
    %v4099 = vpop.f32.mrf.mxu0
    %4100 = vdwg.mxu0
    %4101 = vmatprep.subr.bf16.mxu0 0
    %4102 = vmatpush1.bf16.xpose.msra.mxu0 0
    %4103 = vmatprep.subr.bf16.mxu0 0
    %4104 = vmatpush1.bf16.xpose.msra.mxu0 0
    %4105 = vmatprep.subr.bf16.mxu0 0
    %4106 = vmatpush1.bf16.xpose.msra.mxu0 0
    %4107 = vmatprep.subr.bf16.mxu0 0
    %4108 = vmatpush1.bf16.xpose.msra.mxu0 0
    %4109 = vmatprep.subr.bf16.mxu0 0
    %4110 = vmatpush1.bf16.xpose.msra.mxu0 0
    %4111 = vmatprep.subr.bf16.mxu0 0
    %4112 = vmatpush1.bf16.xpose.msra.mxu0 0
    %4113 = vmatprep.subr.bf16.mxu0 %v3902
    %4114 = vmatpush1.bf16.xpose.msra.mxu0 %v3901
    %4115 = vmatprep.subr.bf16.mxu0 %v3886
    %4116 = vmatpush1.bf16.xpose.msra.mxu0 %v3885
    %4117 = vmatprep.subr.bf16.mxu0 0
    %4118 = vmatpush2.bf16.xpose.msra.mxu0 0
    %4119 = vmatprep.subr.bf16.mxu0 0
    %4120 = vmatpush2.bf16.xpose.msra.mxu0 0
    %4121 = vmatprep.subr.bf16.mxu0 0
    %4122 = vmatpush2.bf16.xpose.msra.mxu0 0
    %4123 = vmatprep.subr.bf16.mxu0 0
    %4124 = vmatpush2.bf16.xpose.msra.mxu0 0
    %4125 = vmatprep.subr.bf16.mxu0 0
    %4126 = vmatpush2.bf16.xpose.msra.mxu0 0
    %4127 = vmatprep.subr.bf16.mxu0 0
    %4128 = vmatpush2.bf16.xpose.msra.mxu0 0
    %4129 = vmatprep.subr.bf16.mxu0 0
    %4130 = vmatpush2.bf16.xpose.msra.mxu0 0
    %4131 = vmatprep.subr.bf16.mxu0 0
    %4132 = vmatpush2.bf16.xpose.msra.mxu0 0
    %4133 = vmatprep.mubr.bf16.mxu0 %v3769
    %4134 = vmatmul.mubr.bf16.gmra.mxu0 %v3768
    %v4135 = vpop.f32.mrf.mxu0
    %v4136 = vadd.f32 %v4096, %v4135
    %v4137 = vpop.f32.mrf.mxu0
    %v4138 = vpop.f32.mrf.mxu0
    %v4139 = vpop.f32.mrf.mxu0
    %4140 = vdwg.mxu0
    %4141 = vmatprep.subr.bf16.mxu0 0
    %4142 = vmatpush1.bf16.xpose.msra.mxu0 0
    %4143 = vmatprep.subr.bf16.mxu0 0
    %4144 = vmatpush1.bf16.xpose.msra.mxu0 0
    %4145 = vmatprep.subr.bf16.mxu0 0
    %4146 = vmatpush1.bf16.xpose.msra.mxu0 0
    %4147 = vmatprep.subr.bf16.mxu0 0
    %4148 = vmatpush1.bf16.xpose.msra.mxu0 0
    %4149 = vmatprep.subr.bf16.mxu0 0
    %4150 = vmatpush1.bf16.xpose.msra.mxu0 0
    %4151 = vmatprep.subr.bf16.mxu0 0
    %4152 = vmatpush1.bf16.xpose.msra.mxu0 0
    %4153 = vmatprep.subr.bf16.mxu0 %v3904
    %4154 = vmatpush1.bf16.xpose.msra.mxu0 %v3903
    %4155 = vmatprep.subr.bf16.mxu0 %v3888
    %4156 = vmatpush1.bf16.xpose.msra.mxu0 %v3887
    %4157 = vmatprep.subr.bf16.mxu0 0
    %4158 = vmatpush2.bf16.xpose.msra.mxu0 0
    %4159 = vmatprep.subr.bf16.mxu0 0
    %4160 = vmatpush2.bf16.xpose.msra.mxu0 0
    %4161 = vmatprep.subr.bf16.mxu0 0
    %4162 = vmatpush2.bf16.xpose.msra.mxu0 0
    %4163 = vmatprep.subr.bf16.mxu0 0
    %4164 = vmatpush2.bf16.xpose.msra.mxu0 0
    %4165 = vmatprep.subr.bf16.mxu0 0
    %4166 = vmatpush2.bf16.xpose.msra.mxu0 0
    %4167 = vmatprep.subr.bf16.mxu0 0
    %4168 = vmatpush2.bf16.xpose.msra.mxu0 0
    %4169 = vmatprep.subr.bf16.mxu0 0
    %4170 = vmatpush2.bf16.xpose.msra.mxu0 0
    %4171 = vmatprep.subr.bf16.mxu0 0
    %4172 = vmatpush2.bf16.xpose.msra.mxu0 0
    %4173 = vmatprep.mubr.bf16.mxu0 %v3771
    %4174 = vmatmul.mubr.bf16.gmra.mxu0 %v3770
    %v4175 = vpop.f32.mrf.mxu0
    %v4176 = vadd.f32 %v4136, %v4175
    %v4177 = vpop.f32.mrf.mxu0
    %v4178 = vpop.f32.mrf.mxu0
    %v4179 = vpop.f32.mrf.mxu0
    %4180 = vdwg.mxu0
    %4181 = vmatprep.subr.bf16.mxu0 0
    %4182 = vmatpush1.bf16.xpose.msra.mxu0 0
    %4183 = vmatprep.subr.bf16.mxu0 0
    %4184 = vmatpush1.bf16.xpose.msra.mxu0 0
    %4185 = vmatprep.subr.bf16.mxu0 0
    %4186 = vmatpush1.bf16.xpose.msra.mxu0 0
    %4187 = vmatprep.subr.bf16.mxu0 0
    %4188 = vmatpush1.bf16.xpose.msra.mxu0 0
    %4189 = vmatprep.subr.bf16.mxu0 0
    %4190 = vmatpush1.bf16.xpose.msra.mxu0 0
    %4191 = vmatprep.subr.bf16.mxu0 0
    %4192 = vmatpush1.bf16.xpose.msra.mxu0 0
    %4193 = vmatprep.subr.bf16.mxu0 %v3906
    %4194 = vmatpush1.bf16.xpose.msra.mxu0 %v3905
    %4195 = vmatprep.subr.bf16.mxu0 %v3890
    %4196 = vmatpush1.bf16.xpose.msra.mxu0 %v3889
    %4197 = vmatprep.subr.bf16.mxu0 0
    %4198 = vmatpush2.bf16.xpose.msra.mxu0 0
    %4199 = vmatprep.subr.bf16.mxu0 0
    %4200 = vmatpush2.bf16.xpose.msra.mxu0 0
    %4201 = vmatprep.subr.bf16.mxu0 0
    %4202 = vmatpush2.bf16.xpose.msra.mxu0 0
    %4203 = vmatprep.subr.bf16.mxu0 0
    %4204 = vmatpush2.bf16.xpose.msra.mxu0 0
    %4205 = vmatprep.subr.bf16.mxu0 0
    %4206 = vmatpush2.bf16.xpose.msra.mxu0 0
    %4207 = vmatprep.subr.bf16.mxu0 0
    %4208 = vmatpush2.bf16.xpose.msra.mxu0 0
    %4209 = vmatprep.subr.bf16.mxu0 0
    %4210 = vmatpush2.bf16.xpose.msra.mxu0 0
    %4211 = vmatprep.subr.bf16.mxu0 0
    %4212 = vmatpush2.bf16.xpose.msra.mxu0 0
    %4213 = vmatprep.mubr.bf16.mxu0 %v3773
    %4214 = vmatmul.mubr.bf16.gmra.mxu0 %v3772
    %v4215 = vpop.f32.mrf.mxu0
    %v4216 = vadd.f32 %v4176, %v4215
    %v4217 = vpop.f32.mrf.mxu0
    %v4218 = vpop.f32.mrf.mxu0
    %v4219 = vpop.f32.mrf.mxu0
    %4220 = vdwg.mxu0
    %4221 = vmatprep.subr.bf16.mxu0 0
    %4222 = vmatpush1.bf16.xpose.msra.mxu0 0
    %4223 = vmatprep.subr.bf16.mxu0 0
    %4224 = vmatpush1.bf16.xpose.msra.mxu0 0
    %4225 = vmatprep.subr.bf16.mxu0 0
    %4226 = vmatpush1.bf16.xpose.msra.mxu0 0
    %4227 = vmatprep.subr.bf16.mxu0 0
    %4228 = vmatpush1.bf16.xpose.msra.mxu0 0
    %4229 = vmatprep.subr.bf16.mxu0 0
    %4230 = vmatpush1.bf16.xpose.msra.mxu0 0
    %4231 = vmatprep.subr.bf16.mxu0 0
    %4232 = vmatpush1.bf16.xpose.msra.mxu0 0
    %4233 = vmatprep.subr.bf16.mxu0 %v3908
    %4234 = vmatpush1.bf16.xpose.msra.mxu0 %v3907
    %4235 = vmatprep.subr.bf16.mxu0 %v3892
    %4236 = vmatpush1.bf16.xpose.msra.mxu0 %v3891
    %4237 = vmatprep.subr.bf16.mxu0 0
    %4238 = vmatpush2.bf16.xpose.msra.mxu0 0
    %4239 = vmatprep.subr.bf16.mxu0 0
    %4240 = vmatpush2.bf16.xpose.msra.mxu0 0
    %4241 = vmatprep.subr.bf16.mxu0 0
    %4242 = vmatpush2.bf16.xpose.msra.mxu0 0
    %4243 = vmatprep.subr.bf16.mxu0 0
    %4244 = vmatpush2.bf16.xpose.msra.mxu0 0
    %4245 = vmatprep.subr.bf16.mxu0 0
    %4246 = vmatpush2.bf16.xpose.msra.mxu0 0
    %4247 = vmatprep.subr.bf16.mxu0 0
    %4248 = vmatpush2.bf16.xpose.msra.mxu0 0
    %4249 = vmatprep.subr.bf16.mxu0 0
    %4250 = vmatpush2.bf16.xpose.msra.mxu0 0
    %4251 = vmatprep.subr.bf16.mxu0 0
    %4252 = vmatpush2.bf16.xpose.msra.mxu0 0
    %4253 = vmatprep.mubr.bf16.mxu0 %v3775
    %4254 = vmatmul.mubr.bf16.gmra.mxu0 %v3774
    %v4255 = vpop.f32.mrf.mxu0
    %v4256 = vadd.f32 %v4216, %v4255
    %v4257 = vpop.f32.mrf.mxu0
    %v4258 = vpop.f32.mrf.mxu0
    %v4259 = vpop.f32.mrf.mxu0
    %4260 = vdwg.mxu0
    %v4261 = vadd.f32 %v3103, %v4256
    %v4262 = vsel %vm209, %v4261, 0.0
    %4263 = vadd.xlane.f32.xlu0 %v4262
    %v4264 = vpop.xlane.xlu0 %4263
    %v4265 = vmul.f32 %v4264, %v213
    %v4266 = vsub.f32 %v4261, %v4265
    %v4267 = vmul.f32 %v4266, %v4266
    %v4268 = vsel %vm209, %v4267, 0.0
    %4269 = vadd.xlane.f32.xlu0 %v4268
    %v4270 = vpop.xlane.xlu0 %4269
    %v4271 = vmul.f32 %v4270, %v213
    %v4272 = vadd.f32 %v4271, 1e-05
    %v4273 = vrsqrt.pop %v4272
    %v4274 = vmul.f32 %v4266, %v4273
    %v4275 = vld [vmem:[#allocation2 + $0x90] sm:$0x1]
    %v4276 = vlaneseq
    %v4277 = vshrl.u32 %v4276, 7
    %v4278 = vsub.s32 0, %v4277
    %v4279 = vrot.slane %v4275, %v4278
    %v4280 = vmul.f32 %v4274, %v4279
    %v4281 = vld [vmem:[#allocation2 + $0x98] sm:$0x1]
    %v4282 = vlaneseq
    %v4283 = vshrl.u32 %v4282, 7
    %v4284 = vsub.s32 0, %v4283
    %v4285 = vrot.slane %v4281, %v4284
    %v4286 = vadd.f32 %v4280, %v4285
    %v4287 = vld [vmem:[%s2 + $0x138] sm:$0xf]
    %v4288 = vld [vmem:[%s2 + $0x13c] sm:$0xf]
    %v4289 = vld [vmem:[%s2 + $0x140] sm:$0xf]
    %v4290 = vld [vmem:[%s2 + $0x144] sm:$0xf]
    %v4291 = vpack.c.bf16 %v4286, %v4286
    %v4292 = vld [vmem:[#allocation2 + $0xa0] sm:$0x1]
    %v4293 = vlaneseq
    %v4294 = vshrl.u32 %v4293, 7
    %v4295 = vsub.s32 0, %v4294
    %v4296 = vrot.slane %v4292, %v4295
    %v4301 = vunpack.c.l.b16 %v4287
    %v4302 = vunpack.c.l.b16 %v4288
    %v4303 = vunpack.c.l.b16 %v4289
    %v4304 = vunpack.c.l.b16 %v4290
    %v4305 = vpack.c.b16 %v4302, %v4301
    %v4306 = vpack.c.b16 %v4304, %v4303
    %v4310 = vsel %vm205, %v4291, 0
    %4312 = vmatprep.subr.bf16.mxu0 0
    %4313 = vmatpush1.bf16.msra.mxu0 0
    %4314 = vmatprep.subr.bf16.mxu0 0
    %4315 = vmatpush1.bf16.msra.mxu0 0
    %4316 = vmatprep.subr.bf16.mxu0 0
    %4317 = vmatpush1.bf16.msra.mxu0 0
    %4318 = vmatprep.subr.bf16.mxu0 0
    %4319 = vmatpush1.bf16.msra.mxu0 0
    %4320 = vmatprep.subr.bf16.mxu0 0
    %4321 = vmatpush1.bf16.msra.mxu0 0
    %4322 = vmatprep.subr.bf16.mxu0 0
    %4323 = vmatpush1.bf16.msra.mxu0 0
    %4324 = vmatprep.subr.bf16.mxu0 0
    %4325 = vmatpush1.bf16.msra.mxu0 %v4306
    %4326 = vmatprep.subr.bf16.mxu0 0
    %4327 = vmatpush1.bf16.msra.mxu0 %v4305
    %4328 = vmatprep.subr.bf16.mxu0 0
    %4329 = vmatpush2.bf16.msra.mxu0 0
    %4330 = vmatprep.subr.bf16.mxu0 0
    %4331 = vmatpush2.bf16.msra.mxu0 0
    %4332 = vmatprep.subr.bf16.mxu0 0
    %4333 = vmatpush2.bf16.msra.mxu0 0
    %4334 = vmatprep.subr.bf16.mxu0 0
    %4335 = vmatpush2.bf16.msra.mxu0 0
    %4336 = vmatprep.subr.bf16.mxu0 0
    %4337 = vmatpush2.bf16.msra.mxu0 0
    %4338 = vmatprep.subr.bf16.mxu0 0
    %4339 = vmatpush2.bf16.msra.mxu0 0
    %4340 = vmatprep.subr.bf16.mxu0 0
    %4341 = vmatpush2.bf16.msra.mxu0 0
    %4342 = vmatprep.subr.bf16.mxu0 0
    %4343 = vmatpush2.bf16.msra.mxu0 0
    %4344 = vmatprep.mubr.bf16.mxu0 0
    %4345 = vmatmul.mubr.bf16.gmra.mxu0 %v4310
    %v4346 = vpop.f32.mrf.mxu0
    %v4347 = vadd.f32 %v4296, %v4346
    %v4348 = vpop.f32.mrf.mxu0
    %v4349 = vpop.f32.mrf.mxu0
    %v4350 = vpop.f32.mrf.mxu0
    %4351 = vdwg.mxu0
    %v4352 = vadd.f32 %v4286, %v4347
    %v4353 = vsel %vm209, %v4352, 0.0
    %4354 = vadd.xlane.f32.xlu0 %v4353
    %v4355 = vpop.xlane.xlu0 %4354
    %v4356 = vmul.f32 %v4355, %v213
    %v4357 = vsub.f32 %v4352, %v4356
    %v4358 = vmul.f32 %v4357, %v4357
    %v4359 = vsel %vm209, %v4358, 0.0
    %4360 = vadd.xlane.f32.xlu0 %v4359
    %v4361 = vpop.xlane.xlu0 %4360
    %v4362 = vmul.f32 %v4361, %v213
    %v4363 = vadd.f32 %v4362, 1e-05
    %v4364 = vrsqrt.pop %v4363
    %v4365 = vmul.f32 %v4357, %v4364
    %v4366 = vld [vmem:[#allocation2 + $0xa8] sm:$0x1]
    %v4367 = vlaneseq
    %v4368 = vshrl.u32 %v4367, 7
    %v4369 = vsub.s32 0, %v4368
    %v4370 = vrot.slane %v4366, %v4369
    %v4371 = vmul.f32 %v4365, %v4370
    %v4372 = vld [vmem:[#allocation2 + $0xb0] sm:$0x1]
    %v4373 = vlaneseq
    %v4374 = vshrl.u32 %v4373, 7
    %v4375 = vsub.s32 0, %v4374
    %v4376 = vrot.slane %v4372, %v4375
    %v4377 = vadd.f32 %v4371, %v4376
    %s4378 = scalar_lea.vmem %s4, 256
    %v4379 = vld [vmem:[%s4378] sm:$0xff]
    %v4380 = vld [vmem:[%s4378 + $0x8] sm:$0xff]
    %v4381 = vld [vmem:[%s4378 + $0x10] sm:$0xff]
    %v4382 = vld [vmem:[%s4378 + $0x18] sm:$0xff]
    %v4383 = vld [vmem:[%s4378 + $0x20] sm:$0xff]
    %v4384 = vld [vmem:[%s4378 + $0x28] sm:$0xff]
    %v4385 = vld [vmem:[%s4378 + $0x30] sm:$0xff]
    %v4386 = vld [vmem:[%s4378 + $0x38] sm:$0xff]
    %v4387 = vld [vmem:[%s4378 + $0x40] sm:$0xff]
    %v4388 = vld [vmem:[%s4378 + $0x48] sm:$0xff]
    %v4389 = vld [vmem:[%s4378 + $0x50] sm:$0xff]
    %v4390 = vld [vmem:[%s4378 + $0x58] sm:$0xff]
    %v4391 = vld [vmem:[%s4378 + $0x60] sm:$0xff]
    %v4392 = vld [vmem:[%s4378 + $0x68] sm:$0xff]
    %v4393 = vld [vmem:[%s4378 + $0x70] sm:$0xff]
    %v4394 = vld [vmem:[%s4378 + $0x78] sm:$0xff]
    %v4395 = vld [vmem:[%s4378 + $0x80] sm:$0xff]
    %v4396 = vld [vmem:[%s4378 + $0x88] sm:$0xff]
    %v4397 = vld [vmem:[%s4378 + $0x90] sm:$0xff]
    %v4398 = vld [vmem:[%s4378 + $0x98] sm:$0xff]
    %v4399 = vld [vmem:[%s4378 + $0xa0] sm:$0xff]
    %v4400 = vld [vmem:[%s4378 + $0xa8] sm:$0xff]
    %v4401 = vld [vmem:[%s4378 + $0xb0] sm:$0xff]
    %v4402 = vld [vmem:[%s4378 + $0xb8] sm:$0xff]
    %v4403 = vld [vmem:[%s4378 + $0xc0] sm:$0xff]
    %v4404 = vld [vmem:[%s4378 + $0xc8] sm:$0xff]
    %v4405 = vld [vmem:[%s4378 + $0xd0] sm:$0xff]
    %v4406 = vld [vmem:[%s4378 + $0xd8] sm:$0xff]
    %v4407 = vld [vmem:[%s4378 + $0xe0] sm:$0xff]
    %v4408 = vld [vmem:[%s4378 + $0xe8] sm:$0xff]
    %v4409 = vld [vmem:[%s4378 + $0xf0] sm:$0xff]
    %v4410 = vld [vmem:[%s4378 + $0xf8] sm:$0xff]
    %v4411 = vpack.c.bf16 %v4377, %v4377
    %s4412 = scalar_lea.vmem %s6, 16
    %v4413 = vld [vmem:[%s4412] sm:$0xff]
    %v4414 = vld [vmem:[%s4412 + $0x8] sm:$0xff]
    %v4417 = vlaneseq
    %v4418 = vshrl.u32 %v4417, 7
    %v4419 = vsub.s32 0, %v4418
    %v4420 = vrot.slane %v4413, %v4419
    %v4421 = vlaneseq
    %v4422 = vshrl.u32 %v4421, 7
    %v4423 = vsub.s32 1, %v4422
    %v4424 = vrot.slane %v4413, %v4423
    %v4425 = vlaneseq
    %v4426 = vshrl.u32 %v4425, 7
    %v4427 = vsub.s32 2, %v4426
    %v4428 = vrot.slane %v4413, %v4427
    %v4429 = vlaneseq
    %v4430 = vshrl.u32 %v4429, 7
    %v4431 = vsub.s32 3, %v4430
    %v4432 = vrot.slane %v4413, %v4431
    %v4433 = vlaneseq
    %v4434 = vshrl.u32 %v4433, 7
    %v4435 = vsub.s32 4, %v4434
    %v4436 = vrot.slane %v4413, %v4435
    %v4437 = vlaneseq
    %v4438 = vshrl.u32 %v4437, 7
    %v4439 = vsub.s32 5, %v4438
    %v4440 = vrot.slane %v4413, %v4439
    %v4441 = vlaneseq
    %v4442 = vshrl.u32 %v4441, 7
    %v4443 = vsub.s32 6, %v4442
    %v4444 = vrot.slane %v4413, %v4443
    %v4445 = vlaneseq
    %v4446 = vshrl.u32 %v4445, 7
    %v4447 = vsub.s32 7, %v4446
    %v4448 = vrot.slane %v4413, %v4447
    %v4449 = vlaneseq
    %v4450 = vshrl.u32 %v4449, 7
    %v4451 = vsub.s32 0, %v4450
    %v4452 = vrot.slane %v4414, %v4451
    %v4453 = vlaneseq
    %v4454 = vshrl.u32 %v4453, 7
    %v4455 = vsub.s32 1, %v4454
    %v4456 = vrot.slane %v4414, %v4455
    %v4457 = vlaneseq
    %v4458 = vshrl.u32 %v4457, 7
    %v4459 = vsub.s32 2, %v4458
    %v4460 = vrot.slane %v4414, %v4459
    %v4461 = vlaneseq
    %v4462 = vshrl.u32 %v4461, 7
    %v4463 = vsub.s32 3, %v4462
    %v4464 = vrot.slane %v4414, %v4463
    %v4465 = vlaneseq
    %v4466 = vshrl.u32 %v4465, 7
    %v4467 = vsub.s32 4, %v4466
    %v4468 = vrot.slane %v4414, %v4467
    %v4469 = vlaneseq
    %v4470 = vshrl.u32 %v4469, 7
    %v4471 = vsub.s32 5, %v4470
    %v4472 = vrot.slane %v4414, %v4471
    %v4473 = vlaneseq
    %v4474 = vshrl.u32 %v4473, 7
    %v4475 = vsub.s32 6, %v4474
    %v4476 = vrot.slane %v4414, %v4475
    %v4477 = vlaneseq
    %v4478 = vshrl.u32 %v4477, 7
    %v4479 = vsub.s32 7, %v4478
    %v4480 = vrot.slane %v4414, %v4479
    %v4529 = vunpack.c.l.b16 %v4379
    %v4530 = vunpack.c.h.b16 %v4379
    %v4531 = vunpack.c.l.b16 %v4380
    %v4532 = vunpack.c.h.b16 %v4380
    %v4533 = vunpack.c.l.b16 %v4381
    %v4534 = vunpack.c.h.b16 %v4381
    %v4535 = vunpack.c.l.b16 %v4382
    %v4536 = vunpack.c.h.b16 %v4382
    %v4537 = vunpack.c.l.b16 %v4383
    %v4538 = vunpack.c.h.b16 %v4383
    %v4539 = vunpack.c.l.b16 %v4384
    %v4540 = vunpack.c.h.b16 %v4384
    %v4541 = vunpack.c.l.b16 %v4385
    %v4542 = vunpack.c.h.b16 %v4385
    %v4543 = vunpack.c.l.b16 %v4386
    %v4544 = vunpack.c.h.b16 %v4386
    %v4545 = vunpack.c.l.b16 %v4387
    %v4546 = vunpack.c.h.b16 %v4387
    %v4547 = vunpack.c.l.b16 %v4388
    %v4548 = vunpack.c.h.b16 %v4388
    %v4549 = vunpack.c.l.b16 %v4389
    %v4550 = vunpack.c.h.b16 %v4389
    %v4551 = vunpack.c.l.b16 %v4390
    %v4552 = vunpack.c.h.b16 %v4390
    %v4553 = vunpack.c.l.b16 %v4391
    %v4554 = vunpack.c.h.b16 %v4391
    %v4555 = vunpack.c.l.b16 %v4392
    %v4556 = vunpack.c.h.b16 %v4392
    %v4557 = vunpack.c.l.b16 %v4393
    %v4558 = vunpack.c.h.b16 %v4393
    %v4559 = vunpack.c.l.b16 %v4394
    %v4560 = vunpack.c.h.b16 %v4394
    %v4561 = vunpack.c.l.b16 %v4395
    %v4562 = vunpack.c.h.b16 %v4395
    %v4563 = vunpack.c.l.b16 %v4396
    %v4564 = vunpack.c.h.b16 %v4396
    %v4565 = vunpack.c.l.b16 %v4397
    %v4566 = vunpack.c.h.b16 %v4397
    %v4567 = vunpack.c.l.b16 %v4398
    %v4568 = vunpack.c.h.b16 %v4398
    %v4569 = vunpack.c.l.b16 %v4399
    %v4570 = vunpack.c.h.b16 %v4399
    %v4571 = vunpack.c.l.b16 %v4400
    %v4572 = vunpack.c.h.b16 %v4400
    %v4573 = vunpack.c.l.b16 %v4401
    %v4574 = vunpack.c.h.b16 %v4401
    %v4575 = vunpack.c.l.b16 %v4402
    %v4576 = vunpack.c.h.b16 %v4402
    %v4577 = vunpack.c.l.b16 %v4403
    %v4578 = vunpack.c.h.b16 %v4403
    %v4579 = vunpack.c.l.b16 %v4404
    %v4580 = vunpack.c.h.b16 %v4404
    %v4581 = vunpack.c.l.b16 %v4405
    %v4582 = vunpack.c.h.b16 %v4405
    %v4583 = vunpack.c.l.b16 %v4406
    %v4584 = vunpack.c.h.b16 %v4406
    %v4585 = vunpack.c.l.b16 %v4407
    %v4586 = vunpack.c.h.b16 %v4407
    %v4587 = vunpack.c.l.b16 %v4408
    %v4588 = vunpack.c.h.b16 %v4408
    %v4589 = vunpack.c.l.b16 %v4409
    %v4590 = vunpack.c.h.b16 %v4409
    %v4591 = vunpack.c.l.b16 %v4410
    %v4592 = vunpack.c.h.b16 %v4410
    %v4593 = vpack.c.b16 %v4545, %v4529
    %v4594 = vpack.c.b16 %v4546, %v4530
    %v4595 = vpack.c.b16 %v4547, %v4531
    %v4596 = vpack.c.b16 %v4548, %v4532
    %v4597 = vpack.c.b16 %v4549, %v4533
    %v4598 = vpack.c.b16 %v4550, %v4534
    %v4599 = vpack.c.b16 %v4551, %v4535
    %v4600 = vpack.c.b16 %v4552, %v4536
    %v4601 = vpack.c.b16 %v4553, %v4537
    %v4602 = vpack.c.b16 %v4554, %v4538
    %v4603 = vpack.c.b16 %v4555, %v4539
    %v4604 = vpack.c.b16 %v4556, %v4540
    %v4605 = vpack.c.b16 %v4557, %v4541
    %v4606 = vpack.c.b16 %v4558, %v4542
    %v4607 = vpack.c.b16 %v4559, %v4543
    %v4608 = vpack.c.b16 %v4560, %v4544
    %v4609 = vpack.c.b16 %v4577, %v4561
    %v4610 = vpack.c.b16 %v4578, %v4562
    %v4611 = vpack.c.b16 %v4579, %v4563
    %v4612 = vpack.c.b16 %v4580, %v4564
    %v4613 = vpack.c.b16 %v4581, %v4565
    %v4614 = vpack.c.b16 %v4582, %v4566
    %v4615 = vpack.c.b16 %v4583, %v4567
    %v4616 = vpack.c.b16 %v4584, %v4568
    %v4617 = vpack.c.b16 %v4585, %v4569
    %v4618 = vpack.c.b16 %v4586, %v4570
    %v4619 = vpack.c.b16 %v4587, %v4571
    %v4620 = vpack.c.b16 %v4588, %v4572
    %v4621 = vpack.c.b16 %v4589, %v4573
    %v4622 = vpack.c.b16 %v4590, %v4574
    %v4623 = vpack.c.b16 %v4591, %v4575
    %v4624 = vpack.c.b16 %v4592, %v4576
    %v4658 = vsel %vm205, %v4411, 0
    %4660 = vmatprep.subr.bf16.mxu0 0
    %4661 = vmatpush1.bf16.msra.mxu0 0
    %4662 = vmatprep.subr.bf16.mxu0 0
    %4663 = vmatpush1.bf16.msra.mxu0 0
    %4664 = vmatprep.subr.bf16.mxu0 0
    %4665 = vmatpush1.bf16.msra.mxu0 0
    %4666 = vmatprep.subr.bf16.mxu0 0
    %4667 = vmatpush1.bf16.msra.mxu0 0
    %4668 = vmatprep.subr.bf16.mxu0 0
    %4669 = vmatpush1.bf16.msra.mxu0 0
    %4670 = vmatprep.subr.bf16.mxu0 0
    %4671 = vmatpush1.bf16.msra.mxu0 0
    %4672 = vmatprep.subr.bf16.mxu0 %v4610
    %4673 = vmatpush1.bf16.msra.mxu0 %v4609
    %4674 = vmatprep.subr.bf16.mxu0 %v4594
    %4675 = vmatpush1.bf16.msra.mxu0 %v4593
    %4676 = vmatprep.subr.bf16.mxu0 0
    %4677 = vmatpush2.bf16.msra.mxu0 0
    %4678 = vmatprep.subr.bf16.mxu0 0
    %4679 = vmatpush2.bf16.msra.mxu0 0
    %4680 = vmatprep.subr.bf16.mxu0 0
    %4681 = vmatpush2.bf16.msra.mxu0 0
    %4682 = vmatprep.subr.bf16.mxu0 0
    %4683 = vmatpush2.bf16.msra.mxu0 0
    %4684 = vmatprep.subr.bf16.mxu0 0
    %4685 = vmatpush2.bf16.msra.mxu0 0
    %4686 = vmatprep.subr.bf16.mxu0 0
    %4687 = vmatpush2.bf16.msra.mxu0 0
    %4688 = vmatprep.subr.bf16.mxu0 0
    %4689 = vmatpush2.bf16.msra.mxu0 0
    %4690 = vmatprep.subr.bf16.mxu0 0
    %4691 = vmatpush2.bf16.msra.mxu0 0
    %4692 = vmatprep.mubr.bf16.mxu0 0
    %4693 = vmatmul.mubr.bf16.gmra.mxu0 %v4658
    %v4694 = vpop.f32.mrf.mxu0
    %v4695 = vadd.f32 %v4420, %v4694
    %v4696 = vpop.f32.mrf.mxu0
    %v4697 = vadd.f32 %v4424, %v4696
    %v4698 = vpop.f32.mrf.mxu0
    %v4699 = vpop.f32.mrf.mxu0
    %4700 = vdwg.mxu0
    %4701 = vmatprep.subr.bf16.mxu0 0
    %4702 = vmatpush1.bf16.msra.mxu0 0
    %4703 = vmatprep.subr.bf16.mxu0 0
    %4704 = vmatpush1.bf16.msra.mxu0 0
    %4705 = vmatprep.subr.bf16.mxu0 0
    %4706 = vmatpush1.bf16.msra.mxu0 0
    %4707 = vmatprep.subr.bf16.mxu0 0
    %4708 = vmatpush1.bf16.msra.mxu0 0
    %4709 = vmatprep.subr.bf16.mxu0 0
    %4710 = vmatpush1.bf16.msra.mxu0 0
    %4711 = vmatprep.subr.bf16.mxu0 0
    %4712 = vmatpush1.bf16.msra.mxu0 0
    %4713 = vmatprep.subr.bf16.mxu0 %v4612
    %4714 = vmatpush1.bf16.msra.mxu0 %v4611
    %4715 = vmatprep.subr.bf16.mxu0 %v4596
    %4716 = vmatpush1.bf16.msra.mxu0 %v4595
    %4717 = vmatprep.subr.bf16.mxu0 0
    %4718 = vmatpush2.bf16.msra.mxu0 0
    %4719 = vmatprep.subr.bf16.mxu0 0
    %4720 = vmatpush2.bf16.msra.mxu0 0
    %4721 = vmatprep.subr.bf16.mxu0 0
    %4722 = vmatpush2.bf16.msra.mxu0 0
    %4723 = vmatprep.subr.bf16.mxu0 0
    %4724 = vmatpush2.bf16.msra.mxu0 0
    %4725 = vmatprep.subr.bf16.mxu0 0
    %4726 = vmatpush2.bf16.msra.mxu0 0
    %4727 = vmatprep.subr.bf16.mxu0 0
    %4728 = vmatpush2.bf16.msra.mxu0 0
    %4729 = vmatprep.subr.bf16.mxu0 0
    %4730 = vmatpush2.bf16.msra.mxu0 0
    %4731 = vmatprep.subr.bf16.mxu0 0
    %4732 = vmatpush2.bf16.msra.mxu0 0
    %4733 = vmatprep.mubr.bf16.mxu0 0
    %4734 = vmatmul.mubr.bf16.gmra.mxu0 %v4658
    %v4735 = vpop.f32.mrf.mxu0
    %v4736 = vadd.f32 %v4428, %v4735
    %v4737 = vpop.f32.mrf.mxu0
    %v4738 = vadd.f32 %v4432, %v4737
    %v4739 = vpop.f32.mrf.mxu0
    %v4740 = vpop.f32.mrf.mxu0
    %4741 = vdwg.mxu0
    %4742 = vmatprep.subr.bf16.mxu0 0
    %4743 = vmatpush1.bf16.msra.mxu0 0
    %4744 = vmatprep.subr.bf16.mxu0 0
    %4745 = vmatpush1.bf16.msra.mxu0 0
    %4746 = vmatprep.subr.bf16.mxu0 0
    %4747 = vmatpush1.bf16.msra.mxu0 0
    %4748 = vmatprep.subr.bf16.mxu0 0
    %4749 = vmatpush1.bf16.msra.mxu0 0
    %4750 = vmatprep.subr.bf16.mxu0 0
    %4751 = vmatpush1.bf16.msra.mxu0 0
    %4752 = vmatprep.subr.bf16.mxu0 0
    %4753 = vmatpush1.bf16.msra.mxu0 0
    %4754 = vmatprep.subr.bf16.mxu0 %v4614
    %4755 = vmatpush1.bf16.msra.mxu0 %v4613
    %4756 = vmatprep.subr.bf16.mxu0 %v4598
    %4757 = vmatpush1.bf16.msra.mxu0 %v4597
    %4758 = vmatprep.subr.bf16.mxu0 0
    %4759 = vmatpush2.bf16.msra.mxu0 0
    %4760 = vmatprep.subr.bf16.mxu0 0
    %4761 = vmatpush2.bf16.msra.mxu0 0
    %4762 = vmatprep.subr.bf16.mxu0 0
    %4763 = vmatpush2.bf16.msra.mxu0 0
    %4764 = vmatprep.subr.bf16.mxu0 0
    %4765 = vmatpush2.bf16.msra.mxu0 0
    %4766 = vmatprep.subr.bf16.mxu0 0
    %4767 = vmatpush2.bf16.msra.mxu0 0
    %4768 = vmatprep.subr.bf16.mxu0 0
    %4769 = vmatpush2.bf16.msra.mxu0 0
    %4770 = vmatprep.subr.bf16.mxu0 0
    %4771 = vmatpush2.bf16.msra.mxu0 0
    %4772 = vmatprep.subr.bf16.mxu0 0
    %4773 = vmatpush2.bf16.msra.mxu0 0
    %4774 = vmatprep.mubr.bf16.mxu0 0
    %4775 = vmatmul.mubr.bf16.gmra.mxu0 %v4658
    %v4776 = vpop.f32.mrf.mxu0
    %v4777 = vadd.f32 %v4436, %v4776
    %v4778 = vpop.f32.mrf.mxu0
    %v4779 = vadd.f32 %v4440, %v4778
    %v4780 = vpop.f32.mrf.mxu0
    %v4781 = vpop.f32.mrf.mxu0
    %4782 = vdwg.mxu0
    %4783 = vmatprep.subr.bf16.mxu0 0
    %4784 = vmatpush1.bf16.msra.mxu0 0
    %4785 = vmatprep.subr.bf16.mxu0 0
    %4786 = vmatpush1.bf16.msra.mxu0 0
    %4787 = vmatprep.subr.bf16.mxu0 0
    %4788 = vmatpush1.bf16.msra.mxu0 0
    %4789 = vmatprep.subr.bf16.mxu0 0
    %4790 = vmatpush1.bf16.msra.mxu0 0
    %4791 = vmatprep.subr.bf16.mxu0 0
    %4792 = vmatpush1.bf16.msra.mxu0 0
    %4793 = vmatprep.subr.bf16.mxu0 0
    %4794 = vmatpush1.bf16.msra.mxu0 0
    %4795 = vmatprep.subr.bf16.mxu0 %v4616
    %4796 = vmatpush1.bf16.msra.mxu0 %v4615
    %4797 = vmatprep.subr.bf16.mxu0 %v4600
    %4798 = vmatpush1.bf16.msra.mxu0 %v4599
    %4799 = vmatprep.subr.bf16.mxu0 0
    %4800 = vmatpush2.bf16.msra.mxu0 0
    %4801 = vmatprep.subr.bf16.mxu0 0
    %4802 = vmatpush2.bf16.msra.mxu0 0
    %4803 = vmatprep.subr.bf16.mxu0 0
    %4804 = vmatpush2.bf16.msra.mxu0 0
    %4805 = vmatprep.subr.bf16.mxu0 0
    %4806 = vmatpush2.bf16.msra.mxu0 0
    %4807 = vmatprep.subr.bf16.mxu0 0
    %4808 = vmatpush2.bf16.msra.mxu0 0
    %4809 = vmatprep.subr.bf16.mxu0 0
    %4810 = vmatpush2.bf16.msra.mxu0 0
    %4811 = vmatprep.subr.bf16.mxu0 0
    %4812 = vmatpush2.bf16.msra.mxu0 0
    %4813 = vmatprep.subr.bf16.mxu0 0
    %4814 = vmatpush2.bf16.msra.mxu0 0
    %4815 = vmatprep.mubr.bf16.mxu0 0
    %4816 = vmatmul.mubr.bf16.gmra.mxu0 %v4658
    %v4817 = vpop.f32.mrf.mxu0
    %v4818 = vadd.f32 %v4444, %v4817
    %v4819 = vpop.f32.mrf.mxu0
    %v4820 = vadd.f32 %v4448, %v4819
    %v4821 = vpop.f32.mrf.mxu0
    %v4822 = vpop.f32.mrf.mxu0
    %4823 = vdwg.mxu0
    %4824 = vmatprep.subr.bf16.mxu0 0
    %4825 = vmatpush1.bf16.msra.mxu0 0
    %4826 = vmatprep.subr.bf16.mxu0 0
    %4827 = vmatpush1.bf16.msra.mxu0 0
    %4828 = vmatprep.subr.bf16.mxu0 0
    %4829 = vmatpush1.bf16.msra.mxu0 0
    %4830 = vmatprep.subr.bf16.mxu0 0
    %4831 = vmatpush1.bf16.msra.mxu0 0
    %4832 = vmatprep.subr.bf16.mxu0 0
    %4833 = vmatpush1.bf16.msra.mxu0 0
    %4834 = vmatprep.subr.bf16.mxu0 0
    %4835 = vmatpush1.bf16.msra.mxu0 0
    %4836 = vmatprep.subr.bf16.mxu0 %v4618
    %4837 = vmatpush1.bf16.msra.mxu0 %v4617
    %4838 = vmatprep.subr.bf16.mxu0 %v4602
    %4839 = vmatpush1.bf16.msra.mxu0 %v4601
    %4840 = vmatprep.subr.bf16.mxu0 0
    %4841 = vmatpush2.bf16.msra.mxu0 0
    %4842 = vmatprep.subr.bf16.mxu0 0
    %4843 = vmatpush2.bf16.msra.mxu0 0
    %4844 = vmatprep.subr.bf16.mxu0 0
    %4845 = vmatpush2.bf16.msra.mxu0 0
    %4846 = vmatprep.subr.bf16.mxu0 0
    %4847 = vmatpush2.bf16.msra.mxu0 0
    %4848 = vmatprep.subr.bf16.mxu0 0
    %4849 = vmatpush2.bf16.msra.mxu0 0
    %4850 = vmatprep.subr.bf16.mxu0 0
    %4851 = vmatpush2.bf16.msra.mxu0 0
    %4852 = vmatprep.subr.bf16.mxu0 0
    %4853 = vmatpush2.bf16.msra.mxu0 0
    %4854 = vmatprep.subr.bf16.mxu0 0
    %4855 = vmatpush2.bf16.msra.mxu0 0
    %4856 = vmatprep.mubr.bf16.mxu0 0
    %4857 = vmatmul.mubr.bf16.gmra.mxu0 %v4658
    %v4858 = vpop.f32.mrf.mxu0
    %v4859 = vadd.f32 %v4452, %v4858
    %v4860 = vpop.f32.mrf.mxu0
    %v4861 = vadd.f32 %v4456, %v4860
    %v4862 = vpop.f32.mrf.mxu0
    %v4863 = vpop.f32.mrf.mxu0
    %4864 = vdwg.mxu0
    %4865 = vmatprep.subr.bf16.mxu0 0
    %4866 = vmatpush1.bf16.msra.mxu0 0
    %4867 = vmatprep.subr.bf16.mxu0 0
    %4868 = vmatpush1.bf16.msra.mxu0 0
    %4869 = vmatprep.subr.bf16.mxu0 0
    %4870 = vmatpush1.bf16.msra.mxu0 0
    %4871 = vmatprep.subr.bf16.mxu0 0
    %4872 = vmatpush1.bf16.msra.mxu0 0
    %4873 = vmatprep.subr.bf16.mxu0 0
    %4874 = vmatpush1.bf16.msra.mxu0 0
    %4875 = vmatprep.subr.bf16.mxu0 0
    %4876 = vmatpush1.bf16.msra.mxu0 0
    %4877 = vmatprep.subr.bf16.mxu0 %v4620
    %4878 = vmatpush1.bf16.msra.mxu0 %v4619
    %4879 = vmatprep.subr.bf16.mxu0 %v4604
    %4880 = vmatpush1.bf16.msra.mxu0 %v4603
    %4881 = vmatprep.subr.bf16.mxu0 0
    %4882 = vmatpush2.bf16.msra.mxu0 0
    %4883 = vmatprep.subr.bf16.mxu0 0
    %4884 = vmatpush2.bf16.msra.mxu0 0
    %4885 = vmatprep.subr.bf16.mxu0 0
    %4886 = vmatpush2.bf16.msra.mxu0 0
    %4887 = vmatprep.subr.bf16.mxu0 0
    %4888 = vmatpush2.bf16.msra.mxu0 0
    %4889 = vmatprep.subr.bf16.mxu0 0
    %4890 = vmatpush2.bf16.msra.mxu0 0
    %4891 = vmatprep.subr.bf16.mxu0 0
    %4892 = vmatpush2.bf16.msra.mxu0 0
    %4893 = vmatprep.subr.bf16.mxu0 0
    %4894 = vmatpush2.bf16.msra.mxu0 0
    %4895 = vmatprep.subr.bf16.mxu0 0
    %4896 = vmatpush2.bf16.msra.mxu0 0
    %4897 = vmatprep.mubr.bf16.mxu0 0
    %4898 = vmatmul.mubr.bf16.gmra.mxu0 %v4658
    %v4899 = vpop.f32.mrf.mxu0
    %v4900 = vadd.f32 %v4460, %v4899
    %v4901 = vpop.f32.mrf.mxu0
    %v4902 = vadd.f32 %v4464, %v4901
    %v4903 = vpop.f32.mrf.mxu0
    %v4904 = vpop.f32.mrf.mxu0
    %4905 = vdwg.mxu0
    %4906 = vmatprep.subr.bf16.mxu0 0
    %4907 = vmatpush1.bf16.msra.mxu0 0
    %4908 = vmatprep.subr.bf16.mxu0 0
    %4909 = vmatpush1.bf16.msra.mxu0 0
    %4910 = vmatprep.subr.bf16.mxu0 0
    %4911 = vmatpush1.bf16.msra.mxu0 0
    %4912 = vmatprep.subr.bf16.mxu0 0
    %4913 = vmatpush1.bf16.msra.mxu0 0
    %4914 = vmatprep.subr.bf16.mxu0 0
    %4915 = vmatpush1.bf16.msra.mxu0 0
    %4916 = vmatprep.subr.bf16.mxu0 0
    %4917 = vmatpush1.bf16.msra.mxu0 0
    %4918 = vmatprep.subr.bf16.mxu0 %v4622
    %4919 = vmatpush1.bf16.msra.mxu0 %v4621
    %4920 = vmatprep.subr.bf16.mxu0 %v4606
    %4921 = vmatpush1.bf16.msra.mxu0 %v4605
    %4922 = vmatprep.subr.bf16.mxu0 0
    %4923 = vmatpush2.bf16.msra.mxu0 0
    %4924 = vmatprep.subr.bf16.mxu0 0
    %4925 = vmatpush2.bf16.msra.mxu0 0
    %4926 = vmatprep.subr.bf16.mxu0 0
    %4927 = vmatpush2.bf16.msra.mxu0 0
    %4928 = vmatprep.subr.bf16.mxu0 0
    %4929 = vmatpush2.bf16.msra.mxu0 0
    %4930 = vmatprep.subr.bf16.mxu0 0
    %4931 = vmatpush2.bf16.msra.mxu0 0
    %4932 = vmatprep.subr.bf16.mxu0 0
    %4933 = vmatpush2.bf16.msra.mxu0 0
    %4934 = vmatprep.subr.bf16.mxu0 0
    %4935 = vmatpush2.bf16.msra.mxu0 0
    %4936 = vmatprep.subr.bf16.mxu0 0
    %4937 = vmatpush2.bf16.msra.mxu0 0
    %4938 = vmatprep.mubr.bf16.mxu0 0
    %4939 = vmatmul.mubr.bf16.gmra.mxu0 %v4658
    %v4940 = vpop.f32.mrf.mxu0
    %v4941 = vadd.f32 %v4468, %v4940
    %v4942 = vpop.f32.mrf.mxu0
    %v4943 = vadd.f32 %v4472, %v4942
    %v4944 = vpop.f32.mrf.mxu0
    %v4945 = vpop.f32.mrf.mxu0
    %4946 = vdwg.mxu0
    %4947 = vmatprep.subr.bf16.mxu0 0
    %4948 = vmatpush1.bf16.msra.mxu0 0
    %4949 = vmatprep.subr.bf16.mxu0 0
    %4950 = vmatpush1.bf16.msra.mxu0 0
    %4951 = vmatprep.subr.bf16.mxu0 0
    %4952 = vmatpush1.bf16.msra.mxu0 0
    %4953 = vmatprep.subr.bf16.mxu0 0
    %4954 = vmatpush1.bf16.msra.mxu0 0
    %4955 = vmatprep.subr.bf16.mxu0 0
    %4956 = vmatpush1.bf16.msra.mxu0 0
    %4957 = vmatprep.subr.bf16.mxu0 0
    %4958 = vmatpush1.bf16.msra.mxu0 0
    %4959 = vmatprep.subr.bf16.mxu0 %v4624
    %4960 = vmatpush1.bf16.msra.mxu0 %v4623
    %4961 = vmatprep.subr.bf16.mxu0 %v4608
    %4962 = vmatpush1.bf16.msra.mxu0 %v4607
    %4963 = vmatprep.subr.bf16.mxu0 0
    %4964 = vmatpush2.bf16.msra.mxu0 0
    %4965 = vmatprep.subr.bf16.mxu0 0
    %4966 = vmatpush2.bf16.msra.mxu0 0
    %4967 = vmatprep.subr.bf16.mxu0 0
    %4968 = vmatpush2.bf16.msra.mxu0 0
    %4969 = vmatprep.subr.bf16.mxu0 0
    %4970 = vmatpush2.bf16.msra.mxu0 0
    %4971 = vmatprep.subr.bf16.mxu0 0
    %4972 = vmatpush2.bf16.msra.mxu0 0
    %4973 = vmatprep.subr.bf16.mxu0 0
    %4974 = vmatpush2.bf16.msra.mxu0 0
    %4975 = vmatprep.subr.bf16.mxu0 0
    %4976 = vmatpush2.bf16.msra.mxu0 0
    %4977 = vmatprep.subr.bf16.mxu0 0
    %4978 = vmatpush2.bf16.msra.mxu0 0
    %4979 = vmatprep.mubr.bf16.mxu0 0
    %4980 = vmatmul.mubr.bf16.gmra.mxu0 %v4658
    %v4981 = vpop.f32.mrf.mxu0
    %v4982 = vadd.f32 %v4476, %v4981
    %v4983 = vpop.f32.mrf.mxu0
    %v4984 = vadd.f32 %v4480, %v4983
    %v4985 = vpop.f32.mrf.mxu0
    %v4986 = vpop.f32.mrf.mxu0
    %4987 = vdwg.mxu0
    %v4988 = vmax.f32 %v4695, 0.0
    %v4989 = vmax.f32 %v4697, 0.0
    %v4990 = vmax.f32 %v4736, 0.0
    %v4991 = vmax.f32 %v4738, 0.0
    %v4992 = vmax.f32 %v4777, 0.0
    %v4993 = vmax.f32 %v4779, 0.0
    %v4994 = vmax.f32 %v4818, 0.0
    %v4995 = vmax.f32 %v4820, 0.0
    %v4996 = vmax.f32 %v4859, 0.0
    %v4997 = vmax.f32 %v4861, 0.0
    %v4998 = vmax.f32 %v4900, 0.0
    %v4999 = vmax.f32 %v4902, 0.0
    %v5000 = vmax.f32 %v4941, 0.0
    %v5001 = vmax.f32 %v4943, 0.0
    %v5002 = vmax.f32 %v4982, 0.0
    %v5003 = vmax.f32 %v4984, 0.0
    %s5004 = scalar_lea.vmem [#allocation5], 256
    %v5005 = vld [vmem:[%s5004] sm:$0xff]
    %v5006 = vld [vmem:[%s5004 + $0x8] sm:$0xff]
    %v5007 = vld [vmem:[%s5004 + $0x10] sm:$0xff]
    %v5008 = vld [vmem:[%s5004 + $0x18] sm:$0xff]
    %v5009 = vld [vmem:[%s5004 + $0x20] sm:$0xff]
    %v5010 = vld [vmem:[%s5004 + $0x28] sm:$0xff]
    %v5011 = vld [vmem:[%s5004 + $0x30] sm:$0xff]
    %v5012 = vld [vmem:[%s5004 + $0x38] sm:$0xff]
    %v5013 = vld [vmem:[%s5004 + $0x40] sm:$0xff]
    %v5014 = vld [vmem:[%s5004 + $0x48] sm:$0xff]
    %v5015 = vld [vmem:[%s5004 + $0x50] sm:$0xff]
    %v5016 = vld [vmem:[%s5004 + $0x58] sm:$0xff]
    %v5017 = vld [vmem:[%s5004 + $0x60] sm:$0xff]
    %v5018 = vld [vmem:[%s5004 + $0x68] sm:$0xff]
    %v5019 = vld [vmem:[%s5004 + $0x70] sm:$0xff]
    %v5020 = vld [vmem:[%s5004 + $0x78] sm:$0xff]
    %v5021 = vld [vmem:[%s5004 + $0x80] sm:$0xff]
    %v5022 = vld [vmem:[%s5004 + $0x88] sm:$0xff]
    %v5023 = vld [vmem:[%s5004 + $0x90] sm:$0xff]
    %v5024 = vld [vmem:[%s5004 + $0x98] sm:$0xff]
    %v5025 = vld [vmem:[%s5004 + $0xa0] sm:$0xff]
    %v5026 = vld [vmem:[%s5004 + $0xa8] sm:$0xff]
    %v5027 = vld [vmem:[%s5004 + $0xb0] sm:$0xff]
    %v5028 = vld [vmem:[%s5004 + $0xb8] sm:$0xff]
    %v5029 = vld [vmem:[%s5004 + $0xc0] sm:$0xff]
    %v5030 = vld [vmem:[%s5004 + $0xc8] sm:$0xff]
    %v5031 = vld [vmem:[%s5004 + $0xd0] sm:$0xff]
    %v5032 = vld [vmem:[%s5004 + $0xd8] sm:$0xff]
    %v5033 = vld [vmem:[%s5004 + $0xe0] sm:$0xff]
    %v5034 = vld [vmem:[%s5004 + $0xe8] sm:$0xff]
    %v5035 = vld [vmem:[%s5004 + $0xf0] sm:$0xff]
    %v5036 = vld [vmem:[%s5004 + $0xf8] sm:$0xff]
    %v5037 = vpack.c.bf16 %v4988, %v4988
    %v5038 = vpack.c.bf16 %v4989, %v4989
    %v5039 = vpack.c.bf16 %v4990, %v4990
    %v5040 = vpack.c.bf16 %v4991, %v4991
    %v5041 = vpack.c.bf16 %v4992, %v4992
    %v5042 = vpack.c.bf16 %v4993, %v4993
    %v5043 = vpack.c.bf16 %v4994, %v4994
    %v5044 = vpack.c.bf16 %v4995, %v4995
    %v5045 = vpack.c.bf16 %v4996, %v4996
    %v5046 = vpack.c.bf16 %v4997, %v4997
    %v5047 = vpack.c.bf16 %v4998, %v4998
    %v5048 = vpack.c.bf16 %v4999, %v4999
    %v5049 = vpack.c.bf16 %v5000, %v5000
    %v5050 = vpack.c.bf16 %v5001, %v5001
    %v5051 = vpack.c.bf16 %v5002, %v5002
    %v5052 = vpack.c.bf16 %v5003, %v5003
    %v5053 = vld [vmem:[#allocation2 + $0xb8] sm:$0x1]
    %v5054 = vlaneseq
    %v5055 = vshrl.u32 %v5054, 7
    %v5056 = vsub.s32 0, %v5055
    %v5057 = vrot.slane %v5053, %v5056
    %v5090 = vunpack.c.l.b16 %v5005
    %v5091 = vunpack.c.h.b16 %v5005
    %v5092 = vunpack.c.l.b16 %v5006
    %v5093 = vunpack.c.h.b16 %v5006
    %v5094 = vunpack.c.l.b16 %v5007
    %v5095 = vunpack.c.h.b16 %v5007
    %v5096 = vunpack.c.l.b16 %v5008
    %v5097 = vunpack.c.h.b16 %v5008
    %v5098 = vunpack.c.l.b16 %v5009
    %v5099 = vunpack.c.h.b16 %v5009
    %v5100 = vunpack.c.l.b16 %v5010
    %v5101 = vunpack.c.h.b16 %v5010
    %v5102 = vunpack.c.l.b16 %v5011
    %v5103 = vunpack.c.h.b16 %v5011
    %v5104 = vunpack.c.l.b16 %v5012
    %v5105 = vunpack.c.h.b16 %v5012
    %v5106 = vunpack.c.l.b16 %v5013
    %v5107 = vunpack.c.h.b16 %v5013
    %v5108 = vunpack.c.l.b16 %v5014
    %v5109 = vunpack.c.h.b16 %v5014
    %v5110 = vunpack.c.l.b16 %v5015
    %v5111 = vunpack.c.h.b16 %v5015
    %v5112 = vunpack.c.l.b16 %v5016
    %v5113 = vunpack.c.h.b16 %v5016
    %v5114 = vunpack.c.l.b16 %v5017
    %v5115 = vunpack.c.h.b16 %v5017
    %v5116 = vunpack.c.l.b16 %v5018
    %v5117 = vunpack.c.h.b16 %v5018
    %v5118 = vunpack.c.l.b16 %v5019
    %v5119 = vunpack.c.h.b16 %v5019
    %v5120 = vunpack.c.l.b16 %v5020
    %v5121 = vunpack.c.h.b16 %v5020
    %v5122 = vunpack.c.l.b16 %v5021
    %v5123 = vunpack.c.h.b16 %v5021
    %v5124 = vunpack.c.l.b16 %v5022
    %v5125 = vunpack.c.h.b16 %v5022
    %v5126 = vunpack.c.l.b16 %v5023
    %v5127 = vunpack.c.h.b16 %v5023
    %v5128 = vunpack.c.l.b16 %v5024
    %v5129 = vunpack.c.h.b16 %v5024
    %v5130 = vunpack.c.l.b16 %v5025
    %v5131 = vunpack.c.h.b16 %v5025
    %v5132 = vunpack.c.l.b16 %v5026
    %v5133 = vunpack.c.h.b16 %v5026
    %v5134 = vunpack.c.l.b16 %v5027
    %v5135 = vunpack.c.h.b16 %v5027
    %v5136 = vunpack.c.l.b16 %v5028
    %v5137 = vunpack.c.h.b16 %v5028
    %v5138 = vunpack.c.l.b16 %v5029
    %v5139 = vunpack.c.h.b16 %v5029
    %v5140 = vunpack.c.l.b16 %v5030
    %v5141 = vunpack.c.h.b16 %v5030
    %v5142 = vunpack.c.l.b16 %v5031
    %v5143 = vunpack.c.h.b16 %v5031
    %v5144 = vunpack.c.l.b16 %v5032
    %v5145 = vunpack.c.h.b16 %v5032
    %v5146 = vunpack.c.l.b16 %v5033
    %v5147 = vunpack.c.h.b16 %v5033
    %v5148 = vunpack.c.l.b16 %v5034
    %v5149 = vunpack.c.h.b16 %v5034
    %v5150 = vunpack.c.l.b16 %v5035
    %v5151 = vunpack.c.h.b16 %v5035
    %v5152 = vunpack.c.l.b16 %v5036
    %v5153 = vunpack.c.h.b16 %v5036
    %v5154 = vpack.c.b16 %v5106, %v5090
    %v5155 = vpack.c.b16 %v5107, %v5091
    %v5156 = vpack.c.b16 %v5108, %v5092
    %v5157 = vpack.c.b16 %v5109, %v5093
    %v5158 = vpack.c.b16 %v5110, %v5094
    %v5159 = vpack.c.b16 %v5111, %v5095
    %v5160 = vpack.c.b16 %v5112, %v5096
    %v5161 = vpack.c.b16 %v5113, %v5097
    %v5162 = vpack.c.b16 %v5114, %v5098
    %v5163 = vpack.c.b16 %v5115, %v5099
    %v5164 = vpack.c.b16 %v5116, %v5100
    %v5165 = vpack.c.b16 %v5117, %v5101
    %v5166 = vpack.c.b16 %v5118, %v5102
    %v5167 = vpack.c.b16 %v5119, %v5103
    %v5168 = vpack.c.b16 %v5120, %v5104
    %v5169 = vpack.c.b16 %v5121, %v5105
    %v5170 = vpack.c.b16 %v5138, %v5122
    %v5171 = vpack.c.b16 %v5139, %v5123
    %v5172 = vpack.c.b16 %v5140, %v5124
    %v5173 = vpack.c.b16 %v5141, %v5125
    %v5174 = vpack.c.b16 %v5142, %v5126
    %v5175 = vpack.c.b16 %v5143, %v5127
    %v5176 = vpack.c.b16 %v5144, %v5128
    %v5177 = vpack.c.b16 %v5145, %v5129
    %v5178 = vpack.c.b16 %v5146, %v5130
    %v5179 = vpack.c.b16 %v5147, %v5131
    %v5180 = vpack.c.b16 %v5148, %v5132
    %v5181 = vpack.c.b16 %v5149, %v5133
    %v5182 = vpack.c.b16 %v5150, %v5134
    %v5183 = vpack.c.b16 %v5151, %v5135
    %v5184 = vpack.c.b16 %v5152, %v5136
    %v5185 = vpack.c.b16 %v5153, %v5137
    %5218 = vmatprep.subr.bf16.mxu0 0
    %5219 = vmatpush1.bf16.xpose.msra.mxu0 0
    %5220 = vmatprep.subr.bf16.mxu0 0
    %5221 = vmatpush1.bf16.xpose.msra.mxu0 0
    %5222 = vmatprep.subr.bf16.mxu0 0
    %5223 = vmatpush1.bf16.xpose.msra.mxu0 0
    %5224 = vmatprep.subr.bf16.mxu0 0
    %5225 = vmatpush1.bf16.xpose.msra.mxu0 0
    %5226 = vmatprep.subr.bf16.mxu0 0
    %5227 = vmatpush1.bf16.xpose.msra.mxu0 0
    %5228 = vmatprep.subr.bf16.mxu0 0
    %5229 = vmatpush1.bf16.xpose.msra.mxu0 0
    %5230 = vmatprep.subr.bf16.mxu0 %v5171
    %5231 = vmatpush1.bf16.xpose.msra.mxu0 %v5170
    %5232 = vmatprep.subr.bf16.mxu0 %v5155
    %5233 = vmatpush1.bf16.xpose.msra.mxu0 %v5154
    %5234 = vmatprep.subr.bf16.mxu0 0
    %5235 = vmatpush2.bf16.xpose.msra.mxu0 0
    %5236 = vmatprep.subr.bf16.mxu0 0
    %5237 = vmatpush2.bf16.xpose.msra.mxu0 0
    %5238 = vmatprep.subr.bf16.mxu0 0
    %5239 = vmatpush2.bf16.xpose.msra.mxu0 0
    %5240 = vmatprep.subr.bf16.mxu0 0
    %5241 = vmatpush2.bf16.xpose.msra.mxu0 0
    %5242 = vmatprep.subr.bf16.mxu0 0
    %5243 = vmatpush2.bf16.xpose.msra.mxu0 0
    %5244 = vmatprep.subr.bf16.mxu0 0
    %5245 = vmatpush2.bf16.xpose.msra.mxu0 0
    %5246 = vmatprep.subr.bf16.mxu0 0
    %5247 = vmatpush2.bf16.xpose.msra.mxu0 0
    %5248 = vmatprep.subr.bf16.mxu0 0
    %5249 = vmatpush2.bf16.xpose.msra.mxu0 0
    %5250 = vmatprep.mubr.bf16.mxu0 %v5038
    %5251 = vmatmul.mubr.bf16.gmra.mxu0 %v5037
    %v5252 = vpop.f32.mrf.mxu0
    %v5253 = vadd.f32 %v5057, %v5252
    %v5254 = vpop.f32.mrf.mxu0
    %v5255 = vpop.f32.mrf.mxu0
    %v5256 = vpop.f32.mrf.mxu0
    %5257 = vdwg.mxu0
    %5258 = vmatprep.subr.bf16.mxu0 0
    %5259 = vmatpush1.bf16.xpose.msra.mxu0 0
    %5260 = vmatprep.subr.bf16.mxu0 0
    %5261 = vmatpush1.bf16.xpose.msra.mxu0 0
    %5262 = vmatprep.subr.bf16.mxu0 0
    %5263 = vmatpush1.bf16.xpose.msra.mxu0 0
    %5264 = vmatprep.subr.bf16.mxu0 0
    %5265 = vmatpush1.bf16.xpose.msra.mxu0 0
    %5266 = vmatprep.subr.bf16.mxu0 0
    %5267 = vmatpush1.bf16.xpose.msra.mxu0 0
    %5268 = vmatprep.subr.bf16.mxu0 0
    %5269 = vmatpush1.bf16.xpose.msra.mxu0 0
    %5270 = vmatprep.subr.bf16.mxu0 %v5173
    %5271 = vmatpush1.bf16.xpose.msra.mxu0 %v5172
    %5272 = vmatprep.subr.bf16.mxu0 %v5157
    %5273 = vmatpush1.bf16.xpose.msra.mxu0 %v5156
    %5274 = vmatprep.subr.bf16.mxu0 0
    %5275 = vmatpush2.bf16.xpose.msra.mxu0 0
    %5276 = vmatprep.subr.bf16.mxu0 0
    %5277 = vmatpush2.bf16.xpose.msra.mxu0 0
    %5278 = vmatprep.subr.bf16.mxu0 0
    %5279 = vmatpush2.bf16.xpose.msra.mxu0 0
    %5280 = vmatprep.subr.bf16.mxu0 0
    %5281 = vmatpush2.bf16.xpose.msra.mxu0 0
    %5282 = vmatprep.subr.bf16.mxu0 0
    %5283 = vmatpush2.bf16.xpose.msra.mxu0 0
    %5284 = vmatprep.subr.bf16.mxu0 0
    %5285 = vmatpush2.bf16.xpose.msra.mxu0 0
    %5286 = vmatprep.subr.bf16.mxu0 0
    %5287 = vmatpush2.bf16.xpose.msra.mxu0 0
    %5288 = vmatprep.subr.bf16.mxu0 0
    %5289 = vmatpush2.bf16.xpose.msra.mxu0 0
    %5290 = vmatprep.mubr.bf16.mxu0 %v5040
    %5291 = vmatmul.mubr.bf16.gmra.mxu0 %v5039
    %v5292 = vpop.f32.mrf.mxu0
    %v5293 = vadd.f32 %v5253, %v5292
    %v5294 = vpop.f32.mrf.mxu0
    %v5295 = vpop.f32.mrf.mxu0
    %v5296 = vpop.f32.mrf.mxu0
    %5297 = vdwg.mxu0
    %5298 = vmatprep.subr.bf16.mxu0 0
    %5299 = vmatpush1.bf16.xpose.msra.mxu0 0
    %5300 = vmatprep.subr.bf16.mxu0 0
    %5301 = vmatpush1.bf16.xpose.msra.mxu0 0
    %5302 = vmatprep.subr.bf16.mxu0 0
    %5303 = vmatpush1.bf16.xpose.msra.mxu0 0
    %5304 = vmatprep.subr.bf16.mxu0 0
    %5305 = vmatpush1.bf16.xpose.msra.mxu0 0
    %5306 = vmatprep.subr.bf16.mxu0 0
    %5307 = vmatpush1.bf16.xpose.msra.mxu0 0
    %5308 = vmatprep.subr.bf16.mxu0 0
    %5309 = vmatpush1.bf16.xpose.msra.mxu0 0
    %5310 = vmatprep.subr.bf16.mxu0 %v5175
    %5311 = vmatpush1.bf16.xpose.msra.mxu0 %v5174
    %5312 = vmatprep.subr.bf16.mxu0 %v5159
    %5313 = vmatpush1.bf16.xpose.msra.mxu0 %v5158
    %5314 = vmatprep.subr.bf16.mxu0 0
    %5315 = vmatpush2.bf16.xpose.msra.mxu0 0
    %5316 = vmatprep.subr.bf16.mxu0 0
    %5317 = vmatpush2.bf16.xpose.msra.mxu0 0
    %5318 = vmatprep.subr.bf16.mxu0 0
    %5319 = vmatpush2.bf16.xpose.msra.mxu0 0
    %5320 = vmatprep.subr.bf16.mxu0 0
    %5321 = vmatpush2.bf16.xpose.msra.mxu0 0
    %5322 = vmatprep.subr.bf16.mxu0 0
    %5323 = vmatpush2.bf16.xpose.msra.mxu0 0
    %5324 = vmatprep.subr.bf16.mxu0 0
    %5325 = vmatpush2.bf16.xpose.msra.mxu0 0
    %5326 = vmatprep.subr.bf16.mxu0 0
    %5327 = vmatpush2.bf16.xpose.msra.mxu0 0
    %5328 = vmatprep.subr.bf16.mxu0 0
    %5329 = vmatpush2.bf16.xpose.msra.mxu0 0
    %5330 = vmatprep.mubr.bf16.mxu0 %v5042
    %5331 = vmatmul.mubr.bf16.gmra.mxu0 %v5041
    %v5332 = vpop.f32.mrf.mxu0
    %v5333 = vadd.f32 %v5293, %v5332
    %v5334 = vpop.f32.mrf.mxu0
    %v5335 = vpop.f32.mrf.mxu0
    %v5336 = vpop.f32.mrf.mxu0
    %5337 = vdwg.mxu0
    %5338 = vmatprep.subr.bf16.mxu0 0
    %5339 = vmatpush1.bf16.xpose.msra.mxu0 0
    %5340 = vmatprep.subr.bf16.mxu0 0
    %5341 = vmatpush1.bf16.xpose.msra.mxu0 0
    %5342 = vmatprep.subr.bf16.mxu0 0
    %5343 = vmatpush1.bf16.xpose.msra.mxu0 0
    %5344 = vmatprep.subr.bf16.mxu0 0
    %5345 = vmatpush1.bf16.xpose.msra.mxu0 0
    %5346 = vmatprep.subr.bf16.mxu0 0
    %5347 = vmatpush1.bf16.xpose.msra.mxu0 0
    %5348 = vmatprep.subr.bf16.mxu0 0
    %5349 = vmatpush1.bf16.xpose.msra.mxu0 0
    %5350 = vmatprep.subr.bf16.mxu0 %v5177
    %5351 = vmatpush1.bf16.xpose.msra.mxu0 %v5176
    %5352 = vmatprep.subr.bf16.mxu0 %v5161
    %5353 = vmatpush1.bf16.xpose.msra.mxu0 %v5160
    %5354 = vmatprep.subr.bf16.mxu0 0
    %5355 = vmatpush2.bf16.xpose.msra.mxu0 0
    %5356 = vmatprep.subr.bf16.mxu0 0
    %5357 = vmatpush2.bf16.xpose.msra.mxu0 0
    %5358 = vmatprep.subr.bf16.mxu0 0
    %5359 = vmatpush2.bf16.xpose.msra.mxu0 0
    %5360 = vmatprep.subr.bf16.mxu0 0
    %5361 = vmatpush2.bf16.xpose.msra.mxu0 0
    %5362 = vmatprep.subr.bf16.mxu0 0
    %5363 = vmatpush2.bf16.xpose.msra.mxu0 0
    %5364 = vmatprep.subr.bf16.mxu0 0
    %5365 = vmatpush2.bf16.xpose.msra.mxu0 0
    %5366 = vmatprep.subr.bf16.mxu0 0
    %5367 = vmatpush2.bf16.xpose.msra.mxu0 0
    %5368 = vmatprep.subr.bf16.mxu0 0
    %5369 = vmatpush2.bf16.xpose.msra.mxu0 0
    %5370 = vmatprep.mubr.bf16.mxu0 %v5044
    %5371 = vmatmul.mubr.bf16.gmra.mxu0 %v5043
    %v5372 = vpop.f32.mrf.mxu0
    %v5373 = vadd.f32 %v5333, %v5372
    %v5374 = vpop.f32.mrf.mxu0
    %v5375 = vpop.f32.mrf.mxu0
    %v5376 = vpop.f32.mrf.mxu0
    %5377 = vdwg.mxu0
    %5378 = vmatprep.subr.bf16.mxu0 0
    %5379 = vmatpush1.bf16.xpose.msra.mxu0 0
    %5380 = vmatprep.subr.bf16.mxu0 0
    %5381 = vmatpush1.bf16.xpose.msra.mxu0 0
    %5382 = vmatprep.subr.bf16.mxu0 0
    %5383 = vmatpush1.bf16.xpose.msra.mxu0 0
    %5384 = vmatprep.subr.bf16.mxu0 0
    %5385 = vmatpush1.bf16.xpose.msra.mxu0 0
    %5386 = vmatprep.subr.bf16.mxu0 0
    %5387 = vmatpush1.bf16.xpose.msra.mxu0 0
    %5388 = vmatprep.subr.bf16.mxu0 0
    %5389 = vmatpush1.bf16.xpose.msra.mxu0 0
    %5390 = vmatprep.subr.bf16.mxu0 %v5179
    %5391 = vmatpush1.bf16.xpose.msra.mxu0 %v5178
    %5392 = vmatprep.subr.bf16.mxu0 %v5163
    %5393 = vmatpush1.bf16.xpose.msra.mxu0 %v5162
    %5394 = vmatprep.subr.bf16.mxu0 0
    %5395 = vmatpush2.bf16.xpose.msra.mxu0 0
    %5396 = vmatprep.subr.bf16.mxu0 0
    %5397 = vmatpush2.bf16.xpose.msra.mxu0 0
    %5398 = vmatprep.subr.bf16.mxu0 0
    %5399 = vmatpush2.bf16.xpose.msra.mxu0 0
    %5400 = vmatprep.subr.bf16.mxu0 0
    %5401 = vmatpush2.bf16.xpose.msra.mxu0 0
    %5402 = vmatprep.subr.bf16.mxu0 0
    %5403 = vmatpush2.bf16.xpose.msra.mxu0 0
    %5404 = vmatprep.subr.bf16.mxu0 0
    %5405 = vmatpush2.bf16.xpose.msra.mxu0 0
    %5406 = vmatprep.subr.bf16.mxu0 0
    %5407 = vmatpush2.bf16.xpose.msra.mxu0 0
    %5408 = vmatprep.subr.bf16.mxu0 0
    %5409 = vmatpush2.bf16.xpose.msra.mxu0 0
    %5410 = vmatprep.mubr.bf16.mxu0 %v5046
    %5411 = vmatmul.mubr.bf16.gmra.mxu0 %v5045
    %v5412 = vpop.f32.mrf.mxu0
    %v5413 = vadd.f32 %v5373, %v5412
    %v5414 = vpop.f32.mrf.mxu0
    %v5415 = vpop.f32.mrf.mxu0
    %v5416 = vpop.f32.mrf.mxu0
    %5417 = vdwg.mxu0
    %5418 = vmatprep.subr.bf16.mxu0 0
    %5419 = vmatpush1.bf16.xpose.msra.mxu0 0
    %5420 = vmatprep.subr.bf16.mxu0 0
    %5421 = vmatpush1.bf16.xpose.msra.mxu0 0
    %5422 = vmatprep.subr.bf16.mxu0 0
    %5423 = vmatpush1.bf16.xpose.msra.mxu0 0
    %5424 = vmatprep.subr.bf16.mxu0 0
    %5425 = vmatpush1.bf16.xpose.msra.mxu0 0
    %5426 = vmatprep.subr.bf16.mxu0 0
    %5427 = vmatpush1.bf16.xpose.msra.mxu0 0
    %5428 = vmatprep.subr.bf16.mxu0 0
    %5429 = vmatpush1.bf16.xpose.msra.mxu0 0
    %5430 = vmatprep.subr.bf16.mxu0 %v5181
    %5431 = vmatpush1.bf16.xpose.msra.mxu0 %v5180
    %5432 = vmatprep.subr.bf16.mxu0 %v5165
    %5433 = vmatpush1.bf16.xpose.msra.mxu0 %v5164
    %5434 = vmatprep.subr.bf16.mxu0 0
    %5435 = vmatpush2.bf16.xpose.msra.mxu0 0
    %5436 = vmatprep.subr.bf16.mxu0 0
    %5437 = vmatpush2.bf16.xpose.msra.mxu0 0
    %5438 = vmatprep.subr.bf16.mxu0 0
    %5439 = vmatpush2.bf16.xpose.msra.mxu0 0
    %5440 = vmatprep.subr.bf16.mxu0 0
    %5441 = vmatpush2.bf16.xpose.msra.mxu0 0
    %5442 = vmatprep.subr.bf16.mxu0 0
    %5443 = vmatpush2.bf16.xpose.msra.mxu0 0
    %5444 = vmatprep.subr.bf16.mxu0 0
    %5445 = vmatpush2.bf16.xpose.msra.mxu0 0
    %5446 = vmatprep.subr.bf16.mxu0 0
    %5447 = vmatpush2.bf16.xpose.msra.mxu0 0
    %5448 = vmatprep.subr.bf16.mxu0 0
    %5449 = vmatpush2.bf16.xpose.msra.mxu0 0
    %5450 = vmatprep.mubr.bf16.mxu0 %v5048
    %5451 = vmatmul.mubr.bf16.gmra.mxu0 %v5047
    %v5452 = vpop.f32.mrf.mxu0
    %v5453 = vadd.f32 %v5413, %v5452
    %v5454 = vpop.f32.mrf.mxu0
    %v5455 = vpop.f32.mrf.mxu0
    %v5456 = vpop.f32.mrf.mxu0
    %5457 = vdwg.mxu0
    %5458 = vmatprep.subr.bf16.mxu0 0
    %5459 = vmatpush1.bf16.xpose.msra.mxu0 0
    %5460 = vmatprep.subr.bf16.mxu0 0
    %5461 = vmatpush1.bf16.xpose.msra.mxu0 0
    %5462 = vmatprep.subr.bf16.mxu0 0
    %5463 = vmatpush1.bf16.xpose.msra.mxu0 0
    %5464 = vmatprep.subr.bf16.mxu0 0
    %5465 = vmatpush1.bf16.xpose.msra.mxu0 0
    %5466 = vmatprep.subr.bf16.mxu0 0
    %5467 = vmatpush1.bf16.xpose.msra.mxu0 0
    %5468 = vmatprep.subr.bf16.mxu0 0
    %5469 = vmatpush1.bf16.xpose.msra.mxu0 0
    %5470 = vmatprep.subr.bf16.mxu0 %v5183
    %5471 = vmatpush1.bf16.xpose.msra.mxu0 %v5182
    %5472 = vmatprep.subr.bf16.mxu0 %v5167
    %5473 = vmatpush1.bf16.xpose.msra.mxu0 %v5166
    %5474 = vmatprep.subr.bf16.mxu0 0
    %5475 = vmatpush2.bf16.xpose.msra.mxu0 0
    %5476 = vmatprep.subr.bf16.mxu0 0
    %5477 = vmatpush2.bf16.xpose.msra.mxu0 0
    %5478 = vmatprep.subr.bf16.mxu0 0
    %5479 = vmatpush2.bf16.xpose.msra.mxu0 0
    %5480 = vmatprep.subr.bf16.mxu0 0
    %5481 = vmatpush2.bf16.xpose.msra.mxu0 0
    %5482 = vmatprep.subr.bf16.mxu0 0
    %5483 = vmatpush2.bf16.xpose.msra.mxu0 0
    %5484 = vmatprep.subr.bf16.mxu0 0
    %5485 = vmatpush2.bf16.xpose.msra.mxu0 0
    %5486 = vmatprep.subr.bf16.mxu0 0
    %5487 = vmatpush2.bf16.xpose.msra.mxu0 0
    %5488 = vmatprep.subr.bf16.mxu0 0
    %5489 = vmatpush2.bf16.xpose.msra.mxu0 0
    %5490 = vmatprep.mubr.bf16.mxu0 %v5050
    %5491 = vmatmul.mubr.bf16.gmra.mxu0 %v5049
    %v5492 = vpop.f32.mrf.mxu0
    %v5493 = vadd.f32 %v5453, %v5492
    %v5494 = vpop.f32.mrf.mxu0
    %v5495 = vpop.f32.mrf.mxu0
    %v5496 = vpop.f32.mrf.mxu0
    %5497 = vdwg.mxu0
    %5498 = vmatprep.subr.bf16.mxu0 0
    %5499 = vmatpush1.bf16.xpose.msra.mxu0 0
    %5500 = vmatprep.subr.bf16.mxu0 0
    %5501 = vmatpush1.bf16.xpose.msra.mxu0 0
    %5502 = vmatprep.subr.bf16.mxu0 0
    %5503 = vmatpush1.bf16.xpose.msra.mxu0 0
    %5504 = vmatprep.subr.bf16.mxu0 0
    %5505 = vmatpush1.bf16.xpose.msra.mxu0 0
    %5506 = vmatprep.subr.bf16.mxu0 0
    %5507 = vmatpush1.bf16.xpose.msra.mxu0 0
    %5508 = vmatprep.subr.bf16.mxu0 0
    %5509 = vmatpush1.bf16.xpose.msra.mxu0 0
    %5510 = vmatprep.subr.bf16.mxu0 %v5185
    %5511 = vmatpush1.bf16.xpose.msra.mxu0 %v5184
    %5512 = vmatprep.subr.bf16.mxu0 %v5169
    %5513 = vmatpush1.bf16.xpose.msra.mxu0 %v5168
    %5514 = vmatprep.subr.bf16.mxu0 0
    %5515 = vmatpush2.bf16.xpose.msra.mxu0 0
    %5516 = vmatprep.subr.bf16.mxu0 0
    %5517 = vmatpush2.bf16.xpose.msra.mxu0 0
    %5518 = vmatprep.subr.bf16.mxu0 0
    %5519 = vmatpush2.bf16.xpose.msra.mxu0 0
    %5520 = vmatprep.subr.bf16.mxu0 0
    %5521 = vmatpush2.bf16.xpose.msra.mxu0 0
    %5522 = vmatprep.subr.bf16.mxu0 0
    %5523 = vmatpush2.bf16.xpose.msra.mxu0 0
    %5524 = vmatprep.subr.bf16.mxu0 0
    %5525 = vmatpush2.bf16.xpose.msra.mxu0 0
    %5526 = vmatprep.subr.bf16.mxu0 0
    %5527 = vmatpush2.bf16.xpose.msra.mxu0 0
    %5528 = vmatprep.subr.bf16.mxu0 0
    %5529 = vmatpush2.bf16.xpose.msra.mxu0 0
    %5530 = vmatprep.mubr.bf16.mxu0 %v5052
    %5531 = vmatmul.mubr.bf16.gmra.mxu0 %v5051
    %v5532 = vpop.f32.mrf.mxu0
    %v5533 = vadd.f32 %v5493, %v5532
    %v5534 = vpop.f32.mrf.mxu0
    %v5535 = vpop.f32.mrf.mxu0
    %v5536 = vpop.f32.mrf.mxu0
    %5537 = vdwg.mxu0
    %v5538 = vadd.f32 %v4377, %v5533
    %v5539 = vsel %vm209, %v5538, 0.0
    %5540 = vadd.xlane.f32.xlu0 %v5539
    %v5541 = vpop.xlane.xlu0 %5540
    %v5542 = vmul.f32 %v5541, %v213
    %v5543 = vsub.f32 %v5538, %v5542
    %v5544 = vmul.f32 %v5543, %v5543
    %v5545 = vsel %vm209, %v5544, 0.0
    %5546 = vadd.xlane.f32.xlu0 %v5545
    %v5547 = vpop.xlane.xlu0 %5546
    %v5548 = vmul.f32 %v5547, %v213
    %v5549 = vadd.f32 %v5548, 1e-05
    %v5550 = vrsqrt.pop %v5549
    %v5551 = vmul.f32 %v5543, %v5550
    %v5552 = vld [vmem:[#allocation2 + $0xc0] sm:$0x1]
    %v5553 = vlaneseq
    %v5554 = vshrl.u32 %v5553, 7
    %v5555 = vsub.s32 0, %v5554
    %v5556 = vrot.slane %v5552, %v5555
    %v5557 = vmul.f32 %v5551, %v5556
    %v5558 = vld [vmem:[#allocation2 + $0xc8] sm:$0x1]
    %v5559 = vlaneseq
    %v5560 = vshrl.u32 %v5559, 7
    %v5561 = vsub.s32 0, %v5560
    %v5562 = vrot.slane %v5558, %v5561
    %v5563 = vadd.f32 %v5557, %v5562
    %v5564 = vld [vmem:[%s2 + $0x148] sm:$0xf]
    %v5565 = vld [vmem:[%s2 + $0x14c] sm:$0xf]
    %v5566 = vld [vmem:[%s2 + $0x150] sm:$0xf]
    %v5567 = vld [vmem:[%s2 + $0x154] sm:$0xf]
    %v5568 = vpack.c.bf16 %v5563, %v5563
    %v5569 = vld [vmem:[#allocation2 + $0xd0] sm:$0x1]
    %v5570 = vlaneseq
    %v5571 = vshrl.u32 %v5570, 7
    %v5572 = vsub.s32 0, %v5571
    %v5573 = vrot.slane %v5569, %v5572
    %v5578 = vunpack.c.l.b16 %v5564
    %v5579 = vunpack.c.l.b16 %v5565
    %v5580 = vunpack.c.l.b16 %v5566
    %v5581 = vunpack.c.l.b16 %v5567
    %v5582 = vpack.c.b16 %v5579, %v5578
    %v5583 = vpack.c.b16 %v5581, %v5580
    %v5587 = vsel %vm205, %v5568, 0
    %5589 = vmatprep.subr.bf16.mxu0 0
    %5590 = vmatpush1.bf16.msra.mxu0 0
    %5591 = vmatprep.subr.bf16.mxu0 0
    %5592 = vmatpush1.bf16.msra.mxu0 0
    %5593 = vmatprep.subr.bf16.mxu0 0
    %5594 = vmatpush1.bf16.msra.mxu0 0
    %5595 = vmatprep.subr.bf16.mxu0 0
    %5596 = vmatpush1.bf16.msra.mxu0 0
    %5597 = vmatprep.subr.bf16.mxu0 0
    %5598 = vmatpush1.bf16.msra.mxu0 0
    %5599 = vmatprep.subr.bf16.mxu0 0
    %5600 = vmatpush1.bf16.msra.mxu0 0
    %5601 = vmatprep.subr.bf16.mxu0 0
    %5602 = vmatpush1.bf16.msra.mxu0 %v5583
    %5603 = vmatprep.subr.bf16.mxu0 0
    %5604 = vmatpush1.bf16.msra.mxu0 %v5582
    %5605 = vmatprep.subr.bf16.mxu0 0
    %5606 = vmatpush2.bf16.msra.mxu0 0
    %5607 = vmatprep.subr.bf16.mxu0 0
    %5608 = vmatpush2.bf16.msra.mxu0 0
    %5609 = vmatprep.subr.bf16.mxu0 0
    %5610 = vmatpush2.bf16.msra.mxu0 0
    %5611 = vmatprep.subr.bf16.mxu0 0
    %5612 = vmatpush2.bf16.msra.mxu0 0
    %5613 = vmatprep.subr.bf16.mxu0 0
    %5614 = vmatpush2.bf16.msra.mxu0 0
    %5615 = vmatprep.subr.bf16.mxu0 0
    %5616 = vmatpush2.bf16.msra.mxu0 0
    %5617 = vmatprep.subr.bf16.mxu0 0
    %5618 = vmatpush2.bf16.msra.mxu0 0
    %5619 = vmatprep.subr.bf16.mxu0 0
    %5620 = vmatpush2.bf16.msra.mxu0 0
    %5621 = vmatprep.mubr.bf16.mxu0 0
    %5622 = vmatmul.mubr.bf16.gmra.mxu0 %v5587
    %v5623 = vpop.f32.mrf.mxu0
    %v5624 = vadd.f32 %v5573, %v5623
    %v5625 = vpop.f32.mrf.mxu0
    %v5626 = vpop.f32.mrf.mxu0
    %v5627 = vpop.f32.mrf.mxu0
    %5628 = vdwg.mxu0
    %5629 = vst [vmem:[#allocation7] sm:$0x3] %v5624
    // Predicated region
    $region38: #{fwd.1} parent=1 // pred_check
      _
    $region39: #{fwd.1} parent=1 // pred_check_branch
      %5631 = sbr.rel (0) target = $region41
    $region40: #{fwd.1} parent=1 // pred_region
      %s5633 = ssub.s32 32, 32
      %5634 = vsyncadd [#allocation4], %s5633
      %s5636 = sshll.u32 [#allocation7], 4
      %s5637 = int_to_ptr.vmem [resolvable:$true] %s5636
      %5639 = dma.vmem_to_hbm [thread:$0]  %s5637, 32, %s7, [#allocation4]
    $region41: #{fwd.1} parent=1 // pred_fallthru
      _
    // Predicated region
    $region42: #{fwd.1} parent=1 // pred_check
      _
    $region43: #{fwd.1} parent=1 // pred_check_branch
      %5641 = sbr.rel (0) target = $region45
    $region44: #{fwd.1} parent=1 // pred_region
      %5642 = dma.done [#allocation4], 32
    $region45: #{fwd.1} parent=1 // pred_fallthru
      _
    %5643 = vsyncpa [#allocation3], 1
    %5644 = vsyncpa [#allocation6], 1
    %5645 = vsyncpa [#allocation4], 1

</llo_original>
